<compile_context>
chip_gen: v7x
topology: tpu7x:2x2x1
jax: 0.10.0
libtpu: 0.0.40
codegen_flags: <defaults>
</compile_context>

<pallas_src>
import functools
import math

import numpy as np
import jax
import jax.numpy as jnp
from jax.experimental import pallas as pl
from jax.experimental.pallas import tpu as pltpu

K = 5          # conv kernel size (fixed by the module)
OUT_PAD = 128  # fc3 output padded to a full 128-lane vreg (sliced back to 10 outside)


# ------------------------------ Pallas kernel -------------------------------

def _lenet_kernel(x_ref, t1_ref, b1_ref, sh1_ref, sw1_ref,
                  t2_ref, b2_ref, sh2_ref, sw2_ref,
                  wf1_ref, bf1_ref, wf2_ref, bf2_ref, wf3_ref, bf3_ref,
                  out_ref, *, n_batch, k):
    """Entire LeNet forward for a small batch, fully resident in VMEM."""

    def mm(a, b):
        return jnp.dot(a, b, preferred_element_type=jnp.float32)

    def conv_relu_pool(xslab, t_ref, b_row, sh_ref, sw_ref):
        # xslab: (H_in, Cin*W_in) for one image, columns ordered (ci, w), w minor.
        # t_ref: (k, Cin*W_in, Cout*W_out) Toeplitz weight slabs (one per kernel row).
        ho = xslab.shape[0] - k + 1
        acc = mm(xslab[0:ho, :], t_ref[0])
        for ky in range(1, k):
            acc = acc + mm(xslab[ky:ky + ho, :], t_ref[ky])
        acc = jnp.maximum(acc + b_row, 0.0)              # bias + ReLU, (Ho, Cout*Wo)
        # 2x2 stride-2 max pool via constant 0/1 selection matmuls.
        sw0, sw1 = sw_ref[0], sw_ref[1]
        a0 = mm(sh_ref[0], acc)                          # rows 2*hp
        a1 = mm(sh_ref[1], acc)                          # rows 2*hp + 1
        return jnp.maximum(jnp.maximum(mm(a0, sw0), mm(a0, sw1)),
                           jnp.maximum(mm(a1, sw0), mm(a1, sw1)))
        # -> (Ho//2, Cout*(Wo//2)), rows = h, cols = (c, w), w minor.

    b1_row, b2_row = b1_ref[...], b2_ref[...]
    bf1, bf2, bf3 = bf1_ref[...], bf2_ref[...], bf3_ref[...]
    wf2, wf3 = wf2_ref[...], wf3_ref[...]

    for n in range(n_batch):                             # tiny static batch, unrolled
        p1 = conv_relu_pool(x_ref[n], t1_ref, b1_row, sh1_ref, sw1_ref)   # (14, 6*14)
        p2 = conv_relu_pool(p1, t2_ref, b2_row, sh2_ref, sw2_ref)         # (5, 16*5)
        # fc1 as a sum over pooled rows (weights pre-permuted to this layout).
        a = mm(p2[0:1, :], wf1_ref[0])
        for h in range(1, p2.shape[0]):
            a = a + mm(p2[h:h + 1, :], wf1_ref[h])
        a = jnp.maximum(a + bf1, 0.0)                    # (1, 120)
        a = jnp.maximum(mm(a, wf2) + bf2, 0.0)           # (1, 84)
        out_ref[n:n + 1, :] = mm(a, wf3) + bf3           # (1, OUT_PAD) lane-dense store


# --------------------------- one-time weight packing ------------------------

def _toeplitz(w_oihw, w_in):
    """T[ky, ci*w_in + w, co*wo + o] so that X[(h), (ci,w)] @ T[ky] does the conv row ky."""
    cout, cin, kh, kw = w_oihw.shape
    wo = w_in - kw + 1
    t = np.zeros((kh, cin * w_in, cout * wo), np.float32)
    d = np.arange(wo)
    for ky in range(kh):
        for ci in range(cin):
            for co in range(cout):
                for kx in range(kw):
                    t[ky, ci * w_in + kx + d, co * wo + d] = float(w_oihw[co, ci, ky, kx])
    return t


def _pool_matrices(cout, ho, wo):
    """0/1 selection matrices: SH[dy] picks rows 2hp+dy, SW[dx] picks cols (co, 2wp+dx)."""
    hp, wp = ho // 2, wo // 2
    sh = np.zeros((2, hp, ho), np.float32)
    sw = np.zeros((2, cout * wo, cout * wp), np.float32)
    for d in range(2):
        sh[d, np.arange(hp), 2 * np.arange(hp) + d] = 1.0
        for co in range(cout):
            sw[d, co * wo + 2 * np.arange(wp) + d, co * wp + np.arange(wp)] = 1.0
    return sh, sw


def pack_params(p, h_in=32, w_in=32):
    """One-time repack of PyTorch-convention weights into fused-kernel operands."""
    w1 = np.asarray(p["w1"], np.float32); b1 = np.asarray(p["b1"], np.float32)
    w2 = np.asarray(p["w2"], np.float32); b2 = np.asarray(p["b2"], np.float32)
    fc1_w = np.asarray(p["fc1_w"], np.float32); fc1_b = np.asarray(p["fc1_b"], np.float32)
    fc2_w = np.asarray(p["fc2_w"], np.float32); fc2_b = np.asarray(p["fc2_b"], np.float32)
    fc3_w = np.asarray(p["fc3_w"], np.float32); fc3_b = np.asarray(p["fc3_b"], np.float32)

    c1 = w1.shape[0]
    c2 = w2.shape[0]
    wo1 = w_in - K + 1            # 28
    wp1 = wo1 // 2                # 14
    wo2 = wp1 - K + 1             # 10
    wp2 = wo2 // 2                # 5

    sh1, sw1 = _pool_matrices(c1, wo1, wo1)
    sh2, sw2 = _pool_matrices(c2, wo2, wo2)

    nf1 = fc1_w.shape[0]
    # Permute fc1 weights so it consumes pool2's (h, (c, w)) layout directly
    # (replaces torch's NCHW flatten + the old runtime transpose).
    wf1 = fc1_w.reshape(nf1, c2, wp2, wp2).transpose(2, 1, 3, 0).reshape(wp2, c2 * wp2, nf1)

    wf3 = np.zeros((fc3_w.shape[1], OUT_PAD), np.float32)
    wf3[:, :fc3_w.shape[0]] = fc3_w.T
    bf3 = np.zeros((1, OUT_PAD), np.float32)
    bf3[0, :fc3_b.shape[0]] = fc3_b

    packed = dict(
        t1=_toeplitz(w1, w_in), b1=np.repeat(b1, wo1)[None, :],
        sh1=sh1, sw1=sw1,
        t2=_toeplitz(w2, wp1), b2=np.repeat(b2, wo2)[None, :],
        sh2=sh2, sw2=sw2,
        wf1=np.ascontiguousarray(wf1), bf1=fc1_b[None, :],
        wf2=np.ascontiguousarray(fc2_w.T), bf2=fc2_b[None, :],
        wf3=wf3, bf3=bf3,
    )
    return {name: jnp.asarray(v) for name, v in packed.items()}


# --------------------------------- forward ----------------------------------

@jax.jit
def net_forward(x_nchw, packed):
    n, c, h, w = x_nchw.shape
    # Only per-forward glue: NCHW -> (N, H, Cin*W) so kernel rows=(h), cols=(ci, w).
    x3 = jnp.transpose(x_nchw, (0, 2, 1, 3)).reshape(n, h, c * w)
    ops = (x3, packed["t1"], packed["b1"], packed["sh1"], packed["sw1"],
           packed["t2"], packed["b2"], packed["sh2"], packed["sw2"],
           packed["wf1"], packed["bf1"], packed["wf2"], packed["bf2"],
           packed["wf3"], packed["bf3"])
    bytes_accessed = sum(int(np.prod(o.shape)) * 4 for o in ops) + n * OUT_PAD * 4
    fwd = pl.pallas_call(
        functools.partial(_lenet_kernel, n_batch=n, k=K),
        out_shape=jax.ShapeDtypeStruct((n, OUT_PAD), jnp.float32),
        in_specs=[pl.BlockSpec(memory_space=pltpu.MemorySpace.VMEM) for _ in ops],
        out_specs=pl.BlockSpec(memory_space=pltpu.MemorySpace.VMEM),
        cost_estimate=pl.CostEstimate(flops=2 * 4_200_000 * n,
                                      transcendentals=0,
                                      bytes_accessed=bytes_accessed),
    )
    return fwd(*ops)[:, :10]


# ------------------------- pure-JAX reference check -------------------------

def reference_forward(x, p):
    def conv(x, w, b):
        y = jax.lax.conv_general_dilated(
            x, w, (1, 1), "VALID", dimension_numbers=("NCHW", "OIHW", "NCHW"))
        return jax.nn.relu(y + b.reshape(1, -1, 1, 1))

    def pool(x):
        return jax.lax.reduce_window(
            x, -jnp.inf, jax.lax.max, (1, 1, 2, 2), (1, 1, 2, 2), "VALID")

    x = pool(conv(x, p["w1"], p["b1"]))
    x = pool(conv(x, p["w2"], p["b2"]))
    x = x.reshape(x.shape[0], -1)
    x = jax.nn.relu(x @ p["fc1_w"].T + p["fc1_b"])
    x = jax.nn.relu(x @ p["fc2_w"].T + p["fc2_b"])
    return x @ p["fc3_w"].T + p["fc3_b"]


# --------------------------------- params -----------------------------------

def init_params(key):
    ks = jax.random.split(key, 10)

    def u(k, shape, fan_in):
        bound = 1.0 / math.sqrt(fan_in)
        return jax.random.uniform(k, shape, jnp.float32, -bound, bound)

    return dict(
        w1=u(ks[0], (6, 3, 5, 5), 3 * 5 * 5),   b1=u(ks[1], (6,), 3 * 5 * 5),
        w2=u(ks[2], (16, 6, 5, 5), 6 * 5 * 5),  b2=u(ks[3], (16,), 6 * 5 * 5),
        fc1_w=u(ks[4], (120, 400), 400),        fc1_b=u(ks[5], (120,), 400),
        fc2_w=u(ks[6], (84, 120), 120),         fc2_b=u(ks[7], (84,), 120),
        fc3_w=u(ks[8], (10, 84), 84),           fc3_b=u(ks[9], (10,), 84),
    )


if __name__ == "__main__":
    key = jax.random.PRNGKey(0)
    pkey, xkey = jax.random.split(key)
    params = init_params(pkey)
    # Net's forward implies 32x32 input: 32 -5+1 ->28 /2 ->14 -5+1 ->10 /2 ->5
    x = jax.random.normal(xkey, (2, 3, 32, 32), jnp.float32)

    packed = pack_params(params)                      # one-time weight repack
    out = jax.block_until_ready(net_forward(x, packed))
    assert out.shape == (2, 10), out.shape

    ref = jax.block_until_ready(reference_forward(x, params))
    max_err = float(jnp.max(jnp.abs(out - ref)))
    assert max_err < 1e-1, f"mismatch vs reference: max abs err = {max_err}"

    print("KERNEL_OK")
</pallas_src>

<mosaic_0001>
module attributes {stable_mosaic.version = 11 : i64} {
  func.func @_lenet_kernel(%arg0: memref<2x32x96xf32, #tpu.memory_space<vmem>>, %arg1: memref<5x96x168xf32, #tpu.memory_space<vmem>>, %arg2: memref<1x168xf32, #tpu.memory_space<vmem>>, %arg3: memref<2x14x28xf32, #tpu.memory_space<vmem>>, %arg4: memref<2x168x84xf32, #tpu.memory_space<vmem>>, %arg5: memref<5x84x160xf32, #tpu.memory_space<vmem>>, %arg6: memref<1x160xf32, #tpu.memory_space<vmem>>, %arg7: memref<2x5x10xf32, #tpu.memory_space<vmem>>, %arg8: memref<2x160x80xf32, #tpu.memory_space<vmem>>, %arg9: memref<5x80x120xf32, #tpu.memory_space<vmem>>, %arg10: memref<1x120xf32, #tpu.memory_space<vmem>>, %arg11: memref<120x84xf32, #tpu.memory_space<vmem>>, %arg12: memref<1x84xf32, #tpu.memory_space<vmem>>, %arg13: memref<84x128xf32, #tpu.memory_space<vmem>>, %arg14: memref<1x128xf32, #tpu.memory_space<vmem>>, %arg15: memref<2x128xf32, #tpu.memory_space<vmem>>) attributes {dimension_semantics = [], scalar_prefetch = 0 : i64, scratch_operands = 0 : i64, tpu.core_type = #tpu.core_type<tc>} {
    %c0 = arith.constant 0 : index
    %c0_0 = arith.constant 0 : index
    %0 = vector.load %arg2[%c0, %c0_0] : memref<1x168xf32, #tpu.memory_space<vmem>>, vector<1x168xf32>
    %c0_1 = arith.constant 0 : index
    %c0_2 = arith.constant 0 : index
    %1 = vector.load %arg6[%c0_1, %c0_2] : memref<1x160xf32, #tpu.memory_space<vmem>>, vector<1x160xf32>
    %c0_3 = arith.constant 0 : index
    %c0_4 = arith.constant 0 : index
    %2 = vector.load %arg10[%c0_3, %c0_4] : memref<1x120xf32, #tpu.memory_space<vmem>>, vector<1x120xf32>
    %c0_5 = arith.constant 0 : index
    %c0_6 = arith.constant 0 : index
    %3 = vector.load %arg12[%c0_5, %c0_6] : memref<1x84xf32, #tpu.memory_space<vmem>>, vector<1x84xf32>
    %c0_7 = arith.constant 0 : index
    %c0_8 = arith.constant 0 : index
    %4 = vector.load %arg14[%c0_7, %c0_8] : memref<1x128xf32, #tpu.memory_space<vmem>>, vector<1x128xf32>
    %c0_9 = arith.constant 0 : index
    %c0_10 = arith.constant 0 : index
    %5 = vector.load %arg11[%c0_9, %c0_10] : memref<120x84xf32, #tpu.memory_space<vmem>>, vector<120x84xf32>
    %c0_11 = arith.constant 0 : index
    %c0_12 = arith.constant 0 : index
    %6 = vector.load %arg13[%c0_11, %c0_12] : memref<84x128xf32, #tpu.memory_space<vmem>>, vector<84x128xf32>
    %c0_13 = arith.constant 0 : index
    %c0_14 = arith.constant 0 : index
    %c0_15 = arith.constant 0 : index
    %7 = vector.load %arg0[%c0_13, %c0_14, %c0_15] : memref<2x32x96xf32, #tpu.memory_space<vmem>>, vector<1x32x96xf32>
    %8 = vector.shape_cast %7 : vector<1x32x96xf32> to vector<32x96xf32>
    %9 = vector.extract_strided_slice %8 {offsets = [0, 0], sizes = [28, 96], strides = [1, 1]} : vector<32x96xf32> to vector<28x96xf32>
    %c0_16 = arith.constant 0 : index
    %c0_17 = arith.constant 0 : index
    %c0_18 = arith.constant 0 : index
    %10 = vector.load %arg1[%c0_16, %c0_17, %c0_18] : memref<5x96x168xf32, #tpu.memory_space<vmem>>, vector<1x96x168xf32>
    %11 = vector.shape_cast %10 : vector<1x96x168xf32> to vector<96x168xf32>
    %cst = arith.constant dense<0.000000e+00> : vector<28x168xf32>
    %12 = tpu.matmul %9, %11, %cst {dimension_numbers = #tpu.dot_dimension_numbers<[1], [0], [0], [1], [0, 0, 1, 1], [], []>} : vector<28x96xf32>, vector<96x168xf32>, vector<28x168xf32> -> vector<28x168xf32>
    %13 = vector.extract_strided_slice %8 {offsets = [1, 0], sizes = [28, 96], strides = [1, 1]} : vector<32x96xf32> to vector<28x96xf32>
    %c1 = arith.constant 1 : index
    %c0_19 = arith.constant 0 : index
    %c0_20 = arith.constant 0 : index
    %14 = vector.load %arg1[%c1, %c0_19, %c0_20] : memref<5x96x168xf32, #tpu.memory_space<vmem>>, vector<1x96x168xf32>
    %15 = vector.shape_cast %14 : vector<1x96x168xf32> to vector<96x168xf32>
    %cst_21 = arith.constant dense<0.000000e+00> : vector<28x168xf32>
    %16 = tpu.matmul %13, %15, %cst_21 {dimension_numbers = #tpu.dot_dimension_numbers<[1], [0], [0], [1], [0, 0, 1, 1], [], []>} : vector<28x96xf32>, vector<96x168xf32>, vector<28x168xf32> -> vector<28x168xf32>
    %17 = arith.addf %12, %16 : vector<28x168xf32>
    %18 = vector.extract_strided_slice %8 {offsets = [2, 0], sizes = [28, 96], strides = [1, 1]} : vector<32x96xf32> to vector<28x96xf32>
    %c2 = arith.constant 2 : index
    %c0_22 = arith.constant 0 : index
    %c0_23 = arith.constant 0 : index
    %19 = vector.load %arg1[%c2, %c0_22, %c0_23] : memref<5x96x168xf32, #tpu.memory_space<vmem>>, vector<1x96x168xf32>
    %20 = vector.shape_cast %19 : vector<1x96x168xf32> to vector<96x168xf32>
    %cst_24 = arith.constant dense<0.000000e+00> : vector<28x168xf32>
    %21 = tpu.matmul %18, %20, %cst_24 {dimension_numbers = #tpu.dot_dimension_numbers<[1], [0], [0], [1], [0, 0, 1, 1], [], []>} : vector<28x96xf32>, vector<96x168xf32>, vector<28x168xf32> -> vector<28x168xf32>
    %22 = arith.addf %17, %21 : vector<28x168xf32>
    %23 = vector.extract_strided_slice %8 {offsets = [3, 0], sizes = [28, 96], strides = [1, 1]} : vector<32x96xf32> to vector<28x96xf32>
    %c3 = arith.constant 3 : index
    %c0_25 = arith.constant 0 : index
    %c0_26 = arith.constant 0 : index
    %24 = vector.load %arg1[%c3, %c0_25, %c0_26] : memref<5x96x168xf32, #tpu.memory_space<vmem>>, vector<1x96x168xf32>
    %25 = vector.shape_cast %24 : vector<1x96x168xf32> to vector<96x168xf32>
    %cst_27 = arith.constant dense<0.000000e+00> : vector<28x168xf32>
    %26 = tpu.matmul %23, %25, %cst_27 {dimension_numbers = #tpu.dot_dimension_numbers<[1], [0], [0], [1], [0, 0, 1, 1], [], []>} : vector<28x96xf32>, vector<96x168xf32>, vector<28x168xf32> -> vector<28x168xf32>
    %27 = arith.addf %22, %26 : vector<28x168xf32>
    %28 = vector.extract_strided_slice %8 {offsets = [4, 0], sizes = [28, 96], strides = [1, 1]} : vector<32x96xf32> to vector<28x96xf32>
    %c4 = arith.constant 4 : index
    %c0_28 = arith.constant 0 : index
    %c0_29 = arith.constant 0 : index
    %29 = vector.load %arg1[%c4, %c0_28, %c0_29] : memref<5x96x168xf32, #tpu.memory_space<vmem>>, vector<1x96x168xf32>
    %30 = vector.shape_cast %29 : vector<1x96x168xf32> to vector<96x168xf32>
    %cst_30 = arith.constant dense<0.000000e+00> : vector<28x168xf32>
    %31 = tpu.matmul %28, %30, %cst_30 {dimension_numbers = #tpu.dot_dimension_numbers<[1], [0], [0], [1], [0, 0, 1, 1], [], []>} : vector<28x96xf32>, vector<96x168xf32>, vector<28x168xf32> -> vector<28x168xf32>
    %32 = arith.addf %27, %31 : vector<28x168xf32>
    %33 = vector.broadcast %0 : vector<1x168xf32> to vector<28x168xf32>
    %34 = arith.addf %32, %33 : vector<28x168xf32>
    %cst_31 = arith.constant 0.000000e+00 : f32
    %35 = vector.broadcast %cst_31 : f32 to vector<28x168xf32>
    %36 = arith.maximumf %34, %35 : vector<28x168xf32>
    %c0_32 = arith.constant 0 : index
    %c0_33 = arith.constant 0 : index
    %c0_34 = arith.constant 0 : index
    %37 = vector.load %arg4[%c0_32, %c0_33, %c0_34] : memref<2x168x84xf32, #tpu.memory_space<vmem>>, vector<1x168x84xf32>
    %38 = vector.shape_cast %37 : vector<1x168x84xf32> to vector<168x84xf32>
    %c1_35 = arith.constant 1 : index
    %c0_36 = arith.constant 0 : index
    %c0_37 = arith.constant 0 : index
    %39 = vector.load %arg4[%c1_35, %c0_36, %c0_37] : memref<2x168x84xf32, #tpu.memory_space<vmem>>, vector<1x168x84xf32>
    %40 = vector.shape_cast %39 : vector<1x168x84xf32> to vector<168x84xf32>
    %c0_38 = arith.constant 0 : index
    %c0_39 = arith.constant 0 : index
    %c0_40 = arith.constant 0 : index
    %41 = vector.load %arg3[%c0_38, %c0_39, %c0_40] : memref<2x14x28xf32, #tpu.memory_space<vmem>>, vector<1x14x28xf32>
    %42 = vector.shape_cast %41 : vector<1x14x28xf32> to vector<14x28xf32>
    %cst_41 = arith.constant dense<0.000000e+00> : vector<14x168xf32>
    %43 = tpu.matmul %42, %36, %cst_41 {dimension_numbers = #tpu.dot_dimension_numbers<[1], [0], [0], [1], [0, 0, 1, 1], [], []>} : vector<14x28xf32>, vector<28x168xf32>, vector<14x168xf32> -> vector<14x168xf32>
    %c1_42 = arith.constant 1 : index
    %c0_43 = arith.constant 0 : index
    %c0_44 = arith.constant 0 : index
    %44 = vector.load %arg3[%c1_42, %c0_43, %c0_44] : memref<2x14x28xf32, #tpu.memory_space<vmem>>, vector<1x14x28xf32>
    %45 = vector.shape_cast %44 : vector<1x14x28xf32> to vector<14x28xf32>
    %cst_45 = arith.constant dense<0.000000e+00> : vector<14x168xf32>
    %46 = tpu.matmul %45, %36, %cst_45 {dimension_numbers = #tpu.dot_dimension_numbers<[1], [0], [0], [1], [0, 0, 1, 1], [], []>} : vector<14x28xf32>, vector<28x168xf32>, vector<14x168xf32> -> vector<14x168xf32>
    %cst_46 = arith.constant dense<0.000000e+00> : vector<14x84xf32>
    %47 = tpu.matmul %43, %38, %cst_46 {dimension_numbers = #tpu.dot_dimension_numbers<[1], [0], [0], [1], [0, 0, 1, 1], [], []>} : vector<14x168xf32>, vector<168x84xf32>, vector<14x84xf32> -> vector<14x84xf32>
    %cst_47 = arith.constant dense<0.000000e+00> : vector<14x84xf32>
    %48 = tpu.matmul %43, %40, %cst_47 {dimension_numbers = #tpu.dot_dimension_numbers<[1], [0], [0], [1], [0, 0, 1, 1], [], []>} : vector<14x168xf32>, vector<168x84xf32>, vector<14x84xf32> -> vector<14x84xf32>
    %49 = arith.maximumf %47, %48 : vector<14x84xf32>
    %cst_48 = arith.constant dense<0.000000e+00> : vector<14x84xf32>
    %50 = tpu.matmul %46, %38, %cst_48 {dimension_numbers = #tpu.dot_dimension_numbers<[1], [0], [0], [1], [0, 0, 1, 1], [], []>} : vector<14x168xf32>, vector<168x84xf32>, vector<14x84xf32> -> vector<14x84xf32>
    %cst_49 = arith.constant dense<0.000000e+00> : vector<14x84xf32>
    %51 = tpu.matmul %46, %40, %cst_49 {dimension_numbers = #tpu.dot_dimension_numbers<[1], [0], [0], [1], [0, 0, 1, 1], [], []>} : vector<14x168xf32>, vector<168x84xf32>, vector<14x84xf32> -> vector<14x84xf32>
    %52 = arith.maximumf %50, %51 : vector<14x84xf32>
    %53 = arith.maximumf %49, %52 : vector<14x84xf32>
    %54 = vector.extract_strided_slice %53 {offsets = [0, 0], sizes = [10, 84], strides = [1, 1]} : vector<14x84xf32> to vector<10x84xf32>
    %c0_50 = arith.constant 0 : index
    %c0_51 = arith.constant 0 : index
    %c0_52 = arith.constant 0 : index
    %55 = vector.load %arg5[%c0_50, %c0_51, %c0_52] : memref<5x84x160xf32, #tpu.memory_space<vmem>>, vector<1x84x160xf32>
    %56 = vector.shape_cast %55 : vector<1x84x160xf32> to vector<84x160xf32>
    %cst_53 = arith.constant dense<0.000000e+00> : vector<10x160xf32>
    %57 = tpu.matmul %54, %56, %cst_53 {dimension_numbers = #tpu.dot_dimension_numbers<[1], [0], [0], [1], [0, 0, 1, 1], [], []>} : vector<10x84xf32>, vector<84x160xf32>, vector<10x160xf32> -> vector<10x160xf32>
    %58 = vector.extract_strided_slice %53 {offsets = [1, 0], sizes = [10, 84], strides = [1, 1]} : vector<14x84xf32> to vector<10x84xf32>
    %c1_54 = arith.constant 1 : index
    %c0_55 = arith.constant 0 : index
    %c0_56 = arith.constant 0 : index
    %59 = vector.load %arg5[%c1_54, %c0_55, %c0_56] : memref<5x84x160xf32, #tpu.memory_space<vmem>>, vector<1x84x160xf32>
    %60 = vector.shape_cast %59 : vector<1x84x160xf32> to vector<84x160xf32>
    %cst_57 = arith.constant dense<0.000000e+00> : vector<10x160xf32>
    %61 = tpu.matmul %58, %60, %cst_57 {dimension_numbers = #tpu.dot_dimension_numbers<[1], [0], [0], [1], [0, 0, 1, 1], [], []>} : vector<10x84xf32>, vector<84x160xf32>, vector<10x160xf32> -> vector<10x160xf32>
    %62 = arith.addf %57, %61 : vector<10x160xf32>
    %63 = vector.extract_strided_slice %53 {offsets = [2, 0], sizes = [10, 84], strides = [1, 1]} : vector<14x84xf32> to vector<10x84xf32>
    %c2_58 = arith.constant 2 : index
    %c0_59 = arith.constant 0 : index
    %c0_60 = arith.constant 0 : index
    %64 = vector.load %arg5[%c2_58, %c0_59, %c0_60] : memref<5x84x160xf32, #tpu.memory_space<vmem>>, vector<1x84x160xf32>
    %65 = vector.shape_cast %64 : vector<1x84x160xf32> to vector<84x160xf32>
    %cst_61 = arith.constant dense<0.000000e+00> : vector<10x160xf32>
    %66 = tpu.matmul %63, %65, %cst_61 {dimension_numbers = #tpu.dot_dimension_numbers<[1], [0], [0], [1], [0, 0, 1, 1], [], []>} : vector<10x84xf32>, vector<84x160xf32>, vector<10x160xf32> -> vector<10x160xf32>
    %67 = arith.addf %62, %66 : vector<10x160xf32>
    %68 = vector.extract_strided_slice %53 {offsets = [3, 0], sizes = [10, 84], strides = [1, 1]} : vector<14x84xf32> to vector<10x84xf32>
    %c3_62 = arith.constant 3 : index
    %c0_63 = arith.constant 0 : index
    %c0_64 = arith.constant 0 : index
    %69 = vector.load %arg5[%c3_62, %c0_63, %c0_64] : memref<5x84x160xf32, #tpu.memory_space<vmem>>, vector<1x84x160xf32>
    %70 = vector.shape_cast %69 : vector<1x84x160xf32> to vector<84x160xf32>
    %cst_65 = arith.constant dense<0.000000e+00> : vector<10x160xf32>
    %71 = tpu.matmul %68, %70, %cst_65 {dimension_numbers = #tpu.dot_dimension_numbers<[1], [0], [0], [1], [0, 0, 1, 1], [], []>} : vector<10x84xf32>, vector<84x160xf32>, vector<10x160xf32> -> vector<10x160xf32>
    %72 = arith.addf %67, %71 : vector<10x160xf32>
    %73 = vector.extract_strided_slice %53 {offsets = [4, 0], sizes = [10, 84], strides = [1, 1]} : vector<14x84xf32> to vector<10x84xf32>
    %c4_66 = arith.constant 4 : index
    %c0_67 = arith.constant 0 : index
    %c0_68 = arith.constant 0 : index
    %74 = vector.load %arg5[%c4_66, %c0_67, %c0_68] : memref<5x84x160xf32, #tpu.memory_space<vmem>>, vector<1x84x160xf32>
    %75 = vector.shape_cast %74 : vector<1x84x160xf32> to vector<84x160xf32>
    %cst_69 = arith.constant dense<0.000000e+00> : vector<10x160xf32>
    %76 = tpu.matmul %73, %75, %cst_69 {dimension_numbers = #tpu.dot_dimension_numbers<[1], [0], [0], [1], [0, 0, 1, 1], [], []>} : vector<10x84xf32>, vector<84x160xf32>, vector<10x160xf32> -> vector<10x160xf32>
    %77 = arith.addf %72, %76 : vector<10x160xf32>
    %78 = vector.broadcast %1 : vector<1x160xf32> to vector<10x160xf32>
    %79 = arith.addf %77, %78 : vector<10x160xf32>
    %cst_70 = arith.constant 0.000000e+00 : f32
    %80 = vector.broadcast %cst_70 : f32 to vector<10x160xf32>
    %81 = arith.maximumf %79, %80 : vector<10x160xf32>
    %c0_71 = arith.constant 0 : index
    %c0_72 = arith.constant 0 : index
    %c0_73 = arith.constant 0 : index
    %82 = vector.load %arg8[%c0_71, %c0_72, %c0_73] : memref<2x160x80xf32, #tpu.memory_space<vmem>>, vector<1x160x80xf32>
    %83 = vector.shape_cast %82 : vector<1x160x80xf32> to vector<160x80xf32>
    %c1_74 = arith.constant 1 : index
    %c0_75 = arith.constant 0 : index
    %c0_76 = arith.constant 0 : index
    %84 = vector.load %arg8[%c1_74, %c0_75, %c0_76] : memref<2x160x80xf32, #tpu.memory_space<vmem>>, vector<1x160x80xf32>
    %85 = vector.shape_cast %84 : vector<1x160x80xf32> to vector<160x80xf32>
    %c0_77 = arith.constant 0 : index
    %c0_78 = arith.constant 0 : index
    %c0_79 = arith.constant 0 : index
    %86 = vector.load %arg7[%c0_77, %c0_78, %c0_79] : memref<2x5x10xf32, #tpu.memory_space<vmem>>, vector<1x5x10xf32>
    %87 = vector.shape_cast %86 : vector<1x5x10xf32> to vector<5x10xf32>
    %cst_80 = arith.constant dense<0.000000e+00> : vector<5x160xf32>
    %88 = tpu.matmul %87, %81, %cst_80 {dimension_numbers = #tpu.dot_dimension_numbers<[1], [0], [0], [1], [0, 0, 1, 1], [], []>} : vector<5x10xf32>, vector<10x160xf32>, vector<5x160xf32> -> vector<5x160xf32>
    %c1_81 = arith.constant 1 : index
    %c0_82 = arith.constant 0 : index
    %c0_83 = arith.constant 0 : index
    %89 = vector.load %arg7[%c1_81, %c0_82, %c0_83] : memref<2x5x10xf32, #tpu.memory_space<vmem>>, vector<1x5x10xf32>
    %90 = vector.shape_cast %89 : vector<1x5x10xf32> to vector<5x10xf32>
    %cst_84 = arith.constant dense<0.000000e+00> : vector<5x160xf32>
    %91 = tpu.matmul %90, %81, %cst_84 {dimension_numbers = #tpu.dot_dimension_numbers<[1], [0], [0], [1], [0, 0, 1, 1], [], []>} : vector<5x10xf32>, vector<10x160xf32>, vector<5x160xf32> -> vector<5x160xf32>
    %cst_85 = arith.constant dense<0.000000e+00> : vector<5x80xf32>
    %92 = tpu.matmul %88, %83, %cst_85 {dimension_numbers = #tpu.dot_dimension_numbers<[1], [0], [0], [1], [0, 0, 1, 1], [], []>} : vector<5x160xf32>, vector<160x80xf32>, vector<5x80xf32> -> vector<5x80xf32>
    %cst_86 = arith.constant dense<0.000000e+00> : vector<5x80xf32>
    %93 = tpu.matmul %88, %85, %cst_86 {dimension_numbers = #tpu.dot_dimension_numbers<[1], [0], [0], [1], [0, 0, 1, 1], [], []>} : vector<5x160xf32>, vector<160x80xf32>, vector<5x80xf32> -> vector<5x80xf32>
    %94 = arith.maximumf %92, %93 : vector<5x80xf32>
    %cst_87 = arith.constant dense<0.000000e+00> : vector<5x80xf32>
    %95 = tpu.matmul %91, %83, %cst_87 {dimension_numbers = #tpu.dot_dimension_numbers<[1], [0], [0], [1], [0, 0, 1, 1], [], []>} : vector<5x160xf32>, vector<160x80xf32>, vector<5x80xf32> -> vector<5x80xf32>
    %cst_88 = arith.constant dense<0.000000e+00> : vector<5x80xf32>
    %96 = tpu.matmul %91, %85, %cst_88 {dimension_numbers = #tpu.dot_dimension_numbers<[1], [0], [0], [1], [0, 0, 1, 1], [], []>} : vector<5x160xf32>, vector<160x80xf32>, vector<5x80xf32> -> vector<5x80xf32>
    %97 = arith.maximumf %95, %96 : vector<5x80xf32>
    %98 = arith.maximumf %94, %97 : vector<5x80xf32>
    %99 = vector.extract_strided_slice %98 {offsets = [0, 0], sizes = [1, 80], strides = [1, 1]} : vector<5x80xf32> to vector<1x80xf32>
    %c0_89 = arith.constant 0 : index
    %c0_90 = arith.constant 0 : index
    %c0_91 = arith.constant 0 : index
    %100 = vector.load %arg9[%c0_89, %c0_90, %c0_91] : memref<5x80x120xf32, #tpu.memory_space<vmem>>, vector<1x80x120xf32>
    %101 = vector.shape_cast %100 : vector<1x80x120xf32> to vector<80x120xf32>
    %cst_92 = arith.constant dense<0.000000e+00> : vector<1x120xf32>
    %102 = tpu.matmul %99, %101, %cst_92 {dimension_numbers = #tpu.dot_dimension_numbers<[1], [0], [0], [1], [0, 0, 1, 1], [], []>} : vector<1x80xf32>, vector<80x120xf32>, vector<1x120xf32> -> vector<1x120xf32>
    %103 = vector.extract_strided_slice %98 {offsets = [1, 0], sizes = [1, 80], strides = [1, 1]} : vector<5x80xf32> to vector<1x80xf32>
    %c1_93 = arith.constant 1 : index
    %c0_94 = arith.constant 0 : index
    %c0_95 = arith.constant 0 : index
    %104 = vector.load %arg9[%c1_93, %c0_94, %c0_95] : memref<5x80x120xf32, #tpu.memory_space<vmem>>, vector<1x80x120xf32>
    %105 = vector.shape_cast %104 : vector<1x80x120xf32> to vector<80x120xf32>
    %cst_96 = arith.constant dense<0.000000e+00> : vector<1x120xf32>
    %106 = tpu.matmul %103, %105, %cst_96 {dimension_numbers = #tpu.dot_dimension_numbers<[1], [0], [0], [1], [0, 0, 1, 1], [], []>} : vector<1x80xf32>, vector<80x120xf32>, vector<1x120xf32> -> vector<1x120xf32>
    %107 = arith.addf %102, %106 : vector<1x120xf32>
    %108 = vector.extract_strided_slice %98 {offsets = [2, 0], sizes = [1, 80], strides = [1, 1]} : vector<5x80xf32> to vector<1x80xf32>
    %c2_97 = arith.constant 2 : index
    %c0_98 = arith.constant 0 : index
    %c0_99 = arith.constant 0 : index
    %109 = vector.load %arg9[%c2_97, %c0_98, %c0_99] : memref<5x80x120xf32, #tpu.memory_space<vmem>>, vector<1x80x120xf32>
    %110 = vector.shape_cast %109 : vector<1x80x120xf32> to vector<80x120xf32>
    %cst_100 = arith.constant dense<0.000000e+00> : vector<1x120xf32>
    %111 = tpu.matmul %108, %110, %cst_100 {dimension_numbers = #tpu.dot_dimension_numbers<[1], [0], [0], [1], [0, 0, 1, 1], [], []>} : vector<1x80xf32>, vector<80x120xf32>, vector<1x120xf32> -> vector<1x120xf32>
    %112 = arith.addf %107, %111 : vector<1x120xf32>
    %113 = vector.extract_strided_slice %98 {offsets = [3, 0], sizes = [1, 80], strides = [1, 1]} : vector<5x80xf32> to vector<1x80xf32>
    %c3_101 = arith.constant 3 : index
    %c0_102 = arith.constant 0 : index
    %c0_103 = arith.constant 0 : index
    %114 = vector.load %arg9[%c3_101, %c0_102, %c0_103] : memref<5x80x120xf32, #tpu.memory_space<vmem>>, vector<1x80x120xf32>
    %115 = vector.shape_cast %114 : vector<1x80x120xf32> to vector<80x120xf32>
    %cst_104 = arith.constant dense<0.000000e+00> : vector<1x120xf32>
    %116 = tpu.matmul %113, %115, %cst_104 {dimension_numbers = #tpu.dot_dimension_numbers<[1], [0], [0], [1], [0, 0, 1, 1], [], []>} : vector<1x80xf32>, vector<80x120xf32>, vector<1x120xf32> -> vector<1x120xf32>
    %117 = arith.addf %112, %116 : vector<1x120xf32>
    %118 = vector.extract_strided_slice %98 {offsets = [4, 0], sizes = [1, 80], strides = [1, 1]} : vector<5x80xf32> to vector<1x80xf32>
    %c4_105 = arith.constant 4 : index
    %c0_106 = arith.constant 0 : index
    %c0_107 = arith.constant 0 : index
    %119 = vector.load %arg9[%c4_105, %c0_106, %c0_107] : memref<5x80x120xf32, #tpu.memory_space<vmem>>, vector<1x80x120xf32>
    %120 = vector.shape_cast %119 : vector<1x80x120xf32> to vector<80x120xf32>
    %cst_108 = arith.constant dense<0.000000e+00> : vector<1x120xf32>
    %121 = tpu.matmul %118, %120, %cst_108 {dimension_numbers = #tpu.dot_dimension_numbers<[1], [0], [0], [1], [0, 0, 1, 1], [], []>} : vector<1x80xf32>, vector<80x120xf32>, vector<1x120xf32> -> vector<1x120xf32>
    %122 = arith.addf %117, %121 : vector<1x120xf32>
    %123 = arith.addf %122, %2 : vector<1x120xf32>
    %cst_109 = arith.constant 0.000000e+00 : f32
    %124 = vector.broadcast %cst_109 : f32 to vector<1x120xf32>
    %125 = arith.maximumf %123, %124 : vector<1x120xf32>
    %cst_110 = arith.constant dense<0.000000e+00> : vector<1x84xf32>
    %126 = tpu.matmul %125, %5, %cst_110 {dimension_numbers = #tpu.dot_dimension_numbers<[1], [0], [0], [1], [0, 0, 1, 1], [], []>} : vector<1x120xf32>, vector<120x84xf32>, vector<1x84xf32> -> vector<1x84xf32>
    %127 = arith.addf %126, %3 : vector<1x84xf32>
    %cst_111 = arith.constant 0.000000e+00 : f32
    %128 = vector.broadcast %cst_111 : f32 to vector<1x84xf32>
    %129 = arith.maximumf %127, %128 : vector<1x84xf32>
    %cst_112 = arith.constant dense<0.000000e+00> : vector<1x128xf32>
    %130 = tpu.matmul %129, %6, %cst_112 {dimension_numbers = #tpu.dot_dimension_numbers<[1], [0], [0], [1], [0, 0, 1, 1], [], []>} : vector<1x84xf32>, vector<84x128xf32>, vector<1x128xf32> -> vector<1x128xf32>
    %131 = arith.addf %130, %4 : vector<1x128xf32>
    %c0_113 = arith.constant 0 : index
    %c0_114 = arith.constant 0 : index
    %132 = vector.load %arg15[%c0_113, %c0_114] : memref<2x128xf32, #tpu.memory_space<vmem>>, vector<1x128xf32>
    tpu.vector_store %arg15[%c0_113, %c0_114], %131 {strides = array<i32>} : memref<2x128xf32, #tpu.memory_space<vmem>>, vector<1x128xf32>,
    %c1_115 = arith.constant 1 : index
    %c0_116 = arith.constant 0 : index
    %c0_117 = arith.constant 0 : index
    %133 = vector.load %arg0[%c1_115, %c0_116, %c0_117] : memref<2x32x96xf32, #tpu.memory_space<vmem>>, vector<1x32x96xf32>
    %134 = vector.shape_cast %133 : vector<1x32x96xf32> to vector<32x96xf32>
    %135 = vector.extract_strided_slice %134 {offsets = [0, 0], sizes = [28, 96], strides = [1, 1]} : vector<32x96xf32> to vector<28x96xf32>
    %c0_118 = arith.constant 0 : index
    %c0_119 = arith.constant 0 : index
    %c0_120 = arith.constant 0 : index
    %136 = vector.load %arg1[%c0_118, %c0_119, %c0_120] : memref<5x96x168xf32, #tpu.memory_space<vmem>>, vector<1x96x168xf32>
    %137 = vector.shape_cast %136 : vector<1x96x168xf32> to vector<96x168xf32>
    %cst_121 = arith.constant dense<0.000000e+00> : vector<28x168xf32>
    %138 = tpu.matmul %135, %137, %cst_121 {dimension_numbers = #tpu.dot_dimension_numbers<[1], [0], [0], [1], [0, 0, 1, 1], [], []>} : vector<28x96xf32>, vector<96x168xf32>, vector<28x168xf32> -> vector<28x168xf32>
    %139 = vector.extract_strided_slice %134 {offsets = [1, 0], sizes = [28, 96], strides = [1, 1]} : vector<32x96xf32> to vector<28x96xf32>
    %c1_122 = arith.constant 1 : index
    %c0_123 = arith.constant 0 : index
    %c0_124 = arith.constant 0 : index
    %140 = vector.load %arg1[%c1_122, %c0_123, %c0_124] : memref<5x96x168xf32, #tpu.memory_space<vmem>>, vector<1x96x168xf32>
    %141 = vector.shape_cast %140 : vector<1x96x168xf32> to vector<96x168xf32>
    %cst_125 = arith.constant dense<0.000000e+00> : vector<28x168xf32>
    %142 = tpu.matmul %139, %141, %cst_125 {dimension_numbers = #tpu.dot_dimension_numbers<[1], [0], [0], [1], [0, 0, 1, 1], [], []>} : vector<28x96xf32>, vector<96x168xf32>, vector<28x168xf32> -> vector<28x168xf32>
    %143 = arith.addf %138, %142 : vector<28x168xf32>
    %144 = vector.extract_strided_slice %134 {offsets = [2, 0], sizes = [28, 96], strides = [1, 1]} : vector<32x96xf32> to vector<28x96xf32>
    %c2_126 = arith.constant 2 : index
    %c0_127 = arith.constant 0 : index
    %c0_128 = arith.constant 0 : index
    %145 = vector.load %arg1[%c2_126, %c0_127, %c0_128] : memref<5x96x168xf32, #tpu.memory_space<vmem>>, vector<1x96x168xf32>
    %146 = vector.shape_cast %145 : vector<1x96x168xf32> to vector<96x168xf32>
    %cst_129 = arith.constant dense<0.000000e+00> : vector<28x168xf32>
    %147 = tpu.matmul %144, %146, %cst_129 {dimension_numbers = #tpu.dot_dimension_numbers<[1], [0], [0], [1], [0, 0, 1, 1], [], []>} : vector<28x96xf32>, vector<96x168xf32>, vector<28x168xf32> -> vector<28x168xf32>
    %148 = arith.addf %143, %147 : vector<28x168xf32>
    %149 = vector.extract_strided_slice %134 {offsets = [3, 0], sizes = [28, 96], strides = [1, 1]} : vector<32x96xf32> to vector<28x96xf32>
    %c3_130 = arith.constant 3 : index
    %c0_131 = arith.constant 0 : index
    %c0_132 = arith.constant 0 : index
    %150 = vector.load %arg1[%c3_130, %c0_131, %c0_132] : memref<5x96x168xf32, #tpu.memory_space<vmem>>, vector<1x96x168xf32>
    %151 = vector.shape_cast %150 : vector<1x96x168xf32> to vector<96x168xf32>
    %cst_133 = arith.constant dense<0.000000e+00> : vector<28x168xf32>
    %152 = tpu.matmul %149, %151, %cst_133 {dimension_numbers = #tpu.dot_dimension_numbers<[1], [0], [0], [1], [0, 0, 1, 1], [], []>} : vector<28x96xf32>, vector<96x168xf32>, vector<28x168xf32> -> vector<28x168xf32>
    %153 = arith.addf %148, %152 : vector<28x168xf32>
    %154 = vector.extract_strided_slice %134 {offsets = [4, 0], sizes = [28, 96], strides = [1, 1]} : vector<32x96xf32> to vector<28x96xf32>
    %c4_134 = arith.constant 4 : index
    %c0_135 = arith.constant 0 : index
    %c0_136 = arith.constant 0 : index
    %155 = vector.load %arg1[%c4_134, %c0_135, %c0_136] : memref<5x96x168xf32, #tpu.memory_space<vmem>>, vector<1x96x168xf32>
    %156 = vector.shape_cast %155 : vector<1x96x168xf32> to vector<96x168xf32>
    %cst_137 = arith.constant dense<0.000000e+00> : vector<28x168xf32>
    %157 = tpu.matmul %154, %156, %cst_137 {dimension_numbers = #tpu.dot_dimension_numbers<[1], [0], [0], [1], [0, 0, 1, 1], [], []>} : vector<28x96xf32>, vector<96x168xf32>, vector<28x168xf32> -> vector<28x168xf32>
    %158 = arith.addf %153, %157 : vector<28x168xf32>
    %159 = vector.broadcast %0 : vector<1x168xf32> to vector<28x168xf32>
    %160 = arith.addf %158, %159 : vector<28x168xf32>
    %cst_138 = arith.constant 0.000000e+00 : f32
    %161 = vector.broadcast %cst_138 : f32 to vector<28x168xf32>
    %162 = arith.maximumf %160, %161 : vector<28x168xf32>
    %c0_139 = arith.constant 0 : index
    %c0_140 = arith.constant 0 : index
    %c0_141 = arith.constant 0 : index
    %163 = vector.load %arg4[%c0_139, %c0_140, %c0_141] : memref<2x168x84xf32, #tpu.memory_space<vmem>>, vector<1x168x84xf32>
    %164 = vector.shape_cast %163 : vector<1x168x84xf32> to vector<168x84xf32>
    %c1_142 = arith.constant 1 : index
    %c0_143 = arith.constant 0 : index
    %c0_144 = arith.constant 0 : index
    %165 = vector.load %arg4[%c1_142, %c0_143, %c0_144] : memref<2x168x84xf32, #tpu.memory_space<vmem>>, vector<1x168x84xf32>
    %166 = vector.shape_cast %165 : vector<1x168x84xf32> to vector<168x84xf32>
    %c0_145 = arith.constant 0 : index
    %c0_146 = arith.constant 0 : index
    %c0_147 = arith.constant 0 : index
    %167 = vector.load %arg3[%c0_145, %c0_146, %c0_147] : memref<2x14x28xf32, #tpu.memory_space<vmem>>, vector<1x14x28xf32>
    %168 = vector.shape_cast %167 : vector<1x14x28xf32> to vector<14x28xf32>
    %cst_148 = arith.constant dense<0.000000e+00> : vector<14x168xf32>
    %169 = tpu.matmul %168, %162, %cst_148 {dimension_numbers = #tpu.dot_dimension_numbers<[1], [0], [0], [1], [0, 0, 1, 1], [], []>} : vector<14x28xf32>, vector<28x168xf32>, vector<14x168xf32> -> vector<14x168xf32>
    %c1_149 = arith.constant 1 : index
    %c0_150 = arith.constant 0 : index
    %c0_151 = arith.constant 0 : index
    %170 = vector.load %arg3[%c1_149, %c0_150, %c0_151] : memref<2x14x28xf32, #tpu.memory_space<vmem>>, vector<1x14x28xf32>
    %171 = vector.shape_cast %170 : vector<1x14x28xf32> to vector<14x28xf32>
    %cst_152 = arith.constant dense<0.000000e+00> : vector<14x168xf32>
    %172 = tpu.matmul %171, %162, %cst_152 {dimension_numbers = #tpu.dot_dimension_numbers<[1], [0], [0], [1], [0, 0, 1, 1], [], []>} : vector<14x28xf32>, vector<28x168xf32>, vector<14x168xf32> -> vector<14x168xf32>
    %cst_153 = arith.constant dense<0.000000e+00> : vector<14x84xf32>
    %173 = tpu.matmul %169, %164, %cst_153 {dimension_numbers = #tpu.dot_dimension_numbers<[1], [0], [0], [1], [0, 0, 1, 1], [], []>} : vector<14x168xf32>, vector<168x84xf32>, vector<14x84xf32> -> vector<14x84xf32>
    %cst_154 = arith.constant dense<0.000000e+00> : vector<14x84xf32>
    %174 = tpu.matmul %169, %166, %cst_154 {dimension_numbers = #tpu.dot_dimension_numbers<[1], [0], [0], [1], [0, 0, 1, 1], [], []>} : vector<14x168xf32>, vector<168x84xf32>, vector<14x84xf32> -> vector<14x84xf32>
    %175 = arith.maximumf %173, %174 : vector<14x84xf32>
    %cst_155 = arith.constant dense<0.000000e+00> : vector<14x84xf32>
    %176 = tpu.matmul %172, %164, %cst_155 {dimension_numbers = #tpu.dot_dimension_numbers<[1], [0], [0], [1], [0, 0, 1, 1], [], []>} : vector<14x168xf32>, vector<168x84xf32>, vector<14x84xf32> -> vector<14x84xf32>
    %cst_156 = arith.constant dense<0.000000e+00> : vector<14x84xf32>
    %177 = tpu.matmul %172, %166, %cst_156 {dimension_numbers = #tpu.dot_dimension_numbers<[1], [0], [0], [1], [0, 0, 1, 1], [], []>} : vector<14x168xf32>, vector<168x84xf32>, vector<14x84xf32> -> vector<14x84xf32>
    %178 = arith.maximumf %176, %177 : vector<14x84xf32>
    %179 = arith.maximumf %175, %178 : vector<14x84xf32>
    %180 = vector.extract_strided_slice %179 {offsets = [0, 0], sizes = [10, 84], strides = [1, 1]} : vector<14x84xf32> to vector<10x84xf32>
    %c0_157 = arith.constant 0 : index
    %c0_158 = arith.constant 0 : index
    %c0_159 = arith.constant 0 : index
    %181 = vector.load %arg5[%c0_157, %c0_158, %c0_159] : memref<5x84x160xf32, #tpu.memory_space<vmem>>, vector<1x84x160xf32>
    %182 = vector.shape_cast %181 : vector<1x84x160xf32> to vector<84x160xf32>
    %cst_160 = arith.constant dense<0.000000e+00> : vector<10x160xf32>
    %183 = tpu.matmul %180, %182, %cst_160 {dimension_numbers = #tpu.dot_dimension_numbers<[1], [0], [0], [1], [0, 0, 1, 1], [], []>} : vector<10x84xf32>, vector<84x160xf32>, vector<10x160xf32> -> vector<10x160xf32>
    %184 = vector.extract_strided_slice %179 {offsets = [1, 0], sizes = [10, 84], strides = [1, 1]} : vector<14x84xf32> to vector<10x84xf32>
    %c1_161 = arith.constant 1 : index
    %c0_162 = arith.constant 0 : index
    %c0_163 = arith.constant 0 : index
    %185 = vector.load %arg5[%c1_161, %c0_162, %c0_163] : memref<5x84x160xf32, #tpu.memory_space<vmem>>, vector<1x84x160xf32>
    %186 = vector.shape_cast %185 : vector<1x84x160xf32> to vector<84x160xf32>
    %cst_164 = arith.constant dense<0.000000e+00> : vector<10x160xf32>
    %187 = tpu.matmul %184, %186, %cst_164 {dimension_numbers = #tpu.dot_dimension_numbers<[1], [0], [0], [1], [0, 0, 1, 1], [], []>} : vector<10x84xf32>, vector<84x160xf32>, vector<10x160xf32> -> vector<10x160xf32>
    %188 = arith.addf %183, %187 : vector<10x160xf32>
    %189 = vector.extract_strided_slice %179 {offsets = [2, 0], sizes = [10, 84], strides = [1, 1]} : vector<14x84xf32> to vector<10x84xf32>
    %c2_165 = arith.constant 2 : index
    %c0_166 = arith.constant 0 : index
    %c0_167 = arith.constant 0 : index
    %190 = vector.load %arg5[%c2_165, %c0_166, %c0_167] : memref<5x84x160xf32, #tpu.memory_space<vmem>>, vector<1x84x160xf32>
    %191 = vector.shape_cast %190 : vector<1x84x160xf32> to vector<84x160xf32>
    %cst_168 = arith.constant dense<0.000000e+00> : vector<10x160xf32>
    %192 = tpu.matmul %189, %191, %cst_168 {dimension_numbers = #tpu.dot_dimension_numbers<[1], [0], [0], [1], [0, 0, 1, 1], [], []>} : vector<10x84xf32>, vector<84x160xf32>, vector<10x160xf32> -> vector<10x160xf32>
    %193 = arith.addf %188, %192 : vector<10x160xf32>
    %194 = vector.extract_strided_slice %179 {offsets = [3, 0], sizes = [10, 84], strides = [1, 1]} : vector<14x84xf32> to vector<10x84xf32>
    %c3_169 = arith.constant 3 : index
    %c0_170 = arith.constant 0 : index
    %c0_171 = arith.constant 0 : index
    %195 = vector.load %arg5[%c3_169, %c0_170, %c0_171] : memref<5x84x160xf32, #tpu.memory_space<vmem>>, vector<1x84x160xf32>
    %196 = vector.shape_cast %195 : vector<1x84x160xf32> to vector<84x160xf32>
    %cst_172 = arith.constant dense<0.000000e+00> : vector<10x160xf32>
    %197 = tpu.matmul %194, %196, %cst_172 {dimension_numbers = #tpu.dot_dimension_numbers<[1], [0], [0], [1], [0, 0, 1, 1], [], []>} : vector<10x84xf32>, vector<84x160xf32>, vector<10x160xf32> -> vector<10x160xf32>
    %198 = arith.addf %193, %197 : vector<10x160xf32>
    %199 = vector.extract_strided_slice %179 {offsets = [4, 0], sizes = [10, 84], strides = [1, 1]} : vector<14x84xf32> to vector<10x84xf32>
    %c4_173 = arith.constant 4 : index
    %c0_174 = arith.constant 0 : index
    %c0_175 = arith.constant 0 : index
    %200 = vector.load %arg5[%c4_173, %c0_174, %c0_175] : memref<5x84x160xf32, #tpu.memory_space<vmem>>, vector<1x84x160xf32>
    %201 = vector.shape_cast %200 : vector<1x84x160xf32> to vector<84x160xf32>
    %cst_176 = arith.constant dense<0.000000e+00> : vector<10x160xf32>
    %202 = tpu.matmul %199, %201, %cst_176 {dimension_numbers = #tpu.dot_dimension_numbers<[1], [0], [0], [1], [0, 0, 1, 1], [], []>} : vector<10x84xf32>, vector<84x160xf32>, vector<10x160xf32> -> vector<10x160xf32>
    %203 = arith.addf %198, %202 : vector<10x160xf32>
    %204 = vector.broadcast %1 : vector<1x160xf32> to vector<10x160xf32>
    %205 = arith.addf %203, %204 : vector<10x160xf32>
    %cst_177 = arith.constant 0.000000e+00 : f32
    %206 = vector.broadcast %cst_177 : f32 to vector<10x160xf32>
    %207 = arith.maximumf %205, %206 : vector<10x160xf32>
    %c0_178 = arith.constant 0 : index
    %c0_179 = arith.constant 0 : index
    %c0_180 = arith.constant 0 : index
    %208 = vector.load %arg8[%c0_178, %c0_179, %c0_180] : memref<2x160x80xf32, #tpu.memory_space<vmem>>, vector<1x160x80xf32>
    %209 = vector.shape_cast %208 : vector<1x160x80xf32> to vector<160x80xf32>
    %c1_181 = arith.constant 1 : index
    %c0_182 = arith.constant 0 : index
    %c0_183 = arith.constant 0 : index
    %210 = vector.load %arg8[%c1_181, %c0_182, %c0_183] : memref<2x160x80xf32, #tpu.memory_space<vmem>>, vector<1x160x80xf32>
    %211 = vector.shape_cast %210 : vector<1x160x80xf32> to vector<160x80xf32>
    %c0_184 = arith.constant 0 : index
    %c0_185 = arith.constant 0 : index
    %c0_186 = arith.constant 0 : index
    %212 = vector.load %arg7[%c0_184, %c0_185, %c0_186] : memref<2x5x10xf32, #tpu.memory_space<vmem>>, vector<1x5x10xf32>
    %213 = vector.shape_cast %212 : vector<1x5x10xf32> to vector<5x10xf32>
    %cst_187 = arith.constant dense<0.000000e+00> : vector<5x160xf32>
    %214 = tpu.matmul %213, %207, %cst_187 {dimension_numbers = #tpu.dot_dimension_numbers<[1], [0], [0], [1], [0, 0, 1, 1], [], []>} : vector<5x10xf32>, vector<10x160xf32>, vector<5x160xf32> -> vector<5x160xf32>
    %c1_188 = arith.constant 1 : index
    %c0_189 = arith.constant 0 : index
    %c0_190 = arith.constant 0 : index
    %215 = vector.load %arg7[%c1_188, %c0_189, %c0_190] : memref<2x5x10xf32, #tpu.memory_space<vmem>>, vector<1x5x10xf32>
    %216 = vector.shape_cast %215 : vector<1x5x10xf32> to vector<5x10xf32>
    %cst_191 = arith.constant dense<0.000000e+00> : vector<5x160xf32>
    %217 = tpu.matmul %216, %207, %cst_191 {dimension_numbers = #tpu.dot_dimension_numbers<[1], [0], [0], [1], [0, 0, 1, 1], [], []>} : vector<5x10xf32>, vector<10x160xf32>, vector<5x160xf32> -> vector<5x160xf32>
    %cst_192 = arith.constant dense<0.000000e+00> : vector<5x80xf32>
    %218 = tpu.matmul %214, %209, %cst_192 {dimension_numbers = #tpu.dot_dimension_numbers<[1], [0], [0], [1], [0, 0, 1, 1], [], []>} : vector<5x160xf32>, vector<160x80xf32>, vector<5x80xf32> -> vector<5x80xf32>
    %cst_193 = arith.constant dense<0.000000e+00> : vector<5x80xf32>
    %219 = tpu.matmul %214, %211, %cst_193 {dimension_numbers = #tpu.dot_dimension_numbers<[1], [0], [0], [1], [0, 0, 1, 1], [], []>} : vector<5x160xf32>, vector<160x80xf32>, vector<5x80xf32> -> vector<5x80xf32>
    %220 = arith.maximumf %218, %219 : vector<5x80xf32>
    %cst_194 = arith.constant dense<0.000000e+00> : vector<5x80xf32>
    %221 = tpu.matmul %217, %209, %cst_194 {dimension_numbers = #tpu.dot_dimension_numbers<[1], [0], [0], [1], [0, 0, 1, 1], [], []>} : vector<5x160xf32>, vector<160x80xf32>, vector<5x80xf32> -> vector<5x80xf32>
    %cst_195 = arith.constant dense<0.000000e+00> : vector<5x80xf32>
    %222 = tpu.matmul %217, %211, %cst_195 {dimension_numbers = #tpu.dot_dimension_numbers<[1], [0], [0], [1], [0, 0, 1, 1], [], []>} : vector<5x160xf32>, vector<160x80xf32>, vector<5x80xf32> -> vector<5x80xf32>
    %223 = arith.maximumf %221, %222 : vector<5x80xf32>
    %224 = arith.maximumf %220, %223 : vector<5x80xf32>
    %225 = vector.extract_strided_slice %224 {offsets = [0, 0], sizes = [1, 80], strides = [1, 1]} : vector<5x80xf32> to vector<1x80xf32>
    %c0_196 = arith.constant 0 : index
    %c0_197 = arith.constant 0 : index
    %c0_198 = arith.constant 0 : index
    %226 = vector.load %arg9[%c0_196, %c0_197, %c0_198] : memref<5x80x120xf32, #tpu.memory_space<vmem>>, vector<1x80x120xf32>
    %227 = vector.shape_cast %226 : vector<1x80x120xf32> to vector<80x120xf32>
    %cst_199 = arith.constant dense<0.000000e+00> : vector<1x120xf32>
    %228 = tpu.matmul %225, %227, %cst_199 {dimension_numbers = #tpu.dot_dimension_numbers<[1], [0], [0], [1], [0, 0, 1, 1], [], []>} : vector<1x80xf32>, vector<80x120xf32>, vector<1x120xf32> -> vector<1x120xf32>
    %229 = vector.extract_strided_slice %224 {offsets = [1, 0], sizes = [1, 80], strides = [1, 1]} : vector<5x80xf32> to vector<1x80xf32>
    %c1_200 = arith.constant 1 : index
    %c0_201 = arith.constant 0 : index
    %c0_202 = arith.constant 0 : index
    %230 = vector.load %arg9[%c1_200, %c0_201, %c0_202] : memref<5x80x120xf32, #tpu.memory_space<vmem>>, vector<1x80x120xf32>
    %231 = vector.shape_cast %230 : vector<1x80x120xf32> to vector<80x120xf32>
    %cst_203 = arith.constant dense<0.000000e+00> : vector<1x120xf32>
    %232 = tpu.matmul %229, %231, %cst_203 {dimension_numbers = #tpu.dot_dimension_numbers<[1], [0], [0], [1], [0, 0, 1, 1], [], []>} : vector<1x80xf32>, vector<80x120xf32>, vector<1x120xf32> -> vector<1x120xf32>
    %233 = arith.addf %228, %232 : vector<1x120xf32>
    %234 = vector.extract_strided_slice %224 {offsets = [2, 0], sizes = [1, 80], strides = [1, 1]} : vector<5x80xf32> to vector<1x80xf32>
    %c2_204 = arith.constant 2 : index
    %c0_205 = arith.constant 0 : index
    %c0_206 = arith.constant 0 : index
    %235 = vector.load %arg9[%c2_204, %c0_205, %c0_206] : memref<5x80x120xf32, #tpu.memory_space<vmem>>, vector<1x80x120xf32>
    %236 = vector.shape_cast %235 : vector<1x80x120xf32> to vector<80x120xf32>
    %cst_207 = arith.constant dense<0.000000e+00> : vector<1x120xf32>
    %237 = tpu.matmul %234, %236, %cst_207 {dimension_numbers = #tpu.dot_dimension_numbers<[1], [0], [0], [1], [0, 0, 1, 1], [], []>} : vector<1x80xf32>, vector<80x120xf32>, vector<1x120xf32> -> vector<1x120xf32>
    %238 = arith.addf %233, %237 : vector<1x120xf32>
    %239 = vector.extract_strided_slice %224 {offsets = [3, 0], sizes = [1, 80], strides = [1, 1]} : vector<5x80xf32> to vector<1x80xf32>
    %c3_208 = arith.constant 3 : index
    %c0_209 = arith.constant 0 : index
    %c0_210 = arith.constant 0 : index
    %240 = vector.load %arg9[%c3_208, %c0_209, %c0_210] : memref<5x80x120xf32, #tpu.memory_space<vmem>>, vector<1x80x120xf32>
    %241 = vector.shape_cast %240 : vector<1x80x120xf32> to vector<80x120xf32>
    %cst_211 = arith.constant dense<0.000000e+00> : vector<1x120xf32>
    %242 = tpu.matmul %239, %241, %cst_211 {dimension_numbers = #tpu.dot_dimension_numbers<[1], [0], [0], [1], [0, 0, 1, 1], [], []>} : vector<1x80xf32>, vector<80x120xf32>, vector<1x120xf32> -> vector<1x120xf32>
    %243 = arith.addf %238, %242 : vector<1x120xf32>
    %244 = vector.extract_strided_slice %224 {offsets = [4, 0], sizes = [1, 80], strides = [1, 1]} : vector<5x80xf32> to vector<1x80xf32>
    %c4_212 = arith.constant 4 : index
    %c0_213 = arith.constant 0 : index
    %c0_214 = arith.constant 0 : index
    %245 = vector.load %arg9[%c4_212, %c0_213, %c0_214] : memref<5x80x120xf32, #tpu.memory_space<vmem>>, vector<1x80x120xf32>
    %246 = vector.shape_cast %245 : vector<1x80x120xf32> to vector<80x120xf32>
    %cst_215 = arith.constant dense<0.000000e+00> : vector<1x120xf32>
    %247 = tpu.matmul %244, %246, %cst_215 {dimension_numbers = #tpu.dot_dimension_numbers<[1], [0], [0], [1], [0, 0, 1, 1], [], []>} : vector<1x80xf32>, vector<80x120xf32>, vector<1x120xf32> -> vector<1x120xf32>
    %248 = arith.addf %243, %247 : vector<1x120xf32>
    %249 = arith.addf %248, %2 : vector<1x120xf32>
    %cst_216 = arith.constant 0.000000e+00 : f32
    %250 = vector.broadcast %cst_216 : f32 to vector<1x120xf32>
    %251 = arith.maximumf %249, %250 : vector<1x120xf32>
    %cst_217 = arith.constant dense<0.000000e+00> : vector<1x84xf32>
    %252 = tpu.matmul %251, %5, %cst_217 {dimension_numbers = #tpu.dot_dimension_numbers<[1], [0], [0], [1], [0, 0, 1, 1], [], []>} : vector<1x120xf32>, vector<120x84xf32>, vector<1x84xf32> -> vector<1x84xf32>
    %253 = arith.addf %252, %3 : vector<1x84xf32>
    %cst_218 = arith.constant 0.000000e+00 : f32
    %254 = vector.broadcast %cst_218 : f32 to vector<1x84xf32>
    %255 = arith.maximumf %253, %254 : vector<1x84xf32>
    %cst_219 = arith.constant dense<0.000000e+00> : vector<1x128xf32>
    %256 = tpu.matmul %255, %6, %cst_219 {dimension_numbers = #tpu.dot_dimension_numbers<[1], [0], [0], [1], [0, 0, 1, 1], [], []>} : vector<1x84xf32>, vector<84x128xf32>, vector<1x128xf32> -> vector<1x128xf32>
    %257 = arith.addf %256, %4 : vector<1x128xf32>
    %c1_220 = arith.constant 1 : index
    %c0_221 = arith.constant 0 : index
    %258 = vector.load %arg15[%c1_220, %c0_221] : memref<2x128xf32, #tpu.memory_space<vmem>>, vector<1x128xf32>
    tpu.vector_store %arg15[%c1_220, %c0_221], %257 {strides = array<i32>} : memref<2x128xf32, #tpu.memory_space<vmem>>, vector<1x128xf32>,
    return
  }
}

</mosaic_0001>

<llo_original>
// kernel: net_forward.1
$region0: #{net_forward.1}
  #allocation0 [shape = 'u32[]', space=smem, size = 0x4, offset = 0x4, fixed_abs, tag = 'smem constant byte address 0x4 - core index']
  #allocation1 [shape = 'u32[144,128]{1,0:T(1,128)}', space=vmem, size = 0x12000, scoped, tag = 'internal scratch']
  %s0 = inlined_call_operand.vmem [shape: f32[2,32,96], index: 0, kind: input, shape index: {}]
  %s1 = inlined_call_operand.vmem [shape: f32[5,96,168], index: 1, kind: input, shape index: {}]
  %s2 = inlined_call_operand.vmem [shape: f32[1,168], index: 2, kind: input, shape index: {}]
  %s3 = inlined_call_operand.vmem [shape: f32[2,14,28], index: 3, kind: input, shape index: {}]
  %s4 = inlined_call_operand.vmem [shape: f32[2,168,84], index: 4, kind: input, shape index: {}]
  %s5 = inlined_call_operand.vmem [shape: f32[5,84,160], index: 5, kind: input, shape index: {}]
  %s6 = inlined_call_operand.vmem [shape: f32[1,160], index: 6, kind: input, shape index: {}]
  %s7 = inlined_call_operand.vmem [shape: f32[2,5,10], index: 7, kind: input, shape index: {}]
  %s8 = inlined_call_operand.vmem [shape: f32[2,160,80], index: 8, kind: input, shape index: {}]
  %s9 = inlined_call_operand.vmem [shape: f32[5,80,120], index: 9, kind: input, shape index: {}]
  %s10 = inlined_call_operand.vmem [shape: f32[1,120], index: 10, kind: input, shape index: {}]
  %s11 = inlined_call_operand.vmem [shape: f32[120,84], index: 11, kind: input, shape index: {}]
  %s12 = inlined_call_operand.vmem [shape: f32[1,84], index: 12, kind: input, shape index: {}]
  %s13 = inlined_call_operand.vmem [shape: f32[84,128], index: 13, kind: input, shape index: {}]
  %s14 = inlined_call_operand.vmem [shape: f32[1,128], index: 14, kind: input, shape index: {}]
  %s15 = inlined_call_operand.hbm [shape: f32[2,128], index: 15, kind: output, shape index: {}]
  %s16 = sld [smem:[#allocation0]]
  $region70: #{net_forward.1} parent=0
    _
  %s18 = ssub.s32 1, %s16
  %s19 = scalar_select 0, %s18, %s16
  $region1: #{net_forward.1} parent=0
    #allocation2 [shape = 'u8[1024]{0}', space=vmem, size = 0x400, scoped, tag = 'output window, operand 0, single buffered']
    #allocation3 [shape = 's32[1]{0}', space=sflag, size = 0x4, scoped, tag = 'scoped memory for net_forward.1']
    %20 = vsyncpa [#allocation3], 0
    // Predicated region
    $region2: #{net_forward.1} parent=1 // pred_check
      _
    $region3: #{net_forward.1} parent=1 // pred_check_branch
      %22 = sbr.rel (0) target = $region5
    $region4: #{net_forward.1} parent=1 // pred_region
      _
    $region5: #{net_forward.1} parent=1 // pred_fallthru
      _
    // Predicated region
    $region6: #{net_forward.1} parent=1 // pred_check
      _
    $region7: #{net_forward.1} parent=1 // pred_check_branch
      %24 = sbr.rel (0) target = $region9
    $region8: #{net_forward.1} parent=1 // pred_region
      _
    $region9: #{net_forward.1} parent=1 // pred_fallthru
      _
    // Predicated region
    $region10: #{net_forward.1} parent=1 // pred_check
      _
    $region11: #{net_forward.1} parent=1 // pred_check_branch
      %26 = sbr.rel (0) target = $region13
    $region12: #{net_forward.1} parent=1 // pred_region
      _
    $region13: #{net_forward.1} parent=1 // pred_fallthru
      _
    // Predicated region
    $region14: #{net_forward.1} parent=1 // pred_check
      _
    $region15: #{net_forward.1} parent=1 // pred_check_branch
      %28 = sbr.rel (0) target = $region17
    $region16: #{net_forward.1} parent=1 // pred_region
      _
    $region17: #{net_forward.1} parent=1 // pred_fallthru
      _
    // Predicated region
    $region18: #{net_forward.1} parent=1 // pred_check
      _
    $region19: #{net_forward.1} parent=1 // pred_check_branch
      %30 = sbr.rel (0) target = $region21
    $region20: #{net_forward.1} parent=1 // pred_region
      _
    $region21: #{net_forward.1} parent=1 // pred_fallthru
      _
    // Predicated region
    $region22: #{net_forward.1} parent=1 // pred_check
      _
    $region23: #{net_forward.1} parent=1 // pred_check_branch
      %32 = sbr.rel (0) target = $region25
    $region24: #{net_forward.1} parent=1 // pred_region
      _
    $region25: #{net_forward.1} parent=1 // pred_fallthru
      _
    // Predicated region
    $region26: #{net_forward.1} parent=1 // pred_check
      _
    $region27: #{net_forward.1} parent=1 // pred_check_branch
      %34 = sbr.rel (0) target = $region29
    $region28: #{net_forward.1} parent=1 // pred_region
      _
    $region29: #{net_forward.1} parent=1 // pred_fallthru
      _
    // Predicated region
    $region30: #{net_forward.1} parent=1 // pred_check
      _
    $region31: #{net_forward.1} parent=1 // pred_check_branch
      %36 = sbr.rel (0) target = $region33
    $region32: #{net_forward.1} parent=1 // pred_region
      _
    $region33: #{net_forward.1} parent=1 // pred_fallthru
      _
    // Predicated region
    $region34: #{net_forward.1} parent=1 // pred_check
      _
    $region35: #{net_forward.1} parent=1 // pred_check_branch
      %38 = sbr.rel (0) target = $region37
    $region36: #{net_forward.1} parent=1 // pred_region
      _
    $region37: #{net_forward.1} parent=1 // pred_fallthru
      _
    // Predicated region
    $region38: #{net_forward.1} parent=1 // pred_check
      _
    $region39: #{net_forward.1} parent=1 // pred_check_branch
      %40 = sbr.rel (0) target = $region41
    $region40: #{net_forward.1} parent=1 // pred_region
      _
    $region41: #{net_forward.1} parent=1 // pred_fallthru
      _
    // Predicated region
    $region42: #{net_forward.1} parent=1 // pred_check
      _
    $region43: #{net_forward.1} parent=1 // pred_check_branch
      %42 = sbr.rel (0) target = $region45
    $region44: #{net_forward.1} parent=1 // pred_region
      _
    $region45: #{net_forward.1} parent=1 // pred_fallthru
      _
    // Predicated region
    $region46: #{net_forward.1} parent=1 // pred_check
      _
    $region47: #{net_forward.1} parent=1 // pred_check_branch
      %44 = sbr.rel (0) target = $region49
    $region48: #{net_forward.1} parent=1 // pred_region
      _
    $region49: #{net_forward.1} parent=1 // pred_fallthru
      _
    // Predicated region
    $region50: #{net_forward.1} parent=1 // pred_check
      _
    $region51: #{net_forward.1} parent=1 // pred_check_branch
      %46 = sbr.rel (0) target = $region53
    $region52: #{net_forward.1} parent=1 // pred_region
      _
    $region53: #{net_forward.1} parent=1 // pred_fallthru
      _
    // Predicated region
    $region54: #{net_forward.1} parent=1 // pred_check
      _
    $region55: #{net_forward.1} parent=1 // pred_check_branch
      %48 = sbr.rel (0) target = $region57
    $region56: #{net_forward.1} parent=1 // pred_region
      _
    $region57: #{net_forward.1} parent=1 // pred_fallthru
      _
    // Predicated region
    $region58: #{net_forward.1} parent=1 // pred_check
      _
    $region59: #{net_forward.1} parent=1 // pred_check_branch
      %50 = sbr.rel (0) target = $region61
    $region60: #{net_forward.1} parent=1 // pred_region
      _
    $region61: #{net_forward.1} parent=1 // pred_fallthru
      _
    %v51 = vld [vmem:[%s2] sm:$0x3]
    %v52 = vld [vmem:[%s6] sm:$0x3]
    %v53 = vld [vmem:[%s10] sm:$0x1]
    %v54 = vld [vmem:[%s12] sm:$0x1]
    %v55 = vld [vmem:[%s14] sm:$0x1]
    %v56 = vld [vmem:[%s11] sm:$0xff]
    %v57 = vld [vmem:[%s11 + $0x8] sm:$0xff]
    %v58 = vld [vmem:[%s11 + $0x10] sm:$0xff]
    %v59 = vld [vmem:[%s11 + $0x18] sm:$0xff]
    %v60 = vld [vmem:[%s11 + $0x20] sm:$0xff]
    %v61 = vld [vmem:[%s11 + $0x28] sm:$0xff]
    %v62 = vld [vmem:[%s11 + $0x30] sm:$0xff]
    %v63 = vld [vmem:[%s11 + $0x38] sm:$0xff]
    %v64 = vld [vmem:[%s11 + $0x40] sm:$0xff]
    %v65 = vld [vmem:[%s11 + $0x48] sm:$0xff]
    %v66 = vld [vmem:[%s11 + $0x50] sm:$0xff]
    %v67 = vld [vmem:[%s11 + $0x58] sm:$0xff]
    %v68 = vld [vmem:[%s11 + $0x60] sm:$0xff]
    %v69 = vld [vmem:[%s11 + $0x68] sm:$0xff]
    %v70 = vld [vmem:[%s11 + $0x70] sm:$0xff]
    %v71 = vld [vmem:[%s13] sm:$0xff]
    %v72 = vld [vmem:[%s13 + $0x8] sm:$0xff]
    %v73 = vld [vmem:[%s13 + $0x10] sm:$0xff]
    %v74 = vld [vmem:[%s13 + $0x18] sm:$0xff]
    %v75 = vld [vmem:[%s13 + $0x20] sm:$0xff]
    %v76 = vld [vmem:[%s13 + $0x28] sm:$0xff]
    %v77 = vld [vmem:[%s13 + $0x30] sm:$0xff]
    %v78 = vld [vmem:[%s13 + $0x38] sm:$0xff]
    %v79 = vld [vmem:[%s13 + $0x40] sm:$0xff]
    %v80 = vld [vmem:[%s13 + $0x48] sm:$0xff]
    %v81 = vld [vmem:[%s13 + $0x50] sm:$0xf]
    %v82 = vld [vmem:[%s0] sm:$0xff]
    %v83 = vld [vmem:[%s0 + $0x8] sm:$0xff]
    %v84 = vld [vmem:[%s0 + $0x10] sm:$0xff]
    %v85 = vld [vmem:[%s0 + $0x18] sm:$0xff]
    %v86 = vld [vmem:[%s1] sm:$0xff]
    %v87 = vld [vmem:[%s1 + $0x8] sm:$0xff]
    %v88 = vld [vmem:[%s1 + $0x10] sm:$0xff]
    %v89 = vld [vmem:[%s1 + $0x18] sm:$0xff]
    %v90 = vld [vmem:[%s1 + $0x20] sm:$0xff]
    %v91 = vld [vmem:[%s1 + $0x28] sm:$0xff]
    %v92 = vld [vmem:[%s1 + $0x30] sm:$0xff]
    %v93 = vld [vmem:[%s1 + $0x38] sm:$0xff]
    %v94 = vld [vmem:[%s1 + $0x40] sm:$0xff]
    %v95 = vld [vmem:[%s1 + $0x48] sm:$0xff]
    %v96 = vld [vmem:[%s1 + $0x50] sm:$0xff]
    %v97 = vld [vmem:[%s1 + $0x58] sm:$0xff]
    %v98 = vld [vmem:[%s1 + $0x60] sm:$0xff]
    %v99 = vld [vmem:[%s1 + $0x68] sm:$0xff]
    %v100 = vld [vmem:[%s1 + $0x70] sm:$0xff]
    %v101 = vld [vmem:[%s1 + $0x78] sm:$0xff]
    %v102 = vld [vmem:[%s1 + $0x80] sm:$0xff]
    %v103 = vld [vmem:[%s1 + $0x88] sm:$0xff]
    %v104 = vld [vmem:[%s1 + $0x90] sm:$0xff]
    %v105 = vld [vmem:[%s1 + $0x98] sm:$0xff]
    %v106 = vld [vmem:[%s1 + $0xa0] sm:$0xff]
    %v107 = vld [vmem:[%s1 + $0xa8] sm:$0xff]
    %v108 = vld [vmem:[%s1 + $0xb0] sm:$0xff]
    %v109 = vld [vmem:[%s1 + $0xb8] sm:$0xff]
    %s110 = scalar_lea.vmem %s1, 192
    %v111 = vld [vmem:[%s110] sm:$0xff]
    %v112 = vld [vmem:[%s110 + $0x8] sm:$0xff]
    %v113 = vld [vmem:[%s110 + $0x10] sm:$0xff]
    %v114 = vld [vmem:[%s110 + $0x18] sm:$0xff]
    %v115 = vld [vmem:[%s110 + $0x20] sm:$0xff]
    %v116 = vld [vmem:[%s110 + $0x28] sm:$0xff]
    %v117 = vld [vmem:[%s110 + $0x30] sm:$0xff]
    %v118 = vld [vmem:[%s110 + $0x38] sm:$0xff]
    %v119 = vld [vmem:[%s110 + $0x40] sm:$0xff]
    %v120 = vld [vmem:[%s110 + $0x48] sm:$0xff]
    %v121 = vld [vmem:[%s110 + $0x50] sm:$0xff]
    %v122 = vld [vmem:[%s110 + $0x58] sm:$0xff]
    %v123 = vld [vmem:[%s110 + $0x60] sm:$0xff]
    %v124 = vld [vmem:[%s110 + $0x68] sm:$0xff]
    %v125 = vld [vmem:[%s110 + $0x70] sm:$0xff]
    %v126 = vld [vmem:[%s110 + $0x78] sm:$0xff]
    %v127 = vld [vmem:[%s110 + $0x80] sm:$0xff]
    %v128 = vld [vmem:[%s110 + $0x88] sm:$0xff]
    %v129 = vld [vmem:[%s110 + $0x90] sm:$0xff]
    %v130 = vld [vmem:[%s110 + $0x98] sm:$0xff]
    %v131 = vld [vmem:[%s110 + $0xa0] sm:$0xff]
    %v132 = vld [vmem:[%s110 + $0xa8] sm:$0xff]
    %v133 = vld [vmem:[%s110 + $0xb0] sm:$0xff]
    %v134 = vld [vmem:[%s110 + $0xb8] sm:$0xff]
    %vm139 = vcmask 1046528
    %v140 = vrot.slane %v82, 1
    %v141 = vrot.slane %v83, 1
    %v142 = vsel %vm139, %v140, %v141
    %v143 = vrot.slane %v84, 1
    %v144 = vsel %vm139, %v141, %v143
    %v145 = vrot.slane %v85, 1
    %v146 = vsel %vm139, %v143, %v145
    %vm147 = vcmask 785408
    %v148 = vsel %vm147, %v142, 0
    %v150 = vsel %vm147, %v144, 0
    %v152 = vsel %vm147, %v146, 0
    %v154 = vsel %vm147, %v145, 0
    %156 = vmatprep.subr.mxu0 %v112
    %157 = vmatpush1.msra.mxu0 %v111
    %158 = vmatprep.subr.mxu0 %v114
    %159 = vmatpush1.msra.mxu0 %v113
    %160 = vmatprep.subr.mxu0 %v116
    %161 = vmatpush1.msra.mxu0 %v115
    %162 = vmatprep.subr.mxu0 %v118
    %163 = vmatpush1.msra.mxu0 %v117
    %164 = vmatprep.subr.mxu0 %v120
    %165 = vmatpush1.msra.mxu0 %v119
    %166 = vmatprep.subr.mxu0 %v122
    %167 = vmatpush1.msra.mxu0 %v121
    %168 = vmatprep.subr.mxu0 %v124
    %169 = vmatpush1.msra.mxu0 %v123
    %170 = vmatprep.subr.mxu0 %v126
    %171 = vmatpush1.msra.mxu0 %v125
    %172 = vmatprep.subr.mxu0 %v128
    %173 = vmatpush1.msra.mxu0 %v127
    %174 = vmatprep.subr.mxu0 %v130
    %175 = vmatpush1.msra.mxu0 %v129
    %176 = vmatprep.subr.mxu0 %v132
    %177 = vmatpush1.msra.mxu0 %v131
    %178 = vmatprep.subr.mxu0 %v134
    %179 = vmatpush1.msra.mxu0 %v133
    %180 = vmatprep.subr.mxu0 0.0
    %181 = vmatpush1.msra.mxu0 0.0
    %182 = vmatprep.subr.mxu0 0.0
    %183 = vmatpush1.msra.mxu0 0.0
    %184 = vmatprep.subr.mxu0 0.0
    %185 = vmatpush1.msra.mxu0 0.0
    %186 = vmatprep.subr.mxu0 0.0
    %187 = vmatpush1.msra.mxu0 0.0
    %188 = vmatprep.subr.mxu0 0.0
    %189 = vmatpush1.msra.mxu0 0.0
    %190 = vmatprep.subr.mxu0 0.0
    %191 = vmatpush1.msra.mxu0 0.0
    %192 = vmatprep.subr.mxu0 0.0
    %193 = vmatpush1.msra.mxu0 0.0
    %194 = vmatprep.subr.mxu0 0.0
    %195 = vmatpush1.msra.mxu0 0.0
    %196 = vmatprep.subr.mxu0 0.0
    %197 = vmatpush1.msra.mxu0 0.0
    %198 = vmatprep.subr.mxu0 0.0
    %199 = vmatpush1.msra.mxu0 0.0
    %200 = vmatprep.subr.mxu0 0.0
    %201 = vmatpush1.msra.mxu0 0.0
    %202 = vmatprep.subr.mxu0 0.0
    %203 = vmatpush1.msra.mxu0 0.0
    %204 = vmatprep.subr.mxu0 0.0
    %205 = vmatpush1.msra.mxu0 0.0
    %206 = vmatprep.subr.mxu0 0.0
    %207 = vmatpush1.msra.mxu0 0.0
    %208 = vmatprep.subr.mxu0 0.0
    %209 = vmatpush1.msra.mxu0 0.0
    %210 = vmatprep.subr.mxu0 0.0
    %211 = vmatpush1.msra.mxu0 0.0
    %212 = vmatprep.subr.mxu0 0.0
    %213 = vmatpush1.msra.mxu0 0.0
    %214 = vmatprep.subr.mxu0 0.0
    %215 = vmatpush1.msra.mxu0 0.0
    %216 = vmatprep.subr.mxu0 0.0
    %217 = vmatpush1.msra.mxu0 0.0
    %218 = vmatprep.subr.mxu0 0.0
    %219 = vmatpush1.msra.mxu0 0.0
    %220 = vmatprep.mubr.f32.mxu0 0.0
    %221 = vmatmul.mubr.f32.gmra.mrb[0].mxu0 %v148
    %v222 = vpop.f32.mrb[0].mxu0
    %v223 = vadd.f32 0.0, %v222
    %v224 = vpop.f32.mrb[0].mxu0
    %v225 = vadd.f32 0.0, %v224
    %226 = vmatprep.mubr.f32.mxu0 0.0
    %227 = vmatmul.mubr.f32.gmra.mrb[0].mxu0 %v150
    %v228 = vpop.f32.mrb[0].mxu0
    %v229 = vadd.f32 0.0, %v228
    %v230 = vpop.f32.mrb[0].mxu0
    %v231 = vadd.f32 0.0, %v230
    %232 = vmatprep.mubr.f32.mxu0 0.0
    %233 = vmatmul.mubr.f32.gmra.mrb[0].mxu0 %v152
    %v234 = vpop.f32.mrb[0].mxu0
    %v235 = vadd.f32 0.0, %v234
    %v236 = vpop.f32.mrb[0].mxu0
    %v237 = vadd.f32 0.0, %v236
    %238 = vmatprep.mubr.f32.mxu0 0.0
    %239 = vmatmul.mubr.f32.gmra.mrb[0].mxu0 %v154
    %v240 = vpop.f32.mrb[0].mxu0
    %v241 = vadd.f32 0.0, %v240
    %v242 = vpop.f32.mrb[0].mxu0
    %v243 = vadd.f32 0.0, %v242
    %244 = vdwg.mxu0
    %v245 = vsel %vm147, %v82, 0
    %v247 = vsel %vm147, %v83, 0
    %v249 = vsel %vm147, %v84, 0
    %v251 = vsel %vm147, %v85, 0
    %253 = vmatprep.subr.mxu0 %v87
    %254 = vmatpush1.msra.mxu0 %v86
    %255 = vmatprep.subr.mxu0 %v89
    %256 = vmatpush1.msra.mxu0 %v88
    %257 = vmatprep.subr.mxu0 %v91
    %258 = vmatpush1.msra.mxu0 %v90
    %259 = vmatprep.subr.mxu0 %v93
    %260 = vmatpush1.msra.mxu0 %v92
    %261 = vmatprep.subr.mxu0 %v95
    %262 = vmatpush1.msra.mxu0 %v94
    %263 = vmatprep.subr.mxu0 %v97
    %264 = vmatpush1.msra.mxu0 %v96
    %265 = vmatprep.subr.mxu0 %v99
    %266 = vmatpush1.msra.mxu0 %v98
    %267 = vmatprep.subr.mxu0 %v101
    %268 = vmatpush1.msra.mxu0 %v100
    %269 = vmatprep.subr.mxu0 %v103
    %270 = vmatpush1.msra.mxu0 %v102
    %271 = vmatprep.subr.mxu0 %v105
    %272 = vmatpush1.msra.mxu0 %v104
    %273 = vmatprep.subr.mxu0 %v107
    %274 = vmatpush1.msra.mxu0 %v106
    %275 = vmatprep.subr.mxu0 %v109
    %276 = vmatpush1.msra.mxu0 %v108
    %277 = vmatprep.subr.mxu0 0.0
    %278 = vmatpush1.msra.mxu0 0.0
    %279 = vmatprep.subr.mxu0 0.0
    %280 = vmatpush1.msra.mxu0 0.0
    %281 = vmatprep.subr.mxu0 0.0
    %282 = vmatpush1.msra.mxu0 0.0
    %283 = vmatprep.subr.mxu0 0.0
    %284 = vmatpush1.msra.mxu0 0.0
    %285 = vmatprep.subr.mxu0 0.0
    %286 = vmatpush1.msra.mxu0 0.0
    %287 = vmatprep.subr.mxu0 0.0
    %288 = vmatpush1.msra.mxu0 0.0
    %289 = vmatprep.subr.mxu0 0.0
    %290 = vmatpush1.msra.mxu0 0.0
    %291 = vmatprep.subr.mxu0 0.0
    %292 = vmatpush1.msra.mxu0 0.0
    %293 = vmatprep.subr.mxu0 0.0
    %294 = vmatpush1.msra.mxu0 0.0
    %295 = vmatprep.subr.mxu0 0.0
    %296 = vmatpush1.msra.mxu0 0.0
    %297 = vmatprep.subr.mxu0 0.0
    %298 = vmatpush1.msra.mxu0 0.0
    %299 = vmatprep.subr.mxu0 0.0
    %300 = vmatpush1.msra.mxu0 0.0
    %301 = vmatprep.subr.mxu0 0.0
    %302 = vmatpush1.msra.mxu0 0.0
    %303 = vmatprep.subr.mxu0 0.0
    %304 = vmatpush1.msra.mxu0 0.0
    %305 = vmatprep.subr.mxu0 0.0
    %306 = vmatpush1.msra.mxu0 0.0
    %307 = vmatprep.subr.mxu0 0.0
    %308 = vmatpush1.msra.mxu0 0.0
    %309 = vmatprep.subr.mxu0 0.0
    %310 = vmatpush1.msra.mxu0 0.0
    %311 = vmatprep.subr.mxu0 0.0
    %312 = vmatpush1.msra.mxu0 0.0
    %313 = vmatprep.subr.mxu0 0.0
    %314 = vmatpush1.msra.mxu0 0.0
    %315 = vmatprep.subr.mxu0 0.0
    %316 = vmatpush1.msra.mxu0 0.0
    %317 = vmatprep.mubr.f32.mxu0 0.0
    %318 = vmatmul.mubr.f32.gmra.mrb[0].mxu0 %v245
    %v319 = vpop.f32.mrb[0].mxu0
    %v320 = vadd.f32 %v223, %v319
    %v321 = vpop.f32.mrb[0].mxu0
    %v322 = vadd.f32 %v225, %v321
    %323 = vmatprep.mubr.f32.mxu0 0.0
    %324 = vmatmul.mubr.f32.gmra.mrb[0].mxu0 %v247
    %v325 = vpop.f32.mrb[0].mxu0
    %v326 = vadd.f32 %v229, %v325
    %v327 = vpop.f32.mrb[0].mxu0
    %v328 = vadd.f32 %v231, %v327
    %329 = vmatprep.mubr.f32.mxu0 0.0
    %330 = vmatmul.mubr.f32.gmra.mrb[0].mxu0 %v249
    %v331 = vpop.f32.mrb[0].mxu0
    %v332 = vadd.f32 %v235, %v331
    %v333 = vpop.f32.mrb[0].mxu0
    %v334 = vadd.f32 %v237, %v333
    %335 = vmatprep.mubr.f32.mxu0 0.0
    %336 = vmatmul.mubr.f32.gmra.mrb[0].mxu0 %v251
    %v337 = vpop.f32.mrb[0].mxu0
    %v338 = vadd.f32 %v241, %v337
    %v339 = vpop.f32.mrb[0].mxu0
    %v340 = vadd.f32 %v243, %v339
    %341 = vdwg.mxu0
    %s342 = scalar_lea.vmem %s1, 384
    %v343 = vld [vmem:[%s342] sm:$0xff]
    %v344 = vld [vmem:[%s342 + $0x8] sm:$0xff]
    %v345 = vld [vmem:[%s342 + $0x10] sm:$0xff]
    %v346 = vld [vmem:[%s342 + $0x18] sm:$0xff]
    %v347 = vld [vmem:[%s342 + $0x20] sm:$0xff]
    %v348 = vld [vmem:[%s342 + $0x28] sm:$0xff]
    %v349 = vld [vmem:[%s342 + $0x30] sm:$0xff]
    %v350 = vld [vmem:[%s342 + $0x38] sm:$0xff]
    %v351 = vld [vmem:[%s342 + $0x40] sm:$0xff]
    %v352 = vld [vmem:[%s342 + $0x48] sm:$0xff]
    %v353 = vld [vmem:[%s342 + $0x50] sm:$0xff]
    %v354 = vld [vmem:[%s342 + $0x58] sm:$0xff]
    %v355 = vld [vmem:[%s342 + $0x60] sm:$0xff]
    %v356 = vld [vmem:[%s342 + $0x68] sm:$0xff]
    %v357 = vld [vmem:[%s342 + $0x70] sm:$0xff]
    %v358 = vld [vmem:[%s342 + $0x78] sm:$0xff]
    %v359 = vld [vmem:[%s342 + $0x80] sm:$0xff]
    %v360 = vld [vmem:[%s342 + $0x88] sm:$0xff]
    %v361 = vld [vmem:[%s342 + $0x90] sm:$0xff]
    %v362 = vld [vmem:[%s342 + $0x98] sm:$0xff]
    %v363 = vld [vmem:[%s342 + $0xa0] sm:$0xff]
    %v364 = vld [vmem:[%s342 + $0xa8] sm:$0xff]
    %v365 = vld [vmem:[%s342 + $0xb0] sm:$0xff]
    %v366 = vld [vmem:[%s342 + $0xb8] sm:$0xff]
    %vm367 = vcmask 1045504
    %v368 = vrot.slane %v82, 2
    %v369 = vrot.slane %v83, 2
    %v370 = vsel %vm367, %v368, %v369
    %v371 = vrot.slane %v84, 2
    %v372 = vsel %vm367, %v369, %v371
    %v373 = vrot.slane %v85, 2
    %v374 = vsel %vm367, %v371, %v373
    %v375 = vsel %vm147, %v370, 0
    %v377 = vsel %vm147, %v372, 0
    %v379 = vsel %vm147, %v374, 0
    %v381 = vsel %vm147, %v373, 0
    %383 = vmatprep.subr.mxu0 %v344
    %384 = vmatpush1.msra.mxu0 %v343
    %385 = vmatprep.subr.mxu0 %v346
    %386 = vmatpush1.msra.mxu0 %v345
    %387 = vmatprep.subr.mxu0 %v348
    %388 = vmatpush1.msra.mxu0 %v347
    %389 = vmatprep.subr.mxu0 %v350
    %390 = vmatpush1.msra.mxu0 %v349
    %391 = vmatprep.subr.mxu0 %v352
    %392 = vmatpush1.msra.mxu0 %v351
    %393 = vmatprep.subr.mxu0 %v354
    %394 = vmatpush1.msra.mxu0 %v353
    %395 = vmatprep.subr.mxu0 %v356
    %396 = vmatpush1.msra.mxu0 %v355
    %397 = vmatprep.subr.mxu0 %v358
    %398 = vmatpush1.msra.mxu0 %v357
    %399 = vmatprep.subr.mxu0 %v360
    %400 = vmatpush1.msra.mxu0 %v359
    %401 = vmatprep.subr.mxu0 %v362
    %402 = vmatpush1.msra.mxu0 %v361
    %403 = vmatprep.subr.mxu0 %v364
    %404 = vmatpush1.msra.mxu0 %v363
    %405 = vmatprep.subr.mxu0 %v366
    %406 = vmatpush1.msra.mxu0 %v365
    %407 = vmatprep.subr.mxu0 0.0
    %408 = vmatpush1.msra.mxu0 0.0
    %409 = vmatprep.subr.mxu0 0.0
    %410 = vmatpush1.msra.mxu0 0.0
    %411 = vmatprep.subr.mxu0 0.0
    %412 = vmatpush1.msra.mxu0 0.0
    %413 = vmatprep.subr.mxu0 0.0
    %414 = vmatpush1.msra.mxu0 0.0
    %415 = vmatprep.subr.mxu0 0.0
    %416 = vmatpush1.msra.mxu0 0.0
    %417 = vmatprep.subr.mxu0 0.0
    %418 = vmatpush1.msra.mxu0 0.0
    %419 = vmatprep.subr.mxu0 0.0
    %420 = vmatpush1.msra.mxu0 0.0
    %421 = vmatprep.subr.mxu0 0.0
    %422 = vmatpush1.msra.mxu0 0.0
    %423 = vmatprep.subr.mxu0 0.0
    %424 = vmatpush1.msra.mxu0 0.0
    %425 = vmatprep.subr.mxu0 0.0
    %426 = vmatpush1.msra.mxu0 0.0
    %427 = vmatprep.subr.mxu0 0.0
    %428 = vmatpush1.msra.mxu0 0.0
    %429 = vmatprep.subr.mxu0 0.0
    %430 = vmatpush1.msra.mxu0 0.0
    %431 = vmatprep.subr.mxu0 0.0
    %432 = vmatpush1.msra.mxu0 0.0
    %433 = vmatprep.subr.mxu0 0.0
    %434 = vmatpush1.msra.mxu0 0.0
    %435 = vmatprep.subr.mxu0 0.0
    %436 = vmatpush1.msra.mxu0 0.0
    %437 = vmatprep.subr.mxu0 0.0
    %438 = vmatpush1.msra.mxu0 0.0
    %439 = vmatprep.subr.mxu0 0.0
    %440 = vmatpush1.msra.mxu0 0.0
    %441 = vmatprep.subr.mxu0 0.0
    %442 = vmatpush1.msra.mxu0 0.0
    %443 = vmatprep.subr.mxu0 0.0
    %444 = vmatpush1.msra.mxu0 0.0
    %445 = vmatprep.subr.mxu0 0.0
    %446 = vmatpush1.msra.mxu0 0.0
    %447 = vmatprep.mubr.f32.mxu0 0.0
    %448 = vmatmul.mubr.f32.gmra.mrb[0].mxu0 %v375
    %v449 = vpop.f32.mrb[0].mxu0
    %v450 = vadd.f32 0.0, %v449
    %v451 = vpop.f32.mrb[0].mxu0
    %v452 = vadd.f32 0.0, %v451
    %453 = vmatprep.mubr.f32.mxu0 0.0
    %454 = vmatmul.mubr.f32.gmra.mrb[0].mxu0 %v377
    %v455 = vpop.f32.mrb[0].mxu0
    %v456 = vadd.f32 0.0, %v455
    %v457 = vpop.f32.mrb[0].mxu0
    %v458 = vadd.f32 0.0, %v457
    %459 = vmatprep.mubr.f32.mxu0 0.0
    %460 = vmatmul.mubr.f32.gmra.mrb[0].mxu0 %v379
    %v461 = vpop.f32.mrb[0].mxu0
    %v462 = vadd.f32 0.0, %v461
    %v463 = vpop.f32.mrb[0].mxu0
    %v464 = vadd.f32 0.0, %v463
    %465 = vmatprep.mubr.f32.mxu0 0.0
    %466 = vmatmul.mubr.f32.gmra.mrb[0].mxu0 %v381
    %v467 = vpop.f32.mrb[0].mxu0
    %v468 = vadd.f32 0.0, %v467
    %v469 = vpop.f32.mrb[0].mxu0
    %v470 = vadd.f32 0.0, %v469
    %471 = vdwg.mxu0
    %v472 = vadd.f32 %v320, %v450
    %v473 = vadd.f32 %v322, %v452
    %v474 = vadd.f32 %v326, %v456
    %v475 = vadd.f32 %v328, %v458
    %v476 = vadd.f32 %v332, %v462
    %v477 = vadd.f32 %v334, %v464
    %v478 = vadd.f32 %v338, %v468
    %v479 = vadd.f32 %v340, %v470
    %s480 = scalar_lea.vmem %s1, 576
    %v481 = vld [vmem:[%s480] sm:$0xff]
    %v482 = vld [vmem:[%s480 + $0x8] sm:$0xff]
    %v483 = vld [vmem:[%s480 + $0x10] sm:$0xff]
    %v484 = vld [vmem:[%s480 + $0x18] sm:$0xff]
    %v485 = vld [vmem:[%s480 + $0x20] sm:$0xff]
    %v486 = vld [vmem:[%s480 + $0x28] sm:$0xff]
    %v487 = vld [vmem:[%s480 + $0x30] sm:$0xff]
    %v488 = vld [vmem:[%s480 + $0x38] sm:$0xff]
    %v489 = vld [vmem:[%s480 + $0x40] sm:$0xff]
    %v490 = vld [vmem:[%s480 + $0x48] sm:$0xff]
    %v491 = vld [vmem:[%s480 + $0x50] sm:$0xff]
    %v492 = vld [vmem:[%s480 + $0x58] sm:$0xff]
    %v493 = vld [vmem:[%s480 + $0x60] sm:$0xff]
    %v494 = vld [vmem:[%s480 + $0x68] sm:$0xff]
    %v495 = vld [vmem:[%s480 + $0x70] sm:$0xff]
    %v496 = vld [vmem:[%s480 + $0x78] sm:$0xff]
    %v497 = vld [vmem:[%s480 + $0x80] sm:$0xff]
    %v498 = vld [vmem:[%s480 + $0x88] sm:$0xff]
    %v499 = vld [vmem:[%s480 + $0x90] sm:$0xff]
    %v500 = vld [vmem:[%s480 + $0x98] sm:$0xff]
    %v501 = vld [vmem:[%s480 + $0xa0] sm:$0xff]
    %v502 = vld [vmem:[%s480 + $0xa8] sm:$0xff]
    %v503 = vld [vmem:[%s480 + $0xb0] sm:$0xff]
    %v504 = vld [vmem:[%s480 + $0xb8] sm:$0xff]
    %vm505 = vcmask 1044480
    %v506 = vrot.slane %v82, 3
    %v507 = vrot.slane %v83, 3
    %v508 = vsel %vm505, %v506, %v507
    %v509 = vrot.slane %v84, 3
    %v510 = vsel %vm505, %v507, %v509
    %v511 = vrot.slane %v85, 3
    %v512 = vsel %vm505, %v509, %v511
    %v513 = vsel %vm147, %v508, 0
    %v515 = vsel %vm147, %v510, 0
    %v517 = vsel %vm147, %v512, 0
    %v519 = vsel %vm147, %v511, 0
    %521 = vmatprep.subr.mxu0 %v482
    %522 = vmatpush1.msra.mxu0 %v481
    %523 = vmatprep.subr.mxu0 %v484
    %524 = vmatpush1.msra.mxu0 %v483
    %525 = vmatprep.subr.mxu0 %v486
    %526 = vmatpush1.msra.mxu0 %v485
    %527 = vmatprep.subr.mxu0 %v488
    %528 = vmatpush1.msra.mxu0 %v487
    %529 = vmatprep.subr.mxu0 %v490
    %530 = vmatpush1.msra.mxu0 %v489
    %531 = vmatprep.subr.mxu0 %v492
    %532 = vmatpush1.msra.mxu0 %v491
    %533 = vmatprep.subr.mxu0 %v494
    %534 = vmatpush1.msra.mxu0 %v493
    %535 = vmatprep.subr.mxu0 %v496
    %536 = vmatpush1.msra.mxu0 %v495
    %537 = vmatprep.subr.mxu0 %v498
    %538 = vmatpush1.msra.mxu0 %v497
    %539 = vmatprep.subr.mxu0 %v500
    %540 = vmatpush1.msra.mxu0 %v499
    %541 = vmatprep.subr.mxu0 %v502
    %542 = vmatpush1.msra.mxu0 %v501
    %543 = vmatprep.subr.mxu0 %v504
    %544 = vmatpush1.msra.mxu0 %v503
    %545 = vmatprep.subr.mxu0 0.0
    %546 = vmatpush1.msra.mxu0 0.0
    %547 = vmatprep.subr.mxu0 0.0
    %548 = vmatpush1.msra.mxu0 0.0
    %549 = vmatprep.subr.mxu0 0.0
    %550 = vmatpush1.msra.mxu0 0.0
    %551 = vmatprep.subr.mxu0 0.0
    %552 = vmatpush1.msra.mxu0 0.0
    %553 = vmatprep.subr.mxu0 0.0
    %554 = vmatpush1.msra.mxu0 0.0
    %555 = vmatprep.subr.mxu0 0.0
    %556 = vmatpush1.msra.mxu0 0.0
    %557 = vmatprep.subr.mxu0 0.0
    %558 = vmatpush1.msra.mxu0 0.0
    %559 = vmatprep.subr.mxu0 0.0
    %560 = vmatpush1.msra.mxu0 0.0
    %561 = vmatprep.subr.mxu0 0.0
    %562 = vmatpush1.msra.mxu0 0.0
    %563 = vmatprep.subr.mxu0 0.0
    %564 = vmatpush1.msra.mxu0 0.0
    %565 = vmatprep.subr.mxu0 0.0
    %566 = vmatpush1.msra.mxu0 0.0
    %567 = vmatprep.subr.mxu0 0.0
    %568 = vmatpush1.msra.mxu0 0.0
    %569 = vmatprep.subr.mxu0 0.0
    %570 = vmatpush1.msra.mxu0 0.0
    %571 = vmatprep.subr.mxu0 0.0
    %572 = vmatpush1.msra.mxu0 0.0
    %573 = vmatprep.subr.mxu0 0.0
    %574 = vmatpush1.msra.mxu0 0.0
    %575 = vmatprep.subr.mxu0 0.0
    %576 = vmatpush1.msra.mxu0 0.0
    %577 = vmatprep.subr.mxu0 0.0
    %578 = vmatpush1.msra.mxu0 0.0
    %579 = vmatprep.subr.mxu0 0.0
    %580 = vmatpush1.msra.mxu0 0.0
    %581 = vmatprep.subr.mxu0 0.0
    %582 = vmatpush1.msra.mxu0 0.0
    %583 = vmatprep.subr.mxu0 0.0
    %584 = vmatpush1.msra.mxu0 0.0
    %585 = vmatprep.mubr.f32.mxu0 0.0
    %586 = vmatmul.mubr.f32.gmra.mrb[0].mxu0 %v513
    %v587 = vpop.f32.mrb[0].mxu0
    %v588 = vadd.f32 0.0, %v587
    %v589 = vpop.f32.mrb[0].mxu0
    %v590 = vadd.f32 0.0, %v589
    %591 = vmatprep.mubr.f32.mxu0 0.0
    %592 = vmatmul.mubr.f32.gmra.mrb[0].mxu0 %v515
    %v593 = vpop.f32.mrb[0].mxu0
    %v594 = vadd.f32 0.0, %v593
    %v595 = vpop.f32.mrb[0].mxu0
    %v596 = vadd.f32 0.0, %v595
    %597 = vmatprep.mubr.f32.mxu0 0.0
    %598 = vmatmul.mubr.f32.gmra.mrb[0].mxu0 %v517
    %v599 = vpop.f32.mrb[0].mxu0
    %v600 = vadd.f32 0.0, %v599
    %v601 = vpop.f32.mrb[0].mxu0
    %v602 = vadd.f32 0.0, %v601
    %603 = vmatprep.mubr.f32.mxu0 0.0
    %604 = vmatmul.mubr.f32.gmra.mrb[0].mxu0 %v519
    %v605 = vpop.f32.mrb[0].mxu0
    %v606 = vadd.f32 0.0, %v605
    %v607 = vpop.f32.mrb[0].mxu0
    %v608 = vadd.f32 0.0, %v607
    %609 = vdwg.mxu0
    %v610 = vadd.f32 %v472, %v588
    %v611 = vadd.f32 %v473, %v590
    %v612 = vadd.f32 %v474, %v594
    %v613 = vadd.f32 %v475, %v596
    %v614 = vadd.f32 %v476, %v600
    %v615 = vadd.f32 %v477, %v602
    %v616 = vadd.f32 %v478, %v606
    %v617 = vadd.f32 %v479, %v608
    %s618 = scalar_lea.vmem %s1, 768
    %v619 = vld [vmem:[%s618] sm:$0xff]
    %v620 = vld [vmem:[%s618 + $0x8] sm:$0xff]
    %v621 = vld [vmem:[%s618 + $0x10] sm:$0xff]
    %v622 = vld [vmem:[%s618 + $0x18] sm:$0xff]
    %v623 = vld [vmem:[%s618 + $0x20] sm:$0xff]
    %v624 = vld [vmem:[%s618 + $0x28] sm:$0xff]
    %v625 = vld [vmem:[%s618 + $0x30] sm:$0xff]
    %v626 = vld [vmem:[%s618 + $0x38] sm:$0xff]
    %v627 = vld [vmem:[%s618 + $0x40] sm:$0xff]
    %v628 = vld [vmem:[%s618 + $0x48] sm:$0xff]
    %v629 = vld [vmem:[%s618 + $0x50] sm:$0xff]
    %v630 = vld [vmem:[%s618 + $0x58] sm:$0xff]
    %v631 = vld [vmem:[%s618 + $0x60] sm:$0xff]
    %v632 = vld [vmem:[%s618 + $0x68] sm:$0xff]
    %v633 = vld [vmem:[%s618 + $0x70] sm:$0xff]
    %v634 = vld [vmem:[%s618 + $0x78] sm:$0xff]
    %v635 = vld [vmem:[%s618 + $0x80] sm:$0xff]
    %v636 = vld [vmem:[%s618 + $0x88] sm:$0xff]
    %v637 = vld [vmem:[%s618 + $0x90] sm:$0xff]
    %v638 = vld [vmem:[%s618 + $0x98] sm:$0xff]
    %v639 = vld [vmem:[%s618 + $0xa0] sm:$0xff]
    %v640 = vld [vmem:[%s618 + $0xa8] sm:$0xff]
    %v641 = vld [vmem:[%s618 + $0xb0] sm:$0xff]
    %v642 = vld [vmem:[%s618 + $0xb8] sm:$0xff]
    %vm643 = vcmask 1043456
    %v644 = vrot.slane %v82, 4
    %v645 = vrot.slane %v83, 4
    %v646 = vsel %vm643, %v644, %v645
    %v647 = vrot.slane %v84, 4
    %v648 = vsel %vm643, %v645, %v647
    %v649 = vrot.slane %v85, 4
    %v650 = vsel %vm643, %v647, %v649
    %v651 = vsel %vm147, %v646, 0
    %v653 = vsel %vm147, %v648, 0
    %v655 = vsel %vm147, %v650, 0
    %v657 = vsel %vm147, %v649, 0
    %659 = vmatprep.subr.mxu0 %v620
    %660 = vmatpush1.msra.mxu0 %v619
    %661 = vmatprep.subr.mxu0 %v622
    %662 = vmatpush1.msra.mxu0 %v621
    %663 = vmatprep.subr.mxu0 %v624
    %664 = vmatpush1.msra.mxu0 %v623
    %665 = vmatprep.subr.mxu0 %v626
    %666 = vmatpush1.msra.mxu0 %v625
    %667 = vmatprep.subr.mxu0 %v628
    %668 = vmatpush1.msra.mxu0 %v627
    %669 = vmatprep.subr.mxu0 %v630
    %670 = vmatpush1.msra.mxu0 %v629
    %671 = vmatprep.subr.mxu0 %v632
    %672 = vmatpush1.msra.mxu0 %v631
    %673 = vmatprep.subr.mxu0 %v634
    %674 = vmatpush1.msra.mxu0 %v633
    %675 = vmatprep.subr.mxu0 %v636
    %676 = vmatpush1.msra.mxu0 %v635
    %677 = vmatprep.subr.mxu0 %v638
    %678 = vmatpush1.msra.mxu0 %v637
    %679 = vmatprep.subr.mxu0 %v640
    %680 = vmatpush1.msra.mxu0 %v639
    %681 = vmatprep.subr.mxu0 %v642
    %682 = vmatpush1.msra.mxu0 %v641
    %683 = vmatprep.subr.mxu0 0.0
    %684 = vmatpush1.msra.mxu0 0.0
    %685 = vmatprep.subr.mxu0 0.0
    %686 = vmatpush1.msra.mxu0 0.0
    %687 = vmatprep.subr.mxu0 0.0
    %688 = vmatpush1.msra.mxu0 0.0
    %689 = vmatprep.subr.mxu0 0.0
    %690 = vmatpush1.msra.mxu0 0.0
    %691 = vmatprep.subr.mxu0 0.0
    %692 = vmatpush1.msra.mxu0 0.0
    %693 = vmatprep.subr.mxu0 0.0
    %694 = vmatpush1.msra.mxu0 0.0
    %695 = vmatprep.subr.mxu0 0.0
    %696 = vmatpush1.msra.mxu0 0.0
    %697 = vmatprep.subr.mxu0 0.0
    %698 = vmatpush1.msra.mxu0 0.0
    %699 = vmatprep.subr.mxu0 0.0
    %700 = vmatpush1.msra.mxu0 0.0
    %701 = vmatprep.subr.mxu0 0.0
    %702 = vmatpush1.msra.mxu0 0.0
    %703 = vmatprep.subr.mxu0 0.0
    %704 = vmatpush1.msra.mxu0 0.0
    %705 = vmatprep.subr.mxu0 0.0
    %706 = vmatpush1.msra.mxu0 0.0
    %707 = vmatprep.subr.mxu0 0.0
    %708 = vmatpush1.msra.mxu0 0.0
    %709 = vmatprep.subr.mxu0 0.0
    %710 = vmatpush1.msra.mxu0 0.0
    %711 = vmatprep.subr.mxu0 0.0
    %712 = vmatpush1.msra.mxu0 0.0
    %713 = vmatprep.subr.mxu0 0.0
    %714 = vmatpush1.msra.mxu0 0.0
    %715 = vmatprep.subr.mxu0 0.0
    %716 = vmatpush1.msra.mxu0 0.0
    %717 = vmatprep.subr.mxu0 0.0
    %718 = vmatpush1.msra.mxu0 0.0
    %719 = vmatprep.subr.mxu0 0.0
    %720 = vmatpush1.msra.mxu0 0.0
    %721 = vmatprep.subr.mxu0 0.0
    %722 = vmatpush1.msra.mxu0 0.0
    %723 = vmatprep.mubr.f32.mxu0 0.0
    %724 = vmatmul.mubr.f32.gmra.mrb[0].mxu0 %v651
    %v725 = vpop.f32.mrb[0].mxu0
    %v726 = vadd.f32 0.0, %v725
    %v727 = vpop.f32.mrb[0].mxu0
    %v728 = vadd.f32 0.0, %v727
    %729 = vmatprep.mubr.f32.mxu0 0.0
    %730 = vmatmul.mubr.f32.gmra.mrb[0].mxu0 %v653
    %v731 = vpop.f32.mrb[0].mxu0
    %v732 = vadd.f32 0.0, %v731
    %v733 = vpop.f32.mrb[0].mxu0
    %v734 = vadd.f32 0.0, %v733
    %735 = vmatprep.mubr.f32.mxu0 0.0
    %736 = vmatmul.mubr.f32.gmra.mrb[0].mxu0 %v655
    %v737 = vpop.f32.mrb[0].mxu0
    %v738 = vadd.f32 0.0, %v737
    %v739 = vpop.f32.mrb[0].mxu0
    %v740 = vadd.f32 0.0, %v739
    %741 = vmatprep.mubr.f32.mxu0 0.0
    %742 = vmatmul.mubr.f32.gmra.mrb[0].mxu0 %v657
    %v743 = vpop.f32.mrb[0].mxu0
    %v744 = vadd.f32 0.0, %v743
    %v745 = vpop.f32.mrb[0].mxu0
    %v746 = vadd.f32 0.0, %v745
    %747 = vdwg.mxu0
    %v748 = vadd.f32 %v610, %v726
    %v749 = vadd.f32 %v611, %v728
    %v750 = vadd.f32 %v612, %v732
    %v751 = vadd.f32 %v613, %v734
    %v752 = vadd.f32 %v614, %v738
    %v753 = vadd.f32 %v615, %v740
    %v754 = vadd.f32 %v616, %v744
    %v755 = vadd.f32 %v617, %v746
    %v757 = vlaneseq
    %v758 = vshrl.u32 %v757, 7
    %v759 = vsub.s32 0, %v758
    %v760 = vrot.slane %v51, %v759
    %v761 = vlaneseq
    %v762 = vshrl.u32 %v761, 7
    %v763 = vsub.s32 1, %v762
    %v764 = vrot.slane %v51, %v763
    %v767 = vadd.f32 %v748, %v760
    %v768 = vadd.f32 %v749, %v764
    %v769 = vadd.f32 %v750, %v760
    %v770 = vadd.f32 %v751, %v764
    %v771 = vadd.f32 %v752, %v760
    %v772 = vadd.f32 %v753, %v764
    %v773 = vadd.f32 %v754, %v760
    %v774 = vadd.f32 %v755, %v764
    %v775 = vmax.f32 %v767, 0.0
    %v776 = vmax.f32 %v768, 0.0
    %v777 = vmax.f32 %v769, 0.0
    %v778 = vmax.f32 %v770, 0.0
    %v779 = vmax.f32 %v771, 0.0
    %v780 = vmax.f32 %v772, 0.0
    %v781 = vmax.f32 %v773, 0.0
    %v782 = vmax.f32 %v774, 0.0
    %v783 = vld [vmem:[%s4] sm:$0xff]
    %v784 = vld [vmem:[%s4 + $0x8] sm:$0xff]
    %v785 = vld [vmem:[%s4 + $0x10] sm:$0xff]
    %v786 = vld [vmem:[%s4 + $0x18] sm:$0xff]
    %v787 = vld [vmem:[%s4 + $0x20] sm:$0xff]
    %v788 = vld [vmem:[%s4 + $0x28] sm:$0xff]
    %v789 = vld [vmem:[%s4 + $0x30] sm:$0xff]
    %v790 = vld [vmem:[%s4 + $0x38] sm:$0xff]
    %v791 = vld [vmem:[%s4 + $0x40] sm:$0xff]
    %v792 = vld [vmem:[%s4 + $0x48] sm:$0xff]
    %v793 = vld [vmem:[%s4 + $0x50] sm:$0xff]
    %v794 = vld [vmem:[%s4 + $0x58] sm:$0xff]
    %v795 = vld [vmem:[%s4 + $0x60] sm:$0xff]
    %v796 = vld [vmem:[%s4 + $0x68] sm:$0xff]
    %v797 = vld [vmem:[%s4 + $0x70] sm:$0xff]
    %v798 = vld [vmem:[%s4 + $0x78] sm:$0xff]
    %v799 = vld [vmem:[%s4 + $0x80] sm:$0xff]
    %v800 = vld [vmem:[%s4 + $0x88] sm:$0xff]
    %v801 = vld [vmem:[%s4 + $0x90] sm:$0xff]
    %v802 = vld [vmem:[%s4 + $0x98] sm:$0xff]
    %v803 = vld [vmem:[%s4 + $0xa0] sm:$0xff]
    %s804 = scalar_lea.vmem %s4, 168
    %v805 = vld [vmem:[%s804] sm:$0xff]
    %v806 = vld [vmem:[%s804 + $0x8] sm:$0xff]
    %v807 = vld [vmem:[%s804 + $0x10] sm:$0xff]
    %v808 = vld [vmem:[%s804 + $0x18] sm:$0xff]
    %v809 = vld [vmem:[%s804 + $0x20] sm:$0xff]
    %v810 = vld [vmem:[%s804 + $0x28] sm:$0xff]
    %v811 = vld [vmem:[%s804 + $0x30] sm:$0xff]
    %v812 = vld [vmem:[%s804 + $0x38] sm:$0xff]
    %v813 = vld [vmem:[%s804 + $0x40] sm:$0xff]
    %v814 = vld [vmem:[%s804 + $0x48] sm:$0xff]
    %v815 = vld [vmem:[%s804 + $0x50] sm:$0xff]
    %v816 = vld [vmem:[%s804 + $0x58] sm:$0xff]
    %v817 = vld [vmem:[%s804 + $0x60] sm:$0xff]
    %v818 = vld [vmem:[%s804 + $0x68] sm:$0xff]
    %v819 = vld [vmem:[%s804 + $0x70] sm:$0xff]
    %v820 = vld [vmem:[%s804 + $0x78] sm:$0xff]
    %v821 = vld [vmem:[%s804 + $0x80] sm:$0xff]
    %v822 = vld [vmem:[%s804 + $0x88] sm:$0xff]
    %v823 = vld [vmem:[%s804 + $0x90] sm:$0xff]
    %v824 = vld [vmem:[%s804 + $0x98] sm:$0xff]
    %v825 = vld [vmem:[%s804 + $0xa0] sm:$0xff]
    %v826 = vld [vmem:[%s3] sm:$0xff]
    %v827 = vld [vmem:[%s3 + $0x8] sm:$0x3f]
    %vm828 = vcmask 228352
    %v830 = vsel %vm828, %v826, 0
    %v833 = vsel %vm828, %v827, 0
    %v836 = vsel %vm643, %v781, 0
    %v839 = vsel %vm643, %v782, 0
    %841 = vmatprep.subr.mxu0 %v776
    %842 = vmatpush1.msra.mxu0 %v775
    %843 = vmatprep.subr.mxu0 %v778
    %844 = vmatpush1.msra.mxu0 %v777
    %845 = vmatprep.subr.mxu0 %v780
    %846 = vmatpush1.msra.mxu0 %v779
    %847 = vmatprep.subr.mxu0 %v839
    %848 = vmatpush1.msra.mxu0 %v836
    %849 = vmatprep.subr.mxu0 0.0
    %850 = vmatpush1.msra.mxu0 0.0
    %851 = vmatprep.subr.mxu0 0.0
    %852 = vmatpush1.msra.mxu0 0.0
    %853 = vmatprep.subr.mxu0 0.0
    %854 = vmatpush1.msra.mxu0 0.0
    %855 = vmatprep.subr.mxu0 0.0
    %856 = vmatpush1.msra.mxu0 0.0
    %857 = vmatprep.subr.mxu0 0.0
    %858 = vmatpush1.msra.mxu0 0.0
    %859 = vmatprep.subr.mxu0 0.0
    %860 = vmatpush1.msra.mxu0 0.0
    %861 = vmatprep.subr.mxu0 0.0
    %862 = vmatpush1.msra.mxu0 0.0
    %863 = vmatprep.subr.mxu0 0.0
    %864 = vmatpush1.msra.mxu0 0.0
    %865 = vmatprep.subr.mxu0 0.0
    %866 = vmatpush1.msra.mxu0 0.0
    %867 = vmatprep.subr.mxu0 0.0
    %868 = vmatpush1.msra.mxu0 0.0
    %869 = vmatprep.subr.mxu0 0.0
    %870 = vmatpush1.msra.mxu0 0.0
    %871 = vmatprep.subr.mxu0 0.0
    %872 = vmatpush1.msra.mxu0 0.0
    %873 = vmatprep.subr.mxu0 0.0
    %874 = vmatpush1.msra.mxu0 0.0
    %875 = vmatprep.subr.mxu0 0.0
    %876 = vmatpush1.msra.mxu0 0.0
    %877 = vmatprep.subr.mxu0 0.0
    %878 = vmatpush1.msra.mxu0 0.0
    %879 = vmatprep.subr.mxu0 0.0
    %880 = vmatpush1.msra.mxu0 0.0
    %881 = vmatprep.subr.mxu0 0.0
    %882 = vmatpush1.msra.mxu0 0.0
    %883 = vmatprep.subr.mxu0 0.0
    %884 = vmatpush1.msra.mxu0 0.0
    %885 = vmatprep.subr.mxu0 0.0
    %886 = vmatpush1.msra.mxu0 0.0
    %887 = vmatprep.subr.mxu0 0.0
    %888 = vmatpush1.msra.mxu0 0.0
    %889 = vmatprep.subr.mxu0 0.0
    %890 = vmatpush1.msra.mxu0 0.0
    %891 = vmatprep.subr.mxu0 0.0
    %892 = vmatpush1.msra.mxu0 0.0
    %893 = vmatprep.subr.mxu0 0.0
    %894 = vmatpush1.msra.mxu0 0.0
    %895 = vmatprep.subr.mxu0 0.0
    %896 = vmatpush1.msra.mxu0 0.0
    %897 = vmatprep.subr.mxu0 0.0
    %898 = vmatpush1.msra.mxu0 0.0
    %899 = vmatprep.subr.mxu0 0.0
    %900 = vmatpush1.msra.mxu0 0.0
    %901 = vmatprep.subr.mxu0 0.0
    %902 = vmatpush1.msra.mxu0 0.0
    %903 = vmatprep.subr.mxu0 0.0
    %904 = vmatpush1.msra.mxu0 0.0
    %905 = vmatprep.mubr.f32.mxu0 0.0
    %906 = vmatmul.mubr.f32.gmra.mrb[0].mxu0 %v830
    %v907 = vpop.f32.mrb[0].mxu0
    %v908 = vadd.f32 0.0, %v907
    %v909 = vpop.f32.mrb[0].mxu0
    %v910 = vadd.f32 0.0, %v909
    %911 = vmatprep.mubr.f32.mxu0 0.0
    %912 = vmatmul.mubr.f32.gmra.mrb[0].mxu0 %v833
    %v913 = vpop.f32.mrb[0].mxu0
    %v914 = vadd.f32 0.0, %v913
    %v915 = vpop.f32.mrb[0].mxu0
    %v916 = vadd.f32 0.0, %v915
    %917 = vdwg.mxu0
    %s918 = scalar_lea.vmem %s3, 16
    %v919 = vld [vmem:[%s918] sm:$0xff]
    %v920 = vld [vmem:[%s918 + $0x8] sm:$0x3f]
    %v922 = vsel %vm828, %v919, 0
    %v925 = vsel %vm828, %v920, 0
    %927 = vmatprep.subr.mxu0 %v776
    %928 = vmatpush1.msra.mxu0 %v775
    %929 = vmatprep.subr.mxu0 %v778
    %930 = vmatpush1.msra.mxu0 %v777
    %931 = vmatprep.subr.mxu0 %v780
    %932 = vmatpush1.msra.mxu0 %v779
    %933 = vmatprep.subr.mxu0 %v839
    %934 = vmatpush1.msra.mxu0 %v836
    %935 = vmatprep.subr.mxu0 0.0
    %936 = vmatpush1.msra.mxu0 0.0
    %937 = vmatprep.subr.mxu0 0.0
    %938 = vmatpush1.msra.mxu0 0.0
    %939 = vmatprep.subr.mxu0 0.0
    %940 = vmatpush1.msra.mxu0 0.0
    %941 = vmatprep.subr.mxu0 0.0
    %942 = vmatpush1.msra.mxu0 0.0
    %943 = vmatprep.subr.mxu0 0.0
    %944 = vmatpush1.msra.mxu0 0.0
    %945 = vmatprep.subr.mxu0 0.0
    %946 = vmatpush1.msra.mxu0 0.0
    %947 = vmatprep.subr.mxu0 0.0
    %948 = vmatpush1.msra.mxu0 0.0
    %949 = vmatprep.subr.mxu0 0.0
    %950 = vmatpush1.msra.mxu0 0.0
    %951 = vmatprep.subr.mxu0 0.0
    %952 = vmatpush1.msra.mxu0 0.0
    %953 = vmatprep.subr.mxu0 0.0
    %954 = vmatpush1.msra.mxu0 0.0
    %955 = vmatprep.subr.mxu0 0.0
    %956 = vmatpush1.msra.mxu0 0.0
    %957 = vmatprep.subr.mxu0 0.0
    %958 = vmatpush1.msra.mxu0 0.0
    %959 = vmatprep.subr.mxu0 0.0
    %960 = vmatpush1.msra.mxu0 0.0
    %961 = vmatprep.subr.mxu0 0.0
    %962 = vmatpush1.msra.mxu0 0.0
    %963 = vmatprep.subr.mxu0 0.0
    %964 = vmatpush1.msra.mxu0 0.0
    %965 = vmatprep.subr.mxu0 0.0
    %966 = vmatpush1.msra.mxu0 0.0
    %967 = vmatprep.subr.mxu0 0.0
    %968 = vmatpush1.msra.mxu0 0.0
    %969 = vmatprep.subr.mxu0 0.0
    %970 = vmatpush1.msra.mxu0 0.0
    %971 = vmatprep.subr.mxu0 0.0
    %972 = vmatpush1.msra.mxu0 0.0
    %973 = vmatprep.subr.mxu0 0.0
    %974 = vmatpush1.msra.mxu0 0.0
    %975 = vmatprep.subr.mxu0 0.0
    %976 = vmatpush1.msra.mxu0 0.0
    %977 = vmatprep.subr.mxu0 0.0
    %978 = vmatpush1.msra.mxu0 0.0
    %979 = vmatprep.subr.mxu0 0.0
    %980 = vmatpush1.msra.mxu0 0.0
    %981 = vmatprep.subr.mxu0 0.0
    %982 = vmatpush1.msra.mxu0 0.0
    %983 = vmatprep.subr.mxu0 0.0
    %984 = vmatpush1.msra.mxu0 0.0
    %985 = vmatprep.subr.mxu0 0.0
    %986 = vmatpush1.msra.mxu0 0.0
    %987 = vmatprep.subr.mxu0 0.0
    %988 = vmatpush1.msra.mxu0 0.0
    %989 = vmatprep.subr.mxu0 0.0
    %990 = vmatpush1.msra.mxu0 0.0
    %991 = vmatprep.mubr.f32.mxu0 0.0
    %992 = vmatmul.mubr.f32.gmra.mrb[0].mxu0 %v922
    %v993 = vpop.f32.mrb[0].mxu0
    %v994 = vadd.f32 0.0, %v993
    %v995 = vpop.f32.mrb[0].mxu0
    %v996 = vadd.f32 0.0, %v995
    %997 = vmatprep.mubr.f32.mxu0 0.0
    %998 = vmatmul.mubr.f32.gmra.mrb[0].mxu0 %v925
    %v999 = vpop.f32.mrb[0].mxu0
    %v1000 = vadd.f32 0.0, %v999
    %v1001 = vpop.f32.mrb[0].mxu0
    %v1002 = vadd.f32 0.0, %v1001
    %1003 = vdwg.mxu0
    %vm1004 = vcmask 326656
    %v1006 = vsel %vm1004, %v910, 0
    %v1009 = vsel %vm1004, %v916, 0
    %1011 = vmatprep.subr.mxu0 0.0
    %1012 = vmatpush1.msra.mxu0 %v783
    %1013 = vmatprep.subr.mxu0 0.0
    %1014 = vmatpush1.msra.mxu0 %v784
    %1015 = vmatprep.subr.mxu0 0.0
    %1016 = vmatpush1.msra.mxu0 %v785
    %1017 = vmatprep.subr.mxu0 0.0
    %1018 = vmatpush1.msra.mxu0 %v786
    %1019 = vmatprep.subr.mxu0 0.0
    %1020 = vmatpush1.msra.mxu0 %v787
    %1021 = vmatprep.subr.mxu0 0.0
    %1022 = vmatpush1.msra.mxu0 %v788
    %1023 = vmatprep.subr.mxu0 0.0
    %1024 = vmatpush1.msra.mxu0 %v789
    %1025 = vmatprep.subr.mxu0 0.0
    %1026 = vmatpush1.msra.mxu0 %v790
    %1027 = vmatprep.subr.mxu0 0.0
    %1028 = vmatpush1.msra.mxu0 %v791
    %1029 = vmatprep.subr.mxu0 0.0
    %1030 = vmatpush1.msra.mxu0 %v792
    %1031 = vmatprep.subr.mxu0 0.0
    %1032 = vmatpush1.msra.mxu0 %v793
    %1033 = vmatprep.subr.mxu0 0.0
    %1034 = vmatpush1.msra.mxu0 %v794
    %1035 = vmatprep.subr.mxu0 0.0
    %1036 = vmatpush1.msra.mxu0 %v795
    %1037 = vmatprep.subr.mxu0 0.0
    %1038 = vmatpush1.msra.mxu0 %v796
    %1039 = vmatprep.subr.mxu0 0.0
    %1040 = vmatpush1.msra.mxu0 %v797
    %1041 = vmatprep.subr.mxu0 0.0
    %1042 = vmatpush1.msra.mxu0 %v798
    %1043 = vmatprep.subr.mxu0 0.0
    %1044 = vmatpush1.msra.mxu0 %v799
    %1045 = vmatprep.subr.mxu0 0.0
    %1046 = vmatpush1.msra.mxu0 %v800
    %1047 = vmatprep.subr.mxu0 0.0
    %1048 = vmatpush1.msra.mxu0 %v801
    %1049 = vmatprep.subr.mxu0 0.0
    %1050 = vmatpush1.msra.mxu0 %v802
    %1051 = vmatprep.subr.mxu0 0.0
    %1052 = vmatpush1.msra.mxu0 %v803
    %1053 = vmatprep.subr.mxu0 0.0
    %1054 = vmatpush1.msra.mxu0 0.0
    %1055 = vmatprep.subr.mxu0 0.0
    %1056 = vmatpush1.msra.mxu0 0.0
    %1057 = vmatprep.subr.mxu0 0.0
    %1058 = vmatpush1.msra.mxu0 0.0
    %1059 = vmatprep.subr.mxu0 0.0
    %1060 = vmatpush1.msra.mxu0 0.0
    %1061 = vmatprep.subr.mxu0 0.0
    %1062 = vmatpush1.msra.mxu0 0.0
    %1063 = vmatprep.subr.mxu0 0.0
    %1064 = vmatpush1.msra.mxu0 0.0
    %1065 = vmatprep.subr.mxu0 0.0
    %1066 = vmatpush1.msra.mxu0 0.0
    %1067 = vmatprep.subr.mxu0 0.0
    %1068 = vmatpush1.msra.mxu0 0.0
    %1069 = vmatprep.subr.mxu0 0.0
    %1070 = vmatpush1.msra.mxu0 0.0
    %1071 = vmatprep.subr.mxu0 0.0
    %1072 = vmatpush1.msra.mxu0 0.0
    %1073 = vmatprep.subr.mxu0 0.0
    %1074 = vmatpush1.msra.mxu0 0.0
    %1075 = vmatprep.mubr.f32.mxu0 %v1006
    %1076 = vmatmul.mubr.f32.gmra.mrb[0].mxu0 %v908
    %v1077 = vpop.f32.mrb[0].mxu0
    %v1078 = vadd.f32 0.0, %v1077
    %v1079 = vpop.f32.mrb[0].mxu0
    %1080 = vmatprep.mubr.f32.mxu0 %v1009
    %1081 = vmatmul.mubr.f32.gmra.mrb[0].mxu0 %v914
    %v1082 = vpop.f32.mrb[0].mxu0
    %v1083 = vadd.f32 0.0, %v1082
    %v1084 = vpop.f32.mrb[0].mxu0
    %1085 = vdwg.mxu0
    %1086 = vmatprep.subr.mxu0 0.0
    %1087 = vmatpush1.msra.mxu0 %v805
    %1088 = vmatprep.subr.mxu0 0.0
    %1089 = vmatpush1.msra.mxu0 %v806
    %1090 = vmatprep.subr.mxu0 0.0
    %1091 = vmatpush1.msra.mxu0 %v807
    %1092 = vmatprep.subr.mxu0 0.0
    %1093 = vmatpush1.msra.mxu0 %v808
    %1094 = vmatprep.subr.mxu0 0.0
    %1095 = vmatpush1.msra.mxu0 %v809
    %1096 = vmatprep.subr.mxu0 0.0
    %1097 = vmatpush1.msra.mxu0 %v810
    %1098 = vmatprep.subr.mxu0 0.0
    %1099 = vmatpush1.msra.mxu0 %v811
    %1100 = vmatprep.subr.mxu0 0.0
    %1101 = vmatpush1.msra.mxu0 %v812
    %1102 = vmatprep.subr.mxu0 0.0
    %1103 = vmatpush1.msra.mxu0 %v813
    %1104 = vmatprep.subr.mxu0 0.0
    %1105 = vmatpush1.msra.mxu0 %v814
    %1106 = vmatprep.subr.mxu0 0.0
    %1107 = vmatpush1.msra.mxu0 %v815
    %1108 = vmatprep.subr.mxu0 0.0
    %1109 = vmatpush1.msra.mxu0 %v816
    %1110 = vmatprep.subr.mxu0 0.0
    %1111 = vmatpush1.msra.mxu0 %v817
    %1112 = vmatprep.subr.mxu0 0.0
    %1113 = vmatpush1.msra.mxu0 %v818
    %1114 = vmatprep.subr.mxu0 0.0
    %1115 = vmatpush1.msra.mxu0 %v819
    %1116 = vmatprep.subr.mxu0 0.0
    %1117 = vmatpush1.msra.mxu0 %v820
    %1118 = vmatprep.subr.mxu0 0.0
    %1119 = vmatpush1.msra.mxu0 %v821
    %1120 = vmatprep.subr.mxu0 0.0
    %1121 = vmatpush1.msra.mxu0 %v822
    %1122 = vmatprep.subr.mxu0 0.0
    %1123 = vmatpush1.msra.mxu0 %v823
    %1124 = vmatprep.subr.mxu0 0.0
    %1125 = vmatpush1.msra.mxu0 %v824
    %1126 = vmatprep.subr.mxu0 0.0
    %1127 = vmatpush1.msra.mxu0 %v825
    %1128 = vmatprep.subr.mxu0 0.0
    %1129 = vmatpush1.msra.mxu0 0.0
    %1130 = vmatprep.subr.mxu0 0.0
    %1131 = vmatpush1.msra.mxu0 0.0
    %1132 = vmatprep.subr.mxu0 0.0
    %1133 = vmatpush1.msra.mxu0 0.0
    %1134 = vmatprep.subr.mxu0 0.0
    %1135 = vmatpush1.msra.mxu0 0.0
    %1136 = vmatprep.subr.mxu0 0.0
    %1137 = vmatpush1.msra.mxu0 0.0
    %1138 = vmatprep.subr.mxu0 0.0
    %1139 = vmatpush1.msra.mxu0 0.0
    %1140 = vmatprep.subr.mxu0 0.0
    %1141 = vmatpush1.msra.mxu0 0.0
    %1142 = vmatprep.subr.mxu0 0.0
    %1143 = vmatpush1.msra.mxu0 0.0
    %1144 = vmatprep.subr.mxu0 0.0
    %1145 = vmatpush1.msra.mxu0 0.0
    %1146 = vmatprep.subr.mxu0 0.0
    %1147 = vmatpush1.msra.mxu0 0.0
    %1148 = vmatprep.subr.mxu0 0.0
    %1149 = vmatpush1.msra.mxu0 0.0
    %1150 = vmatprep.mubr.f32.mxu0 %v1006
    %1151 = vmatmul.mubr.f32.gmra.mrb[0].mxu0 %v908
    %v1152 = vpop.f32.mrb[0].mxu0
    %v1153 = vadd.f32 0.0, %v1152
    %v1154 = vpop.f32.mrb[0].mxu0
    %1155 = vmatprep.mubr.f32.mxu0 %v1009
    %1156 = vmatmul.mubr.f32.gmra.mrb[0].mxu0 %v914
    %v1157 = vpop.f32.mrb[0].mxu0
    %v1158 = vadd.f32 0.0, %v1157
    %v1159 = vpop.f32.mrb[0].mxu0
    %1160 = vdwg.mxu0
    %v1161 = vmax.f32 %v1078, %v1153
    %v1162 = vmax.f32 %v1083, %v1158
    %v1164 = vsel %vm1004, %v996, 0
    %v1167 = vsel %vm1004, %v1002, 0
    %1169 = vmatprep.subr.mxu0 0.0
    %1170 = vmatpush1.msra.mxu0 %v783
    %1171 = vmatprep.subr.mxu0 0.0
    %1172 = vmatpush1.msra.mxu0 %v784
    %1173 = vmatprep.subr.mxu0 0.0
    %1174 = vmatpush1.msra.mxu0 %v785
    %1175 = vmatprep.subr.mxu0 0.0
    %1176 = vmatpush1.msra.mxu0 %v786
    %1177 = vmatprep.subr.mxu0 0.0
    %1178 = vmatpush1.msra.mxu0 %v787
    %1179 = vmatprep.subr.mxu0 0.0
    %1180 = vmatpush1.msra.mxu0 %v788
    %1181 = vmatprep.subr.mxu0 0.0
    %1182 = vmatpush1.msra.mxu0 %v789
    %1183 = vmatprep.subr.mxu0 0.0
    %1184 = vmatpush1.msra.mxu0 %v790
    %1185 = vmatprep.subr.mxu0 0.0
    %1186 = vmatpush1.msra.mxu0 %v791
    %1187 = vmatprep.subr.mxu0 0.0
    %1188 = vmatpush1.msra.mxu0 %v792
    %1189 = vmatprep.subr.mxu0 0.0
    %1190 = vmatpush1.msra.mxu0 %v793
    %1191 = vmatprep.subr.mxu0 0.0
    %1192 = vmatpush1.msra.mxu0 %v794
    %1193 = vmatprep.subr.mxu0 0.0
    %1194 = vmatpush1.msra.mxu0 %v795
    %1195 = vmatprep.subr.mxu0 0.0
    %1196 = vmatpush1.msra.mxu0 %v796
    %1197 = vmatprep.subr.mxu0 0.0
    %1198 = vmatpush1.msra.mxu0 %v797
    %1199 = vmatprep.subr.mxu0 0.0
    %1200 = vmatpush1.msra.mxu0 %v798
    %1201 = vmatprep.subr.mxu0 0.0
    %1202 = vmatpush1.msra.mxu0 %v799
    %1203 = vmatprep.subr.mxu0 0.0
    %1204 = vmatpush1.msra.mxu0 %v800
    %1205 = vmatprep.subr.mxu0 0.0
    %1206 = vmatpush1.msra.mxu0 %v801
    %1207 = vmatprep.subr.mxu0 0.0
    %1208 = vmatpush1.msra.mxu0 %v802
    %1209 = vmatprep.subr.mxu0 0.0
    %1210 = vmatpush1.msra.mxu0 %v803
    %1211 = vmatprep.subr.mxu0 0.0
    %1212 = vmatpush1.msra.mxu0 0.0
    %1213 = vmatprep.subr.mxu0 0.0
    %1214 = vmatpush1.msra.mxu0 0.0
    %1215 = vmatprep.subr.mxu0 0.0
    %1216 = vmatpush1.msra.mxu0 0.0
    %1217 = vmatprep.subr.mxu0 0.0
    %1218 = vmatpush1.msra.mxu0 0.0
    %1219 = vmatprep.subr.mxu0 0.0
    %1220 = vmatpush1.msra.mxu0 0.0
    %1221 = vmatprep.subr.mxu0 0.0
    %1222 = vmatpush1.msra.mxu0 0.0
    %1223 = vmatprep.subr.mxu0 0.0
    %1224 = vmatpush1.msra.mxu0 0.0
    %1225 = vmatprep.subr.mxu0 0.0
    %1226 = vmatpush1.msra.mxu0 0.0
    %1227 = vmatprep.subr.mxu0 0.0
    %1228 = vmatpush1.msra.mxu0 0.0
    %1229 = vmatprep.subr.mxu0 0.0
    %1230 = vmatpush1.msra.mxu0 0.0
    %1231 = vmatprep.subr.mxu0 0.0
    %1232 = vmatpush1.msra.mxu0 0.0
    %1233 = vmatprep.mubr.f32.mxu0 %v1164
    %1234 = vmatmul.mubr.f32.gmra.mrb[0].mxu0 %v994
    %v1235 = vpop.f32.mrb[0].mxu0
    %v1236 = vadd.f32 0.0, %v1235
    %v1237 = vpop.f32.mrb[0].mxu0
    %1238 = vmatprep.mubr.f32.mxu0 %v1167
    %1239 = vmatmul.mubr.f32.gmra.mrb[0].mxu0 %v1000
    %v1240 = vpop.f32.mrb[0].mxu0
    %v1241 = vadd.f32 0.0, %v1240
    %v1242 = vpop.f32.mrb[0].mxu0
    %1243 = vdwg.mxu0
    %1244 = vmatprep.subr.mxu0 0.0
    %1245 = vmatpush1.msra.mxu0 %v805
    %1246 = vmatprep.subr.mxu0 0.0
    %1247 = vmatpush1.msra.mxu0 %v806
    %1248 = vmatprep.subr.mxu0 0.0
    %1249 = vmatpush1.msra.mxu0 %v807
    %1250 = vmatprep.subr.mxu0 0.0
    %1251 = vmatpush1.msra.mxu0 %v808
    %1252 = vmatprep.subr.mxu0 0.0
    %1253 = vmatpush1.msra.mxu0 %v809
    %1254 = vmatprep.subr.mxu0 0.0
    %1255 = vmatpush1.msra.mxu0 %v810
    %1256 = vmatprep.subr.mxu0 0.0
    %1257 = vmatpush1.msra.mxu0 %v811
    %1258 = vmatprep.subr.mxu0 0.0
    %1259 = vmatpush1.msra.mxu0 %v812
    %1260 = vmatprep.subr.mxu0 0.0
    %1261 = vmatpush1.msra.mxu0 %v813
    %1262 = vmatprep.subr.mxu0 0.0
    %1263 = vmatpush1.msra.mxu0 %v814
    %1264 = vmatprep.subr.mxu0 0.0
    %1265 = vmatpush1.msra.mxu0 %v815
    %1266 = vmatprep.subr.mxu0 0.0
    %1267 = vmatpush1.msra.mxu0 %v816
    %1268 = vmatprep.subr.mxu0 0.0
    %1269 = vmatpush1.msra.mxu0 %v817
    %1270 = vmatprep.subr.mxu0 0.0
    %1271 = vmatpush1.msra.mxu0 %v818
    %1272 = vmatprep.subr.mxu0 0.0
    %1273 = vmatpush1.msra.mxu0 %v819
    %1274 = vmatprep.subr.mxu0 0.0
    %1275 = vmatpush1.msra.mxu0 %v820
    %1276 = vmatprep.subr.mxu0 0.0
    %1277 = vmatpush1.msra.mxu0 %v821
    %1278 = vmatprep.subr.mxu0 0.0
    %1279 = vmatpush1.msra.mxu0 %v822
    %1280 = vmatprep.subr.mxu0 0.0
    %1281 = vmatpush1.msra.mxu0 %v823
    %1282 = vmatprep.subr.mxu0 0.0
    %1283 = vmatpush1.msra.mxu0 %v824
    %1284 = vmatprep.subr.mxu0 0.0
    %1285 = vmatpush1.msra.mxu0 %v825
    %1286 = vmatprep.subr.mxu0 0.0
    %1287 = vmatpush1.msra.mxu0 0.0
    %1288 = vmatprep.subr.mxu0 0.0
    %1289 = vmatpush1.msra.mxu0 0.0
    %1290 = vmatprep.subr.mxu0 0.0
    %1291 = vmatpush1.msra.mxu0 0.0
    %1292 = vmatprep.subr.mxu0 0.0
    %1293 = vmatpush1.msra.mxu0 0.0
    %1294 = vmatprep.subr.mxu0 0.0
    %1295 = vmatpush1.msra.mxu0 0.0
    %1296 = vmatprep.subr.mxu0 0.0
    %1297 = vmatpush1.msra.mxu0 0.0
    %1298 = vmatprep.subr.mxu0 0.0
    %1299 = vmatpush1.msra.mxu0 0.0
    %1300 = vmatprep.subr.mxu0 0.0
    %1301 = vmatpush1.msra.mxu0 0.0
    %1302 = vmatprep.subr.mxu0 0.0
    %1303 = vmatpush1.msra.mxu0 0.0
    %1304 = vmatprep.subr.mxu0 0.0
    %1305 = vmatpush1.msra.mxu0 0.0
    %1306 = vmatprep.subr.mxu0 0.0
    %1307 = vmatpush1.msra.mxu0 0.0
    %1308 = vmatprep.mubr.f32.mxu0 %v1164
    %1309 = vmatmul.mubr.f32.gmra.mrb[0].mxu0 %v994
    %v1310 = vpop.f32.mrb[0].mxu0
    %v1311 = vadd.f32 0.0, %v1310
    %v1312 = vpop.f32.mrb[0].mxu0
    %1313 = vmatprep.mubr.f32.mxu0 %v1167
    %1314 = vmatmul.mubr.f32.gmra.mrb[0].mxu0 %v1000
    %v1315 = vpop.f32.mrb[0].mxu0
    %v1316 = vadd.f32 0.0, %v1315
    %v1317 = vpop.f32.mrb[0].mxu0
    %1318 = vdwg.mxu0
    %v1319 = vmax.f32 %v1236, %v1311
    %v1320 = vmax.f32 %v1241, %v1316
    %v1321 = vmax.f32 %v1161, %v1319
    %v1322 = vmax.f32 %v1162, %v1320
    %v1323 = vld [vmem:[%s5] sm:$0xff]
    %v1324 = vld [vmem:[%s5 + $0x8] sm:$0xff]
    %v1325 = vld [vmem:[%s5 + $0x10] sm:$0xff]
    %v1326 = vld [vmem:[%s5 + $0x18] sm:$0xff]
    %v1327 = vld [vmem:[%s5 + $0x20] sm:$0xff]
    %v1328 = vld [vmem:[%s5 + $0x28] sm:$0xff]
    %v1329 = vld [vmem:[%s5 + $0x30] sm:$0xff]
    %v1330 = vld [vmem:[%s5 + $0x38] sm:$0xff]
    %v1331 = vld [vmem:[%s5 + $0x40] sm:$0xff]
    %v1332 = vld [vmem:[%s5 + $0x48] sm:$0xff]
    %v1333 = vld [vmem:[%s5 + $0x50] sm:$0xff]
    %v1334 = vld [vmem:[%s5 + $0x58] sm:$0xff]
    %v1335 = vld [vmem:[%s5 + $0x60] sm:$0xff]
    %v1336 = vld [vmem:[%s5 + $0x68] sm:$0xff]
    %v1337 = vld [vmem:[%s5 + $0x70] sm:$0xff]
    %v1338 = vld [vmem:[%s5 + $0x78] sm:$0xff]
    %v1339 = vld [vmem:[%s5 + $0x80] sm:$0xff]
    %v1340 = vld [vmem:[%s5 + $0x88] sm:$0xff]
    %v1341 = vld [vmem:[%s5 + $0x90] sm:$0xff]
    %v1342 = vld [vmem:[%s5 + $0x98] sm:$0xff]
    %v1343 = vld [vmem:[%s5 + $0xa0] sm:$0xf]
    %v1344 = vld [vmem:[%s5 + $0xa8] sm:$0xf]
    %s1345 = scalar_lea.vmem %s5, 176
    %v1346 = vld [vmem:[%s1345] sm:$0xff]
    %v1347 = vld [vmem:[%s1345 + $0x8] sm:$0xff]
    %v1348 = vld [vmem:[%s1345 + $0x10] sm:$0xff]
    %v1349 = vld [vmem:[%s1345 + $0x18] sm:$0xff]
    %v1350 = vld [vmem:[%s1345 + $0x20] sm:$0xff]
    %v1351 = vld [vmem:[%s1345 + $0x28] sm:$0xff]
    %v1352 = vld [vmem:[%s1345 + $0x30] sm:$0xff]
    %v1353 = vld [vmem:[%s1345 + $0x38] sm:$0xff]
    %v1354 = vld [vmem:[%s1345 + $0x40] sm:$0xff]
    %v1355 = vld [vmem:[%s1345 + $0x48] sm:$0xff]
    %v1356 = vld [vmem:[%s1345 + $0x50] sm:$0xff]
    %v1357 = vld [vmem:[%s1345 + $0x58] sm:$0xff]
    %v1358 = vld [vmem:[%s1345 + $0x60] sm:$0xff]
    %v1359 = vld [vmem:[%s1345 + $0x68] sm:$0xff]
    %v1360 = vld [vmem:[%s1345 + $0x70] sm:$0xff]
    %v1361 = vld [vmem:[%s1345 + $0x78] sm:$0xff]
    %v1362 = vld [vmem:[%s1345 + $0x80] sm:$0xff]
    %v1363 = vld [vmem:[%s1345 + $0x88] sm:$0xff]
    %v1364 = vld [vmem:[%s1345 + $0x90] sm:$0xff]
    %v1365 = vld [vmem:[%s1345 + $0x98] sm:$0xff]
    %v1366 = vld [vmem:[%s1345 + $0xa0] sm:$0xf]
    %v1367 = vld [vmem:[%s1345 + $0xa8] sm:$0xf]
    %v1370 = vrot.slane %v1321, 1
    %v1371 = vrot.slane %v1322, 1
    %v1372 = vsel %vm139, %v1370, %v1371
    %vm1373 = vcmask 687104
    %v1374 = vsel %vm1373, %v1372, 0
    %v1376 = vsel %vm1373, %v1371, 0
    %v1379 = vsel %vm643, %v1366, 0
    %v1382 = vsel %vm643, %v1367, 0
    %1384 = vmatprep.subr.mxu0 %v1347
    %1385 = vmatpush1.msra.mxu0 %v1346
    %1386 = vmatprep.subr.mxu0 %v1349
    %1387 = vmatpush1.msra.mxu0 %v1348
    %1388 = vmatprep.subr.mxu0 %v1351
    %1389 = vmatpush1.msra.mxu0 %v1350
    %1390 = vmatprep.subr.mxu0 %v1353
    %1391 = vmatpush1.msra.mxu0 %v1352
    %1392 = vmatprep.subr.mxu0 %v1355
    %1393 = vmatpush1.msra.mxu0 %v1354
    %1394 = vmatprep.subr.mxu0 %v1357
    %1395 = vmatpush1.msra.mxu0 %v1356
    %1396 = vmatprep.subr.mxu0 %v1359
    %1397 = vmatpush1.msra.mxu0 %v1358
    %1398 = vmatprep.subr.mxu0 %v1361
    %1399 = vmatpush1.msra.mxu0 %v1360
    %1400 = vmatprep.subr.mxu0 %v1363
    %1401 = vmatpush1.msra.mxu0 %v1362
    %1402 = vmatprep.subr.mxu0 %v1365
    %1403 = vmatpush1.msra.mxu0 %v1364
    %1404 = vmatprep.subr.mxu0 %v1382
    %1405 = vmatpush1.msra.mxu0 %v1379
    %1406 = vmatprep.subr.mxu0 0.0
    %1407 = vmatpush1.msra.mxu0 0.0
    %1408 = vmatprep.subr.mxu0 0.0
    %1409 = vmatpush1.msra.mxu0 0.0
    %1410 = vmatprep.subr.mxu0 0.0
    %1411 = vmatpush1.msra.mxu0 0.0
    %1412 = vmatprep.subr.mxu0 0.0
    %1413 = vmatpush1.msra.mxu0 0.0
    %1414 = vmatprep.subr.mxu0 0.0
    %1415 = vmatpush1.msra.mxu0 0.0
    %1416 = vmatprep.subr.mxu0 0.0
    %1417 = vmatpush1.msra.mxu0 0.0
    %1418 = vmatprep.subr.mxu0 0.0
    %1419 = vmatpush1.msra.mxu0 0.0
    %1420 = vmatprep.subr.mxu0 0.0
    %1421 = vmatpush1.msra.mxu0 0.0
    %1422 = vmatprep.subr.mxu0 0.0
    %1423 = vmatpush1.msra.mxu0 0.0
    %1424 = vmatprep.subr.mxu0 0.0
    %1425 = vmatpush1.msra.mxu0 0.0
    %1426 = vmatprep.subr.mxu0 0.0
    %1427 = vmatpush1.msra.mxu0 0.0
    %1428 = vmatprep.subr.mxu0 0.0
    %1429 = vmatpush1.msra.mxu0 0.0
    %1430 = vmatprep.subr.mxu0 0.0
    %1431 = vmatpush1.msra.mxu0 0.0
    %1432 = vmatprep.subr.mxu0 0.0
    %1433 = vmatpush1.msra.mxu0 0.0
    %1434 = vmatprep.subr.mxu0 0.0
    %1435 = vmatpush1.msra.mxu0 0.0
    %1436 = vmatprep.subr.mxu0 0.0
    %1437 = vmatpush1.msra.mxu0 0.0
    %1438 = vmatprep.subr.mxu0 0.0
    %1439 = vmatpush1.msra.mxu0 0.0
    %1440 = vmatprep.subr.mxu0 0.0
    %1441 = vmatpush1.msra.mxu0 0.0
    %1442 = vmatprep.subr.mxu0 0.0
    %1443 = vmatpush1.msra.mxu0 0.0
    %1444 = vmatprep.subr.mxu0 0.0
    %1445 = vmatpush1.msra.mxu0 0.0
    %1446 = vmatprep.subr.mxu0 0.0
    %1447 = vmatpush1.msra.mxu0 0.0
    %1448 = vmatprep.mubr.f32.mxu0 0.0
    %1449 = vmatmul.mubr.f32.gmra.mrb[0].mxu0 %v1374
    %v1450 = vpop.f32.mrb[0].mxu0
    %v1451 = vadd.f32 0.0, %v1450
    %v1452 = vpop.f32.mrb[0].mxu0
    %v1453 = vadd.f32 0.0, %v1452
    %1454 = vmatprep.mubr.f32.mxu0 0.0
    %1455 = vmatmul.mubr.f32.gmra.mrb[0].mxu0 %v1376
    %v1456 = vpop.f32.mrb[0].mxu0
    %v1457 = vadd.f32 0.0, %v1456
    %v1458 = vpop.f32.mrb[0].mxu0
    %v1459 = vadd.f32 0.0, %v1458
    %1460 = vdwg.mxu0
    %v1461 = vsel %vm1373, %v1321, 0
    %v1463 = vsel %vm1373, %v1322, 0
    %v1466 = vsel %vm643, %v1343, 0
    %v1469 = vsel %vm643, %v1344, 0
    %1471 = vmatprep.subr.mxu0 %v1324
    %1472 = vmatpush1.msra.mxu0 %v1323
    %1473 = vmatprep.subr.mxu0 %v1326
    %1474 = vmatpush1.msra.mxu0 %v1325
    %1475 = vmatprep.subr.mxu0 %v1328
    %1476 = vmatpush1.msra.mxu0 %v1327
    %1477 = vmatprep.subr.mxu0 %v1330
    %1478 = vmatpush1.msra.mxu0 %v1329
    %1479 = vmatprep.subr.mxu0 %v1332
    %1480 = vmatpush1.msra.mxu0 %v1331
    %1481 = vmatprep.subr.mxu0 %v1334
    %1482 = vmatpush1.msra.mxu0 %v1333
    %1483 = vmatprep.subr.mxu0 %v1336
    %1484 = vmatpush1.msra.mxu0 %v1335
    %1485 = vmatprep.subr.mxu0 %v1338
    %1486 = vmatpush1.msra.mxu0 %v1337
    %1487 = vmatprep.subr.mxu0 %v1340
    %1488 = vmatpush1.msra.mxu0 %v1339
    %1489 = vmatprep.subr.mxu0 %v1342
    %1490 = vmatpush1.msra.mxu0 %v1341
    %1491 = vmatprep.subr.mxu0 %v1469
    %1492 = vmatpush1.msra.mxu0 %v1466
    %1493 = vmatprep.subr.mxu0 0.0
    %1494 = vmatpush1.msra.mxu0 0.0
    %1495 = vmatprep.subr.mxu0 0.0
    %1496 = vmatpush1.msra.mxu0 0.0
    %1497 = vmatprep.subr.mxu0 0.0
    %1498 = vmatpush1.msra.mxu0 0.0
    %1499 = vmatprep.subr.mxu0 0.0
    %1500 = vmatpush1.msra.mxu0 0.0
    %1501 = vmatprep.subr.mxu0 0.0
    %1502 = vmatpush1.msra.mxu0 0.0
    %1503 = vmatprep.subr.mxu0 0.0
    %1504 = vmatpush1.msra.mxu0 0.0
    %1505 = vmatprep.subr.mxu0 0.0
    %1506 = vmatpush1.msra.mxu0 0.0
    %1507 = vmatprep.subr.mxu0 0.0
    %1508 = vmatpush1.msra.mxu0 0.0
    %1509 = vmatprep.subr.mxu0 0.0
    %1510 = vmatpush1.msra.mxu0 0.0
    %1511 = vmatprep.subr.mxu0 0.0
    %1512 = vmatpush1.msra.mxu0 0.0
    %1513 = vmatprep.subr.mxu0 0.0
    %1514 = vmatpush1.msra.mxu0 0.0
    %1515 = vmatprep.subr.mxu0 0.0
    %1516 = vmatpush1.msra.mxu0 0.0
    %1517 = vmatprep.subr.mxu0 0.0
    %1518 = vmatpush1.msra.mxu0 0.0
    %1519 = vmatprep.subr.mxu0 0.0
    %1520 = vmatpush1.msra.mxu0 0.0
    %1521 = vmatprep.subr.mxu0 0.0
    %1522 = vmatpush1.msra.mxu0 0.0
    %1523 = vmatprep.subr.mxu0 0.0
    %1524 = vmatpush1.msra.mxu0 0.0
    %1525 = vmatprep.subr.mxu0 0.0
    %1526 = vmatpush1.msra.mxu0 0.0
    %1527 = vmatprep.subr.mxu0 0.0
    %1528 = vmatpush1.msra.mxu0 0.0
    %1529 = vmatprep.subr.mxu0 0.0
    %1530 = vmatpush1.msra.mxu0 0.0
    %1531 = vmatprep.subr.mxu0 0.0
    %1532 = vmatpush1.msra.mxu0 0.0
    %1533 = vmatprep.subr.mxu0 0.0
    %1534 = vmatpush1.msra.mxu0 0.0
    %1535 = vmatprep.mubr.f32.mxu0 0.0
    %1536 = vmatmul.mubr.f32.gmra.mrb[0].mxu0 %v1461
    %v1537 = vpop.f32.mrb[0].mxu0
    %v1538 = vadd.f32 %v1451, %v1537
    %v1539 = vpop.f32.mrb[0].mxu0
    %v1540 = vadd.f32 %v1453, %v1539
    %1541 = vmatprep.mubr.f32.mxu0 0.0
    %1542 = vmatmul.mubr.f32.gmra.mrb[0].mxu0 %v1463
    %v1543 = vpop.f32.mrb[0].mxu0
    %v1544 = vadd.f32 %v1457, %v1543
    %v1545 = vpop.f32.mrb[0].mxu0
    %v1546 = vadd.f32 %v1459, %v1545
    %1547 = vdwg.mxu0
    %s1548 = scalar_lea.vmem %s5, 352
    %v1549 = vld [vmem:[%s1548] sm:$0xff]
    %v1550 = vld [vmem:[%s1548 + $0x8] sm:$0xff]
    %v1551 = vld [vmem:[%s1548 + $0x10] sm:$0xff]
    %v1552 = vld [vmem:[%s1548 + $0x18] sm:$0xff]
    %v1553 = vld [vmem:[%s1548 + $0x20] sm:$0xff]
    %v1554 = vld [vmem:[%s1548 + $0x28] sm:$0xff]
    %v1555 = vld [vmem:[%s1548 + $0x30] sm:$0xff]
    %v1556 = vld [vmem:[%s1548 + $0x38] sm:$0xff]
    %v1557 = vld [vmem:[%s1548 + $0x40] sm:$0xff]
    %v1558 = vld [vmem:[%s1548 + $0x48] sm:$0xff]
    %v1559 = vld [vmem:[%s1548 + $0x50] sm:$0xff]
    %v1560 = vld [vmem:[%s1548 + $0x58] sm:$0xff]
    %v1561 = vld [vmem:[%s1548 + $0x60] sm:$0xff]
    %v1562 = vld [vmem:[%s1548 + $0x68] sm:$0xff]
    %v1563 = vld [vmem:[%s1548 + $0x70] sm:$0xff]
    %v1564 = vld [vmem:[%s1548 + $0x78] sm:$0xff]
    %v1565 = vld [vmem:[%s1548 + $0x80] sm:$0xff]
    %v1566 = vld [vmem:[%s1548 + $0x88] sm:$0xff]
    %v1567 = vld [vmem:[%s1548 + $0x90] sm:$0xff]
    %v1568 = vld [vmem:[%s1548 + $0x98] sm:$0xff]
    %v1569 = vld [vmem:[%s1548 + $0xa0] sm:$0xf]
    %v1570 = vld [vmem:[%s1548 + $0xa8] sm:$0xf]
    %v1571 = vrot.slane %v1321, 2
    %v1572 = vrot.slane %v1322, 2
    %v1573 = vsel %vm367, %v1571, %v1572
    %v1574 = vsel %vm1373, %v1573, 0
    %v1576 = vsel %vm1373, %v1572, 0
    %v1579 = vsel %vm643, %v1569, 0
    %v1582 = vsel %vm643, %v1570, 0
    %1584 = vmatprep.subr.mxu0 %v1550
    %1585 = vmatpush1.msra.mxu0 %v1549
    %1586 = vmatprep.subr.mxu0 %v1552
    %1587 = vmatpush1.msra.mxu0 %v1551
    %1588 = vmatprep.subr.mxu0 %v1554
    %1589 = vmatpush1.msra.mxu0 %v1553
    %1590 = vmatprep.subr.mxu0 %v1556
    %1591 = vmatpush1.msra.mxu0 %v1555
    %1592 = vmatprep.subr.mxu0 %v1558
    %1593 = vmatpush1.msra.mxu0 %v1557
    %1594 = vmatprep.subr.mxu0 %v1560
    %1595 = vmatpush1.msra.mxu0 %v1559
    %1596 = vmatprep.subr.mxu0 %v1562
    %1597 = vmatpush1.msra.mxu0 %v1561
    %1598 = vmatprep.subr.mxu0 %v1564
    %1599 = vmatpush1.msra.mxu0 %v1563
    %1600 = vmatprep.subr.mxu0 %v1566
    %1601 = vmatpush1.msra.mxu0 %v1565
    %1602 = vmatprep.subr.mxu0 %v1568
    %1603 = vmatpush1.msra.mxu0 %v1567
    %1604 = vmatprep.subr.mxu0 %v1582
    %1605 = vmatpush1.msra.mxu0 %v1579
    %1606 = vmatprep.subr.mxu0 0.0
    %1607 = vmatpush1.msra.mxu0 0.0
    %1608 = vmatprep.subr.mxu0 0.0
    %1609 = vmatpush1.msra.mxu0 0.0
    %1610 = vmatprep.subr.mxu0 0.0
    %1611 = vmatpush1.msra.mxu0 0.0
    %1612 = vmatprep.subr.mxu0 0.0
    %1613 = vmatpush1.msra.mxu0 0.0
    %1614 = vmatprep.subr.mxu0 0.0
    %1615 = vmatpush1.msra.mxu0 0.0
    %1616 = vmatprep.subr.mxu0 0.0
    %1617 = vmatpush1.msra.mxu0 0.0
    %1618 = vmatprep.subr.mxu0 0.0
    %1619 = vmatpush1.msra.mxu0 0.0
    %1620 = vmatprep.subr.mxu0 0.0
    %1621 = vmatpush1.msra.mxu0 0.0
    %1622 = vmatprep.subr.mxu0 0.0
    %1623 = vmatpush1.msra.mxu0 0.0
    %1624 = vmatprep.subr.mxu0 0.0
    %1625 = vmatpush1.msra.mxu0 0.0
    %1626 = vmatprep.subr.mxu0 0.0
    %1627 = vmatpush1.msra.mxu0 0.0
    %1628 = vmatprep.subr.mxu0 0.0
    %1629 = vmatpush1.msra.mxu0 0.0
    %1630 = vmatprep.subr.mxu0 0.0
    %1631 = vmatpush1.msra.mxu0 0.0
    %1632 = vmatprep.subr.mxu0 0.0
    %1633 = vmatpush1.msra.mxu0 0.0
    %1634 = vmatprep.subr.mxu0 0.0
    %1635 = vmatpush1.msra.mxu0 0.0
    %1636 = vmatprep.subr.mxu0 0.0
    %1637 = vmatpush1.msra.mxu0 0.0
    %1638 = vmatprep.subr.mxu0 0.0
    %1639 = vmatpush1.msra.mxu0 0.0
    %1640 = vmatprep.subr.mxu0 0.0
    %1641 = vmatpush1.msra.mxu0 0.0
    %1642 = vmatprep.subr.mxu0 0.0
    %1643 = vmatpush1.msra.mxu0 0.0
    %1644 = vmatprep.subr.mxu0 0.0
    %1645 = vmatpush1.msra.mxu0 0.0
    %1646 = vmatprep.subr.mxu0 0.0
    %1647 = vmatpush1.msra.mxu0 0.0
    %1648 = vmatprep.mubr.f32.mxu0 0.0
    %1649 = vmatmul.mubr.f32.gmra.mrb[0].mxu0 %v1574
    %v1650 = vpop.f32.mrb[0].mxu0
    %v1651 = vadd.f32 0.0, %v1650
    %v1652 = vpop.f32.mrb[0].mxu0
    %v1653 = vadd.f32 0.0, %v1652
    %1654 = vmatprep.mubr.f32.mxu0 0.0
    %1655 = vmatmul.mubr.f32.gmra.mrb[0].mxu0 %v1576
    %v1656 = vpop.f32.mrb[0].mxu0
    %v1657 = vadd.f32 0.0, %v1656
    %v1658 = vpop.f32.mrb[0].mxu0
    %v1659 = vadd.f32 0.0, %v1658
    %1660 = vdwg.mxu0
    %v1661 = vadd.f32 %v1538, %v1651
    %v1662 = vadd.f32 %v1540, %v1653
    %v1663 = vadd.f32 %v1544, %v1657
    %v1664 = vadd.f32 %v1546, %v1659
    %s1665 = scalar_lea.vmem %s5, 528
    %v1666 = vld [vmem:[%s1665] sm:$0xff]
    %v1667 = vld [vmem:[%s1665 + $0x8] sm:$0xff]
    %v1668 = vld [vmem:[%s1665 + $0x10] sm:$0xff]
    %v1669 = vld [vmem:[%s1665 + $0x18] sm:$0xff]
    %v1670 = vld [vmem:[%s1665 + $0x20] sm:$0xff]
    %v1671 = vld [vmem:[%s1665 + $0x28] sm:$0xff]
    %v1672 = vld [vmem:[%s1665 + $0x30] sm:$0xff]
    %v1673 = vld [vmem:[%s1665 + $0x38] sm:$0xff]
    %v1674 = vld [vmem:[%s1665 + $0x40] sm:$0xff]
    %v1675 = vld [vmem:[%s1665 + $0x48] sm:$0xff]
    %v1676 = vld [vmem:[%s1665 + $0x50] sm:$0xff]
    %v1677 = vld [vmem:[%s1665 + $0x58] sm:$0xff]
    %v1678 = vld [vmem:[%s1665 + $0x60] sm:$0xff]
    %v1679 = vld [vmem:[%s1665 + $0x68] sm:$0xff]
    %v1680 = vld [vmem:[%s1665 + $0x70] sm:$0xff]
    %v1681 = vld [vmem:[%s1665 + $0x78] sm:$0xff]
    %v1682 = vld [vmem:[%s1665 + $0x80] sm:$0xff]
    %v1683 = vld [vmem:[%s1665 + $0x88] sm:$0xff]
    %v1684 = vld [vmem:[%s1665 + $0x90] sm:$0xff]
    %v1685 = vld [vmem:[%s1665 + $0x98] sm:$0xff]
    %v1686 = vld [vmem:[%s1665 + $0xa0] sm:$0xf]
    %v1687 = vld [vmem:[%s1665 + $0xa8] sm:$0xf]
    %v1688 = vrot.slane %v1321, 3
    %v1689 = vrot.slane %v1322, 3
    %v1690 = vsel %vm505, %v1688, %v1689
    %v1691 = vsel %vm1373, %v1690, 0
    %v1693 = vsel %vm1373, %v1689, 0
    %v1696 = vsel %vm643, %v1686, 0
    %v1699 = vsel %vm643, %v1687, 0
    %1701 = vmatprep.subr.mxu0 %v1667
    %1702 = vmatpush1.msra.mxu0 %v1666
    %1703 = vmatprep.subr.mxu0 %v1669
    %1704 = vmatpush1.msra.mxu0 %v1668
    %1705 = vmatprep.subr.mxu0 %v1671
    %1706 = vmatpush1.msra.mxu0 %v1670
    %1707 = vmatprep.subr.mxu0 %v1673
    %1708 = vmatpush1.msra.mxu0 %v1672
    %1709 = vmatprep.subr.mxu0 %v1675
    %1710 = vmatpush1.msra.mxu0 %v1674
    %1711 = vmatprep.subr.mxu0 %v1677
    %1712 = vmatpush1.msra.mxu0 %v1676
    %1713 = vmatprep.subr.mxu0 %v1679
    %1714 = vmatpush1.msra.mxu0 %v1678
    %1715 = vmatprep.subr.mxu0 %v1681
    %1716 = vmatpush1.msra.mxu0 %v1680
    %1717 = vmatprep.subr.mxu0 %v1683
    %1718 = vmatpush1.msra.mxu0 %v1682
    %1719 = vmatprep.subr.mxu0 %v1685
    %1720 = vmatpush1.msra.mxu0 %v1684
    %1721 = vmatprep.subr.mxu0 %v1699
    %1722 = vmatpush1.msra.mxu0 %v1696
    %1723 = vmatprep.subr.mxu0 0.0
    %1724 = vmatpush1.msra.mxu0 0.0
    %1725 = vmatprep.subr.mxu0 0.0
    %1726 = vmatpush1.msra.mxu0 0.0
    %1727 = vmatprep.subr.mxu0 0.0
    %1728 = vmatpush1.msra.mxu0 0.0
    %1729 = vmatprep.subr.mxu0 0.0
    %1730 = vmatpush1.msra.mxu0 0.0
    %1731 = vmatprep.subr.mxu0 0.0
    %1732 = vmatpush1.msra.mxu0 0.0
    %1733 = vmatprep.subr.mxu0 0.0
    %1734 = vmatpush1.msra.mxu0 0.0
    %1735 = vmatprep.subr.mxu0 0.0
    %1736 = vmatpush1.msra.mxu0 0.0
    %1737 = vmatprep.subr.mxu0 0.0
    %1738 = vmatpush1.msra.mxu0 0.0
    %1739 = vmatprep.subr.mxu0 0.0
    %1740 = vmatpush1.msra.mxu0 0.0
    %1741 = vmatprep.subr.mxu0 0.0
    %1742 = vmatpush1.msra.mxu0 0.0
    %1743 = vmatprep.subr.mxu0 0.0
    %1744 = vmatpush1.msra.mxu0 0.0
    %1745 = vmatprep.subr.mxu0 0.0
    %1746 = vmatpush1.msra.mxu0 0.0
    %1747 = vmatprep.subr.mxu0 0.0
    %1748 = vmatpush1.msra.mxu0 0.0
    %1749 = vmatprep.subr.mxu0 0.0
    %1750 = vmatpush1.msra.mxu0 0.0
    %1751 = vmatprep.subr.mxu0 0.0
    %1752 = vmatpush1.msra.mxu0 0.0
    %1753 = vmatprep.subr.mxu0 0.0
    %1754 = vmatpush1.msra.mxu0 0.0
    %1755 = vmatprep.subr.mxu0 0.0
    %1756 = vmatpush1.msra.mxu0 0.0
    %1757 = vmatprep.subr.mxu0 0.0
    %1758 = vmatpush1.msra.mxu0 0.0
    %1759 = vmatprep.subr.mxu0 0.0
    %1760 = vmatpush1.msra.mxu0 0.0
    %1761 = vmatprep.subr.mxu0 0.0
    %1762 = vmatpush1.msra.mxu0 0.0
    %1763 = vmatprep.subr.mxu0 0.0
    %1764 = vmatpush1.msra.mxu0 0.0
    %1765 = vmatprep.mubr.f32.mxu0 0.0
    %1766 = vmatmul.mubr.f32.gmra.mrb[0].mxu0 %v1691
    %v1767 = vpop.f32.mrb[0].mxu0
    %v1768 = vadd.f32 0.0, %v1767
    %v1769 = vpop.f32.mrb[0].mxu0
    %v1770 = vadd.f32 0.0, %v1769
    %1771 = vmatprep.mubr.f32.mxu0 0.0
    %1772 = vmatmul.mubr.f32.gmra.mrb[0].mxu0 %v1693
    %v1773 = vpop.f32.mrb[0].mxu0
    %v1774 = vadd.f32 0.0, %v1773
    %v1775 = vpop.f32.mrb[0].mxu0
    %v1776 = vadd.f32 0.0, %v1775
    %1777 = vdwg.mxu0
    %v1778 = vadd.f32 %v1661, %v1768
    %v1779 = vadd.f32 %v1662, %v1770
    %v1780 = vadd.f32 %v1663, %v1774
    %v1781 = vadd.f32 %v1664, %v1776
    %s1782 = scalar_lea.vmem %s5, 704
    %v1783 = vld [vmem:[%s1782] sm:$0xff]
    %v1784 = vld [vmem:[%s1782 + $0x8] sm:$0xff]
    %v1785 = vld [vmem:[%s1782 + $0x10] sm:$0xff]
    %v1786 = vld [vmem:[%s1782 + $0x18] sm:$0xff]
    %v1787 = vld [vmem:[%s1782 + $0x20] sm:$0xff]
    %v1788 = vld [vmem:[%s1782 + $0x28] sm:$0xff]
    %v1789 = vld [vmem:[%s1782 + $0x30] sm:$0xff]
    %v1790 = vld [vmem:[%s1782 + $0x38] sm:$0xff]
    %v1791 = vld [vmem:[%s1782 + $0x40] sm:$0xff]
    %v1792 = vld [vmem:[%s1782 + $0x48] sm:$0xff]
    %v1793 = vld [vmem:[%s1782 + $0x50] sm:$0xff]
    %v1794 = vld [vmem:[%s1782 + $0x58] sm:$0xff]
    %v1795 = vld [vmem:[%s1782 + $0x60] sm:$0xff]
    %v1796 = vld [vmem:[%s1782 + $0x68] sm:$0xff]
    %v1797 = vld [vmem:[%s1782 + $0x70] sm:$0xff]
    %v1798 = vld [vmem:[%s1782 + $0x78] sm:$0xff]
    %v1799 = vld [vmem:[%s1782 + $0x80] sm:$0xff]
    %v1800 = vld [vmem:[%s1782 + $0x88] sm:$0xff]
    %v1801 = vld [vmem:[%s1782 + $0x90] sm:$0xff]
    %v1802 = vld [vmem:[%s1782 + $0x98] sm:$0xff]
    %v1803 = vld [vmem:[%s1782 + $0xa0] sm:$0xf]
    %v1804 = vld [vmem:[%s1782 + $0xa8] sm:$0xf]
    %v1805 = vrot.slane %v1321, 4
    %v1806 = vrot.slane %v1322, 4
    %v1807 = vsel %vm643, %v1805, %v1806
    %v1808 = vsel %vm1373, %v1807, 0
    %v1810 = vsel %vm1373, %v1806, 0
    %v1813 = vsel %vm643, %v1803, 0
    %v1816 = vsel %vm643, %v1804, 0
    %1818 = vmatprep.subr.mxu0 %v1784
    %1819 = vmatpush1.msra.mxu0 %v1783
    %1820 = vmatprep.subr.mxu0 %v1786
    %1821 = vmatpush1.msra.mxu0 %v1785
    %1822 = vmatprep.subr.mxu0 %v1788
    %1823 = vmatpush1.msra.mxu0 %v1787
    %1824 = vmatprep.subr.mxu0 %v1790
    %1825 = vmatpush1.msra.mxu0 %v1789
    %1826 = vmatprep.subr.mxu0 %v1792
    %1827 = vmatpush1.msra.mxu0 %v1791
    %1828 = vmatprep.subr.mxu0 %v1794
    %1829 = vmatpush1.msra.mxu0 %v1793
    %1830 = vmatprep.subr.mxu0 %v1796
    %1831 = vmatpush1.msra.mxu0 %v1795
    %1832 = vmatprep.subr.mxu0 %v1798
    %1833 = vmatpush1.msra.mxu0 %v1797
    %1834 = vmatprep.subr.mxu0 %v1800
    %1835 = vmatpush1.msra.mxu0 %v1799
    %1836 = vmatprep.subr.mxu0 %v1802
    %1837 = vmatpush1.msra.mxu0 %v1801
    %1838 = vmatprep.subr.mxu0 %v1816
    %1839 = vmatpush1.msra.mxu0 %v1813
    %1840 = vmatprep.subr.mxu0 0.0
    %1841 = vmatpush1.msra.mxu0 0.0
    %1842 = vmatprep.subr.mxu0 0.0
    %1843 = vmatpush1.msra.mxu0 0.0
    %1844 = vmatprep.subr.mxu0 0.0
    %1845 = vmatpush1.msra.mxu0 0.0
    %1846 = vmatprep.subr.mxu0 0.0
    %1847 = vmatpush1.msra.mxu0 0.0
    %1848 = vmatprep.subr.mxu0 0.0
    %1849 = vmatpush1.msra.mxu0 0.0
    %1850 = vmatprep.subr.mxu0 0.0
    %1851 = vmatpush1.msra.mxu0 0.0
    %1852 = vmatprep.subr.mxu0 0.0
    %1853 = vmatpush1.msra.mxu0 0.0
    %1854 = vmatprep.subr.mxu0 0.0
    %1855 = vmatpush1.msra.mxu0 0.0
    %1856 = vmatprep.subr.mxu0 0.0
    %1857 = vmatpush1.msra.mxu0 0.0
    %1858 = vmatprep.subr.mxu0 0.0
    %1859 = vmatpush1.msra.mxu0 0.0
    %1860 = vmatprep.subr.mxu0 0.0
    %1861 = vmatpush1.msra.mxu0 0.0
    %1862 = vmatprep.subr.mxu0 0.0
    %1863 = vmatpush1.msra.mxu0 0.0
    %1864 = vmatprep.subr.mxu0 0.0
    %1865 = vmatpush1.msra.mxu0 0.0
    %1866 = vmatprep.subr.mxu0 0.0
    %1867 = vmatpush1.msra.mxu0 0.0
    %1868 = vmatprep.subr.mxu0 0.0
    %1869 = vmatpush1.msra.mxu0 0.0
    %1870 = vmatprep.subr.mxu0 0.0
    %1871 = vmatpush1.msra.mxu0 0.0
    %1872 = vmatprep.subr.mxu0 0.0
    %1873 = vmatpush1.msra.mxu0 0.0
    %1874 = vmatprep.subr.mxu0 0.0
    %1875 = vmatpush1.msra.mxu0 0.0
    %1876 = vmatprep.subr.mxu0 0.0
    %1877 = vmatpush1.msra.mxu0 0.0
    %1878 = vmatprep.subr.mxu0 0.0
    %1879 = vmatpush1.msra.mxu0 0.0
    %1880 = vmatprep.subr.mxu0 0.0
    %1881 = vmatpush1.msra.mxu0 0.0
    %1882 = vmatprep.mubr.f32.mxu0 0.0
    %1883 = vmatmul.mubr.f32.gmra.mrb[0].mxu0 %v1808
    %v1884 = vpop.f32.mrb[0].mxu0
    %v1885 = vadd.f32 0.0, %v1884
    %v1886 = vpop.f32.mrb[0].mxu0
    %v1887 = vadd.f32 0.0, %v1886
    %1888 = vmatprep.mubr.f32.mxu0 0.0
    %1889 = vmatmul.mubr.f32.gmra.mrb[0].mxu0 %v1810
    %v1890 = vpop.f32.mrb[0].mxu0
    %v1891 = vadd.f32 0.0, %v1890
    %v1892 = vpop.f32.mrb[0].mxu0
    %v1893 = vadd.f32 0.0, %v1892
    %1894 = vdwg.mxu0
    %v1895 = vadd.f32 %v1778, %v1885
    %v1896 = vadd.f32 %v1779, %v1887
    %v1897 = vadd.f32 %v1780, %v1891
    %v1898 = vadd.f32 %v1781, %v1893
    %v1900 = vlaneseq
    %v1901 = vshrl.u32 %v1900, 7
    %v1902 = vsub.s32 0, %v1901
    %v1903 = vrot.slane %v52, %v1902
    %v1904 = vlaneseq
    %v1905 = vshrl.u32 %v1904, 7
    %v1906 = vsub.s32 1, %v1905
    %v1907 = vrot.slane %v52, %v1906
    %v1910 = vadd.f32 %v1895, %v1903
    %v1911 = vadd.f32 %v1896, %v1907
    %v1912 = vadd.f32 %v1897, %v1903
    %v1913 = vadd.f32 %v1898, %v1907
    %v1914 = vmax.f32 %v1910, 0.0
    %v1915 = vmax.f32 %v1911, 0.0
    %v1916 = vmax.f32 %v1912, 0.0
    %v1917 = vmax.f32 %v1913, 0.0
    %v1918 = vld [vmem:[%s8] sm:$0xff]
    %v1919 = vld [vmem:[%s8 + $0x8] sm:$0xff]
    %v1920 = vld [vmem:[%s8 + $0x10] sm:$0xff]
    %v1921 = vld [vmem:[%s8 + $0x18] sm:$0xff]
    %v1922 = vld [vmem:[%s8 + $0x20] sm:$0xff]
    %v1923 = vld [vmem:[%s8 + $0x28] sm:$0xff]
    %v1924 = vld [vmem:[%s8 + $0x30] sm:$0xff]
    %v1925 = vld [vmem:[%s8 + $0x38] sm:$0xff]
    %v1926 = vld [vmem:[%s8 + $0x40] sm:$0xff]
    %v1927 = vld [vmem:[%s8 + $0x48] sm:$0xff]
    %v1928 = vld [vmem:[%s8 + $0x50] sm:$0xff]
    %v1929 = vld [vmem:[%s8 + $0x58] sm:$0xff]
    %v1930 = vld [vmem:[%s8 + $0x60] sm:$0xff]
    %v1931 = vld [vmem:[%s8 + $0x68] sm:$0xff]
    %v1932 = vld [vmem:[%s8 + $0x70] sm:$0xff]
    %v1933 = vld [vmem:[%s8 + $0x78] sm:$0xff]
    %v1934 = vld [vmem:[%s8 + $0x80] sm:$0xff]
    %v1935 = vld [vmem:[%s8 + $0x88] sm:$0xff]
    %v1936 = vld [vmem:[%s8 + $0x90] sm:$0xff]
    %v1937 = vld [vmem:[%s8 + $0x98] sm:$0xff]
    %s1938 = scalar_lea.vmem %s8, 160
    %v1939 = vld [vmem:[%s1938] sm:$0xff]
    %v1940 = vld [vmem:[%s1938 + $0x8] sm:$0xff]
    %v1941 = vld [vmem:[%s1938 + $0x10] sm:$0xff]
    %v1942 = vld [vmem:[%s1938 + $0x18] sm:$0xff]
    %v1943 = vld [vmem:[%s1938 + $0x20] sm:$0xff]
    %v1944 = vld [vmem:[%s1938 + $0x28] sm:$0xff]
    %v1945 = vld [vmem:[%s1938 + $0x30] sm:$0xff]
    %v1946 = vld [vmem:[%s1938 + $0x38] sm:$0xff]
    %v1947 = vld [vmem:[%s1938 + $0x40] sm:$0xff]
    %v1948 = vld [vmem:[%s1938 + $0x48] sm:$0xff]
    %v1949 = vld [vmem:[%s1938 + $0x50] sm:$0xff]
    %v1950 = vld [vmem:[%s1938 + $0x58] sm:$0xff]
    %v1951 = vld [vmem:[%s1938 + $0x60] sm:$0xff]
    %v1952 = vld [vmem:[%s1938 + $0x68] sm:$0xff]
    %v1953 = vld [vmem:[%s1938 + $0x70] sm:$0xff]
    %v1954 = vld [vmem:[%s1938 + $0x78] sm:$0xff]
    %v1955 = vld [vmem:[%s1938 + $0x80] sm:$0xff]
    %v1956 = vld [vmem:[%s1938 + $0x88] sm:$0xff]
    %v1957 = vld [vmem:[%s1938 + $0x90] sm:$0xff]
    %v1958 = vld [vmem:[%s1938 + $0x98] sm:$0xff]
    %v1959 = vld [vmem:[%s7] sm:$0x1f]
    %vm1960 = vcmask 80896
    %v1962 = vsel %vm1960, %v1959, 0
    %vm1964 = vcmask 1041408
    %v1966 = vsel %vm1964, %v1916, 0
    %v1969 = vsel %vm1964, %v1917, 0
    %1971 = vmatprep.subr.mxu0 %v1915
    %1972 = vmatpush1.msra.mxu0 %v1914
    %1973 = vmatprep.subr.mxu0 %v1969
    %1974 = vmatpush1.msra.mxu0 %v1966
    %1975 = vmatprep.subr.mxu0 0.0
    %1976 = vmatpush1.msra.mxu0 0.0
    %1977 = vmatprep.subr.mxu0 0.0
    %1978 = vmatpush1.msra.mxu0 0.0
    %1979 = vmatprep.subr.mxu0 0.0
    %1980 = vmatpush1.msra.mxu0 0.0
    %1981 = vmatprep.subr.mxu0 0.0
    %1982 = vmatpush1.msra.mxu0 0.0
    %1983 = vmatprep.subr.mxu0 0.0
    %1984 = vmatpush1.msra.mxu0 0.0
    %1985 = vmatprep.subr.mxu0 0.0
    %1986 = vmatpush1.msra.mxu0 0.0
    %1987 = vmatprep.subr.mxu0 0.0
    %1988 = vmatpush1.msra.mxu0 0.0
    %1989 = vmatprep.subr.mxu0 0.0
    %1990 = vmatpush1.msra.mxu0 0.0
    %1991 = vmatprep.subr.mxu0 0.0
    %1992 = vmatpush1.msra.mxu0 0.0
    %1993 = vmatprep.subr.mxu0 0.0
    %1994 = vmatpush1.msra.mxu0 0.0
    %1995 = vmatprep.subr.mxu0 0.0
    %1996 = vmatpush1.msra.mxu0 0.0
    %1997 = vmatprep.subr.mxu0 0.0
    %1998 = vmatpush1.msra.mxu0 0.0
    %1999 = vmatprep.subr.mxu0 0.0
    %2000 = vmatpush1.msra.mxu0 0.0
    %2001 = vmatprep.subr.mxu0 0.0
    %2002 = vmatpush1.msra.mxu0 0.0
    %2003 = vmatprep.subr.mxu0 0.0
    %2004 = vmatpush1.msra.mxu0 0.0
    %2005 = vmatprep.subr.mxu0 0.0
    %2006 = vmatpush1.msra.mxu0 0.0
    %2007 = vmatprep.subr.mxu0 0.0
    %2008 = vmatpush1.msra.mxu0 0.0
    %2009 = vmatprep.subr.mxu0 0.0
    %2010 = vmatpush1.msra.mxu0 0.0
    %2011 = vmatprep.subr.mxu0 0.0
    %2012 = vmatpush1.msra.mxu0 0.0
    %2013 = vmatprep.subr.mxu0 0.0
    %2014 = vmatpush1.msra.mxu0 0.0
    %2015 = vmatprep.subr.mxu0 0.0
    %2016 = vmatpush1.msra.mxu0 0.0
    %2017 = vmatprep.subr.mxu0 0.0
    %2018 = vmatpush1.msra.mxu0 0.0
    %2019 = vmatprep.subr.mxu0 0.0
    %2020 = vmatpush1.msra.mxu0 0.0
    %2021 = vmatprep.subr.mxu0 0.0
    %2022 = vmatpush1.msra.mxu0 0.0
    %2023 = vmatprep.subr.mxu0 0.0
    %2024 = vmatpush1.msra.mxu0 0.0
    %2025 = vmatprep.subr.mxu0 0.0
    %2026 = vmatpush1.msra.mxu0 0.0
    %2027 = vmatprep.subr.mxu0 0.0
    %2028 = vmatpush1.msra.mxu0 0.0
    %2029 = vmatprep.subr.mxu0 0.0
    %2030 = vmatpush1.msra.mxu0 0.0
    %2031 = vmatprep.subr.mxu0 0.0
    %2032 = vmatpush1.msra.mxu0 0.0
    %2033 = vmatprep.subr.mxu0 0.0
    %2034 = vmatpush1.msra.mxu0 0.0
    %2035 = vmatprep.mubr.f32.mxu0 0.0
    %2036 = vmatmul.mubr.f32.gmra.mrb[0].mxu0 %v1962
    %v2037 = vpop.f32.mrb[0].mxu0
    %v2038 = vadd.f32 0.0, %v2037
    %v2039 = vpop.f32.mrb[0].mxu0
    %v2040 = vadd.f32 0.0, %v2039
    %2041 = vdwg.mxu0
    %s2042 = scalar_lea.vmem %s7, 8
    %v2043 = vld [vmem:[%s2042] sm:$0x1f]
    %v2045 = vsel %vm1960, %v2043, 0
    %2047 = vmatprep.subr.mxu0 %v1915
    %2048 = vmatpush1.msra.mxu0 %v1914
    %2049 = vmatprep.subr.mxu0 %v1969
    %2050 = vmatpush1.msra.mxu0 %v1966
    %2051 = vmatprep.subr.mxu0 0.0
    %2052 = vmatpush1.msra.mxu0 0.0
    %2053 = vmatprep.subr.mxu0 0.0
    %2054 = vmatpush1.msra.mxu0 0.0
    %2055 = vmatprep.subr.mxu0 0.0
    %2056 = vmatpush1.msra.mxu0 0.0
    %2057 = vmatprep.subr.mxu0 0.0
    %2058 = vmatpush1.msra.mxu0 0.0
    %2059 = vmatprep.subr.mxu0 0.0
    %2060 = vmatpush1.msra.mxu0 0.0
    %2061 = vmatprep.subr.mxu0 0.0
    %2062 = vmatpush1.msra.mxu0 0.0
    %2063 = vmatprep.subr.mxu0 0.0
    %2064 = vmatpush1.msra.mxu0 0.0
    %2065 = vmatprep.subr.mxu0 0.0
    %2066 = vmatpush1.msra.mxu0 0.0
    %2067 = vmatprep.subr.mxu0 0.0
    %2068 = vmatpush1.msra.mxu0 0.0
    %2069 = vmatprep.subr.mxu0 0.0
    %2070 = vmatpush1.msra.mxu0 0.0
    %2071 = vmatprep.subr.mxu0 0.0
    %2072 = vmatpush1.msra.mxu0 0.0
    %2073 = vmatprep.subr.mxu0 0.0
    %2074 = vmatpush1.msra.mxu0 0.0
    %2075 = vmatprep.subr.mxu0 0.0
    %2076 = vmatpush1.msra.mxu0 0.0
    %2077 = vmatprep.subr.mxu0 0.0
    %2078 = vmatpush1.msra.mxu0 0.0
    %2079 = vmatprep.subr.mxu0 0.0
    %2080 = vmatpush1.msra.mxu0 0.0
    %2081 = vmatprep.subr.mxu0 0.0
    %2082 = vmatpush1.msra.mxu0 0.0
    %2083 = vmatprep.subr.mxu0 0.0
    %2084 = vmatpush1.msra.mxu0 0.0
    %2085 = vmatprep.subr.mxu0 0.0
    %2086 = vmatpush1.msra.mxu0 0.0
    %2087 = vmatprep.subr.mxu0 0.0
    %2088 = vmatpush1.msra.mxu0 0.0
    %2089 = vmatprep.subr.mxu0 0.0
    %2090 = vmatpush1.msra.mxu0 0.0
    %2091 = vmatprep.subr.mxu0 0.0
    %2092 = vmatpush1.msra.mxu0 0.0
    %2093 = vmatprep.subr.mxu0 0.0
    %2094 = vmatpush1.msra.mxu0 0.0
    %2095 = vmatprep.subr.mxu0 0.0
    %2096 = vmatpush1.msra.mxu0 0.0
    %2097 = vmatprep.subr.mxu0 0.0
    %2098 = vmatpush1.msra.mxu0 0.0
    %2099 = vmatprep.subr.mxu0 0.0
    %2100 = vmatpush1.msra.mxu0 0.0
    %2101 = vmatprep.subr.mxu0 0.0
    %2102 = vmatpush1.msra.mxu0 0.0
    %2103 = vmatprep.subr.mxu0 0.0
    %2104 = vmatpush1.msra.mxu0 0.0
    %2105 = vmatprep.subr.mxu0 0.0
    %2106 = vmatpush1.msra.mxu0 0.0
    %2107 = vmatprep.subr.mxu0 0.0
    %2108 = vmatpush1.msra.mxu0 0.0
    %2109 = vmatprep.subr.mxu0 0.0
    %2110 = vmatpush1.msra.mxu0 0.0
    %2111 = vmatprep.mubr.f32.mxu0 0.0
    %2112 = vmatmul.mubr.f32.gmra.mrb[0].mxu0 %v2045
    %v2113 = vpop.f32.mrb[0].mxu0
    %v2114 = vadd.f32 0.0, %v2113
    %v2115 = vpop.f32.mrb[0].mxu0
    %v2116 = vadd.f32 0.0, %v2115
    %2117 = vdwg.mxu0
    %vm2118 = vcmask 261120
    %v2120 = vsel %vm2118, %v2040, 0
    %2122 = vmatprep.subr.mxu0 0.0
    %2123 = vmatpush1.msra.mxu0 %v1918
    %2124 = vmatprep.subr.mxu0 0.0
    %2125 = vmatpush1.msra.mxu0 %v1919
    %2126 = vmatprep.subr.mxu0 0.0
    %2127 = vmatpush1.msra.mxu0 %v1920
    %2128 = vmatprep.subr.mxu0 0.0
    %2129 = vmatpush1.msra.mxu0 %v1921
    %2130 = vmatprep.subr.mxu0 0.0
    %2131 = vmatpush1.msra.mxu0 %v1922
    %2132 = vmatprep.subr.mxu0 0.0
    %2133 = vmatpush1.msra.mxu0 %v1923
    %2134 = vmatprep.subr.mxu0 0.0
    %2135 = vmatpush1.msra.mxu0 %v1924
    %2136 = vmatprep.subr.mxu0 0.0
    %2137 = vmatpush1.msra.mxu0 %v1925
    %2138 = vmatprep.subr.mxu0 0.0
    %2139 = vmatpush1.msra.mxu0 %v1926
    %2140 = vmatprep.subr.mxu0 0.0
    %2141 = vmatpush1.msra.mxu0 %v1927
    %2142 = vmatprep.subr.mxu0 0.0
    %2143 = vmatpush1.msra.mxu0 %v1928
    %2144 = vmatprep.subr.mxu0 0.0
    %2145 = vmatpush1.msra.mxu0 %v1929
    %2146 = vmatprep.subr.mxu0 0.0
    %2147 = vmatpush1.msra.mxu0 %v1930
    %2148 = vmatprep.subr.mxu0 0.0
    %2149 = vmatpush1.msra.mxu0 %v1931
    %2150 = vmatprep.subr.mxu0 0.0
    %2151 = vmatpush1.msra.mxu0 %v1932
    %2152 = vmatprep.subr.mxu0 0.0
    %2153 = vmatpush1.msra.mxu0 %v1933
    %2154 = vmatprep.subr.mxu0 0.0
    %2155 = vmatpush1.msra.mxu0 %v1934
    %2156 = vmatprep.subr.mxu0 0.0
    %2157 = vmatpush1.msra.mxu0 %v1935
    %2158 = vmatprep.subr.mxu0 0.0
    %2159 = vmatpush1.msra.mxu0 %v1936
    %2160 = vmatprep.subr.mxu0 0.0
    %2161 = vmatpush1.msra.mxu0 %v1937
    %2162 = vmatprep.subr.mxu0 0.0
    %2163 = vmatpush1.msra.mxu0 0.0
    %2164 = vmatprep.subr.mxu0 0.0
    %2165 = vmatpush1.msra.mxu0 0.0
    %2166 = vmatprep.subr.mxu0 0.0
    %2167 = vmatpush1.msra.mxu0 0.0
    %2168 = vmatprep.subr.mxu0 0.0
    %2169 = vmatpush1.msra.mxu0 0.0
    %2170 = vmatprep.subr.mxu0 0.0
    %2171 = vmatpush1.msra.mxu0 0.0
    %2172 = vmatprep.subr.mxu0 0.0
    %2173 = vmatpush1.msra.mxu0 0.0
    %2174 = vmatprep.subr.mxu0 0.0
    %2175 = vmatpush1.msra.mxu0 0.0
    %2176 = vmatprep.subr.mxu0 0.0
    %2177 = vmatpush1.msra.mxu0 0.0
    %2178 = vmatprep.subr.mxu0 0.0
    %2179 = vmatpush1.msra.mxu0 0.0
    %2180 = vmatprep.subr.mxu0 0.0
    %2181 = vmatpush1.msra.mxu0 0.0
    %2182 = vmatprep.subr.mxu0 0.0
    %2183 = vmatpush1.msra.mxu0 0.0
    %2184 = vmatprep.subr.mxu0 0.0
    %2185 = vmatpush1.msra.mxu0 0.0
    %2186 = vmatprep.mubr.f32.mxu0 %v2120
    %2187 = vmatmul.mubr.f32.gmra.mrb[0].mxu0 %v2038
    %v2188 = vpop.f32.mrb[0].mxu0
    %v2189 = vadd.f32 0.0, %v2188
    %v2190 = vpop.f32.mrb[0].mxu0
    %2191 = vdwg.mxu0
    %2192 = vmatprep.subr.mxu0 0.0
    %2193 = vmatpush1.msra.mxu0 %v1939
    %2194 = vmatprep.subr.mxu0 0.0
    %2195 = vmatpush1.msra.mxu0 %v1940
    %2196 = vmatprep.subr.mxu0 0.0
    %2197 = vmatpush1.msra.mxu0 %v1941
    %2198 = vmatprep.subr.mxu0 0.0
    %2199 = vmatpush1.msra.mxu0 %v1942
    %2200 = vmatprep.subr.mxu0 0.0
    %2201 = vmatpush1.msra.mxu0 %v1943
    %2202 = vmatprep.subr.mxu0 0.0
    %2203 = vmatpush1.msra.mxu0 %v1944
    %2204 = vmatprep.subr.mxu0 0.0
    %2205 = vmatpush1.msra.mxu0 %v1945
    %2206 = vmatprep.subr.mxu0 0.0
    %2207 = vmatpush1.msra.mxu0 %v1946
    %2208 = vmatprep.subr.mxu0 0.0
    %2209 = vmatpush1.msra.mxu0 %v1947
    %2210 = vmatprep.subr.mxu0 0.0
    %2211 = vmatpush1.msra.mxu0 %v1948
    %2212 = vmatprep.subr.mxu0 0.0
    %2213 = vmatpush1.msra.mxu0 %v1949
    %2214 = vmatprep.subr.mxu0 0.0
    %2215 = vmatpush1.msra.mxu0 %v1950
    %2216 = vmatprep.subr.mxu0 0.0
    %2217 = vmatpush1.msra.mxu0 %v1951
    %2218 = vmatprep.subr.mxu0 0.0
    %2219 = vmatpush1.msra.mxu0 %v1952
    %2220 = vmatprep.subr.mxu0 0.0
    %2221 = vmatpush1.msra.mxu0 %v1953
    %2222 = vmatprep.subr.mxu0 0.0
    %2223 = vmatpush1.msra.mxu0 %v1954
    %2224 = vmatprep.subr.mxu0 0.0
    %2225 = vmatpush1.msra.mxu0 %v1955
    %2226 = vmatprep.subr.mxu0 0.0
    %2227 = vmatpush1.msra.mxu0 %v1956
    %2228 = vmatprep.subr.mxu0 0.0
    %2229 = vmatpush1.msra.mxu0 %v1957
    %2230 = vmatprep.subr.mxu0 0.0
    %2231 = vmatpush1.msra.mxu0 %v1958
    %2232 = vmatprep.subr.mxu0 0.0
    %2233 = vmatpush1.msra.mxu0 0.0
    %2234 = vmatprep.subr.mxu0 0.0
    %2235 = vmatpush1.msra.mxu0 0.0
    %2236 = vmatprep.subr.mxu0 0.0
    %2237 = vmatpush1.msra.mxu0 0.0
    %2238 = vmatprep.subr.mxu0 0.0
    %2239 = vmatpush1.msra.mxu0 0.0
    %2240 = vmatprep.subr.mxu0 0.0
    %2241 = vmatpush1.msra.mxu0 0.0
    %2242 = vmatprep.subr.mxu0 0.0
    %2243 = vmatpush1.msra.mxu0 0.0
    %2244 = vmatprep.subr.mxu0 0.0
    %2245 = vmatpush1.msra.mxu0 0.0
    %2246 = vmatprep.subr.mxu0 0.0
    %2247 = vmatpush1.msra.mxu0 0.0
    %2248 = vmatprep.subr.mxu0 0.0
    %2249 = vmatpush1.msra.mxu0 0.0
    %2250 = vmatprep.subr.mxu0 0.0
    %2251 = vmatpush1.msra.mxu0 0.0
    %2252 = vmatprep.subr.mxu0 0.0
    %2253 = vmatpush1.msra.mxu0 0.0
    %2254 = vmatprep.subr.mxu0 0.0
    %2255 = vmatpush1.msra.mxu0 0.0
    %2256 = vmatprep.mubr.f32.mxu0 %v2120
    %2257 = vmatmul.mubr.f32.gmra.mrb[0].mxu0 %v2038
    %v2258 = vpop.f32.mrb[0].mxu0
    %v2259 = vadd.f32 0.0, %v2258
    %v2260 = vpop.f32.mrb[0].mxu0
    %2261 = vdwg.mxu0
    %v2262 = vmax.f32 %v2189, %v2259
    %v2264 = vsel %vm2118, %v2116, 0
    %2266 = vmatprep.subr.mxu0 0.0
    %2267 = vmatpush1.msra.mxu0 %v1918
    %2268 = vmatprep.subr.mxu0 0.0
    %2269 = vmatpush1.msra.mxu0 %v1919
    %2270 = vmatprep.subr.mxu0 0.0
    %2271 = vmatpush1.msra.mxu0 %v1920
    %2272 = vmatprep.subr.mxu0 0.0
    %2273 = vmatpush1.msra.mxu0 %v1921
    %2274 = vmatprep.subr.mxu0 0.0
    %2275 = vmatpush1.msra.mxu0 %v1922
    %2276 = vmatprep.subr.mxu0 0.0
    %2277 = vmatpush1.msra.mxu0 %v1923
    %2278 = vmatprep.subr.mxu0 0.0
    %2279 = vmatpush1.msra.mxu0 %v1924
    %2280 = vmatprep.subr.mxu0 0.0
    %2281 = vmatpush1.msra.mxu0 %v1925
    %2282 = vmatprep.subr.mxu0 0.0
    %2283 = vmatpush1.msra.mxu0 %v1926
    %2284 = vmatprep.subr.mxu0 0.0
    %2285 = vmatpush1.msra.mxu0 %v1927
    %2286 = vmatprep.subr.mxu0 0.0
    %2287 = vmatpush1.msra.mxu0 %v1928
    %2288 = vmatprep.subr.mxu0 0.0
    %2289 = vmatpush1.msra.mxu0 %v1929
    %2290 = vmatprep.subr.mxu0 0.0
    %2291 = vmatpush1.msra.mxu0 %v1930
    %2292 = vmatprep.subr.mxu0 0.0
    %2293 = vmatpush1.msra.mxu0 %v1931
    %2294 = vmatprep.subr.mxu0 0.0
    %2295 = vmatpush1.msra.mxu0 %v1932
    %2296 = vmatprep.subr.mxu0 0.0
    %2297 = vmatpush1.msra.mxu0 %v1933
    %2298 = vmatprep.subr.mxu0 0.0
    %2299 = vmatpush1.msra.mxu0 %v1934
    %2300 = vmatprep.subr.mxu0 0.0
    %2301 = vmatpush1.msra.mxu0 %v1935
    %2302 = vmatprep.subr.mxu0 0.0
    %2303 = vmatpush1.msra.mxu0 %v1936
    %2304 = vmatprep.subr.mxu0 0.0
    %2305 = vmatpush1.msra.mxu0 %v1937
    %2306 = vmatprep.subr.mxu0 0.0
    %2307 = vmatpush1.msra.mxu0 0.0
    %2308 = vmatprep.subr.mxu0 0.0
    %2309 = vmatpush1.msra.mxu0 0.0
    %2310 = vmatprep.subr.mxu0 0.0
    %2311 = vmatpush1.msra.mxu0 0.0
    %2312 = vmatprep.subr.mxu0 0.0
    %2313 = vmatpush1.msra.mxu0 0.0
    %2314 = vmatprep.subr.mxu0 0.0
    %2315 = vmatpush1.msra.mxu0 0.0
    %2316 = vmatprep.subr.mxu0 0.0
    %2317 = vmatpush1.msra.mxu0 0.0
    %2318 = vmatprep.subr.mxu0 0.0
    %2319 = vmatpush1.msra.mxu0 0.0
    %2320 = vmatprep.subr.mxu0 0.0
    %2321 = vmatpush1.msra.mxu0 0.0
    %2322 = vmatprep.subr.mxu0 0.0
    %2323 = vmatpush1.msra.mxu0 0.0
    %2324 = vmatprep.subr.mxu0 0.0
    %2325 = vmatpush1.msra.mxu0 0.0
    %2326 = vmatprep.subr.mxu0 0.0
    %2327 = vmatpush1.msra.mxu0 0.0
    %2328 = vmatprep.subr.mxu0 0.0
    %2329 = vmatpush1.msra.mxu0 0.0
    %2330 = vmatprep.mubr.f32.mxu0 %v2264
    %2331 = vmatmul.mubr.f32.gmra.mrb[0].mxu0 %v2114
    %v2332 = vpop.f32.mrb[0].mxu0
    %v2333 = vadd.f32 0.0, %v2332
    %v2334 = vpop.f32.mrb[0].mxu0
    %2335 = vdwg.mxu0
    %2336 = vmatprep.subr.mxu0 0.0
    %2337 = vmatpush1.msra.mxu0 %v1939
    %2338 = vmatprep.subr.mxu0 0.0
    %2339 = vmatpush1.msra.mxu0 %v1940
    %2340 = vmatprep.subr.mxu0 0.0
    %2341 = vmatpush1.msra.mxu0 %v1941
    %2342 = vmatprep.subr.mxu0 0.0
    %2343 = vmatpush1.msra.mxu0 %v1942
    %2344 = vmatprep.subr.mxu0 0.0
    %2345 = vmatpush1.msra.mxu0 %v1943
    %2346 = vmatprep.subr.mxu0 0.0
    %2347 = vmatpush1.msra.mxu0 %v1944
    %2348 = vmatprep.subr.mxu0 0.0
    %2349 = vmatpush1.msra.mxu0 %v1945
    %2350 = vmatprep.subr.mxu0 0.0
    %2351 = vmatpush1.msra.mxu0 %v1946
    %2352 = vmatprep.subr.mxu0 0.0
    %2353 = vmatpush1.msra.mxu0 %v1947
    %2354 = vmatprep.subr.mxu0 0.0
    %2355 = vmatpush1.msra.mxu0 %v1948
    %2356 = vmatprep.subr.mxu0 0.0
    %2357 = vmatpush1.msra.mxu0 %v1949
    %2358 = vmatprep.subr.mxu0 0.0
    %2359 = vmatpush1.msra.mxu0 %v1950
    %2360 = vmatprep.subr.mxu0 0.0
    %2361 = vmatpush1.msra.mxu0 %v1951
    %2362 = vmatprep.subr.mxu0 0.0
    %2363 = vmatpush1.msra.mxu0 %v1952
    %2364 = vmatprep.subr.mxu0 0.0
    %2365 = vmatpush1.msra.mxu0 %v1953
    %2366 = vmatprep.subr.mxu0 0.0
    %2367 = vmatpush1.msra.mxu0 %v1954
    %2368 = vmatprep.subr.mxu0 0.0
    %2369 = vmatpush1.msra.mxu0 %v1955
    %2370 = vmatprep.subr.mxu0 0.0
    %2371 = vmatpush1.msra.mxu0 %v1956
    %2372 = vmatprep.subr.mxu0 0.0
    %2373 = vmatpush1.msra.mxu0 %v1957
    %2374 = vmatprep.subr.mxu0 0.0
    %2375 = vmatpush1.msra.mxu0 %v1958
    %2376 = vmatprep.subr.mxu0 0.0
    %2377 = vmatpush1.msra.mxu0 0.0
    %2378 = vmatprep.subr.mxu0 0.0
    %2379 = vmatpush1.msra.mxu0 0.0
    %2380 = vmatprep.subr.mxu0 0.0
    %2381 = vmatpush1.msra.mxu0 0.0
    %2382 = vmatprep.subr.mxu0 0.0
    %2383 = vmatpush1.msra.mxu0 0.0
    %2384 = vmatprep.subr.mxu0 0.0
    %2385 = vmatpush1.msra.mxu0 0.0
    %2386 = vmatprep.subr.mxu0 0.0
    %2387 = vmatpush1.msra.mxu0 0.0
    %2388 = vmatprep.subr.mxu0 0.0
    %2389 = vmatpush1.msra.mxu0 0.0
    %2390 = vmatprep.subr.mxu0 0.0
    %2391 = vmatpush1.msra.mxu0 0.0
    %2392 = vmatprep.subr.mxu0 0.0
    %2393 = vmatpush1.msra.mxu0 0.0
    %2394 = vmatprep.subr.mxu0 0.0
    %2395 = vmatpush1.msra.mxu0 0.0
    %2396 = vmatprep.subr.mxu0 0.0
    %2397 = vmatpush1.msra.mxu0 0.0
    %2398 = vmatprep.subr.mxu0 0.0
    %2399 = vmatpush1.msra.mxu0 0.0
    %2400 = vmatprep.mubr.f32.mxu0 %v2264
    %2401 = vmatmul.mubr.f32.gmra.mrb[0].mxu0 %v2114
    %v2402 = vpop.f32.mrb[0].mxu0
    %v2403 = vadd.f32 0.0, %v2402
    %v2404 = vpop.f32.mrb[0].mxu0
    %2405 = vdwg.mxu0
    %v2406 = vmax.f32 %v2333, %v2403
    %v2407 = vmax.f32 %v2262, %v2406
    %v2408 = vld [vmem:[%s9] sm:$0xff]
    %v2409 = vld [vmem:[%s9 + $0x8] sm:$0xff]
    %v2410 = vld [vmem:[%s9 + $0x10] sm:$0xff]
    %v2411 = vld [vmem:[%s9 + $0x18] sm:$0xff]
    %v2412 = vld [vmem:[%s9 + $0x20] sm:$0xff]
    %v2413 = vld [vmem:[%s9 + $0x28] sm:$0xff]
    %v2414 = vld [vmem:[%s9 + $0x30] sm:$0xff]
    %v2415 = vld [vmem:[%s9 + $0x38] sm:$0xff]
    %v2416 = vld [vmem:[%s9 + $0x40] sm:$0xff]
    %v2417 = vld [vmem:[%s9 + $0x48] sm:$0xff]
    %s2418 = scalar_lea.vmem %s9, 80
    %v2419 = vld [vmem:[%s2418] sm:$0xff]
    %v2420 = vld [vmem:[%s2418 + $0x8] sm:$0xff]
    %v2421 = vld [vmem:[%s2418 + $0x10] sm:$0xff]
    %v2422 = vld [vmem:[%s2418 + $0x18] sm:$0xff]
    %v2423 = vld [vmem:[%s2418 + $0x20] sm:$0xff]
    %v2424 = vld [vmem:[%s2418 + $0x28] sm:$0xff]
    %v2425 = vld [vmem:[%s2418 + $0x30] sm:$0xff]
    %v2426 = vld [vmem:[%s2418 + $0x38] sm:$0xff]
    %v2427 = vld [vmem:[%s2418 + $0x40] sm:$0xff]
    %v2428 = vld [vmem:[%s2418 + $0x48] sm:$0xff]
    %v2430 = vrot.slane %v2407, 1
    %vm2431 = vcmask 654336
    %v2432 = vsel %vm2431, %v2430, 0
    %2434 = vmatprep.subr.mxu0 0.0
    %2435 = vmatpush1.msra.mxu0 %v2419
    %2436 = vmatprep.subr.mxu0 0.0
    %2437 = vmatpush1.msra.mxu0 %v2420
    %2438 = vmatprep.subr.mxu0 0.0
    %2439 = vmatpush1.msra.mxu0 %v2421
    %2440 = vmatprep.subr.mxu0 0.0
    %2441 = vmatpush1.msra.mxu0 %v2422
    %2442 = vmatprep.subr.mxu0 0.0
    %2443 = vmatpush1.msra.mxu0 %v2423
    %2444 = vmatprep.subr.mxu0 0.0
    %2445 = vmatpush1.msra.mxu0 %v2424
    %2446 = vmatprep.subr.mxu0 0.0
    %2447 = vmatpush1.msra.mxu0 %v2425
    %2448 = vmatprep.subr.mxu0 0.0
    %2449 = vmatpush1.msra.mxu0 %v2426
    %2450 = vmatprep.subr.mxu0 0.0
    %2451 = vmatpush1.msra.mxu0 %v2427
    %2452 = vmatprep.subr.mxu0 0.0
    %2453 = vmatpush1.msra.mxu0 %v2428
    %2454 = vmatprep.subr.mxu0 0.0
    %2455 = vmatpush1.msra.mxu0 0.0
    %2456 = vmatprep.subr.mxu0 0.0
    %2457 = vmatpush1.msra.mxu0 0.0
    %2458 = vmatprep.subr.mxu0 0.0
    %2459 = vmatpush1.msra.mxu0 0.0
    %2460 = vmatprep.subr.mxu0 0.0
    %2461 = vmatpush1.msra.mxu0 0.0
    %2462 = vmatprep.subr.mxu0 0.0
    %2463 = vmatpush1.msra.mxu0 0.0
    %2464 = vmatprep.subr.mxu0 0.0
    %2465 = vmatpush1.msra.mxu0 0.0
    %2466 = vmatprep.subr.mxu0 0.0
    %2467 = vmatpush1.msra.mxu0 0.0
    %2468 = vmatprep.subr.mxu0 0.0
    %2469 = vmatpush1.msra.mxu0 0.0
    %2470 = vmatprep.subr.mxu0 0.0
    %2471 = vmatpush1.msra.mxu0 0.0
    %2472 = vmatprep.subr.mxu0 0.0
    %2473 = vmatpush1.msra.mxu0 0.0
    %2474 = vmatprep.subr.mxu0 0.0
    %2475 = vmatpush1.msra.mxu0 0.0
    %2476 = vmatprep.subr.mxu0 0.0
    %2477 = vmatpush1.msra.mxu0 0.0
    %2478 = vmatprep.subr.mxu0 0.0
    %2479 = vmatpush1.msra.mxu0 0.0
    %2480 = vmatprep.subr.mxu0 0.0
    %2481 = vmatpush1.msra.mxu0 0.0
    %2482 = vmatprep.subr.mxu0 0.0
    %2483 = vmatpush1.msra.mxu0 0.0
    %2484 = vmatprep.subr.mxu0 0.0
    %2485 = vmatpush1.msra.mxu0 0.0
    %2486 = vmatprep.subr.mxu0 0.0
    %2487 = vmatpush1.msra.mxu0 0.0
    %2488 = vmatprep.subr.mxu0 0.0
    %2489 = vmatpush1.msra.mxu0 0.0
    %2490 = vmatprep.subr.mxu0 0.0
    %2491 = vmatpush1.msra.mxu0 0.0
    %2492 = vmatprep.subr.mxu0 0.0
    %2493 = vmatpush1.msra.mxu0 0.0
    %2494 = vmatprep.subr.mxu0 0.0
    %2495 = vmatpush1.msra.mxu0 0.0
    %2496 = vmatprep.subr.mxu0 0.0
    %2497 = vmatpush1.msra.mxu0 0.0
    %2498 = vmatprep.mubr.f32.mxu0 0.0
    %2499 = vmatmul.mubr.f32.gmra.mrb[0].mxu0 %v2432
    %v2500 = vpop.f32.mrb[0].mxu0
    %v2501 = vadd.f32 0.0, %v2500
    %v2502 = vpop.f32.mrb[0].mxu0
    %2503 = vdwg.mxu0
    %v2504 = vsel %vm2431, %v2407, 0
    %2506 = vmatprep.subr.mxu0 0.0
    %2507 = vmatpush1.msra.mxu0 %v2408
    %2508 = vmatprep.subr.mxu0 0.0
    %2509 = vmatpush1.msra.mxu0 %v2409
    %2510 = vmatprep.subr.mxu0 0.0
    %2511 = vmatpush1.msra.mxu0 %v2410
    %2512 = vmatprep.subr.mxu0 0.0
    %2513 = vmatpush1.msra.mxu0 %v2411
    %2514 = vmatprep.subr.mxu0 0.0
    %2515 = vmatpush1.msra.mxu0 %v2412
    %2516 = vmatprep.subr.mxu0 0.0
    %2517 = vmatpush1.msra.mxu0 %v2413
    %2518 = vmatprep.subr.mxu0 0.0
    %2519 = vmatpush1.msra.mxu0 %v2414
    %2520 = vmatprep.subr.mxu0 0.0
    %2521 = vmatpush1.msra.mxu0 %v2415
    %2522 = vmatprep.subr.mxu0 0.0
    %2523 = vmatpush1.msra.mxu0 %v2416
    %2524 = vmatprep.subr.mxu0 0.0
    %2525 = vmatpush1.msra.mxu0 %v2417
    %2526 = vmatprep.subr.mxu0 0.0
    %2527 = vmatpush1.msra.mxu0 0.0
    %2528 = vmatprep.subr.mxu0 0.0
    %2529 = vmatpush1.msra.mxu0 0.0
    %2530 = vmatprep.subr.mxu0 0.0
    %2531 = vmatpush1.msra.mxu0 0.0
    %2532 = vmatprep.subr.mxu0 0.0
    %2533 = vmatpush1.msra.mxu0 0.0
    %2534 = vmatprep.subr.mxu0 0.0
    %2535 = vmatpush1.msra.mxu0 0.0
    %2536 = vmatprep.subr.mxu0 0.0
    %2537 = vmatpush1.msra.mxu0 0.0
    %2538 = vmatprep.subr.mxu0 0.0
    %2539 = vmatpush1.msra.mxu0 0.0
    %2540 = vmatprep.subr.mxu0 0.0
    %2541 = vmatpush1.msra.mxu0 0.0
    %2542 = vmatprep.subr.mxu0 0.0
    %2543 = vmatpush1.msra.mxu0 0.0
    %2544 = vmatprep.subr.mxu0 0.0
    %2545 = vmatpush1.msra.mxu0 0.0
    %2546 = vmatprep.subr.mxu0 0.0
    %2547 = vmatpush1.msra.mxu0 0.0
    %2548 = vmatprep.subr.mxu0 0.0
    %2549 = vmatpush1.msra.mxu0 0.0
    %2550 = vmatprep.subr.mxu0 0.0
    %2551 = vmatpush1.msra.mxu0 0.0
    %2552 = vmatprep.subr.mxu0 0.0
    %2553 = vmatpush1.msra.mxu0 0.0
    %2554 = vmatprep.subr.mxu0 0.0
    %2555 = vmatpush1.msra.mxu0 0.0
    %2556 = vmatprep.subr.mxu0 0.0
    %2557 = vmatpush1.msra.mxu0 0.0
    %2558 = vmatprep.subr.mxu0 0.0
    %2559 = vmatpush1.msra.mxu0 0.0
    %2560 = vmatprep.subr.mxu0 0.0
    %2561 = vmatpush1.msra.mxu0 0.0
    %2562 = vmatprep.subr.mxu0 0.0
    %2563 = vmatpush1.msra.mxu0 0.0
    %2564 = vmatprep.subr.mxu0 0.0
    %2565 = vmatpush1.msra.mxu0 0.0
    %2566 = vmatprep.subr.mxu0 0.0
    %2567 = vmatpush1.msra.mxu0 0.0
    %2568 = vmatprep.subr.mxu0 0.0
    %2569 = vmatpush1.msra.mxu0 0.0
    %2570 = vmatprep.mubr.f32.mxu0 0.0
    %2571 = vmatmul.mubr.f32.gmra.mrb[0].mxu0 %v2504
    %v2572 = vpop.f32.mrb[0].mxu0
    %v2573 = vadd.f32 %v2501, %v2572
    %v2574 = vpop.f32.mrb[0].mxu0
    %2575 = vdwg.mxu0
    %s2576 = scalar_lea.vmem %s9, 160
    %v2577 = vld [vmem:[%s2576] sm:$0xff]
    %v2578 = vld [vmem:[%s2576 + $0x8] sm:$0xff]
    %v2579 = vld [vmem:[%s2576 + $0x10] sm:$0xff]
    %v2580 = vld [vmem:[%s2576 + $0x18] sm:$0xff]
    %v2581 = vld [vmem:[%s2576 + $0x20] sm:$0xff]
    %v2582 = vld [vmem:[%s2576 + $0x28] sm:$0xff]
    %v2583 = vld [vmem:[%s2576 + $0x30] sm:$0xff]
    %v2584 = vld [vmem:[%s2576 + $0x38] sm:$0xff]
    %v2585 = vld [vmem:[%s2576 + $0x40] sm:$0xff]
    %v2586 = vld [vmem:[%s2576 + $0x48] sm:$0xff]
    %v2587 = vrot.slane %v2407, 2
    %v2588 = vsel %vm2431, %v2587, 0
    %2590 = vmatprep.subr.mxu0 0.0
    %2591 = vmatpush1.msra.mxu0 %v2577
    %2592 = vmatprep.subr.mxu0 0.0
    %2593 = vmatpush1.msra.mxu0 %v2578
    %2594 = vmatprep.subr.mxu0 0.0
    %2595 = vmatpush1.msra.mxu0 %v2579
    %2596 = vmatprep.subr.mxu0 0.0
    %2597 = vmatpush1.msra.mxu0 %v2580
    %2598 = vmatprep.subr.mxu0 0.0
    %2599 = vmatpush1.msra.mxu0 %v2581
    %2600 = vmatprep.subr.mxu0 0.0
    %2601 = vmatpush1.msra.mxu0 %v2582
    %2602 = vmatprep.subr.mxu0 0.0
    %2603 = vmatpush1.msra.mxu0 %v2583
    %2604 = vmatprep.subr.mxu0 0.0
    %2605 = vmatpush1.msra.mxu0 %v2584
    %2606 = vmatprep.subr.mxu0 0.0
    %2607 = vmatpush1.msra.mxu0 %v2585
    %2608 = vmatprep.subr.mxu0 0.0
    %2609 = vmatpush1.msra.mxu0 %v2586
    %2610 = vmatprep.subr.mxu0 0.0
    %2611 = vmatpush1.msra.mxu0 0.0
    %2612 = vmatprep.subr.mxu0 0.0
    %2613 = vmatpush1.msra.mxu0 0.0
    %2614 = vmatprep.subr.mxu0 0.0
    %2615 = vmatpush1.msra.mxu0 0.0
    %2616 = vmatprep.subr.mxu0 0.0
    %2617 = vmatpush1.msra.mxu0 0.0
    %2618 = vmatprep.subr.mxu0 0.0
    %2619 = vmatpush1.msra.mxu0 0.0
    %2620 = vmatprep.subr.mxu0 0.0
    %2621 = vmatpush1.msra.mxu0 0.0
    %2622 = vmatprep.subr.mxu0 0.0
    %2623 = vmatpush1.msra.mxu0 0.0
    %2624 = vmatprep.subr.mxu0 0.0
    %2625 = vmatpush1.msra.mxu0 0.0
    %2626 = vmatprep.subr.mxu0 0.0
    %2627 = vmatpush1.msra.mxu0 0.0
    %2628 = vmatprep.subr.mxu0 0.0
    %2629 = vmatpush1.msra.mxu0 0.0
    %2630 = vmatprep.subr.mxu0 0.0
    %2631 = vmatpush1.msra.mxu0 0.0
    %2632 = vmatprep.subr.mxu0 0.0
    %2633 = vmatpush1.msra.mxu0 0.0
    %2634 = vmatprep.subr.mxu0 0.0
    %2635 = vmatpush1.msra.mxu0 0.0
    %2636 = vmatprep.subr.mxu0 0.0
    %2637 = vmatpush1.msra.mxu0 0.0
    %2638 = vmatprep.subr.mxu0 0.0
    %2639 = vmatpush1.msra.mxu0 0.0
    %2640 = vmatprep.subr.mxu0 0.0
    %2641 = vmatpush1.msra.mxu0 0.0
    %2642 = vmatprep.subr.mxu0 0.0
    %2643 = vmatpush1.msra.mxu0 0.0
    %2644 = vmatprep.subr.mxu0 0.0
    %2645 = vmatpush1.msra.mxu0 0.0
    %2646 = vmatprep.subr.mxu0 0.0
    %2647 = vmatpush1.msra.mxu0 0.0
    %2648 = vmatprep.subr.mxu0 0.0
    %2649 = vmatpush1.msra.mxu0 0.0
    %2650 = vmatprep.subr.mxu0 0.0
    %2651 = vmatpush1.msra.mxu0 0.0
    %2652 = vmatprep.subr.mxu0 0.0
    %2653 = vmatpush1.msra.mxu0 0.0
    %2654 = vmatprep.mubr.f32.mxu0 0.0
    %2655 = vmatmul.mubr.f32.gmra.mrb[0].mxu0 %v2588
    %v2656 = vpop.f32.mrb[0].mxu0
    %v2657 = vadd.f32 0.0, %v2656
    %v2658 = vpop.f32.mrb[0].mxu0
    %2659 = vdwg.mxu0
    %v2660 = vadd.f32 %v2573, %v2657
    %s2661 = scalar_lea.vmem %s9, 240
    %v2662 = vld [vmem:[%s2661] sm:$0xff]
    %v2663 = vld [vmem:[%s2661 + $0x8] sm:$0xff]
    %v2664 = vld [vmem:[%s2661 + $0x10] sm:$0xff]
    %v2665 = vld [vmem:[%s2661 + $0x18] sm:$0xff]
    %v2666 = vld [vmem:[%s2661 + $0x20] sm:$0xff]
    %v2667 = vld [vmem:[%s2661 + $0x28] sm:$0xff]
    %v2668 = vld [vmem:[%s2661 + $0x30] sm:$0xff]
    %v2669 = vld [vmem:[%s2661 + $0x38] sm:$0xff]
    %v2670 = vld [vmem:[%s2661 + $0x40] sm:$0xff]
    %v2671 = vld [vmem:[%s2661 + $0x48] sm:$0xff]
    %v2672 = vrot.slane %v2407, 3
    %v2673 = vsel %vm2431, %v2672, 0
    %2675 = vmatprep.subr.mxu0 0.0
    %2676 = vmatpush1.msra.mxu0 %v2662
    %2677 = vmatprep.subr.mxu0 0.0
    %2678 = vmatpush1.msra.mxu0 %v2663
    %2679 = vmatprep.subr.mxu0 0.0
    %2680 = vmatpush1.msra.mxu0 %v2664
    %2681 = vmatprep.subr.mxu0 0.0
    %2682 = vmatpush1.msra.mxu0 %v2665
    %2683 = vmatprep.subr.mxu0 0.0
    %2684 = vmatpush1.msra.mxu0 %v2666
    %2685 = vmatprep.subr.mxu0 0.0
    %2686 = vmatpush1.msra.mxu0 %v2667
    %2687 = vmatprep.subr.mxu0 0.0
    %2688 = vmatpush1.msra.mxu0 %v2668
    %2689 = vmatprep.subr.mxu0 0.0
    %2690 = vmatpush1.msra.mxu0 %v2669
    %2691 = vmatprep.subr.mxu0 0.0
    %2692 = vmatpush1.msra.mxu0 %v2670
    %2693 = vmatprep.subr.mxu0 0.0
    %2694 = vmatpush1.msra.mxu0 %v2671
    %2695 = vmatprep.subr.mxu0 0.0
    %2696 = vmatpush1.msra.mxu0 0.0
    %2697 = vmatprep.subr.mxu0 0.0
    %2698 = vmatpush1.msra.mxu0 0.0
    %2699 = vmatprep.subr.mxu0 0.0
    %2700 = vmatpush1.msra.mxu0 0.0
    %2701 = vmatprep.subr.mxu0 0.0
    %2702 = vmatpush1.msra.mxu0 0.0
    %2703 = vmatprep.subr.mxu0 0.0
    %2704 = vmatpush1.msra.mxu0 0.0
    %2705 = vmatprep.subr.mxu0 0.0
    %2706 = vmatpush1.msra.mxu0 0.0
    %2707 = vmatprep.subr.mxu0 0.0
    %2708 = vmatpush1.msra.mxu0 0.0
    %2709 = vmatprep.subr.mxu0 0.0
    %2710 = vmatpush1.msra.mxu0 0.0
    %2711 = vmatprep.subr.mxu0 0.0
    %2712 = vmatpush1.msra.mxu0 0.0
    %2713 = vmatprep.subr.mxu0 0.0
    %2714 = vmatpush1.msra.mxu0 0.0
    %2715 = vmatprep.subr.mxu0 0.0
    %2716 = vmatpush1.msra.mxu0 0.0
    %2717 = vmatprep.subr.mxu0 0.0
    %2718 = vmatpush1.msra.mxu0 0.0
    %2719 = vmatprep.subr.mxu0 0.0
    %2720 = vmatpush1.msra.mxu0 0.0
    %2721 = vmatprep.subr.mxu0 0.0
    %2722 = vmatpush1.msra.mxu0 0.0
    %2723 = vmatprep.subr.mxu0 0.0
    %2724 = vmatpush1.msra.mxu0 0.0
    %2725 = vmatprep.subr.mxu0 0.0
    %2726 = vmatpush1.msra.mxu0 0.0
    %2727 = vmatprep.subr.mxu0 0.0
    %2728 = vmatpush1.msra.mxu0 0.0
    %2729 = vmatprep.subr.mxu0 0.0
    %2730 = vmatpush1.msra.mxu0 0.0
    %2731 = vmatprep.subr.mxu0 0.0
    %2732 = vmatpush1.msra.mxu0 0.0
    %2733 = vmatprep.subr.mxu0 0.0
    %2734 = vmatpush1.msra.mxu0 0.0
    %2735 = vmatprep.subr.mxu0 0.0
    %2736 = vmatpush1.msra.mxu0 0.0
    %2737 = vmatprep.subr.mxu0 0.0
    %2738 = vmatpush1.msra.mxu0 0.0
    %2739 = vmatprep.mubr.f32.mxu0 0.0
    %2740 = vmatmul.mubr.f32.gmra.mrb[0].mxu0 %v2673
    %v2741 = vpop.f32.mrb[0].mxu0
    %v2742 = vadd.f32 0.0, %v2741
    %v2743 = vpop.f32.mrb[0].mxu0
    %2744 = vdwg.mxu0
    %v2745 = vadd.f32 %v2660, %v2742
    %s2746 = scalar_lea.vmem %s9, 320
    %v2747 = vld [vmem:[%s2746] sm:$0xff]
    %v2748 = vld [vmem:[%s2746 + $0x8] sm:$0xff]
    %v2749 = vld [vmem:[%s2746 + $0x10] sm:$0xff]
    %v2750 = vld [vmem:[%s2746 + $0x18] sm:$0xff]
    %v2751 = vld [vmem:[%s2746 + $0x20] sm:$0xff]
    %v2752 = vld [vmem:[%s2746 + $0x28] sm:$0xff]
    %v2753 = vld [vmem:[%s2746 + $0x30] sm:$0xff]
    %v2754 = vld [vmem:[%s2746 + $0x38] sm:$0xff]
    %v2755 = vld [vmem:[%s2746 + $0x40] sm:$0xff]
    %v2756 = vld [vmem:[%s2746 + $0x48] sm:$0xff]
    %v2757 = vrot.slane %v2407, 4
    %v2758 = vsel %vm2431, %v2757, 0
    %2760 = vmatprep.subr.mxu0 0.0
    %2761 = vmatpush1.msra.mxu0 %v2747
    %2762 = vmatprep.subr.mxu0 0.0
    %2763 = vmatpush1.msra.mxu0 %v2748
    %2764 = vmatprep.subr.mxu0 0.0
    %2765 = vmatpush1.msra.mxu0 %v2749
    %2766 = vmatprep.subr.mxu0 0.0
    %2767 = vmatpush1.msra.mxu0 %v2750
    %2768 = vmatprep.subr.mxu0 0.0
    %2769 = vmatpush1.msra.mxu0 %v2751
    %2770 = vmatprep.subr.mxu0 0.0
    %2771 = vmatpush1.msra.mxu0 %v2752
    %2772 = vmatprep.subr.mxu0 0.0
    %2773 = vmatpush1.msra.mxu0 %v2753
    %2774 = vmatprep.subr.mxu0 0.0
    %2775 = vmatpush1.msra.mxu0 %v2754
    %2776 = vmatprep.subr.mxu0 0.0
    %2777 = vmatpush1.msra.mxu0 %v2755
    %2778 = vmatprep.subr.mxu0 0.0
    %2779 = vmatpush1.msra.mxu0 %v2756
    %2780 = vmatprep.subr.mxu0 0.0
    %2781 = vmatpush1.msra.mxu0 0.0
    %2782 = vmatprep.subr.mxu0 0.0
    %2783 = vmatpush1.msra.mxu0 0.0
    %2784 = vmatprep.subr.mxu0 0.0
    %2785 = vmatpush1.msra.mxu0 0.0
    %2786 = vmatprep.subr.mxu0 0.0
    %2787 = vmatpush1.msra.mxu0 0.0
    %2788 = vmatprep.subr.mxu0 0.0
    %2789 = vmatpush1.msra.mxu0 0.0
    %2790 = vmatprep.subr.mxu0 0.0
    %2791 = vmatpush1.msra.mxu0 0.0
    %2792 = vmatprep.subr.mxu0 0.0
    %2793 = vmatpush1.msra.mxu0 0.0
    %2794 = vmatprep.subr.mxu0 0.0
    %2795 = vmatpush1.msra.mxu0 0.0
    %2796 = vmatprep.subr.mxu0 0.0
    %2797 = vmatpush1.msra.mxu0 0.0
    %2798 = vmatprep.subr.mxu0 0.0
    %2799 = vmatpush1.msra.mxu0 0.0
    %2800 = vmatprep.subr.mxu0 0.0
    %2801 = vmatpush1.msra.mxu0 0.0
    %2802 = vmatprep.subr.mxu0 0.0
    %2803 = vmatpush1.msra.mxu0 0.0
    %2804 = vmatprep.subr.mxu0 0.0
    %2805 = vmatpush1.msra.mxu0 0.0
    %2806 = vmatprep.subr.mxu0 0.0
    %2807 = vmatpush1.msra.mxu0 0.0
    %2808 = vmatprep.subr.mxu0 0.0
    %2809 = vmatpush1.msra.mxu0 0.0
    %2810 = vmatprep.subr.mxu0 0.0
    %2811 = vmatpush1.msra.mxu0 0.0
    %2812 = vmatprep.subr.mxu0 0.0
    %2813 = vmatpush1.msra.mxu0 0.0
    %2814 = vmatprep.subr.mxu0 0.0
    %2815 = vmatpush1.msra.mxu0 0.0
    %2816 = vmatprep.subr.mxu0 0.0
    %2817 = vmatpush1.msra.mxu0 0.0
    %2818 = vmatprep.subr.mxu0 0.0
    %2819 = vmatpush1.msra.mxu0 0.0
    %2820 = vmatprep.subr.mxu0 0.0
    %2821 = vmatpush1.msra.mxu0 0.0
    %2822 = vmatprep.subr.mxu0 0.0
    %2823 = vmatpush1.msra.mxu0 0.0
    %2824 = vmatprep.mubr.f32.mxu0 0.0
    %2825 = vmatmul.mubr.f32.gmra.mrb[0].mxu0 %v2758
    %v2826 = vpop.f32.mrb[0].mxu0
    %v2827 = vadd.f32 0.0, %v2826
    %v2828 = vpop.f32.mrb[0].mxu0
    %2829 = vdwg.mxu0
    %v2830 = vadd.f32 %v2745, %v2827
    %v2831 = vadd.f32 %v2830, %v53
    %v2832 = vmax.f32 %v2831, 0.0
    %vm2833 = vcmask 982016
    %v2835 = vsel %vm2833, %v2832, 0
    %2837 = vmatprep.subr.mxu0 0.0
    %2838 = vmatpush1.msra.mxu0 %v56
    %2839 = vmatprep.subr.mxu0 0.0
    %2840 = vmatpush1.msra.mxu0 %v57
    %2841 = vmatprep.subr.mxu0 0.0
    %2842 = vmatpush1.msra.mxu0 %v58
    %2843 = vmatprep.subr.mxu0 0.0
    %2844 = vmatpush1.msra.mxu0 %v59
    %2845 = vmatprep.subr.mxu0 0.0
    %2846 = vmatpush1.msra.mxu0 %v60
    %2847 = vmatprep.subr.mxu0 0.0
    %2848 = vmatpush1.msra.mxu0 %v61
    %2849 = vmatprep.subr.mxu0 0.0
    %2850 = vmatpush1.msra.mxu0 %v62
    %2851 = vmatprep.subr.mxu0 0.0
    %2852 = vmatpush1.msra.mxu0 %v63
    %2853 = vmatprep.subr.mxu0 0.0
    %2854 = vmatpush1.msra.mxu0 %v64
    %2855 = vmatprep.subr.mxu0 0.0
    %2856 = vmatpush1.msra.mxu0 %v65
    %2857 = vmatprep.subr.mxu0 0.0
    %2858 = vmatpush1.msra.mxu0 %v66
    %2859 = vmatprep.subr.mxu0 0.0
    %2860 = vmatpush1.msra.mxu0 %v67
    %2861 = vmatprep.subr.mxu0 0.0
    %2862 = vmatpush1.msra.mxu0 %v68
    %2863 = vmatprep.subr.mxu0 0.0
    %2864 = vmatpush1.msra.mxu0 %v69
    %2865 = vmatprep.subr.mxu0 0.0
    %2866 = vmatpush1.msra.mxu0 %v70
    %2867 = vmatprep.subr.mxu0 0.0
    %2868 = vmatpush1.msra.mxu0 0.0
    %2869 = vmatprep.subr.mxu0 0.0
    %2870 = vmatpush1.msra.mxu0 0.0
    %2871 = vmatprep.subr.mxu0 0.0
    %2872 = vmatpush1.msra.mxu0 0.0
    %2873 = vmatprep.subr.mxu0 0.0
    %2874 = vmatpush1.msra.mxu0 0.0
    %2875 = vmatprep.subr.mxu0 0.0
    %2876 = vmatpush1.msra.mxu0 0.0
    %2877 = vmatprep.subr.mxu0 0.0
    %2878 = vmatpush1.msra.mxu0 0.0
    %2879 = vmatprep.subr.mxu0 0.0
    %2880 = vmatpush1.msra.mxu0 0.0
    %2881 = vmatprep.subr.mxu0 0.0
    %2882 = vmatpush1.msra.mxu0 0.0
    %2883 = vmatprep.subr.mxu0 0.0
    %2884 = vmatpush1.msra.mxu0 0.0
    %2885 = vmatprep.subr.mxu0 0.0
    %2886 = vmatpush1.msra.mxu0 0.0
    %2887 = vmatprep.subr.mxu0 0.0
    %2888 = vmatpush1.msra.mxu0 0.0
    %2889 = vmatprep.subr.mxu0 0.0
    %2890 = vmatpush1.msra.mxu0 0.0
    %2891 = vmatprep.subr.mxu0 0.0
    %2892 = vmatpush1.msra.mxu0 0.0
    %2893 = vmatprep.subr.mxu0 0.0
    %2894 = vmatpush1.msra.mxu0 0.0
    %2895 = vmatprep.subr.mxu0 0.0
    %2896 = vmatpush1.msra.mxu0 0.0
    %2897 = vmatprep.subr.mxu0 0.0
    %2898 = vmatpush1.msra.mxu0 0.0
    %2899 = vmatprep.subr.mxu0 0.0
    %2900 = vmatpush1.msra.mxu0 0.0
    %2901 = vmatprep.mubr.f32.mxu0 0.0
    %2902 = vmatmul.mubr.f32.gmra.mrb[0].mxu0 %v2835
    %v2903 = vpop.f32.mrb[0].mxu0
    %v2904 = vadd.f32 %v54, %v2903
    %v2905 = vpop.f32.mrb[0].mxu0
    %2906 = vdwg.mxu0
    %v2907 = vmax.f32 %v2904, 0.0
    %v2909 = vsel %vm1373, %v2907, 0
    %v2912 = vsel %vm643, %v81, 0
    %2914 = vmatprep.subr.mxu0 0.0
    %2915 = vmatpush1.msra.mxu0 %v71
    %2916 = vmatprep.subr.mxu0 0.0
    %2917 = vmatpush1.msra.mxu0 %v72
    %2918 = vmatprep.subr.mxu0 0.0
    %2919 = vmatpush1.msra.mxu0 %v73
    %2920 = vmatprep.subr.mxu0 0.0
    %2921 = vmatpush1.msra.mxu0 %v74
    %2922 = vmatprep.subr.mxu0 0.0
    %2923 = vmatpush1.msra.mxu0 %v75
    %2924 = vmatprep.subr.mxu0 0.0
    %2925 = vmatpush1.msra.mxu0 %v76
    %2926 = vmatprep.subr.mxu0 0.0
    %2927 = vmatpush1.msra.mxu0 %v77
    %2928 = vmatprep.subr.mxu0 0.0
    %2929 = vmatpush1.msra.mxu0 %v78
    %2930 = vmatprep.subr.mxu0 0.0
    %2931 = vmatpush1.msra.mxu0 %v79
    %2932 = vmatprep.subr.mxu0 0.0
    %2933 = vmatpush1.msra.mxu0 %v80
    %2934 = vmatprep.subr.mxu0 0.0
    %2935 = vmatpush1.msra.mxu0 %v2912
    %2936 = vmatprep.subr.mxu0 0.0
    %2937 = vmatpush1.msra.mxu0 0.0
    %2938 = vmatprep.subr.mxu0 0.0
    %2939 = vmatpush1.msra.mxu0 0.0
    %2940 = vmatprep.subr.mxu0 0.0
    %2941 = vmatpush1.msra.mxu0 0.0
    %2942 = vmatprep.subr.mxu0 0.0
    %2943 = vmatpush1.msra.mxu0 0.0
    %2944 = vmatprep.subr.mxu0 0.0
    %2945 = vmatpush1.msra.mxu0 0.0
    %2946 = vmatprep.subr.mxu0 0.0
    %2947 = vmatpush1.msra.mxu0 0.0
    %2948 = vmatprep.subr.mxu0 0.0
    %2949 = vmatpush1.msra.mxu0 0.0
    %2950 = vmatprep.subr.mxu0 0.0
    %2951 = vmatpush1.msra.mxu0 0.0
    %2952 = vmatprep.subr.mxu0 0.0
    %2953 = vmatpush1.msra.mxu0 0.0
    %2954 = vmatprep.subr.mxu0 0.0
    %2955 = vmatpush1.msra.mxu0 0.0
    %2956 = vmatprep.subr.mxu0 0.0
    %2957 = vmatpush1.msra.mxu0 0.0
    %2958 = vmatprep.subr.mxu0 0.0
    %2959 = vmatpush1.msra.mxu0 0.0
    %2960 = vmatprep.subr.mxu0 0.0
    %2961 = vmatpush1.msra.mxu0 0.0
    %2962 = vmatprep.subr.mxu0 0.0
    %2963 = vmatpush1.msra.mxu0 0.0
    %2964 = vmatprep.subr.mxu0 0.0
    %2965 = vmatpush1.msra.mxu0 0.0
    %2966 = vmatprep.subr.mxu0 0.0
    %2967 = vmatpush1.msra.mxu0 0.0
    %2968 = vmatprep.subr.mxu0 0.0
    %2969 = vmatpush1.msra.mxu0 0.0
    %2970 = vmatprep.subr.mxu0 0.0
    %2971 = vmatpush1.msra.mxu0 0.0
    %2972 = vmatprep.subr.mxu0 0.0
    %2973 = vmatpush1.msra.mxu0 0.0
    %2974 = vmatprep.subr.mxu0 0.0
    %2975 = vmatpush1.msra.mxu0 0.0
    %2976 = vmatprep.subr.mxu0 0.0
    %2977 = vmatpush1.msra.mxu0 0.0
    %2978 = vmatprep.mubr.f32.mxu0 0.0
    %2979 = vmatmul.mubr.f32.gmra.mrb[0].mxu0 %v2909
    %v2980 = vpop.f32.mrb[0].mxu0
    %v2981 = vadd.f32 %v55, %v2980
    %v2982 = vpop.f32.mrb[0].mxu0
    %2983 = vdwg.mxu0
    %2984 = vst [vmem:[#allocation2] sm:$0x1] %v2981
    %s2985 = scalar_lea.vmem %s0, 32
    %v2986 = vld [vmem:[%s2985] sm:$0xff]
    %v2987 = vld [vmem:[%s2985 + $0x8] sm:$0xff]
    %v2988 = vld [vmem:[%s2985 + $0x10] sm:$0xff]
    %v2989 = vld [vmem:[%s2985 + $0x18] sm:$0xff]
    %v2990 = vld [vmem:[%s1] sm:$0xff]
    %v2991 = vld [vmem:[%s1 + $0x8] sm:$0xff]
    %v2992 = vld [vmem:[%s1 + $0x10] sm:$0xff]
    %v2993 = vld [vmem:[%s1 + $0x18] sm:$0xff]
    %v2994 = vld [vmem:[%s1 + $0x20] sm:$0xff]
    %v2995 = vld [vmem:[%s1 + $0x28] sm:$0xff]
    %v2996 = vld [vmem:[%s1 + $0x30] sm:$0xff]
    %v2997 = vld [vmem:[%s1 + $0x38] sm:$0xff]
    %v2998 = vld [vmem:[%s1 + $0x40] sm:$0xff]
    %v2999 = vld [vmem:[%s1 + $0x48] sm:$0xff]
    %v3000 = vld [vmem:[%s1 + $0x50] sm:$0xff]
    %v3001 = vld [vmem:[%s1 + $0x58] sm:$0xff]
    %v3002 = vld [vmem:[%s1 + $0x60] sm:$0xff]
    %v3003 = vld [vmem:[%s1 + $0x68] sm:$0xff]
    %v3004 = vld [vmem:[%s1 + $0x70] sm:$0xff]
    %v3005 = vld [vmem:[%s1 + $0x78] sm:$0xff]
    %v3006 = vld [vmem:[%s1 + $0x80] sm:$0xff]
    %v3007 = vld [vmem:[%s1 + $0x88] sm:$0xff]
    %v3008 = vld [vmem:[%s1 + $0x90] sm:$0xff]
    %v3009 = vld [vmem:[%s1 + $0x98] sm:$0xff]
    %v3010 = vld [vmem:[%s1 + $0xa0] sm:$0xff]
    %v3011 = vld [vmem:[%s1 + $0xa8] sm:$0xff]
    %v3012 = vld [vmem:[%s1 + $0xb0] sm:$0xff]
    %v3013 = vld [vmem:[%s1 + $0xb8] sm:$0xff]
    %v3014 = vld [vmem:[%s110] sm:$0xff]
    %v3015 = vld [vmem:[%s110 + $0x8] sm:$0xff]
    %v3016 = vld [vmem:[%s110 + $0x10] sm:$0xff]
    %v3017 = vld [vmem:[%s110 + $0x18] sm:$0xff]
    %v3018 = vld [vmem:[%s110 + $0x20] sm:$0xff]
    %v3019 = vld [vmem:[%s110 + $0x28] sm:$0xff]
    %v3020 = vld [vmem:[%s110 + $0x30] sm:$0xff]
    %v3021 = vld [vmem:[%s110 + $0x38] sm:$0xff]
    %v3022 = vld [vmem:[%s110 + $0x40] sm:$0xff]
    %v3023 = vld [vmem:[%s110 + $0x48] sm:$0xff]
    %v3024 = vld [vmem:[%s110 + $0x50] sm:$0xff]
    %v3025 = vld [vmem:[%s110 + $0x58] sm:$0xff]
    %v3026 = vld [vmem:[%s110 + $0x60] sm:$0xff]
    %v3027 = vld [vmem:[%s110 + $0x68] sm:$0xff]
    %v3028 = vld [vmem:[%s110 + $0x70] sm:$0xff]
    %v3029 = vld [vmem:[%s110 + $0x78] sm:$0xff]
    %v3030 = vld [vmem:[%s110 + $0x80] sm:$0xff]
    %v3031 = vld [vmem:[%s110 + $0x88] sm:$0xff]
    %v3032 = vld [vmem:[%s110 + $0x90] sm:$0xff]
    %v3033 = vld [vmem:[%s110 + $0x98] sm:$0xff]
    %v3034 = vld [vmem:[%s110 + $0xa0] sm:$0xff]
    %v3035 = vld [vmem:[%s110 + $0xa8] sm:$0xff]
    %v3036 = vld [vmem:[%s110 + $0xb0] sm:$0xff]
    %v3037 = vld [vmem:[%s110 + $0xb8] sm:$0xff]
    %v3042 = vrot.slane %v2986, 1
    %v3043 = vrot.slane %v2987, 1
    %v3044 = vsel %vm139, %v3042, %v3043
    %v3045 = vrot.slane %v2988, 1
    %v3046 = vsel %vm139, %v3043, %v3045
    %v3047 = vrot.slane %v2989, 1
    %v3048 = vsel %vm139, %v3045, %v3047
    %v3049 = vsel %vm147, %v3044, 0
    %v3051 = vsel %vm147, %v3046, 0
    %v3053 = vsel %vm147, %v3048, 0
    %v3055 = vsel %vm147, %v3047, 0
    %3057 = vmatprep.subr.mxu0 %v3015
    %3058 = vmatpush1.msra.mxu0 %v3014
    %3059 = vmatprep.subr.mxu0 %v3017
    %3060 = vmatpush1.msra.mxu0 %v3016
    %3061 = vmatprep.subr.mxu0 %v3019
    %3062 = vmatpush1.msra.mxu0 %v3018
    %3063 = vmatprep.subr.mxu0 %v3021
    %3064 = vmatpush1.msra.mxu0 %v3020
    %3065 = vmatprep.subr.mxu0 %v3023
    %3066 = vmatpush1.msra.mxu0 %v3022
    %3067 = vmatprep.subr.mxu0 %v3025
    %3068 = vmatpush1.msra.mxu0 %v3024
    %3069 = vmatprep.subr.mxu0 %v3027
    %3070 = vmatpush1.msra.mxu0 %v3026
    %3071 = vmatprep.subr.mxu0 %v3029
    %3072 = vmatpush1.msra.mxu0 %v3028
    %3073 = vmatprep.subr.mxu0 %v3031
    %3074 = vmatpush1.msra.mxu0 %v3030
    %3075 = vmatprep.subr.mxu0 %v3033
    %3076 = vmatpush1.msra.mxu0 %v3032
    %3077 = vmatprep.subr.mxu0 %v3035
    %3078 = vmatpush1.msra.mxu0 %v3034
    %3079 = vmatprep.subr.mxu0 %v3037
    %3080 = vmatpush1.msra.mxu0 %v3036
    %3081 = vmatprep.subr.mxu0 0.0
    %3082 = vmatpush1.msra.mxu0 0.0
    %3083 = vmatprep.subr.mxu0 0.0
    %3084 = vmatpush1.msra.mxu0 0.0
    %3085 = vmatprep.subr.mxu0 0.0
    %3086 = vmatpush1.msra.mxu0 0.0
    %3087 = vmatprep.subr.mxu0 0.0
    %3088 = vmatpush1.msra.mxu0 0.0
    %3089 = vmatprep.subr.mxu0 0.0
    %3090 = vmatpush1.msra.mxu0 0.0
    %3091 = vmatprep.subr.mxu0 0.0
    %3092 = vmatpush1.msra.mxu0 0.0
    %3093 = vmatprep.subr.mxu0 0.0
    %3094 = vmatpush1.msra.mxu0 0.0
    %3095 = vmatprep.subr.mxu0 0.0
    %3096 = vmatpush1.msra.mxu0 0.0
    %3097 = vmatprep.subr.mxu0 0.0
    %3098 = vmatpush1.msra.mxu0 0.0
    %3099 = vmatprep.subr.mxu0 0.0
    %3100 = vmatpush1.msra.mxu0 0.0
    %3101 = vmatprep.subr.mxu0 0.0
    %3102 = vmatpush1.msra.mxu0 0.0
    %3103 = vmatprep.subr.mxu0 0.0
    %3104 = vmatpush1.msra.mxu0 0.0
    %3105 = vmatprep.subr.mxu0 0.0
    %3106 = vmatpush1.msra.mxu0 0.0
    %3107 = vmatprep.subr.mxu0 0.0
    %3108 = vmatpush1.msra.mxu0 0.0
    %3109 = vmatprep.subr.mxu0 0.0
    %3110 = vmatpush1.msra.mxu0 0.0
    %3111 = vmatprep.subr.mxu0 0.0
    %3112 = vmatpush1.msra.mxu0 0.0
    %3113 = vmatprep.subr.mxu0 0.0
    %3114 = vmatpush1.msra.mxu0 0.0
    %3115 = vmatprep.subr.mxu0 0.0
    %3116 = vmatpush1.msra.mxu0 0.0
    %3117 = vmatprep.subr.mxu0 0.0
    %3118 = vmatpush1.msra.mxu0 0.0
    %3119 = vmatprep.subr.mxu0 0.0
    %3120 = vmatpush1.msra.mxu0 0.0
    %3121 = vmatprep.mubr.f32.mxu0 0.0
    %3122 = vmatmul.mubr.f32.gmra.mrb[0].mxu0 %v3049
    %v3123 = vpop.f32.mrb[0].mxu0
    %v3124 = vadd.f32 0.0, %v3123
    %v3125 = vpop.f32.mrb[0].mxu0
    %v3126 = vadd.f32 0.0, %v3125
    %3127 = vmatprep.mubr.f32.mxu0 0.0
    %3128 = vmatmul.mubr.f32.gmra.mrb[0].mxu0 %v3051
    %v3129 = vpop.f32.mrb[0].mxu0
    %v3130 = vadd.f32 0.0, %v3129
    %v3131 = vpop.f32.mrb[0].mxu0
    %v3132 = vadd.f32 0.0, %v3131
    %3133 = vmatprep.mubr.f32.mxu0 0.0
    %3134 = vmatmul.mubr.f32.gmra.mrb[0].mxu0 %v3053
    %v3135 = vpop.f32.mrb[0].mxu0
    %v3136 = vadd.f32 0.0, %v3135
    %v3137 = vpop.f32.mrb[0].mxu0
    %v3138 = vadd.f32 0.0, %v3137
    %3139 = vmatprep.mubr.f32.mxu0 0.0
    %3140 = vmatmul.mubr.f32.gmra.mrb[0].mxu0 %v3055
    %v3141 = vpop.f32.mrb[0].mxu0
    %v3142 = vadd.f32 0.0, %v3141
    %v3143 = vpop.f32.mrb[0].mxu0
    %v3144 = vadd.f32 0.0, %v3143
    %3145 = vdwg.mxu0
    %v3146 = vsel %vm147, %v2986, 0
    %v3148 = vsel %vm147, %v2987, 0
    %v3150 = vsel %vm147, %v2988, 0
    %v3152 = vsel %vm147, %v2989, 0
    %3154 = vmatprep.subr.mxu0 %v2991
    %3155 = vmatpush1.msra.mxu0 %v2990
    %3156 = vmatprep.subr.mxu0 %v2993
    %3157 = vmatpush1.msra.mxu0 %v2992
    %3158 = vmatprep.subr.mxu0 %v2995
    %3159 = vmatpush1.msra.mxu0 %v2994
    %3160 = vmatprep.subr.mxu0 %v2997
    %3161 = vmatpush1.msra.mxu0 %v2996
    %3162 = vmatprep.subr.mxu0 %v2999
    %3163 = vmatpush1.msra.mxu0 %v2998
    %3164 = vmatprep.subr.mxu0 %v3001
    %3165 = vmatpush1.msra.mxu0 %v3000
    %3166 = vmatprep.subr.mxu0 %v3003
    %3167 = vmatpush1.msra.mxu0 %v3002
    %3168 = vmatprep.subr.mxu0 %v3005
    %3169 = vmatpush1.msra.mxu0 %v3004
    %3170 = vmatprep.subr.mxu0 %v3007
    %3171 = vmatpush1.msra.mxu0 %v3006
    %3172 = vmatprep.subr.mxu0 %v3009
    %3173 = vmatpush1.msra.mxu0 %v3008
    %3174 = vmatprep.subr.mxu0 %v3011
    %3175 = vmatpush1.msra.mxu0 %v3010
    %3176 = vmatprep.subr.mxu0 %v3013
    %3177 = vmatpush1.msra.mxu0 %v3012
    %3178 = vmatprep.subr.mxu0 0.0
    %3179 = vmatpush1.msra.mxu0 0.0
    %3180 = vmatprep.subr.mxu0 0.0
    %3181 = vmatpush1.msra.mxu0 0.0
    %3182 = vmatprep.subr.mxu0 0.0
    %3183 = vmatpush1.msra.mxu0 0.0
    %3184 = vmatprep.subr.mxu0 0.0
    %3185 = vmatpush1.msra.mxu0 0.0
    %3186 = vmatprep.subr.mxu0 0.0
    %3187 = vmatpush1.msra.mxu0 0.0
    %3188 = vmatprep.subr.mxu0 0.0
    %3189 = vmatpush1.msra.mxu0 0.0
    %3190 = vmatprep.subr.mxu0 0.0
    %3191 = vmatpush1.msra.mxu0 0.0
    %3192 = vmatprep.subr.mxu0 0.0
    %3193 = vmatpush1.msra.mxu0 0.0
    %3194 = vmatprep.subr.mxu0 0.0
    %3195 = vmatpush1.msra.mxu0 0.0
    %3196 = vmatprep.subr.mxu0 0.0
    %3197 = vmatpush1.msra.mxu0 0.0
    %3198 = vmatprep.subr.mxu0 0.0
    %3199 = vmatpush1.msra.mxu0 0.0
    %3200 = vmatprep.subr.mxu0 0.0
    %3201 = vmatpush1.msra.mxu0 0.0
    %3202 = vmatprep.subr.mxu0 0.0
    %3203 = vmatpush1.msra.mxu0 0.0
    %3204 = vmatprep.subr.mxu0 0.0
    %3205 = vmatpush1.msra.mxu0 0.0
    %3206 = vmatprep.subr.mxu0 0.0
    %3207 = vmatpush1.msra.mxu0 0.0
    %3208 = vmatprep.subr.mxu0 0.0
    %3209 = vmatpush1.msra.mxu0 0.0
    %3210 = vmatprep.subr.mxu0 0.0
    %3211 = vmatpush1.msra.mxu0 0.0
    %3212 = vmatprep.subr.mxu0 0.0
    %3213 = vmatpush1.msra.mxu0 0.0
    %3214 = vmatprep.subr.mxu0 0.0
    %3215 = vmatpush1.msra.mxu0 0.0
    %3216 = vmatprep.subr.mxu0 0.0
    %3217 = vmatpush1.msra.mxu0 0.0
    %3218 = vmatprep.mubr.f32.mxu0 0.0
    %3219 = vmatmul.mubr.f32.gmra.mrb[0].mxu0 %v3146
    %v3220 = vpop.f32.mrb[0].mxu0
    %v3221 = vadd.f32 %v3124, %v3220
    %v3222 = vpop.f32.mrb[0].mxu0
    %v3223 = vadd.f32 %v3126, %v3222
    %3224 = vmatprep.mubr.f32.mxu0 0.0
    %3225 = vmatmul.mubr.f32.gmra.mrb[0].mxu0 %v3148
    %v3226 = vpop.f32.mrb[0].mxu0
    %v3227 = vadd.f32 %v3130, %v3226
    %v3228 = vpop.f32.mrb[0].mxu0
    %v3229 = vadd.f32 %v3132, %v3228
    %3230 = vmatprep.mubr.f32.mxu0 0.0
    %3231 = vmatmul.mubr.f32.gmra.mrb[0].mxu0 %v3150
    %v3232 = vpop.f32.mrb[0].mxu0
    %v3233 = vadd.f32 %v3136, %v3232
    %v3234 = vpop.f32.mrb[0].mxu0
    %v3235 = vadd.f32 %v3138, %v3234
    %3236 = vmatprep.mubr.f32.mxu0 0.0
    %3237 = vmatmul.mubr.f32.gmra.mrb[0].mxu0 %v3152
    %v3238 = vpop.f32.mrb[0].mxu0
    %v3239 = vadd.f32 %v3142, %v3238
    %v3240 = vpop.f32.mrb[0].mxu0
    %v3241 = vadd.f32 %v3144, %v3240
    %3242 = vdwg.mxu0
    %v3243 = vld [vmem:[%s342] sm:$0xff]
    %v3244 = vld [vmem:[%s342 + $0x8] sm:$0xff]
    %v3245 = vld [vmem:[%s342 + $0x10] sm:$0xff]
    %v3246 = vld [vmem:[%s342 + $0x18] sm:$0xff]
    %v3247 = vld [vmem:[%s342 + $0x20] sm:$0xff]
    %v3248 = vld [vmem:[%s342 + $0x28] sm:$0xff]
    %v3249 = vld [vmem:[%s342 + $0x30] sm:$0xff]
    %v3250 = vld [vmem:[%s342 + $0x38] sm:$0xff]
    %v3251 = vld [vmem:[%s342 + $0x40] sm:$0xff]
    %v3252 = vld [vmem:[%s342 + $0x48] sm:$0xff]
    %v3253 = vld [vmem:[%s342 + $0x50] sm:$0xff]
    %v3254 = vld [vmem:[%s342 + $0x58] sm:$0xff]
    %v3255 = vld [vmem:[%s342 + $0x60] sm:$0xff]
    %v3256 = vld [vmem:[%s342 + $0x68] sm:$0xff]
    %v3257 = vld [vmem:[%s342 + $0x70] sm:$0xff]
    %v3258 = vld [vmem:[%s342 + $0x78] sm:$0xff]
    %v3259 = vld [vmem:[%s342 + $0x80] sm:$0xff]
    %v3260 = vld [vmem:[%s342 + $0x88] sm:$0xff]
    %v3261 = vld [vmem:[%s342 + $0x90] sm:$0xff]
    %v3262 = vld [vmem:[%s342 + $0x98] sm:$0xff]
    %v3263 = vld [vmem:[%s342 + $0xa0] sm:$0xff]
    %v3264 = vld [vmem:[%s342 + $0xa8] sm:$0xff]
    %v3265 = vld [vmem:[%s342 + $0xb0] sm:$0xff]
    %v3266 = vld [vmem:[%s342 + $0xb8] sm:$0xff]
    %v3267 = vrot.slane %v2986, 2
    %v3268 = vrot.slane %v2987, 2
    %v3269 = vsel %vm367, %v3267, %v3268
    %v3270 = vrot.slane %v2988, 2
    %v3271 = vsel %vm367, %v3268, %v3270
    %v3272 = vrot.slane %v2989, 2
    %v3273 = vsel %vm367, %v3270, %v3272
    %v3274 = vsel %vm147, %v3269, 0
    %v3276 = vsel %vm147, %v3271, 0
    %v3278 = vsel %vm147, %v3273, 0
    %v3280 = vsel %vm147, %v3272, 0
    %3282 = vmatprep.subr.mxu0 %v3244
    %3283 = vmatpush1.msra.mxu0 %v3243
    %3284 = vmatprep.subr.mxu0 %v3246
    %3285 = vmatpush1.msra.mxu0 %v3245
    %3286 = vmatprep.subr.mxu0 %v3248
    %3287 = vmatpush1.msra.mxu0 %v3247
    %3288 = vmatprep.subr.mxu0 %v3250
    %3289 = vmatpush1.msra.mxu0 %v3249
    %3290 = vmatprep.subr.mxu0 %v3252
    %3291 = vmatpush1.msra.mxu0 %v3251
    %3292 = vmatprep.subr.mxu0 %v3254
    %3293 = vmatpush1.msra.mxu0 %v3253
    %3294 = vmatprep.subr.mxu0 %v3256
    %3295 = vmatpush1.msra.mxu0 %v3255
    %3296 = vmatprep.subr.mxu0 %v3258
    %3297 = vmatpush1.msra.mxu0 %v3257
    %3298 = vmatprep.subr.mxu0 %v3260
    %3299 = vmatpush1.msra.mxu0 %v3259
    %3300 = vmatprep.subr.mxu0 %v3262
    %3301 = vmatpush1.msra.mxu0 %v3261
    %3302 = vmatprep.subr.mxu0 %v3264
    %3303 = vmatpush1.msra.mxu0 %v3263
    %3304 = vmatprep.subr.mxu0 %v3266
    %3305 = vmatpush1.msra.mxu0 %v3265
    %3306 = vmatprep.subr.mxu0 0.0
    %3307 = vmatpush1.msra.mxu0 0.0
    %3308 = vmatprep.subr.mxu0 0.0
    %3309 = vmatpush1.msra.mxu0 0.0
    %3310 = vmatprep.subr.mxu0 0.0
    %3311 = vmatpush1.msra.mxu0 0.0
    %3312 = vmatprep.subr.mxu0 0.0
    %3313 = vmatpush1.msra.mxu0 0.0
    %3314 = vmatprep.subr.mxu0 0.0
    %3315 = vmatpush1.msra.mxu0 0.0
    %3316 = vmatprep.subr.mxu0 0.0
    %3317 = vmatpush1.msra.mxu0 0.0
    %3318 = vmatprep.subr.mxu0 0.0
    %3319 = vmatpush1.msra.mxu0 0.0
    %3320 = vmatprep.subr.mxu0 0.0
    %3321 = vmatpush1.msra.mxu0 0.0
    %3322 = vmatprep.subr.mxu0 0.0
    %3323 = vmatpush1.msra.mxu0 0.0
    %3324 = vmatprep.subr.mxu0 0.0
    %3325 = vmatpush1.msra.mxu0 0.0
    %3326 = vmatprep.subr.mxu0 0.0
    %3327 = vmatpush1.msra.mxu0 0.0
    %3328 = vmatprep.subr.mxu0 0.0
    %3329 = vmatpush1.msra.mxu0 0.0
    %3330 = vmatprep.subr.mxu0 0.0
    %3331 = vmatpush1.msra.mxu0 0.0
    %3332 = vmatprep.subr.mxu0 0.0
    %3333 = vmatpush1.msra.mxu0 0.0
    %3334 = vmatprep.subr.mxu0 0.0
    %3335 = vmatpush1.msra.mxu0 0.0
    %3336 = vmatprep.subr.mxu0 0.0
    %3337 = vmatpush1.msra.mxu0 0.0
    %3338 = vmatprep.subr.mxu0 0.0
    %3339 = vmatpush1.msra.mxu0 0.0
    %3340 = vmatprep.subr.mxu0 0.0
    %3341 = vmatpush1.msra.mxu0 0.0
    %3342 = vmatprep.subr.mxu0 0.0
    %3343 = vmatpush1.msra.mxu0 0.0
    %3344 = vmatprep.subr.mxu0 0.0
    %3345 = vmatpush1.msra.mxu0 0.0
    %3346 = vmatprep.mubr.f32.mxu0 0.0
    %3347 = vmatmul.mubr.f32.gmra.mrb[0].mxu0 %v3274
    %v3348 = vpop.f32.mrb[0].mxu0
    %v3349 = vadd.f32 0.0, %v3348
    %v3350 = vpop.f32.mrb[0].mxu0
    %v3351 = vadd.f32 0.0, %v3350
    %3352 = vmatprep.mubr.f32.mxu0 0.0
    %3353 = vmatmul.mubr.f32.gmra.mrb[0].mxu0 %v3276
    %v3354 = vpop.f32.mrb[0].mxu0
    %v3355 = vadd.f32 0.0, %v3354
    %v3356 = vpop.f32.mrb[0].mxu0
    %v3357 = vadd.f32 0.0, %v3356
    %3358 = vmatprep.mubr.f32.mxu0 0.0
    %3359 = vmatmul.mubr.f32.gmra.mrb[0].mxu0 %v3278
    %v3360 = vpop.f32.mrb[0].mxu0
    %v3361 = vadd.f32 0.0, %v3360
    %v3362 = vpop.f32.mrb[0].mxu0
    %v3363 = vadd.f32 0.0, %v3362
    %3364 = vmatprep.mubr.f32.mxu0 0.0
    %3365 = vmatmul.mubr.f32.gmra.mrb[0].mxu0 %v3280
    %v3366 = vpop.f32.mrb[0].mxu0
    %v3367 = vadd.f32 0.0, %v3366
    %v3368 = vpop.f32.mrb[0].mxu0
    %v3369 = vadd.f32 0.0, %v3368
    %3370 = vdwg.mxu0
    %v3371 = vadd.f32 %v3221, %v3349
    %v3372 = vadd.f32 %v3223, %v3351
    %v3373 = vadd.f32 %v3227, %v3355
    %v3374 = vadd.f32 %v3229, %v3357
    %v3375 = vadd.f32 %v3233, %v3361
    %v3376 = vadd.f32 %v3235, %v3363
    %v3377 = vadd.f32 %v3239, %v3367
    %v3378 = vadd.f32 %v3241, %v3369
    %v3379 = vld [vmem:[%s480] sm:$0xff]
    %v3380 = vld [vmem:[%s480 + $0x8] sm:$0xff]
    %v3381 = vld [vmem:[%s480 + $0x10] sm:$0xff]
    %v3382 = vld [vmem:[%s480 + $0x18] sm:$0xff]
    %v3383 = vld [vmem:[%s480 + $0x20] sm:$0xff]
    %v3384 = vld [vmem:[%s480 + $0x28] sm:$0xff]
    %v3385 = vld [vmem:[%s480 + $0x30] sm:$0xff]
    %v3386 = vld [vmem:[%s480 + $0x38] sm:$0xff]
    %v3387 = vld [vmem:[%s480 + $0x40] sm:$0xff]
    %v3388 = vld [vmem:[%s480 + $0x48] sm:$0xff]
    %v3389 = vld [vmem:[%s480 + $0x50] sm:$0xff]
    %v3390 = vld [vmem:[%s480 + $0x58] sm:$0xff]
    %v3391 = vld [vmem:[%s480 + $0x60] sm:$0xff]
    %v3392 = vld [vmem:[%s480 + $0x68] sm:$0xff]
    %v3393 = vld [vmem:[%s480 + $0x70] sm:$0xff]
    %v3394 = vld [vmem:[%s480 + $0x78] sm:$0xff]
    %v3395 = vld [vmem:[%s480 + $0x80] sm:$0xff]
    %v3396 = vld [vmem:[%s480 + $0x88] sm:$0xff]
    %v3397 = vld [vmem:[%s480 + $0x90] sm:$0xff]
    %v3398 = vld [vmem:[%s480 + $0x98] sm:$0xff]
    %v3399 = vld [vmem:[%s480 + $0xa0] sm:$0xff]
    %v3400 = vld [vmem:[%s480 + $0xa8] sm:$0xff]
    %v3401 = vld [vmem:[%s480 + $0xb0] sm:$0xff]
    %v3402 = vld [vmem:[%s480 + $0xb8] sm:$0xff]
    %v3403 = vrot.slane %v2986, 3
    %v3404 = vrot.slane %v2987, 3
    %v3405 = vsel %vm505, %v3403, %v3404
    %v3406 = vrot.slane %v2988, 3
    %v3407 = vsel %vm505, %v3404, %v3406
    %v3408 = vrot.slane %v2989, 3
    %v3409 = vsel %vm505, %v3406, %v3408
    %v3410 = vsel %vm147, %v3405, 0
    %v3412 = vsel %vm147, %v3407, 0
    %v3414 = vsel %vm147, %v3409, 0
    %v3416 = vsel %vm147, %v3408, 0
    %3418 = vmatprep.subr.mxu0 %v3380
    %3419 = vmatpush1.msra.mxu0 %v3379
    %3420 = vmatprep.subr.mxu0 %v3382
    %3421 = vmatpush1.msra.mxu0 %v3381
    %3422 = vmatprep.subr.mxu0 %v3384
    %3423 = vmatpush1.msra.mxu0 %v3383
    %3424 = vmatprep.subr.mxu0 %v3386
    %3425 = vmatpush1.msra.mxu0 %v3385
    %3426 = vmatprep.subr.mxu0 %v3388
    %3427 = vmatpush1.msra.mxu0 %v3387
    %3428 = vmatprep.subr.mxu0 %v3390
    %3429 = vmatpush1.msra.mxu0 %v3389
    %3430 = vmatprep.subr.mxu0 %v3392
    %3431 = vmatpush1.msra.mxu0 %v3391
    %3432 = vmatprep.subr.mxu0 %v3394
    %3433 = vmatpush1.msra.mxu0 %v3393
    %3434 = vmatprep.subr.mxu0 %v3396
    %3435 = vmatpush1.msra.mxu0 %v3395
    %3436 = vmatprep.subr.mxu0 %v3398
    %3437 = vmatpush1.msra.mxu0 %v3397
    %3438 = vmatprep.subr.mxu0 %v3400
    %3439 = vmatpush1.msra.mxu0 %v3399
    %3440 = vmatprep.subr.mxu0 %v3402
    %3441 = vmatpush1.msra.mxu0 %v3401
    %3442 = vmatprep.subr.mxu0 0.0
    %3443 = vmatpush1.msra.mxu0 0.0
    %3444 = vmatprep.subr.mxu0 0.0
    %3445 = vmatpush1.msra.mxu0 0.0
    %3446 = vmatprep.subr.mxu0 0.0
    %3447 = vmatpush1.msra.mxu0 0.0
    %3448 = vmatprep.subr.mxu0 0.0
    %3449 = vmatpush1.msra.mxu0 0.0
    %3450 = vmatprep.subr.mxu0 0.0
    %3451 = vmatpush1.msra.mxu0 0.0
    %3452 = vmatprep.subr.mxu0 0.0
    %3453 = vmatpush1.msra.mxu0 0.0
    %3454 = vmatprep.subr.mxu0 0.0
    %3455 = vmatpush1.msra.mxu0 0.0
    %3456 = vmatprep.subr.mxu0 0.0
    %3457 = vmatpush1.msra.mxu0 0.0
    %3458 = vmatprep.subr.mxu0 0.0
    %3459 = vmatpush1.msra.mxu0 0.0
    %3460 = vmatprep.subr.mxu0 0.0
    %3461 = vmatpush1.msra.mxu0 0.0
    %3462 = vmatprep.subr.mxu0 0.0
    %3463 = vmatpush1.msra.mxu0 0.0
    %3464 = vmatprep.subr.mxu0 0.0
    %3465 = vmatpush1.msra.mxu0 0.0
    %3466 = vmatprep.subr.mxu0 0.0
    %3467 = vmatpush1.msra.mxu0 0.0
    %3468 = vmatprep.subr.mxu0 0.0
    %3469 = vmatpush1.msra.mxu0 0.0
    %3470 = vmatprep.subr.mxu0 0.0
    %3471 = vmatpush1.msra.mxu0 0.0
    %3472 = vmatprep.subr.mxu0 0.0
    %3473 = vmatpush1.msra.mxu0 0.0
    %3474 = vmatprep.subr.mxu0 0.0
    %3475 = vmatpush1.msra.mxu0 0.0
    %3476 = vmatprep.subr.mxu0 0.0
    %3477 = vmatpush1.msra.mxu0 0.0
    %3478 = vmatprep.subr.mxu0 0.0
    %3479 = vmatpush1.msra.mxu0 0.0
    %3480 = vmatprep.subr.mxu0 0.0
    %3481 = vmatpush1.msra.mxu0 0.0
    %3482 = vmatprep.mubr.f32.mxu0 0.0
    %3483 = vmatmul.mubr.f32.gmra.mrb[0].mxu0 %v3410
    %v3484 = vpop.f32.mrb[0].mxu0
    %v3485 = vadd.f32 0.0, %v3484
    %v3486 = vpop.f32.mrb[0].mxu0
    %v3487 = vadd.f32 0.0, %v3486
    %3488 = vmatprep.mubr.f32.mxu0 0.0
    %3489 = vmatmul.mubr.f32.gmra.mrb[0].mxu0 %v3412
    %v3490 = vpop.f32.mrb[0].mxu0
    %v3491 = vadd.f32 0.0, %v3490
    %v3492 = vpop.f32.mrb[0].mxu0
    %v3493 = vadd.f32 0.0, %v3492
    %3494 = vmatprep.mubr.f32.mxu0 0.0
    %3495 = vmatmul.mubr.f32.gmra.mrb[0].mxu0 %v3414
    %v3496 = vpop.f32.mrb[0].mxu0
    %v3497 = vadd.f32 0.0, %v3496
    %v3498 = vpop.f32.mrb[0].mxu0
    %v3499 = vadd.f32 0.0, %v3498
    %3500 = vmatprep.mubr.f32.mxu0 0.0
    %3501 = vmatmul.mubr.f32.gmra.mrb[0].mxu0 %v3416
    %v3502 = vpop.f32.mrb[0].mxu0
    %v3503 = vadd.f32 0.0, %v3502
    %v3504 = vpop.f32.mrb[0].mxu0
    %v3505 = vadd.f32 0.0, %v3504
    %3506 = vdwg.mxu0
    %v3507 = vadd.f32 %v3371, %v3485
    %v3508 = vadd.f32 %v3372, %v3487
    %v3509 = vadd.f32 %v3373, %v3491
    %v3510 = vadd.f32 %v3374, %v3493
    %v3511 = vadd.f32 %v3375, %v3497
    %v3512 = vadd.f32 %v3376, %v3499
    %v3513 = vadd.f32 %v3377, %v3503
    %v3514 = vadd.f32 %v3378, %v3505
    %v3515 = vld [vmem:[%s618] sm:$0xff]
    %v3516 = vld [vmem:[%s618 + $0x8] sm:$0xff]
    %v3517 = vld [vmem:[%s618 + $0x10] sm:$0xff]
    %v3518 = vld [vmem:[%s618 + $0x18] sm:$0xff]
    %v3519 = vld [vmem:[%s618 + $0x20] sm:$0xff]
    %v3520 = vld [vmem:[%s618 + $0x28] sm:$0xff]
    %v3521 = vld [vmem:[%s618 + $0x30] sm:$0xff]
    %v3522 = vld [vmem:[%s618 + $0x38] sm:$0xff]
    %v3523 = vld [vmem:[%s618 + $0x40] sm:$0xff]
    %v3524 = vld [vmem:[%s618 + $0x48] sm:$0xff]
    %v3525 = vld [vmem:[%s618 + $0x50] sm:$0xff]
    %v3526 = vld [vmem:[%s618 + $0x58] sm:$0xff]
    %v3527 = vld [vmem:[%s618 + $0x60] sm:$0xff]
    %v3528 = vld [vmem:[%s618 + $0x68] sm:$0xff]
    %v3529 = vld [vmem:[%s618 + $0x70] sm:$0xff]
    %v3530 = vld [vmem:[%s618 + $0x78] sm:$0xff]
    %v3531 = vld [vmem:[%s618 + $0x80] sm:$0xff]
    %v3532 = vld [vmem:[%s618 + $0x88] sm:$0xff]
    %v3533 = vld [vmem:[%s618 + $0x90] sm:$0xff]
    %v3534 = vld [vmem:[%s618 + $0x98] sm:$0xff]
    %v3535 = vld [vmem:[%s618 + $0xa0] sm:$0xff]
    %v3536 = vld [vmem:[%s618 + $0xa8] sm:$0xff]
    %v3537 = vld [vmem:[%s618 + $0xb0] sm:$0xff]
    %v3538 = vld [vmem:[%s618 + $0xb8] sm:$0xff]
    %v3539 = vrot.slane %v2986, 4
    %v3540 = vrot.slane %v2987, 4
    %v3541 = vsel %vm643, %v3539, %v3540
    %v3542 = vrot.slane %v2988, 4
    %v3543 = vsel %vm643, %v3540, %v3542
    %v3544 = vrot.slane %v2989, 4
    %v3545 = vsel %vm643, %v3542, %v3544
    %v3546 = vsel %vm147, %v3541, 0
    %v3548 = vsel %vm147, %v3543, 0
    %v3550 = vsel %vm147, %v3545, 0
    %v3552 = vsel %vm147, %v3544, 0
    %3554 = vmatprep.subr.mxu0 %v3516
    %3555 = vmatpush1.msra.mxu0 %v3515
    %3556 = vmatprep.subr.mxu0 %v3518
    %3557 = vmatpush1.msra.mxu0 %v3517
    %3558 = vmatprep.subr.mxu0 %v3520
    %3559 = vmatpush1.msra.mxu0 %v3519
    %3560 = vmatprep.subr.mxu0 %v3522
    %3561 = vmatpush1.msra.mxu0 %v3521
    %3562 = vmatprep.subr.mxu0 %v3524
    %3563 = vmatpush1.msra.mxu0 %v3523
    %3564 = vmatprep.subr.mxu0 %v3526
    %3565 = vmatpush1.msra.mxu0 %v3525
    %3566 = vmatprep.subr.mxu0 %v3528
    %3567 = vmatpush1.msra.mxu0 %v3527
    %3568 = vmatprep.subr.mxu0 %v3530
    %3569 = vmatpush1.msra.mxu0 %v3529
    %3570 = vmatprep.subr.mxu0 %v3532
    %3571 = vmatpush1.msra.mxu0 %v3531
    %3572 = vmatprep.subr.mxu0 %v3534
    %3573 = vmatpush1.msra.mxu0 %v3533
    %3574 = vmatprep.subr.mxu0 %v3536
    %3575 = vmatpush1.msra.mxu0 %v3535
    %3576 = vmatprep.subr.mxu0 %v3538
    %3577 = vmatpush1.msra.mxu0 %v3537
    %3578 = vmatprep.subr.mxu0 0.0
    %3579 = vmatpush1.msra.mxu0 0.0
    %3580 = vmatprep.subr.mxu0 0.0
    %3581 = vmatpush1.msra.mxu0 0.0
    %3582 = vmatprep.subr.mxu0 0.0
    %3583 = vmatpush1.msra.mxu0 0.0
    %3584 = vmatprep.subr.mxu0 0.0
    %3585 = vmatpush1.msra.mxu0 0.0
    %3586 = vmatprep.subr.mxu0 0.0
    %3587 = vmatpush1.msra.mxu0 0.0
    %3588 = vmatprep.subr.mxu0 0.0
    %3589 = vmatpush1.msra.mxu0 0.0
    %3590 = vmatprep.subr.mxu0 0.0
    %3591 = vmatpush1.msra.mxu0 0.0
    %3592 = vmatprep.subr.mxu0 0.0
    %3593 = vmatpush1.msra.mxu0 0.0
    %3594 = vmatprep.subr.mxu0 0.0
    %3595 = vmatpush1.msra.mxu0 0.0
    %3596 = vmatprep.subr.mxu0 0.0
    %3597 = vmatpush1.msra.mxu0 0.0
    %3598 = vmatprep.subr.mxu0 0.0
    %3599 = vmatpush1.msra.mxu0 0.0
    %3600 = vmatprep.subr.mxu0 0.0
    %3601 = vmatpush1.msra.mxu0 0.0
    %3602 = vmatprep.subr.mxu0 0.0
    %3603 = vmatpush1.msra.mxu0 0.0
    %3604 = vmatprep.subr.mxu0 0.0
    %3605 = vmatpush1.msra.mxu0 0.0
    %3606 = vmatprep.subr.mxu0 0.0
    %3607 = vmatpush1.msra.mxu0 0.0
    %3608 = vmatprep.subr.mxu0 0.0
    %3609 = vmatpush1.msra.mxu0 0.0
    %3610 = vmatprep.subr.mxu0 0.0
    %3611 = vmatpush1.msra.mxu0 0.0
    %3612 = vmatprep.subr.mxu0 0.0
    %3613 = vmatpush1.msra.mxu0 0.0
    %3614 = vmatprep.subr.mxu0 0.0
    %3615 = vmatpush1.msra.mxu0 0.0
    %3616 = vmatprep.subr.mxu0 0.0
    %3617 = vmatpush1.msra.mxu0 0.0
    %3618 = vmatprep.mubr.f32.mxu0 0.0
    %3619 = vmatmul.mubr.f32.gmra.mrb[0].mxu0 %v3546
    %v3620 = vpop.f32.mrb[0].mxu0
    %v3621 = vadd.f32 0.0, %v3620
    %v3622 = vpop.f32.mrb[0].mxu0
    %v3623 = vadd.f32 0.0, %v3622
    %3624 = vmatprep.mubr.f32.mxu0 0.0
    %3625 = vmatmul.mubr.f32.gmra.mrb[0].mxu0 %v3548
    %v3626 = vpop.f32.mrb[0].mxu0
    %v3627 = vadd.f32 0.0, %v3626
    %v3628 = vpop.f32.mrb[0].mxu0
    %v3629 = vadd.f32 0.0, %v3628
    %3630 = vmatprep.mubr.f32.mxu0 0.0
    %3631 = vmatmul.mubr.f32.gmra.mrb[0].mxu0 %v3550
    %v3632 = vpop.f32.mrb[0].mxu0
    %v3633 = vadd.f32 0.0, %v3632
    %v3634 = vpop.f32.mrb[0].mxu0
    %v3635 = vadd.f32 0.0, %v3634
    %3636 = vmatprep.mubr.f32.mxu0 0.0
    %3637 = vmatmul.mubr.f32.gmra.mrb[0].mxu0 %v3552
    %v3638 = vpop.f32.mrb[0].mxu0
    %v3639 = vadd.f32 0.0, %v3638
    %v3640 = vpop.f32.mrb[0].mxu0
    %v3641 = vadd.f32 0.0, %v3640
    %3642 = vdwg.mxu0
    %v3643 = vadd.f32 %v3507, %v3621
    %v3644 = vadd.f32 %v3508, %v3623
    %v3645 = vadd.f32 %v3509, %v3627
    %v3646 = vadd.f32 %v3510, %v3629
    %v3647 = vadd.f32 %v3511, %v3633
    %v3648 = vadd.f32 %v3512, %v3635
    %v3649 = vadd.f32 %v3513, %v3639
    %v3650 = vadd.f32 %v3514, %v3641
    %v3651 = vadd.f32 %v3643, %v760
    %v3652 = vadd.f32 %v3644, %v764
    %v3653 = vadd.f32 %v3645, %v760
    %v3654 = vadd.f32 %v3646, %v764
    %v3655 = vadd.f32 %v3647, %v760
    %v3656 = vadd.f32 %v3648, %v764
    %v3657 = vadd.f32 %v3649, %v760
    %v3658 = vadd.f32 %v3650, %v764
    %v3659 = vmax.f32 %v3651, 0.0
    %v3660 = vmax.f32 %v3652, 0.0
    %v3661 = vmax.f32 %v3653, 0.0
    %v3662 = vmax.f32 %v3654, 0.0
    %v3663 = vmax.f32 %v3655, 0.0
    %v3664 = vmax.f32 %v3656, 0.0
    %v3665 = vmax.f32 %v3657, 0.0
    %v3666 = vmax.f32 %v3658, 0.0
    %v3667 = vld [vmem:[%s4] sm:$0xff]
    %v3668 = vld [vmem:[%s4 + $0x8] sm:$0xff]
    %v3669 = vld [vmem:[%s4 + $0x10] sm:$0xff]
    %v3670 = vld [vmem:[%s4 + $0x18] sm:$0xff]
    %v3671 = vld [vmem:[%s4 + $0x20] sm:$0xff]
    %v3672 = vld [vmem:[%s4 + $0x28] sm:$0xff]
    %v3673 = vld [vmem:[%s4 + $0x30] sm:$0xff]
    %v3674 = vld [vmem:[%s4 + $0x38] sm:$0xff]
    %v3675 = vld [vmem:[%s4 + $0x40] sm:$0xff]
    %v3676 = vld [vmem:[%s4 + $0x48] sm:$0xff]
    %v3677 = vld [vmem:[%s4 + $0x50] sm:$0xff]
    %v3678 = vld [vmem:[%s4 + $0x58] sm:$0xff]
    %v3679 = vld [vmem:[%s4 + $0x60] sm:$0xff]
    %v3680 = vld [vmem:[%s4 + $0x68] sm:$0xff]
    %v3681 = vld [vmem:[%s4 + $0x70] sm:$0xff]
    %v3682 = vld [vmem:[%s4 + $0x78] sm:$0xff]
    %v3683 = vld [vmem:[%s4 + $0x80] sm:$0xff]
    %v3684 = vld [vmem:[%s4 + $0x88] sm:$0xff]
    %v3685 = vld [vmem:[%s4 + $0x90] sm:$0xff]
    %v3686 = vld [vmem:[%s4 + $0x98] sm:$0xff]
    %v3687 = vld [vmem:[%s4 + $0xa0] sm:$0xff]
    %v3688 = vld [vmem:[%s804] sm:$0xff]
    %v3689 = vld [vmem:[%s804 + $0x8] sm:$0xff]
    %v3690 = vld [vmem:[%s804 + $0x10] sm:$0xff]
    %v3691 = vld [vmem:[%s804 + $0x18] sm:$0xff]
    %v3692 = vld [vmem:[%s804 + $0x20] sm:$0xff]
    %v3693 = vld [vmem:[%s804 + $0x28] sm:$0xff]
    %v3694 = vld [vmem:[%s804 + $0x30] sm:$0xff]
    %v3695 = vld [vmem:[%s804 + $0x38] sm:$0xff]
    %v3696 = vld [vmem:[%s804 + $0x40] sm:$0xff]
    %v3697 = vld [vmem:[%s804 + $0x48] sm:$0xff]
    %v3698 = vld [vmem:[%s804 + $0x50] sm:$0xff]
    %v3699 = vld [vmem:[%s804 + $0x58] sm:$0xff]
    %v3700 = vld [vmem:[%s804 + $0x60] sm:$0xff]
    %v3701 = vld [vmem:[%s804 + $0x68] sm:$0xff]
    %v3702 = vld [vmem:[%s804 + $0x70] sm:$0xff]
    %v3703 = vld [vmem:[%s804 + $0x78] sm:$0xff]
    %v3704 = vld [vmem:[%s804 + $0x80] sm:$0xff]
    %v3705 = vld [vmem:[%s804 + $0x88] sm:$0xff]
    %v3706 = vld [vmem:[%s804 + $0x90] sm:$0xff]
    %v3707 = vld [vmem:[%s804 + $0x98] sm:$0xff]
    %v3708 = vld [vmem:[%s804 + $0xa0] sm:$0xff]
    %v3709 = vld [vmem:[%s3] sm:$0xff]
    %v3710 = vld [vmem:[%s3 + $0x8] sm:$0x3f]
    %v3712 = vsel %vm828, %v3709, 0
    %v3715 = vsel %vm828, %v3710, 0
    %v3718 = vsel %vm643, %v3665, 0
    %v3721 = vsel %vm643, %v3666, 0
    %3723 = vmatprep.subr.mxu0 %v3660
    %3724 = vmatpush1.msra.mxu0 %v3659
    %3725 = vmatprep.subr.mxu0 %v3662
    %3726 = vmatpush1.msra.mxu0 %v3661
    %3727 = vmatprep.subr.mxu0 %v3664
    %3728 = vmatpush1.msra.mxu0 %v3663
    %3729 = vmatprep.subr.mxu0 %v3721
    %3730 = vmatpush1.msra.mxu0 %v3718
    %3731 = vmatprep.subr.mxu0 0.0
    %3732 = vmatpush1.msra.mxu0 0.0
    %3733 = vmatprep.subr.mxu0 0.0
    %3734 = vmatpush1.msra.mxu0 0.0
    %3735 = vmatprep.subr.mxu0 0.0
    %3736 = vmatpush1.msra.mxu0 0.0
    %3737 = vmatprep.subr.mxu0 0.0
    %3738 = vmatpush1.msra.mxu0 0.0
    %3739 = vmatprep.subr.mxu0 0.0
    %3740 = vmatpush1.msra.mxu0 0.0
    %3741 = vmatprep.subr.mxu0 0.0
    %3742 = vmatpush1.msra.mxu0 0.0
    %3743 = vmatprep.subr.mxu0 0.0
    %3744 = vmatpush1.msra.mxu0 0.0
    %3745 = vmatprep.subr.mxu0 0.0
    %3746 = vmatpush1.msra.mxu0 0.0
    %3747 = vmatprep.subr.mxu0 0.0
    %3748 = vmatpush1.msra.mxu0 0.0
    %3749 = vmatprep.subr.mxu0 0.0
    %3750 = vmatpush1.msra.mxu0 0.0
    %3751 = vmatprep.subr.mxu0 0.0
    %3752 = vmatpush1.msra.mxu0 0.0
    %3753 = vmatprep.subr.mxu0 0.0
    %3754 = vmatpush1.msra.mxu0 0.0
    %3755 = vmatprep.subr.mxu0 0.0
    %3756 = vmatpush1.msra.mxu0 0.0
    %3757 = vmatprep.subr.mxu0 0.0
    %3758 = vmatpush1.msra.mxu0 0.0
    %3759 = vmatprep.subr.mxu0 0.0
    %3760 = vmatpush1.msra.mxu0 0.0
    %3761 = vmatprep.subr.mxu0 0.0
    %3762 = vmatpush1.msra.mxu0 0.0
    %3763 = vmatprep.subr.mxu0 0.0
    %3764 = vmatpush1.msra.mxu0 0.0
    %3765 = vmatprep.subr.mxu0 0.0
    %3766 = vmatpush1.msra.mxu0 0.0
    %3767 = vmatprep.subr.mxu0 0.0
    %3768 = vmatpush1.msra.mxu0 0.0
    %3769 = vmatprep.subr.mxu0 0.0
    %3770 = vmatpush1.msra.mxu0 0.0
    %3771 = vmatprep.subr.mxu0 0.0
    %3772 = vmatpush1.msra.mxu0 0.0
    %3773 = vmatprep.subr.mxu0 0.0
    %3774 = vmatpush1.msra.mxu0 0.0
    %3775 = vmatprep.subr.mxu0 0.0
    %3776 = vmatpush1.msra.mxu0 0.0
    %3777 = vmatprep.subr.mxu0 0.0
    %3778 = vmatpush1.msra.mxu0 0.0
    %3779 = vmatprep.subr.mxu0 0.0
    %3780 = vmatpush1.msra.mxu0 0.0
    %3781 = vmatprep.subr.mxu0 0.0
    %3782 = vmatpush1.msra.mxu0 0.0
    %3783 = vmatprep.subr.mxu0 0.0
    %3784 = vmatpush1.msra.mxu0 0.0
    %3785 = vmatprep.subr.mxu0 0.0
    %3786 = vmatpush1.msra.mxu0 0.0
    %3787 = vmatprep.mubr.f32.mxu0 0.0
    %3788 = vmatmul.mubr.f32.gmra.mrb[0].mxu0 %v3712
    %v3789 = vpop.f32.mrb[0].mxu0
    %v3790 = vadd.f32 0.0, %v3789
    %v3791 = vpop.f32.mrb[0].mxu0
    %v3792 = vadd.f32 0.0, %v3791
    %3793 = vmatprep.mubr.f32.mxu0 0.0
    %3794 = vmatmul.mubr.f32.gmra.mrb[0].mxu0 %v3715
    %v3795 = vpop.f32.mrb[0].mxu0
    %v3796 = vadd.f32 0.0, %v3795
    %v3797 = vpop.f32.mrb[0].mxu0
    %v3798 = vadd.f32 0.0, %v3797
    %3799 = vdwg.mxu0
    %v3800 = vld [vmem:[%s918] sm:$0xff]
    %v3801 = vld [vmem:[%s918 + $0x8] sm:$0x3f]
    %v3803 = vsel %vm828, %v3800, 0
    %v3806 = vsel %vm828, %v3801, 0
    %3808 = vmatprep.subr.mxu0 %v3660
    %3809 = vmatpush1.msra.mxu0 %v3659
    %3810 = vmatprep.subr.mxu0 %v3662
    %3811 = vmatpush1.msra.mxu0 %v3661
    %3812 = vmatprep.subr.mxu0 %v3664
    %3813 = vmatpush1.msra.mxu0 %v3663
    %3814 = vmatprep.subr.mxu0 %v3721
    %3815 = vmatpush1.msra.mxu0 %v3718
    %3816 = vmatprep.subr.mxu0 0.0
    %3817 = vmatpush1.msra.mxu0 0.0
    %3818 = vmatprep.subr.mxu0 0.0
    %3819 = vmatpush1.msra.mxu0 0.0
    %3820 = vmatprep.subr.mxu0 0.0
    %3821 = vmatpush1.msra.mxu0 0.0
    %3822 = vmatprep.subr.mxu0 0.0
    %3823 = vmatpush1.msra.mxu0 0.0
    %3824 = vmatprep.subr.mxu0 0.0
    %3825 = vmatpush1.msra.mxu0 0.0
    %3826 = vmatprep.subr.mxu0 0.0
    %3827 = vmatpush1.msra.mxu0 0.0
    %3828 = vmatprep.subr.mxu0 0.0
    %3829 = vmatpush1.msra.mxu0 0.0
    %3830 = vmatprep.subr.mxu0 0.0
    %3831 = vmatpush1.msra.mxu0 0.0
    %3832 = vmatprep.subr.mxu0 0.0
    %3833 = vmatpush1.msra.mxu0 0.0
    %3834 = vmatprep.subr.mxu0 0.0
    %3835 = vmatpush1.msra.mxu0 0.0
    %3836 = vmatprep.subr.mxu0 0.0
    %3837 = vmatpush1.msra.mxu0 0.0
    %3838 = vmatprep.subr.mxu0 0.0
    %3839 = vmatpush1.msra.mxu0 0.0
    %3840 = vmatprep.subr.mxu0 0.0
    %3841 = vmatpush1.msra.mxu0 0.0
    %3842 = vmatprep.subr.mxu0 0.0
    %3843 = vmatpush1.msra.mxu0 0.0
    %3844 = vmatprep.subr.mxu0 0.0
    %3845 = vmatpush1.msra.mxu0 0.0
    %3846 = vmatprep.subr.mxu0 0.0
    %3847 = vmatpush1.msra.mxu0 0.0
    %3848 = vmatprep.subr.mxu0 0.0
    %3849 = vmatpush1.msra.mxu0 0.0
    %3850 = vmatprep.subr.mxu0 0.0
    %3851 = vmatpush1.msra.mxu0 0.0
    %3852 = vmatprep.subr.mxu0 0.0
    %3853 = vmatpush1.msra.mxu0 0.0
    %3854 = vmatprep.subr.mxu0 0.0
    %3855 = vmatpush1.msra.mxu0 0.0
    %3856 = vmatprep.subr.mxu0 0.0
    %3857 = vmatpush1.msra.mxu0 0.0
    %3858 = vmatprep.subr.mxu0 0.0
    %3859 = vmatpush1.msra.mxu0 0.0
    %3860 = vmatprep.subr.mxu0 0.0
    %3861 = vmatpush1.msra.mxu0 0.0
    %3862 = vmatprep.subr.mxu0 0.0
    %3863 = vmatpush1.msra.mxu0 0.0
    %3864 = vmatprep.subr.mxu0 0.0
    %3865 = vmatpush1.msra.mxu0 0.0
    %3866 = vmatprep.subr.mxu0 0.0
    %3867 = vmatpush1.msra.mxu0 0.0
    %3868 = vmatprep.subr.mxu0 0.0
    %3869 = vmatpush1.msra.mxu0 0.0
    %3870 = vmatprep.subr.mxu0 0.0
    %3871 = vmatpush1.msra.mxu0 0.0
    %3872 = vmatprep.mubr.f32.mxu0 0.0
    %3873 = vmatmul.mubr.f32.gmra.mrb[0].mxu0 %v3803
    %v3874 = vpop.f32.mrb[0].mxu0
    %v3875 = vadd.f32 0.0, %v3874
    %v3876 = vpop.f32.mrb[0].mxu0
    %v3877 = vadd.f32 0.0, %v3876
    %3878 = vmatprep.mubr.f32.mxu0 0.0
    %3879 = vmatmul.mubr.f32.gmra.mrb[0].mxu0 %v3806
    %v3880 = vpop.f32.mrb[0].mxu0
    %v3881 = vadd.f32 0.0, %v3880
    %v3882 = vpop.f32.mrb[0].mxu0
    %v3883 = vadd.f32 0.0, %v3882
    %3884 = vdwg.mxu0
    %v3886 = vsel %vm1004, %v3792, 0
    %v3889 = vsel %vm1004, %v3798, 0
    %3891 = vmatprep.subr.mxu0 0.0
    %3892 = vmatpush1.msra.mxu0 %v3667
    %3893 = vmatprep.subr.mxu0 0.0
    %3894 = vmatpush1.msra.mxu0 %v3668
    %3895 = vmatprep.subr.mxu0 0.0
    %3896 = vmatpush1.msra.mxu0 %v3669
    %3897 = vmatprep.subr.mxu0 0.0
    %3898 = vmatpush1.msra.mxu0 %v3670
    %3899 = vmatprep.subr.mxu0 0.0
    %3900 = vmatpush1.msra.mxu0 %v3671
    %3901 = vmatprep.subr.mxu0 0.0
    %3902 = vmatpush1.msra.mxu0 %v3672
    %3903 = vmatprep.subr.mxu0 0.0
    %3904 = vmatpush1.msra.mxu0 %v3673
    %3905 = vmatprep.subr.mxu0 0.0
    %3906 = vmatpush1.msra.mxu0 %v3674
    %3907 = vmatprep.subr.mxu0 0.0
    %3908 = vmatpush1.msra.mxu0 %v3675
    %3909 = vmatprep.subr.mxu0 0.0
    %3910 = vmatpush1.msra.mxu0 %v3676
    %3911 = vmatprep.subr.mxu0 0.0
    %3912 = vmatpush1.msra.mxu0 %v3677
    %3913 = vmatprep.subr.mxu0 0.0
    %3914 = vmatpush1.msra.mxu0 %v3678
    %3915 = vmatprep.subr.mxu0 0.0
    %3916 = vmatpush1.msra.mxu0 %v3679
    %3917 = vmatprep.subr.mxu0 0.0
    %3918 = vmatpush1.msra.mxu0 %v3680
    %3919 = vmatprep.subr.mxu0 0.0
    %3920 = vmatpush1.msra.mxu0 %v3681
    %3921 = vmatprep.subr.mxu0 0.0
    %3922 = vmatpush1.msra.mxu0 %v3682
    %3923 = vmatprep.subr.mxu0 0.0
    %3924 = vmatpush1.msra.mxu0 %v3683
    %3925 = vmatprep.subr.mxu0 0.0
    %3926 = vmatpush1.msra.mxu0 %v3684
    %3927 = vmatprep.subr.mxu0 0.0
    %3928 = vmatpush1.msra.mxu0 %v3685
    %3929 = vmatprep.subr.mxu0 0.0
    %3930 = vmatpush1.msra.mxu0 %v3686
    %3931 = vmatprep.subr.mxu0 0.0
    %3932 = vmatpush1.msra.mxu0 %v3687
    %3933 = vmatprep.subr.mxu0 0.0
    %3934 = vmatpush1.msra.mxu0 0.0
    %3935 = vmatprep.subr.mxu0 0.0
    %3936 = vmatpush1.msra.mxu0 0.0
    %3937 = vmatprep.subr.mxu0 0.0
    %3938 = vmatpush1.msra.mxu0 0.0
    %3939 = vmatprep.subr.mxu0 0.0
    %3940 = vmatpush1.msra.mxu0 0.0
    %3941 = vmatprep.subr.mxu0 0.0
    %3942 = vmatpush1.msra.mxu0 0.0
    %3943 = vmatprep.subr.mxu0 0.0
    %3944 = vmatpush1.msra.mxu0 0.0
    %3945 = vmatprep.subr.mxu0 0.0
    %3946 = vmatpush1.msra.mxu0 0.0
    %3947 = vmatprep.subr.mxu0 0.0
    %3948 = vmatpush1.msra.mxu0 0.0
    %3949 = vmatprep.subr.mxu0 0.0
    %3950 = vmatpush1.msra.mxu0 0.0
    %3951 = vmatprep.subr.mxu0 0.0
    %3952 = vmatpush1.msra.mxu0 0.0
    %3953 = vmatprep.subr.mxu0 0.0
    %3954 = vmatpush1.msra.mxu0 0.0
    %3955 = vmatprep.mubr.f32.mxu0 %v3886
    %3956 = vmatmul.mubr.f32.gmra.mrb[0].mxu0 %v3790
    %v3957 = vpop.f32.mrb[0].mxu0
    %v3958 = vadd.f32 0.0, %v3957
    %v3959 = vpop.f32.mrb[0].mxu0
    %3960 = vmatprep.mubr.f32.mxu0 %v3889
    %3961 = vmatmul.mubr.f32.gmra.mrb[0].mxu0 %v3796
    %v3962 = vpop.f32.mrb[0].mxu0
    %v3963 = vadd.f32 0.0, %v3962
    %v3964 = vpop.f32.mrb[0].mxu0
    %3965 = vdwg.mxu0
    %3966 = vmatprep.subr.mxu0 0.0
    %3967 = vmatpush1.msra.mxu0 %v3688
    %3968 = vmatprep.subr.mxu0 0.0
    %3969 = vmatpush1.msra.mxu0 %v3689
    %3970 = vmatprep.subr.mxu0 0.0
    %3971 = vmatpush1.msra.mxu0 %v3690
    %3972 = vmatprep.subr.mxu0 0.0
    %3973 = vmatpush1.msra.mxu0 %v3691
    %3974 = vmatprep.subr.mxu0 0.0
    %3975 = vmatpush1.msra.mxu0 %v3692
    %3976 = vmatprep.subr.mxu0 0.0
    %3977 = vmatpush1.msra.mxu0 %v3693
    %3978 = vmatprep.subr.mxu0 0.0
    %3979 = vmatpush1.msra.mxu0 %v3694
    %3980 = vmatprep.subr.mxu0 0.0
    %3981 = vmatpush1.msra.mxu0 %v3695
    %3982 = vmatprep.subr.mxu0 0.0
    %3983 = vmatpush1.msra.mxu0 %v3696
    %3984 = vmatprep.subr.mxu0 0.0
    %3985 = vmatpush1.msra.mxu0 %v3697
    %3986 = vmatprep.subr.mxu0 0.0
    %3987 = vmatpush1.msra.mxu0 %v3698
    %3988 = vmatprep.subr.mxu0 0.0
    %3989 = vmatpush1.msra.mxu0 %v3699
    %3990 = vmatprep.subr.mxu0 0.0
    %3991 = vmatpush1.msra.mxu0 %v3700
    %3992 = vmatprep.subr.mxu0 0.0
    %3993 = vmatpush1.msra.mxu0 %v3701
    %3994 = vmatprep.subr.mxu0 0.0
    %3995 = vmatpush1.msra.mxu0 %v3702
    %3996 = vmatprep.subr.mxu0 0.0
    %3997 = vmatpush1.msra.mxu0 %v3703
    %3998 = vmatprep.subr.mxu0 0.0
    %3999 = vmatpush1.msra.mxu0 %v3704
    %4000 = vmatprep.subr.mxu0 0.0
    %4001 = vmatpush1.msra.mxu0 %v3705
    %4002 = vmatprep.subr.mxu0 0.0
    %4003 = vmatpush1.msra.mxu0 %v3706
    %4004 = vmatprep.subr.mxu0 0.0
    %4005 = vmatpush1.msra.mxu0 %v3707
    %4006 = vmatprep.subr.mxu0 0.0
    %4007 = vmatpush1.msra.mxu0 %v3708
    %4008 = vmatprep.subr.mxu0 0.0
    %4009 = vmatpush1.msra.mxu0 0.0
    %4010 = vmatprep.subr.mxu0 0.0
    %4011 = vmatpush1.msra.mxu0 0.0
    %4012 = vmatprep.subr.mxu0 0.0
    %4013 = vmatpush1.msra.mxu0 0.0
    %4014 = vmatprep.subr.mxu0 0.0
    %4015 = vmatpush1.msra.mxu0 0.0
    %4016 = vmatprep.subr.mxu0 0.0
    %4017 = vmatpush1.msra.mxu0 0.0
    %4018 = vmatprep.subr.mxu0 0.0
    %4019 = vmatpush1.msra.mxu0 0.0
    %4020 = vmatprep.subr.mxu0 0.0
    %4021 = vmatpush1.msra.mxu0 0.0
    %4022 = vmatprep.subr.mxu0 0.0
    %4023 = vmatpush1.msra.mxu0 0.0
    %4024 = vmatprep.subr.mxu0 0.0
    %4025 = vmatpush1.msra.mxu0 0.0
    %4026 = vmatprep.subr.mxu0 0.0
    %4027 = vmatpush1.msra.mxu0 0.0
    %4028 = vmatprep.subr.mxu0 0.0
    %4029 = vmatpush1.msra.mxu0 0.0
    %4030 = vmatprep.mubr.f32.mxu0 %v3886
    %4031 = vmatmul.mubr.f32.gmra.mrb[0].mxu0 %v3790
    %v4032 = vpop.f32.mrb[0].mxu0
    %v4033 = vadd.f32 0.0, %v4032
    %v4034 = vpop.f32.mrb[0].mxu0
    %4035 = vmatprep.mubr.f32.mxu0 %v3889
    %4036 = vmatmul.mubr.f32.gmra.mrb[0].mxu0 %v3796
    %v4037 = vpop.f32.mrb[0].mxu0
    %v4038 = vadd.f32 0.0, %v4037
    %v4039 = vpop.f32.mrb[0].mxu0
    %4040 = vdwg.mxu0
    %v4041 = vmax.f32 %v3958, %v4033
    %v4042 = vmax.f32 %v3963, %v4038
    %v4044 = vsel %vm1004, %v3877, 0
    %v4047 = vsel %vm1004, %v3883, 0
    %4049 = vmatprep.subr.mxu0 0.0
    %4050 = vmatpush1.msra.mxu0 %v3667
    %4051 = vmatprep.subr.mxu0 0.0
    %4052 = vmatpush1.msra.mxu0 %v3668
    %4053 = vmatprep.subr.mxu0 0.0
    %4054 = vmatpush1.msra.mxu0 %v3669
    %4055 = vmatprep.subr.mxu0 0.0
    %4056 = vmatpush1.msra.mxu0 %v3670
    %4057 = vmatprep.subr.mxu0 0.0
    %4058 = vmatpush1.msra.mxu0 %v3671
    %4059 = vmatprep.subr.mxu0 0.0
    %4060 = vmatpush1.msra.mxu0 %v3672
    %4061 = vmatprep.subr.mxu0 0.0
    %4062 = vmatpush1.msra.mxu0 %v3673
    %4063 = vmatprep.subr.mxu0 0.0
    %4064 = vmatpush1.msra.mxu0 %v3674
    %4065 = vmatprep.subr.mxu0 0.0
    %4066 = vmatpush1.msra.mxu0 %v3675
    %4067 = vmatprep.subr.mxu0 0.0
    %4068 = vmatpush1.msra.mxu0 %v3676
    %4069 = vmatprep.subr.mxu0 0.0
    %4070 = vmatpush1.msra.mxu0 %v3677
    %4071 = vmatprep.subr.mxu0 0.0
    %4072 = vmatpush1.msra.mxu0 %v3678
    %4073 = vmatprep.subr.mxu0 0.0
    %4074 = vmatpush1.msra.mxu0 %v3679
    %4075 = vmatprep.subr.mxu0 0.0
    %4076 = vmatpush1.msra.mxu0 %v3680
    %4077 = vmatprep.subr.mxu0 0.0
    %4078 = vmatpush1.msra.mxu0 %v3681
    %4079 = vmatprep.subr.mxu0 0.0
    %4080 = vmatpush1.msra.mxu0 %v3682
    %4081 = vmatprep.subr.mxu0 0.0
    %4082 = vmatpush1.msra.mxu0 %v3683
    %4083 = vmatprep.subr.mxu0 0.0
    %4084 = vmatpush1.msra.mxu0 %v3684
    %4085 = vmatprep.subr.mxu0 0.0
    %4086 = vmatpush1.msra.mxu0 %v3685
    %4087 = vmatprep.subr.mxu0 0.0
    %4088 = vmatpush1.msra.mxu0 %v3686
    %4089 = vmatprep.subr.mxu0 0.0
    %4090 = vmatpush1.msra.mxu0 %v3687
    %4091 = vmatprep.subr.mxu0 0.0
    %4092 = vmatpush1.msra.mxu0 0.0
    %4093 = vmatprep.subr.mxu0 0.0
    %4094 = vmatpush1.msra.mxu0 0.0
    %4095 = vmatprep.subr.mxu0 0.0
    %4096 = vmatpush1.msra.mxu0 0.0
    %4097 = vmatprep.subr.mxu0 0.0
    %4098 = vmatpush1.msra.mxu0 0.0
    %4099 = vmatprep.subr.mxu0 0.0
    %4100 = vmatpush1.msra.mxu0 0.0
    %4101 = vmatprep.subr.mxu0 0.0
    %4102 = vmatpush1.msra.mxu0 0.0
    %4103 = vmatprep.subr.mxu0 0.0
    %4104 = vmatpush1.msra.mxu0 0.0
    %4105 = vmatprep.subr.mxu0 0.0
    %4106 = vmatpush1.msra.mxu0 0.0
    %4107 = vmatprep.subr.mxu0 0.0
    %4108 = vmatpush1.msra.mxu0 0.0
    %4109 = vmatprep.subr.mxu0 0.0
    %4110 = vmatpush1.msra.mxu0 0.0
    %4111 = vmatprep.subr.mxu0 0.0
    %4112 = vmatpush1.msra.mxu0 0.0
    %4113 = vmatprep.mubr.f32.mxu0 %v4044
    %4114 = vmatmul.mubr.f32.gmra.mrb[0].mxu0 %v3875
    %v4115 = vpop.f32.mrb[0].mxu0
    %v4116 = vadd.f32 0.0, %v4115
    %v4117 = vpop.f32.mrb[0].mxu0
    %4118 = vmatprep.mubr.f32.mxu0 %v4047
    %4119 = vmatmul.mubr.f32.gmra.mrb[0].mxu0 %v3881
    %v4120 = vpop.f32.mrb[0].mxu0
    %v4121 = vadd.f32 0.0, %v4120
    %v4122 = vpop.f32.mrb[0].mxu0
    %4123 = vdwg.mxu0
    %4124 = vmatprep.subr.mxu0 0.0
    %4125 = vmatpush1.msra.mxu0 %v3688
    %4126 = vmatprep.subr.mxu0 0.0
    %4127 = vmatpush1.msra.mxu0 %v3689
    %4128 = vmatprep.subr.mxu0 0.0
    %4129 = vmatpush1.msra.mxu0 %v3690
    %4130 = vmatprep.subr.mxu0 0.0
    %4131 = vmatpush1.msra.mxu0 %v3691
    %4132 = vmatprep.subr.mxu0 0.0
    %4133 = vmatpush1.msra.mxu0 %v3692
    %4134 = vmatprep.subr.mxu0 0.0
    %4135 = vmatpush1.msra.mxu0 %v3693
    %4136 = vmatprep.subr.mxu0 0.0
    %4137 = vmatpush1.msra.mxu0 %v3694
    %4138 = vmatprep.subr.mxu0 0.0
    %4139 = vmatpush1.msra.mxu0 %v3695
    %4140 = vmatprep.subr.mxu0 0.0
    %4141 = vmatpush1.msra.mxu0 %v3696
    %4142 = vmatprep.subr.mxu0 0.0
    %4143 = vmatpush1.msra.mxu0 %v3697
    %4144 = vmatprep.subr.mxu0 0.0
    %4145 = vmatpush1.msra.mxu0 %v3698
    %4146 = vmatprep.subr.mxu0 0.0
    %4147 = vmatpush1.msra.mxu0 %v3699
    %4148 = vmatprep.subr.mxu0 0.0
    %4149 = vmatpush1.msra.mxu0 %v3700
    %4150 = vmatprep.subr.mxu0 0.0
    %4151 = vmatpush1.msra.mxu0 %v3701
    %4152 = vmatprep.subr.mxu0 0.0
    %4153 = vmatpush1.msra.mxu0 %v3702
    %4154 = vmatprep.subr.mxu0 0.0
    %4155 = vmatpush1.msra.mxu0 %v3703
    %4156 = vmatprep.subr.mxu0 0.0
    %4157 = vmatpush1.msra.mxu0 %v3704
    %4158 = vmatprep.subr.mxu0 0.0
    %4159 = vmatpush1.msra.mxu0 %v3705
    %4160 = vmatprep.subr.mxu0 0.0
    %4161 = vmatpush1.msra.mxu0 %v3706
    %4162 = vmatprep.subr.mxu0 0.0
    %4163 = vmatpush1.msra.mxu0 %v3707
    %4164 = vmatprep.subr.mxu0 0.0
    %4165 = vmatpush1.msra.mxu0 %v3708
    %4166 = vmatprep.subr.mxu0 0.0
    %4167 = vmatpush1.msra.mxu0 0.0
    %4168 = vmatprep.subr.mxu0 0.0
    %4169 = vmatpush1.msra.mxu0 0.0
    %4170 = vmatprep.subr.mxu0 0.0
    %4171 = vmatpush1.msra.mxu0 0.0
    %4172 = vmatprep.subr.mxu0 0.0
    %4173 = vmatpush1.msra.mxu0 0.0
    %4174 = vmatprep.subr.mxu0 0.0
    %4175 = vmatpush1.msra.mxu0 0.0
    %4176 = vmatprep.subr.mxu0 0.0
    %4177 = vmatpush1.msra.mxu0 0.0
    %4178 = vmatprep.subr.mxu0 0.0
    %4179 = vmatpush1.msra.mxu0 0.0
    %4180 = vmatprep.subr.mxu0 0.0
    %4181 = vmatpush1.msra.mxu0 0.0
    %4182 = vmatprep.subr.mxu0 0.0
    %4183 = vmatpush1.msra.mxu0 0.0
    %4184 = vmatprep.subr.mxu0 0.0
    %4185 = vmatpush1.msra.mxu0 0.0
    %4186 = vmatprep.subr.mxu0 0.0
    %4187 = vmatpush1.msra.mxu0 0.0
    %4188 = vmatprep.mubr.f32.mxu0 %v4044
    %4189 = vmatmul.mubr.f32.gmra.mrb[0].mxu0 %v3875
    %v4190 = vpop.f32.mrb[0].mxu0
    %v4191 = vadd.f32 0.0, %v4190
    %v4192 = vpop.f32.mrb[0].mxu0
    %4193 = vmatprep.mubr.f32.mxu0 %v4047
    %4194 = vmatmul.mubr.f32.gmra.mrb[0].mxu0 %v3881
    %v4195 = vpop.f32.mrb[0].mxu0
    %v4196 = vadd.f32 0.0, %v4195
    %v4197 = vpop.f32.mrb[0].mxu0
    %4198 = vdwg.mxu0
    %v4199 = vmax.f32 %v4116, %v4191
    %v4200 = vmax.f32 %v4121, %v4196
    %v4201 = vmax.f32 %v4041, %v4199
    %v4202 = vmax.f32 %v4042, %v4200
    %v4203 = vld [vmem:[%s5] sm:$0xff]
    %v4204 = vld [vmem:[%s5 + $0x8] sm:$0xff]
    %v4205 = vld [vmem:[%s5 + $0x10] sm:$0xff]
    %v4206 = vld [vmem:[%s5 + $0x18] sm:$0xff]
    %v4207 = vld [vmem:[%s5 + $0x20] sm:$0xff]
    %v4208 = vld [vmem:[%s5 + $0x28] sm:$0xff]
    %v4209 = vld [vmem:[%s5 + $0x30] sm:$0xff]
    %v4210 = vld [vmem:[%s5 + $0x38] sm:$0xff]
    %v4211 = vld [vmem:[%s5 + $0x40] sm:$0xff]
    %v4212 = vld [vmem:[%s5 + $0x48] sm:$0xff]
    %v4213 = vld [vmem:[%s5 + $0x50] sm:$0xff]
    %v4214 = vld [vmem:[%s5 + $0x58] sm:$0xff]
    %v4215 = vld [vmem:[%s5 + $0x60] sm:$0xff]
    %v4216 = vld [vmem:[%s5 + $0x68] sm:$0xff]
    %v4217 = vld [vmem:[%s5 + $0x70] sm:$0xff]
    %v4218 = vld [vmem:[%s5 + $0x78] sm:$0xff]
    %v4219 = vld [vmem:[%s5 + $0x80] sm:$0xff]
    %v4220 = vld [vmem:[%s5 + $0x88] sm:$0xff]
    %v4221 = vld [vmem:[%s5 + $0x90] sm:$0xff]
    %v4222 = vld [vmem:[%s5 + $0x98] sm:$0xff]
    %v4223 = vld [vmem:[%s5 + $0xa0] sm:$0xf]
    %v4224 = vld [vmem:[%s5 + $0xa8] sm:$0xf]
    %v4225 = vld [vmem:[%s1345] sm:$0xff]
    %v4226 = vld [vmem:[%s1345 + $0x8] sm:$0xff]
    %v4227 = vld [vmem:[%s1345 + $0x10] sm:$0xff]
    %v4228 = vld [vmem:[%s1345 + $0x18] sm:$0xff]
    %v4229 = vld [vmem:[%s1345 + $0x20] sm:$0xff]
    %v4230 = vld [vmem:[%s1345 + $0x28] sm:$0xff]
    %v4231 = vld [vmem:[%s1345 + $0x30] sm:$0xff]
    %v4232 = vld [vmem:[%s1345 + $0x38] sm:$0xff]
    %v4233 = vld [vmem:[%s1345 + $0x40] sm:$0xff]
    %v4234 = vld [vmem:[%s1345 + $0x48] sm:$0xff]
    %v4235 = vld [vmem:[%s1345 + $0x50] sm:$0xff]
    %v4236 = vld [vmem:[%s1345 + $0x58] sm:$0xff]
    %v4237 = vld [vmem:[%s1345 + $0x60] sm:$0xff]
    %v4238 = vld [vmem:[%s1345 + $0x68] sm:$0xff]
    %v4239 = vld [vmem:[%s1345 + $0x70] sm:$0xff]
    %v4240 = vld [vmem:[%s1345 + $0x78] sm:$0xff]
    %v4241 = vld [vmem:[%s1345 + $0x80] sm:$0xff]
    %v4242 = vld [vmem:[%s1345 + $0x88] sm:$0xff]
    %v4243 = vld [vmem:[%s1345 + $0x90] sm:$0xff]
    %v4244 = vld [vmem:[%s1345 + $0x98] sm:$0xff]
    %v4245 = vld [vmem:[%s1345 + $0xa0] sm:$0xf]
    %v4246 = vld [vmem:[%s1345 + $0xa8] sm:$0xf]
    %v4249 = vrot.slane %v4201, 1
    %v4250 = vrot.slane %v4202, 1
    %v4251 = vsel %vm139, %v4249, %v4250
    %v4252 = vsel %vm1373, %v4251, 0
    %v4254 = vsel %vm1373, %v4250, 0
    %v4257 = vsel %vm643, %v4245, 0
    %v4260 = vsel %vm643, %v4246, 0
    %4262 = vmatprep.subr.mxu0 %v4226
    %4263 = vmatpush1.msra.mxu0 %v4225
    %4264 = vmatprep.subr.mxu0 %v4228
    %4265 = vmatpush1.msra.mxu0 %v4227
    %4266 = vmatprep.subr.mxu0 %v4230
    %4267 = vmatpush1.msra.mxu0 %v4229
    %4268 = vmatprep.subr.mxu0 %v4232
    %4269 = vmatpush1.msra.mxu0 %v4231
    %4270 = vmatprep.subr.mxu0 %v4234
    %4271 = vmatpush1.msra.mxu0 %v4233
    %4272 = vmatprep.subr.mxu0 %v4236
    %4273 = vmatpush1.msra.mxu0 %v4235
    %4274 = vmatprep.subr.mxu0 %v4238
    %4275 = vmatpush1.msra.mxu0 %v4237
    %4276 = vmatprep.subr.mxu0 %v4240
    %4277 = vmatpush1.msra.mxu0 %v4239
    %4278 = vmatprep.subr.mxu0 %v4242
    %4279 = vmatpush1.msra.mxu0 %v4241
    %4280 = vmatprep.subr.mxu0 %v4244
    %4281 = vmatpush1.msra.mxu0 %v4243
    %4282 = vmatprep.subr.mxu0 %v4260
    %4283 = vmatpush1.msra.mxu0 %v4257
    %4284 = vmatprep.subr.mxu0 0.0
    %4285 = vmatpush1.msra.mxu0 0.0
    %4286 = vmatprep.subr.mxu0 0.0
    %4287 = vmatpush1.msra.mxu0 0.0
    %4288 = vmatprep.subr.mxu0 0.0
    %4289 = vmatpush1.msra.mxu0 0.0
    %4290 = vmatprep.subr.mxu0 0.0
    %4291 = vmatpush1.msra.mxu0 0.0
    %4292 = vmatprep.subr.mxu0 0.0
    %4293 = vmatpush1.msra.mxu0 0.0
    %4294 = vmatprep.subr.mxu0 0.0
    %4295 = vmatpush1.msra.mxu0 0.0
    %4296 = vmatprep.subr.mxu0 0.0
    %4297 = vmatpush1.msra.mxu0 0.0
    %4298 = vmatprep.subr.mxu0 0.0
    %4299 = vmatpush1.msra.mxu0 0.0
    %4300 = vmatprep.subr.mxu0 0.0
    %4301 = vmatpush1.msra.mxu0 0.0
    %4302 = vmatprep.subr.mxu0 0.0
    %4303 = vmatpush1.msra.mxu0 0.0
    %4304 = vmatprep.subr.mxu0 0.0
    %4305 = vmatpush1.msra.mxu0 0.0
    %4306 = vmatprep.subr.mxu0 0.0
    %4307 = vmatpush1.msra.mxu0 0.0
    %4308 = vmatprep.subr.mxu0 0.0
    %4309 = vmatpush1.msra.mxu0 0.0
    %4310 = vmatprep.subr.mxu0 0.0
    %4311 = vmatpush1.msra.mxu0 0.0
    %4312 = vmatprep.subr.mxu0 0.0
    %4313 = vmatpush1.msra.mxu0 0.0
    %4314 = vmatprep.subr.mxu0 0.0
    %4315 = vmatpush1.msra.mxu0 0.0
    %4316 = vmatprep.subr.mxu0 0.0
    %4317 = vmatpush1.msra.mxu0 0.0
    %4318 = vmatprep.subr.mxu0 0.0
    %4319 = vmatpush1.msra.mxu0 0.0
    %4320 = vmatprep.subr.mxu0 0.0
    %4321 = vmatpush1.msra.mxu0 0.0
    %4322 = vmatprep.subr.mxu0 0.0
    %4323 = vmatpush1.msra.mxu0 0.0
    %4324 = vmatprep.subr.mxu0 0.0
    %4325 = vmatpush1.msra.mxu0 0.0
    %4326 = vmatprep.mubr.f32.mxu0 0.0
    %4327 = vmatmul.mubr.f32.gmra.mrb[0].mxu0 %v4252
    %v4328 = vpop.f32.mrb[0].mxu0
    %v4329 = vadd.f32 0.0, %v4328
    %v4330 = vpop.f32.mrb[0].mxu0
    %v4331 = vadd.f32 0.0, %v4330
    %4332 = vmatprep.mubr.f32.mxu0 0.0
    %4333 = vmatmul.mubr.f32.gmra.mrb[0].mxu0 %v4254
    %v4334 = vpop.f32.mrb[0].mxu0
    %v4335 = vadd.f32 0.0, %v4334
    %v4336 = vpop.f32.mrb[0].mxu0
    %v4337 = vadd.f32 0.0, %v4336
    %4338 = vdwg.mxu0
    %v4339 = vsel %vm1373, %v4201, 0
    %v4341 = vsel %vm1373, %v4202, 0
    %v4344 = vsel %vm643, %v4223, 0
    %v4347 = vsel %vm643, %v4224, 0
    %4349 = vmatprep.subr.mxu0 %v4204
    %4350 = vmatpush1.msra.mxu0 %v4203
    %4351 = vmatprep.subr.mxu0 %v4206
    %4352 = vmatpush1.msra.mxu0 %v4205
    %4353 = vmatprep.subr.mxu0 %v4208
    %4354 = vmatpush1.msra.mxu0 %v4207
    %4355 = vmatprep.subr.mxu0 %v4210
    %4356 = vmatpush1.msra.mxu0 %v4209
    %4357 = vmatprep.subr.mxu0 %v4212
    %4358 = vmatpush1.msra.mxu0 %v4211
    %4359 = vmatprep.subr.mxu0 %v4214
    %4360 = vmatpush1.msra.mxu0 %v4213
    %4361 = vmatprep.subr.mxu0 %v4216
    %4362 = vmatpush1.msra.mxu0 %v4215
    %4363 = vmatprep.subr.mxu0 %v4218
    %4364 = vmatpush1.msra.mxu0 %v4217
    %4365 = vmatprep.subr.mxu0 %v4220
    %4366 = vmatpush1.msra.mxu0 %v4219
    %4367 = vmatprep.subr.mxu0 %v4222
    %4368 = vmatpush1.msra.mxu0 %v4221
    %4369 = vmatprep.subr.mxu0 %v4347
    %4370 = vmatpush1.msra.mxu0 %v4344
    %4371 = vmatprep.subr.mxu0 0.0
    %4372 = vmatpush1.msra.mxu0 0.0
    %4373 = vmatprep.subr.mxu0 0.0
    %4374 = vmatpush1.msra.mxu0 0.0
    %4375 = vmatprep.subr.mxu0 0.0
    %4376 = vmatpush1.msra.mxu0 0.0
    %4377 = vmatprep.subr.mxu0 0.0
    %4378 = vmatpush1.msra.mxu0 0.0
    %4379 = vmatprep.subr.mxu0 0.0
    %4380 = vmatpush1.msra.mxu0 0.0
    %4381 = vmatprep.subr.mxu0 0.0
    %4382 = vmatpush1.msra.mxu0 0.0
    %4383 = vmatprep.subr.mxu0 0.0
    %4384 = vmatpush1.msra.mxu0 0.0
    %4385 = vmatprep.subr.mxu0 0.0
    %4386 = vmatpush1.msra.mxu0 0.0
    %4387 = vmatprep.subr.mxu0 0.0
    %4388 = vmatpush1.msra.mxu0 0.0
    %4389 = vmatprep.subr.mxu0 0.0
    %4390 = vmatpush1.msra.mxu0 0.0
    %4391 = vmatprep.subr.mxu0 0.0
    %4392 = vmatpush1.msra.mxu0 0.0
    %4393 = vmatprep.subr.mxu0 0.0
    %4394 = vmatpush1.msra.mxu0 0.0
    %4395 = vmatprep.subr.mxu0 0.0
    %4396 = vmatpush1.msra.mxu0 0.0
    %4397 = vmatprep.subr.mxu0 0.0
    %4398 = vmatpush1.msra.mxu0 0.0
    %4399 = vmatprep.subr.mxu0 0.0
    %4400 = vmatpush1.msra.mxu0 0.0
    %4401 = vmatprep.subr.mxu0 0.0
    %4402 = vmatpush1.msra.mxu0 0.0
    %4403 = vmatprep.subr.mxu0 0.0
    %4404 = vmatpush1.msra.mxu0 0.0
    %4405 = vmatprep.subr.mxu0 0.0
    %4406 = vmatpush1.msra.mxu0 0.0
    %4407 = vmatprep.subr.mxu0 0.0
    %4408 = vmatpush1.msra.mxu0 0.0
    %4409 = vmatprep.subr.mxu0 0.0
    %4410 = vmatpush1.msra.mxu0 0.0
    %4411 = vmatprep.subr.mxu0 0.0
    %4412 = vmatpush1.msra.mxu0 0.0
    %4413 = vmatprep.mubr.f32.mxu0 0.0
    %4414 = vmatmul.mubr.f32.gmra.mrb[0].mxu0 %v4339
    %v4415 = vpop.f32.mrb[0].mxu0
    %v4416 = vadd.f32 %v4329, %v4415
    %v4417 = vpop.f32.mrb[0].mxu0
    %v4418 = vadd.f32 %v4331, %v4417
    %4419 = vmatprep.mubr.f32.mxu0 0.0
    %4420 = vmatmul.mubr.f32.gmra.mrb[0].mxu0 %v4341
    %v4421 = vpop.f32.mrb[0].mxu0
    %v4422 = vadd.f32 %v4335, %v4421
    %v4423 = vpop.f32.mrb[0].mxu0
    %v4424 = vadd.f32 %v4337, %v4423
    %4425 = vdwg.mxu0
    %v4426 = vld [vmem:[%s1548] sm:$0xff]
    %v4427 = vld [vmem:[%s1548 + $0x8] sm:$0xff]
    %v4428 = vld [vmem:[%s1548 + $0x10] sm:$0xff]
    %v4429 = vld [vmem:[%s1548 + $0x18] sm:$0xff]
    %v4430 = vld [vmem:[%s1548 + $0x20] sm:$0xff]
    %v4431 = vld [vmem:[%s1548 + $0x28] sm:$0xff]
    %v4432 = vld [vmem:[%s1548 + $0x30] sm:$0xff]
    %v4433 = vld [vmem:[%s1548 + $0x38] sm:$0xff]
    %v4434 = vld [vmem:[%s1548 + $0x40] sm:$0xff]
    %v4435 = vld [vmem:[%s1548 + $0x48] sm:$0xff]
    %v4436 = vld [vmem:[%s1548 + $0x50] sm:$0xff]
    %v4437 = vld [vmem:[%s1548 + $0x58] sm:$0xff]
    %v4438 = vld [vmem:[%s1548 + $0x60] sm:$0xff]
    %v4439 = vld [vmem:[%s1548 + $0x68] sm:$0xff]
    %v4440 = vld [vmem:[%s1548 + $0x70] sm:$0xff]
    %v4441 = vld [vmem:[%s1548 + $0x78] sm:$0xff]
    %v4442 = vld [vmem:[%s1548 + $0x80] sm:$0xff]
    %v4443 = vld [vmem:[%s1548 + $0x88] sm:$0xff]
    %v4444 = vld [vmem:[%s1548 + $0x90] sm:$0xff]
    %v4445 = vld [vmem:[%s1548 + $0x98] sm:$0xff]
    %v4446 = vld [vmem:[%s1548 + $0xa0] sm:$0xf]
    %v4447 = vld [vmem:[%s1548 + $0xa8] sm:$0xf]
    %v4448 = vrot.slane %v4201, 2
    %v4449 = vrot.slane %v4202, 2
    %v4450 = vsel %vm367, %v4448, %v4449
    %v4451 = vsel %vm1373, %v4450, 0
    %v4453 = vsel %vm1373, %v4449, 0
    %v4456 = vsel %vm643, %v4446, 0
    %v4459 = vsel %vm643, %v4447, 0
    %4461 = vmatprep.subr.mxu0 %v4427
    %4462 = vmatpush1.msra.mxu0 %v4426
    %4463 = vmatprep.subr.mxu0 %v4429
    %4464 = vmatpush1.msra.mxu0 %v4428
    %4465 = vmatprep.subr.mxu0 %v4431
    %4466 = vmatpush1.msra.mxu0 %v4430
    %4467 = vmatprep.subr.mxu0 %v4433
    %4468 = vmatpush1.msra.mxu0 %v4432
    %4469 = vmatprep.subr.mxu0 %v4435
    %4470 = vmatpush1.msra.mxu0 %v4434
    %4471 = vmatprep.subr.mxu0 %v4437
    %4472 = vmatpush1.msra.mxu0 %v4436
    %4473 = vmatprep.subr.mxu0 %v4439
    %4474 = vmatpush1.msra.mxu0 %v4438
    %4475 = vmatprep.subr.mxu0 %v4441
    %4476 = vmatpush1.msra.mxu0 %v4440
    %4477 = vmatprep.subr.mxu0 %v4443
    %4478 = vmatpush1.msra.mxu0 %v4442
    %4479 = vmatprep.subr.mxu0 %v4445
    %4480 = vmatpush1.msra.mxu0 %v4444
    %4481 = vmatprep.subr.mxu0 %v4459
    %4482 = vmatpush1.msra.mxu0 %v4456
    %4483 = vmatprep.subr.mxu0 0.0
    %4484 = vmatpush1.msra.mxu0 0.0
    %4485 = vmatprep.subr.mxu0 0.0
    %4486 = vmatpush1.msra.mxu0 0.0
    %4487 = vmatprep.subr.mxu0 0.0
    %4488 = vmatpush1.msra.mxu0 0.0
    %4489 = vmatprep.subr.mxu0 0.0
    %4490 = vmatpush1.msra.mxu0 0.0
    %4491 = vmatprep.subr.mxu0 0.0
    %4492 = vmatpush1.msra.mxu0 0.0
    %4493 = vmatprep.subr.mxu0 0.0
    %4494 = vmatpush1.msra.mxu0 0.0
    %4495 = vmatprep.subr.mxu0 0.0
    %4496 = vmatpush1.msra.mxu0 0.0
    %4497 = vmatprep.subr.mxu0 0.0
    %4498 = vmatpush1.msra.mxu0 0.0
    %4499 = vmatprep.subr.mxu0 0.0
    %4500 = vmatpush1.msra.mxu0 0.0
    %4501 = vmatprep.subr.mxu0 0.0
    %4502 = vmatpush1.msra.mxu0 0.0
    %4503 = vmatprep.subr.mxu0 0.0
    %4504 = vmatpush1.msra.mxu0 0.0
    %4505 = vmatprep.subr.mxu0 0.0
    %4506 = vmatpush1.msra.mxu0 0.0
    %4507 = vmatprep.subr.mxu0 0.0
    %4508 = vmatpush1.msra.mxu0 0.0
    %4509 = vmatprep.subr.mxu0 0.0
    %4510 = vmatpush1.msra.mxu0 0.0
    %4511 = vmatprep.subr.mxu0 0.0
    %4512 = vmatpush1.msra.mxu0 0.0
    %4513 = vmatprep.subr.mxu0 0.0
    %4514 = vmatpush1.msra.mxu0 0.0
    %4515 = vmatprep.subr.mxu0 0.0
    %4516 = vmatpush1.msra.mxu0 0.0
    %4517 = vmatprep.subr.mxu0 0.0
    %4518 = vmatpush1.msra.mxu0 0.0
    %4519 = vmatprep.subr.mxu0 0.0
    %4520 = vmatpush1.msra.mxu0 0.0
    %4521 = vmatprep.subr.mxu0 0.0
    %4522 = vmatpush1.msra.mxu0 0.0
    %4523 = vmatprep.subr.mxu0 0.0
    %4524 = vmatpush1.msra.mxu0 0.0
    %4525 = vmatprep.mubr.f32.mxu0 0.0
    %4526 = vmatmul.mubr.f32.gmra.mrb[0].mxu0 %v4451
    %v4527 = vpop.f32.mrb[0].mxu0
    %v4528 = vadd.f32 0.0, %v4527
    %v4529 = vpop.f32.mrb[0].mxu0
    %v4530 = vadd.f32 0.0, %v4529
    %4531 = vmatprep.mubr.f32.mxu0 0.0
    %4532 = vmatmul.mubr.f32.gmra.mrb[0].mxu0 %v4453
    %v4533 = vpop.f32.mrb[0].mxu0
    %v4534 = vadd.f32 0.0, %v4533
    %v4535 = vpop.f32.mrb[0].mxu0
    %v4536 = vadd.f32 0.0, %v4535
    %4537 = vdwg.mxu0
    %v4538 = vadd.f32 %v4416, %v4528
    %v4539 = vadd.f32 %v4418, %v4530
    %v4540 = vadd.f32 %v4422, %v4534
    %v4541 = vadd.f32 %v4424, %v4536
    %v4542 = vld [vmem:[%s1665] sm:$0xff]
    %v4543 = vld [vmem:[%s1665 + $0x8] sm:$0xff]
    %v4544 = vld [vmem:[%s1665 + $0x10] sm:$0xff]
    %v4545 = vld [vmem:[%s1665 + $0x18] sm:$0xff]
    %v4546 = vld [vmem:[%s1665 + $0x20] sm:$0xff]
    %v4547 = vld [vmem:[%s1665 + $0x28] sm:$0xff]
    %v4548 = vld [vmem:[%s1665 + $0x30] sm:$0xff]
    %v4549 = vld [vmem:[%s1665 + $0x38] sm:$0xff]
    %v4550 = vld [vmem:[%s1665 + $0x40] sm:$0xff]
    %v4551 = vld [vmem:[%s1665 + $0x48] sm:$0xff]
    %v4552 = vld [vmem:[%s1665 + $0x50] sm:$0xff]
    %v4553 = vld [vmem:[%s1665 + $0x58] sm:$0xff]
    %v4554 = vld [vmem:[%s1665 + $0x60] sm:$0xff]
    %v4555 = vld [vmem:[%s1665 + $0x68] sm:$0xff]
    %v4556 = vld [vmem:[%s1665 + $0x70] sm:$0xff]
    %v4557 = vld [vmem:[%s1665 + $0x78] sm:$0xff]
    %v4558 = vld [vmem:[%s1665 + $0x80] sm:$0xff]
    %v4559 = vld [vmem:[%s1665 + $0x88] sm:$0xff]
    %v4560 = vld [vmem:[%s1665 + $0x90] sm:$0xff]
    %v4561 = vld [vmem:[%s1665 + $0x98] sm:$0xff]
    %v4562 = vld [vmem:[%s1665 + $0xa0] sm:$0xf]
    %v4563 = vld [vmem:[%s1665 + $0xa8] sm:$0xf]
    %v4564 = vrot.slane %v4201, 3
    %v4565 = vrot.slane %v4202, 3
    %v4566 = vsel %vm505, %v4564, %v4565
    %v4567 = vsel %vm1373, %v4566, 0
    %v4569 = vsel %vm1373, %v4565, 0
    %v4572 = vsel %vm643, %v4562, 0
    %v4575 = vsel %vm643, %v4563, 0
    %4577 = vmatprep.subr.mxu0 %v4543
    %4578 = vmatpush1.msra.mxu0 %v4542
    %4579 = vmatprep.subr.mxu0 %v4545
    %4580 = vmatpush1.msra.mxu0 %v4544
    %4581 = vmatprep.subr.mxu0 %v4547
    %4582 = vmatpush1.msra.mxu0 %v4546
    %4583 = vmatprep.subr.mxu0 %v4549
    %4584 = vmatpush1.msra.mxu0 %v4548
    %4585 = vmatprep.subr.mxu0 %v4551
    %4586 = vmatpush1.msra.mxu0 %v4550
    %4587 = vmatprep.subr.mxu0 %v4553
    %4588 = vmatpush1.msra.mxu0 %v4552
    %4589 = vmatprep.subr.mxu0 %v4555
    %4590 = vmatpush1.msra.mxu0 %v4554
    %4591 = vmatprep.subr.mxu0 %v4557
    %4592 = vmatpush1.msra.mxu0 %v4556
    %4593 = vmatprep.subr.mxu0 %v4559
    %4594 = vmatpush1.msra.mxu0 %v4558
    %4595 = vmatprep.subr.mxu0 %v4561
    %4596 = vmatpush1.msra.mxu0 %v4560
    %4597 = vmatprep.subr.mxu0 %v4575
    %4598 = vmatpush1.msra.mxu0 %v4572
    %4599 = vmatprep.subr.mxu0 0.0
    %4600 = vmatpush1.msra.mxu0 0.0
    %4601 = vmatprep.subr.mxu0 0.0
    %4602 = vmatpush1.msra.mxu0 0.0
    %4603 = vmatprep.subr.mxu0 0.0
    %4604 = vmatpush1.msra.mxu0 0.0
    %4605 = vmatprep.subr.mxu0 0.0
    %4606 = vmatpush1.msra.mxu0 0.0
    %4607 = vmatprep.subr.mxu0 0.0
    %4608 = vmatpush1.msra.mxu0 0.0
    %4609 = vmatprep.subr.mxu0 0.0
    %4610 = vmatpush1.msra.mxu0 0.0
    %4611 = vmatprep.subr.mxu0 0.0
    %4612 = vmatpush1.msra.mxu0 0.0
    %4613 = vmatprep.subr.mxu0 0.0
    %4614 = vmatpush1.msra.mxu0 0.0
    %4615 = vmatprep.subr.mxu0 0.0
    %4616 = vmatpush1.msra.mxu0 0.0
    %4617 = vmatprep.subr.mxu0 0.0
    %4618 = vmatpush1.msra.mxu0 0.0
    %4619 = vmatprep.subr.mxu0 0.0
    %4620 = vmatpush1.msra.mxu0 0.0
    %4621 = vmatprep.subr.mxu0 0.0
    %4622 = vmatpush1.msra.mxu0 0.0
    %4623 = vmatprep.subr.mxu0 0.0
    %4624 = vmatpush1.msra.mxu0 0.0
    %4625 = vmatprep.subr.mxu0 0.0
    %4626 = vmatpush1.msra.mxu0 0.0
    %4627 = vmatprep.subr.mxu0 0.0
    %4628 = vmatpush1.msra.mxu0 0.0
    %4629 = vmatprep.subr.mxu0 0.0
    %4630 = vmatpush1.msra.mxu0 0.0
    %4631 = vmatprep.subr.mxu0 0.0
    %4632 = vmatpush1.msra.mxu0 0.0
    %4633 = vmatprep.subr.mxu0 0.0
    %4634 = vmatpush1.msra.mxu0 0.0
    %4635 = vmatprep.subr.mxu0 0.0
    %4636 = vmatpush1.msra.mxu0 0.0
    %4637 = vmatprep.subr.mxu0 0.0
    %4638 = vmatpush1.msra.mxu0 0.0
    %4639 = vmatprep.subr.mxu0 0.0
    %4640 = vmatpush1.msra.mxu0 0.0
    %4641 = vmatprep.mubr.f32.mxu0 0.0
    %4642 = vmatmul.mubr.f32.gmra.mrb[0].mxu0 %v4567
    %v4643 = vpop.f32.mrb[0].mxu0
    %v4644 = vadd.f32 0.0, %v4643
    %v4645 = vpop.f32.mrb[0].mxu0
    %v4646 = vadd.f32 0.0, %v4645
    %4647 = vmatprep.mubr.f32.mxu0 0.0
    %4648 = vmatmul.mubr.f32.gmra.mrb[0].mxu0 %v4569
    %v4649 = vpop.f32.mrb[0].mxu0
    %v4650 = vadd.f32 0.0, %v4649
    %v4651 = vpop.f32.mrb[0].mxu0
    %v4652 = vadd.f32 0.0, %v4651
    %4653 = vdwg.mxu0
    %v4654 = vadd.f32 %v4538, %v4644
    %v4655 = vadd.f32 %v4539, %v4646
    %v4656 = vadd.f32 %v4540, %v4650
    %v4657 = vadd.f32 %v4541, %v4652
    %v4658 = vld [vmem:[%s1782] sm:$0xff]
    %v4659 = vld [vmem:[%s1782 + $0x8] sm:$0xff]
    %v4660 = vld [vmem:[%s1782 + $0x10] sm:$0xff]
    %v4661 = vld [vmem:[%s1782 + $0x18] sm:$0xff]
    %v4662 = vld [vmem:[%s1782 + $0x20] sm:$0xff]
    %v4663 = vld [vmem:[%s1782 + $0x28] sm:$0xff]
    %v4664 = vld [vmem:[%s1782 + $0x30] sm:$0xff]
    %v4665 = vld [vmem:[%s1782 + $0x38] sm:$0xff]
    %v4666 = vld [vmem:[%s1782 + $0x40] sm:$0xff]
    %v4667 = vld [vmem:[%s1782 + $0x48] sm:$0xff]
    %v4668 = vld [vmem:[%s1782 + $0x50] sm:$0xff]
    %v4669 = vld [vmem:[%s1782 + $0x58] sm:$0xff]
    %v4670 = vld [vmem:[%s1782 + $0x60] sm:$0xff]
    %v4671 = vld [vmem:[%s1782 + $0x68] sm:$0xff]
    %v4672 = vld [vmem:[%s1782 + $0x70] sm:$0xff]
    %v4673 = vld [vmem:[%s1782 + $0x78] sm:$0xff]
    %v4674 = vld [vmem:[%s1782 + $0x80] sm:$0xff]
    %v4675 = vld [vmem:[%s1782 + $0x88] sm:$0xff]
    %v4676 = vld [vmem:[%s1782 + $0x90] sm:$0xff]
    %v4677 = vld [vmem:[%s1782 + $0x98] sm:$0xff]
    %v4678 = vld [vmem:[%s1782 + $0xa0] sm:$0xf]
    %v4679 = vld [vmem:[%s1782 + $0xa8] sm:$0xf]
    %v4680 = vrot.slane %v4201, 4
    %v4681 = vrot.slane %v4202, 4
    %v4682 = vsel %vm643, %v4680, %v4681
    %v4683 = vsel %vm1373, %v4682, 0
    %v4685 = vsel %vm1373, %v4681, 0
    %v4688 = vsel %vm643, %v4678, 0
    %v4691 = vsel %vm643, %v4679, 0
    %4693 = vmatprep.subr.mxu0 %v4659
    %4694 = vmatpush1.msra.mxu0 %v4658
    %4695 = vmatprep.subr.mxu0 %v4661
    %4696 = vmatpush1.msra.mxu0 %v4660
    %4697 = vmatprep.subr.mxu0 %v4663
    %4698 = vmatpush1.msra.mxu0 %v4662
    %4699 = vmatprep.subr.mxu0 %v4665
    %4700 = vmatpush1.msra.mxu0 %v4664
    %4701 = vmatprep.subr.mxu0 %v4667
    %4702 = vmatpush1.msra.mxu0 %v4666
    %4703 = vmatprep.subr.mxu0 %v4669
    %4704 = vmatpush1.msra.mxu0 %v4668
    %4705 = vmatprep.subr.mxu0 %v4671
    %4706 = vmatpush1.msra.mxu0 %v4670
    %4707 = vmatprep.subr.mxu0 %v4673
    %4708 = vmatpush1.msra.mxu0 %v4672
    %4709 = vmatprep.subr.mxu0 %v4675
    %4710 = vmatpush1.msra.mxu0 %v4674
    %4711 = vmatprep.subr.mxu0 %v4677
    %4712 = vmatpush1.msra.mxu0 %v4676
    %4713 = vmatprep.subr.mxu0 %v4691
    %4714 = vmatpush1.msra.mxu0 %v4688
    %4715 = vmatprep.subr.mxu0 0.0
    %4716 = vmatpush1.msra.mxu0 0.0
    %4717 = vmatprep.subr.mxu0 0.0
    %4718 = vmatpush1.msra.mxu0 0.0
    %4719 = vmatprep.subr.mxu0 0.0
    %4720 = vmatpush1.msra.mxu0 0.0
    %4721 = vmatprep.subr.mxu0 0.0
    %4722 = vmatpush1.msra.mxu0 0.0
    %4723 = vmatprep.subr.mxu0 0.0
    %4724 = vmatpush1.msra.mxu0 0.0
    %4725 = vmatprep.subr.mxu0 0.0
    %4726 = vmatpush1.msra.mxu0 0.0
    %4727 = vmatprep.subr.mxu0 0.0
    %4728 = vmatpush1.msra.mxu0 0.0
    %4729 = vmatprep.subr.mxu0 0.0
    %4730 = vmatpush1.msra.mxu0 0.0
    %4731 = vmatprep.subr.mxu0 0.0
    %4732 = vmatpush1.msra.mxu0 0.0
    %4733 = vmatprep.subr.mxu0 0.0
    %4734 = vmatpush1.msra.mxu0 0.0
    %4735 = vmatprep.subr.mxu0 0.0
    %4736 = vmatpush1.msra.mxu0 0.0
    %4737 = vmatprep.subr.mxu0 0.0
    %4738 = vmatpush1.msra.mxu0 0.0
    %4739 = vmatprep.subr.mxu0 0.0
    %4740 = vmatpush1.msra.mxu0 0.0
    %4741 = vmatprep.subr.mxu0 0.0
    %4742 = vmatpush1.msra.mxu0 0.0
    %4743 = vmatprep.subr.mxu0 0.0
    %4744 = vmatpush1.msra.mxu0 0.0
    %4745 = vmatprep.subr.mxu0 0.0
    %4746 = vmatpush1.msra.mxu0 0.0
    %4747 = vmatprep.subr.mxu0 0.0
    %4748 = vmatpush1.msra.mxu0 0.0
    %4749 = vmatprep.subr.mxu0 0.0
    %4750 = vmatpush1.msra.mxu0 0.0
    %4751 = vmatprep.subr.mxu0 0.0
    %4752 = vmatpush1.msra.mxu0 0.0
    %4753 = vmatprep.subr.mxu0 0.0
    %4754 = vmatpush1.msra.mxu0 0.0
    %4755 = vmatprep.subr.mxu0 0.0
    %4756 = vmatpush1.msra.mxu0 0.0
    %4757 = vmatprep.mubr.f32.mxu0 0.0
    %4758 = vmatmul.mubr.f32.gmra.mrb[0].mxu0 %v4683
    %v4759 = vpop.f32.mrb[0].mxu0
    %v4760 = vadd.f32 0.0, %v4759
    %v4761 = vpop.f32.mrb[0].mxu0
    %v4762 = vadd.f32 0.0, %v4761
    %4763 = vmatprep.mubr.f32.mxu0 0.0
    %4764 = vmatmul.mubr.f32.gmra.mrb[0].mxu0 %v4685
    %v4765 = vpop.f32.mrb[0].mxu0
    %v4766 = vadd.f32 0.0, %v4765
    %v4767 = vpop.f32.mrb[0].mxu0
    %v4768 = vadd.f32 0.0, %v4767
    %4769 = vdwg.mxu0
    %v4770 = vadd.f32 %v4654, %v4760
    %v4771 = vadd.f32 %v4655, %v4762
    %v4772 = vadd.f32 %v4656, %v4766
    %v4773 = vadd.f32 %v4657, %v4768
    %v4774 = vadd.f32 %v4770, %v1903
    %v4775 = vadd.f32 %v4771, %v1907
    %v4776 = vadd.f32 %v4772, %v1903
    %v4777 = vadd.f32 %v4773, %v1907
    %v4778 = vmax.f32 %v4774, 0.0
    %v4779 = vmax.f32 %v4775, 0.0
    %v4780 = vmax.f32 %v4776, 0.0
    %v4781 = vmax.f32 %v4777, 0.0
    %v4782 = vld [vmem:[%s8] sm:$0xff]
    %v4783 = vld [vmem:[%s8 + $0x8] sm:$0xff]
    %v4784 = vld [vmem:[%s8 + $0x10] sm:$0xff]
    %v4785 = vld [vmem:[%s8 + $0x18] sm:$0xff]
    %v4786 = vld [vmem:[%s8 + $0x20] sm:$0xff]
    %v4787 = vld [vmem:[%s8 + $0x28] sm:$0xff]
    %v4788 = vld [vmem:[%s8 + $0x30] sm:$0xff]
    %v4789 = vld [vmem:[%s8 + $0x38] sm:$0xff]
    %v4790 = vld [vmem:[%s8 + $0x40] sm:$0xff]
    %v4791 = vld [vmem:[%s8 + $0x48] sm:$0xff]
    %v4792 = vld [vmem:[%s8 + $0x50] sm:$0xff]
    %v4793 = vld [vmem:[%s8 + $0x58] sm:$0xff]
    %v4794 = vld [vmem:[%s8 + $0x60] sm:$0xff]
    %v4795 = vld [vmem:[%s8 + $0x68] sm:$0xff]
    %v4796 = vld [vmem:[%s8 + $0x70] sm:$0xff]
    %v4797 = vld [vmem:[%s8 + $0x78] sm:$0xff]
    %v4798 = vld [vmem:[%s8 + $0x80] sm:$0xff]
    %v4799 = vld [vmem:[%s8 + $0x88] sm:$0xff]
    %v4800 = vld [vmem:[%s8 + $0x90] sm:$0xff]
    %v4801 = vld [vmem:[%s8 + $0x98] sm:$0xff]
    %v4802 = vld [vmem:[%s1938] sm:$0xff]
    %v4803 = vld [vmem:[%s1938 + $0x8] sm:$0xff]
    %v4804 = vld [vmem:[%s1938 + $0x10] sm:$0xff]
    %v4805 = vld [vmem:[%s1938 + $0x18] sm:$0xff]
    %v4806 = vld [vmem:[%s1938 + $0x20] sm:$0xff]
    %v4807 = vld [vmem:[%s1938 + $0x28] sm:$0xff]
    %v4808 = vld [vmem:[%s1938 + $0x30] sm:$0xff]
    %v4809 = vld [vmem:[%s1938 + $0x38] sm:$0xff]
    %v4810 = vld [vmem:[%s1938 + $0x40] sm:$0xff]
    %v4811 = vld [vmem:[%s1938 + $0x48] sm:$0xff]
    %v4812 = vld [vmem:[%s1938 + $0x50] sm:$0xff]
    %v4813 = vld [vmem:[%s1938 + $0x58] sm:$0xff]
    %v4814 = vld [vmem:[%s1938 + $0x60] sm:$0xff]
    %v4815 = vld [vmem:[%s1938 + $0x68] sm:$0xff]
    %v4816 = vld [vmem:[%s1938 + $0x70] sm:$0xff]
    %v4817 = vld [vmem:[%s1938 + $0x78] sm:$0xff]
    %v4818 = vld [vmem:[%s1938 + $0x80] sm:$0xff]
    %v4819 = vld [vmem:[%s1938 + $0x88] sm:$0xff]
    %v4820 = vld [vmem:[%s1938 + $0x90] sm:$0xff]
    %v4821 = vld [vmem:[%s1938 + $0x98] sm:$0xff]
    %v4822 = vld [vmem:[%s7] sm:$0x1f]
    %v4824 = vsel %vm1960, %v4822, 0
    %v4827 = vsel %vm1964, %v4780, 0
    %v4830 = vsel %vm1964, %v4781, 0
    %4832 = vmatprep.subr.mxu0 %v4779
    %4833 = vmatpush1.msra.mxu0 %v4778
    %4834 = vmatprep.subr.mxu0 %v4830
    %4835 = vmatpush1.msra.mxu0 %v4827
    %4836 = vmatprep.subr.mxu0 0.0
    %4837 = vmatpush1.msra.mxu0 0.0
    %4838 = vmatprep.subr.mxu0 0.0
    %4839 = vmatpush1.msra.mxu0 0.0
    %4840 = vmatprep.subr.mxu0 0.0
    %4841 = vmatpush1.msra.mxu0 0.0
    %4842 = vmatprep.subr.mxu0 0.0
    %4843 = vmatpush1.msra.mxu0 0.0
    %4844 = vmatprep.subr.mxu0 0.0
    %4845 = vmatpush1.msra.mxu0 0.0
    %4846 = vmatprep.subr.mxu0 0.0
    %4847 = vmatpush1.msra.mxu0 0.0
    %4848 = vmatprep.subr.mxu0 0.0
    %4849 = vmatpush1.msra.mxu0 0.0
    %4850 = vmatprep.subr.mxu0 0.0
    %4851 = vmatpush1.msra.mxu0 0.0
    %4852 = vmatprep.subr.mxu0 0.0
    %4853 = vmatpush1.msra.mxu0 0.0
    %4854 = vmatprep.subr.mxu0 0.0
    %4855 = vmatpush1.msra.mxu0 0.0
    %4856 = vmatprep.subr.mxu0 0.0
    %4857 = vmatpush1.msra.mxu0 0.0
    %4858 = vmatprep.subr.mxu0 0.0
    %4859 = vmatpush1.msra.mxu0 0.0
    %4860 = vmatprep.subr.mxu0 0.0
    %4861 = vmatpush1.msra.mxu0 0.0
    %4862 = vmatprep.subr.mxu0 0.0
    %4863 = vmatpush1.msra.mxu0 0.0
    %4864 = vmatprep.subr.mxu0 0.0
    %4865 = vmatpush1.msra.mxu0 0.0
    %4866 = vmatprep.subr.mxu0 0.0
    %4867 = vmatpush1.msra.mxu0 0.0
    %4868 = vmatprep.subr.mxu0 0.0
    %4869 = vmatpush1.msra.mxu0 0.0
    %4870 = vmatprep.subr.mxu0 0.0
    %4871 = vmatpush1.msra.mxu0 0.0
    %4872 = vmatprep.subr.mxu0 0.0
    %4873 = vmatpush1.msra.mxu0 0.0
    %4874 = vmatprep.subr.mxu0 0.0
    %4875 = vmatpush1.msra.mxu0 0.0
    %4876 = vmatprep.subr.mxu0 0.0
    %4877 = vmatpush1.msra.mxu0 0.0
    %4878 = vmatprep.subr.mxu0 0.0
    %4879 = vmatpush1.msra.mxu0 0.0
    %4880 = vmatprep.subr.mxu0 0.0
    %4881 = vmatpush1.msra.mxu0 0.0
    %4882 = vmatprep.subr.mxu0 0.0
    %4883 = vmatpush1.msra.mxu0 0.0
    %4884 = vmatprep.subr.mxu0 0.0
    %4885 = vmatpush1.msra.mxu0 0.0
    %4886 = vmatprep.subr.mxu0 0.0
    %4887 = vmatpush1.msra.mxu0 0.0
    %4888 = vmatprep.subr.mxu0 0.0
    %4889 = vmatpush1.msra.mxu0 0.0
    %4890 = vmatprep.subr.mxu0 0.0
    %4891 = vmatpush1.msra.mxu0 0.0
    %4892 = vmatprep.subr.mxu0 0.0
    %4893 = vmatpush1.msra.mxu0 0.0
    %4894 = vmatprep.subr.mxu0 0.0
    %4895 = vmatpush1.msra.mxu0 0.0
    %4896 = vmatprep.mubr.f32.mxu0 0.0
    %4897 = vmatmul.mubr.f32.gmra.mrb[0].mxu0 %v4824
    %v4898 = vpop.f32.mrb[0].mxu0
    %v4899 = vadd.f32 0.0, %v4898
    %v4900 = vpop.f32.mrb[0].mxu0
    %v4901 = vadd.f32 0.0, %v4900
    %4902 = vdwg.mxu0
    %v4903 = vld [vmem:[%s2042] sm:$0x1f]
    %v4905 = vsel %vm1960, %v4903, 0
    %4907 = vmatprep.subr.mxu0 %v4779
    %4908 = vmatpush1.msra.mxu0 %v4778
    %4909 = vmatprep.subr.mxu0 %v4830
    %4910 = vmatpush1.msra.mxu0 %v4827
    %4911 = vmatprep.subr.mxu0 0.0
    %4912 = vmatpush1.msra.mxu0 0.0
    %4913 = vmatprep.subr.mxu0 0.0
    %4914 = vmatpush1.msra.mxu0 0.0
    %4915 = vmatprep.subr.mxu0 0.0
    %4916 = vmatpush1.msra.mxu0 0.0
    %4917 = vmatprep.subr.mxu0 0.0
    %4918 = vmatpush1.msra.mxu0 0.0
    %4919 = vmatprep.subr.mxu0 0.0
    %4920 = vmatpush1.msra.mxu0 0.0
    %4921 = vmatprep.subr.mxu0 0.0
    %4922 = vmatpush1.msra.mxu0 0.0
    %4923 = vmatprep.subr.mxu0 0.0
    %4924 = vmatpush1.msra.mxu0 0.0
    %4925 = vmatprep.subr.mxu0 0.0
    %4926 = vmatpush1.msra.mxu0 0.0
    %4927 = vmatprep.subr.mxu0 0.0
    %4928 = vmatpush1.msra.mxu0 0.0
    %4929 = vmatprep.subr.mxu0 0.0
    %4930 = vmatpush1.msra.mxu0 0.0
    %4931 = vmatprep.subr.mxu0 0.0
    %4932 = vmatpush1.msra.mxu0 0.0
    %4933 = vmatprep.subr.mxu0 0.0
    %4934 = vmatpush1.msra.mxu0 0.0
    %4935 = vmatprep.subr.mxu0 0.0
    %4936 = vmatpush1.msra.mxu0 0.0
    %4937 = vmatprep.subr.mxu0 0.0
    %4938 = vmatpush1.msra.mxu0 0.0
    %4939 = vmatprep.subr.mxu0 0.0
    %4940 = vmatpush1.msra.mxu0 0.0
    %4941 = vmatprep.subr.mxu0 0.0
    %4942 = vmatpush1.msra.mxu0 0.0
    %4943 = vmatprep.subr.mxu0 0.0
    %4944 = vmatpush1.msra.mxu0 0.0
    %4945 = vmatprep.subr.mxu0 0.0
    %4946 = vmatpush1.msra.mxu0 0.0
    %4947 = vmatprep.subr.mxu0 0.0
    %4948 = vmatpush1.msra.mxu0 0.0
    %4949 = vmatprep.subr.mxu0 0.0
    %4950 = vmatpush1.msra.mxu0 0.0
    %4951 = vmatprep.subr.mxu0 0.0
    %4952 = vmatpush1.msra.mxu0 0.0
    %4953 = vmatprep.subr.mxu0 0.0
    %4954 = vmatpush1.msra.mxu0 0.0
    %4955 = vmatprep.subr.mxu0 0.0
    %4956 = vmatpush1.msra.mxu0 0.0
    %4957 = vmatprep.subr.mxu0 0.0
    %4958 = vmatpush1.msra.mxu0 0.0
    %4959 = vmatprep.subr.mxu0 0.0
    %4960 = vmatpush1.msra.mxu0 0.0
    %4961 = vmatprep.subr.mxu0 0.0
    %4962 = vmatpush1.msra.mxu0 0.0
    %4963 = vmatprep.subr.mxu0 0.0
    %4964 = vmatpush1.msra.mxu0 0.0
    %4965 = vmatprep.subr.mxu0 0.0
    %4966 = vmatpush1.msra.mxu0 0.0
    %4967 = vmatprep.subr.mxu0 0.0
    %4968 = vmatpush1.msra.mxu0 0.0
    %4969 = vmatprep.subr.mxu0 0.0
    %4970 = vmatpush1.msra.mxu0 0.0
    %4971 = vmatprep.mubr.f32.mxu0 0.0
    %4972 = vmatmul.mubr.f32.gmra.mrb[0].mxu0 %v4905
    %v4973 = vpop.f32.mrb[0].mxu0
    %v4974 = vadd.f32 0.0, %v4973
    %v4975 = vpop.f32.mrb[0].mxu0
    %v4976 = vadd.f32 0.0, %v4975
    %4977 = vdwg.mxu0
    %v4979 = vsel %vm2118, %v4901, 0
    %4981 = vmatprep.subr.mxu0 0.0
    %4982 = vmatpush1.msra.mxu0 %v4782
    %4983 = vmatprep.subr.mxu0 0.0
    %4984 = vmatpush1.msra.mxu0 %v4783
    %4985 = vmatprep.subr.mxu0 0.0
    %4986 = vmatpush1.msra.mxu0 %v4784
    %4987 = vmatprep.subr.mxu0 0.0
    %4988 = vmatpush1.msra.mxu0 %v4785
    %4989 = vmatprep.subr.mxu0 0.0
    %4990 = vmatpush1.msra.mxu0 %v4786
    %4991 = vmatprep.subr.mxu0 0.0
    %4992 = vmatpush1.msra.mxu0 %v4787
    %4993 = vmatprep.subr.mxu0 0.0
    %4994 = vmatpush1.msra.mxu0 %v4788
    %4995 = vmatprep.subr.mxu0 0.0
    %4996 = vmatpush1.msra.mxu0 %v4789
    %4997 = vmatprep.subr.mxu0 0.0
    %4998 = vmatpush1.msra.mxu0 %v4790
    %4999 = vmatprep.subr.mxu0 0.0
    %5000 = vmatpush1.msra.mxu0 %v4791
    %5001 = vmatprep.subr.mxu0 0.0
    %5002 = vmatpush1.msra.mxu0 %v4792
    %5003 = vmatprep.subr.mxu0 0.0
    %5004 = vmatpush1.msra.mxu0 %v4793
    %5005 = vmatprep.subr.mxu0 0.0
    %5006 = vmatpush1.msra.mxu0 %v4794
    %5007 = vmatprep.subr.mxu0 0.0
    %5008 = vmatpush1.msra.mxu0 %v4795
    %5009 = vmatprep.subr.mxu0 0.0
    %5010 = vmatpush1.msra.mxu0 %v4796
    %5011 = vmatprep.subr.mxu0 0.0
    %5012 = vmatpush1.msra.mxu0 %v4797
    %5013 = vmatprep.subr.mxu0 0.0
    %5014 = vmatpush1.msra.mxu0 %v4798
    %5015 = vmatprep.subr.mxu0 0.0
    %5016 = vmatpush1.msra.mxu0 %v4799
    %5017 = vmatprep.subr.mxu0 0.0
    %5018 = vmatpush1.msra.mxu0 %v4800
    %5019 = vmatprep.subr.mxu0 0.0
    %5020 = vmatpush1.msra.mxu0 %v4801
    %5021 = vmatprep.subr.mxu0 0.0
    %5022 = vmatpush1.msra.mxu0 0.0
    %5023 = vmatprep.subr.mxu0 0.0
    %5024 = vmatpush1.msra.mxu0 0.0
    %5025 = vmatprep.subr.mxu0 0.0
    %5026 = vmatpush1.msra.mxu0 0.0
    %5027 = vmatprep.subr.mxu0 0.0
    %5028 = vmatpush1.msra.mxu0 0.0
    %5029 = vmatprep.subr.mxu0 0.0
    %5030 = vmatpush1.msra.mxu0 0.0
    %5031 = vmatprep.subr.mxu0 0.0
    %5032 = vmatpush1.msra.mxu0 0.0
    %5033 = vmatprep.subr.mxu0 0.0
    %5034 = vmatpush1.msra.mxu0 0.0
    %5035 = vmatprep.subr.mxu0 0.0
    %5036 = vmatpush1.msra.mxu0 0.0
    %5037 = vmatprep.subr.mxu0 0.0
    %5038 = vmatpush1.msra.mxu0 0.0
    %5039 = vmatprep.subr.mxu0 0.0
    %5040 = vmatpush1.msra.mxu0 0.0
    %5041 = vmatprep.subr.mxu0 0.0
    %5042 = vmatpush1.msra.mxu0 0.0
    %5043 = vmatprep.subr.mxu0 0.0
    %5044 = vmatpush1.msra.mxu0 0.0
    %5045 = vmatprep.mubr.f32.mxu0 %v4979
    %5046 = vmatmul.mubr.f32.gmra.mrb[0].mxu0 %v4899
    %v5047 = vpop.f32.mrb[0].mxu0
    %v5048 = vadd.f32 0.0, %v5047
    %v5049 = vpop.f32.mrb[0].mxu0
    %5050 = vdwg.mxu0
    %5051 = vmatprep.subr.mxu0 0.0
    %5052 = vmatpush1.msra.mxu0 %v4802
    %5053 = vmatprep.subr.mxu0 0.0
    %5054 = vmatpush1.msra.mxu0 %v4803
    %5055 = vmatprep.subr.mxu0 0.0
    %5056 = vmatpush1.msra.mxu0 %v4804
    %5057 = vmatprep.subr.mxu0 0.0
    %5058 = vmatpush1.msra.mxu0 %v4805
    %5059 = vmatprep.subr.mxu0 0.0
    %5060 = vmatpush1.msra.mxu0 %v4806
    %5061 = vmatprep.subr.mxu0 0.0
    %5062 = vmatpush1.msra.mxu0 %v4807
    %5063 = vmatprep.subr.mxu0 0.0
    %5064 = vmatpush1.msra.mxu0 %v4808
    %5065 = vmatprep.subr.mxu0 0.0
    %5066 = vmatpush1.msra.mxu0 %v4809
    %5067 = vmatprep.subr.mxu0 0.0
    %5068 = vmatpush1.msra.mxu0 %v4810
    %5069 = vmatprep.subr.mxu0 0.0
    %5070 = vmatpush1.msra.mxu0 %v4811
    %5071 = vmatprep.subr.mxu0 0.0
    %5072 = vmatpush1.msra.mxu0 %v4812
    %5073 = vmatprep.subr.mxu0 0.0
    %5074 = vmatpush1.msra.mxu0 %v4813
    %5075 = vmatprep.subr.mxu0 0.0
    %5076 = vmatpush1.msra.mxu0 %v4814
    %5077 = vmatprep.subr.mxu0 0.0
    %5078 = vmatpush1.msra.mxu0 %v4815
    %5079 = vmatprep.subr.mxu0 0.0
    %5080 = vmatpush1.msra.mxu0 %v4816
    %5081 = vmatprep.subr.mxu0 0.0
    %5082 = vmatpush1.msra.mxu0 %v4817
    %5083 = vmatprep.subr.mxu0 0.0
    %5084 = vmatpush1.msra.mxu0 %v4818
    %5085 = vmatprep.subr.mxu0 0.0
    %5086 = vmatpush1.msra.mxu0 %v4819
    %5087 = vmatprep.subr.mxu0 0.0
    %5088 = vmatpush1.msra.mxu0 %v4820
    %5089 = vmatprep.subr.mxu0 0.0
    %5090 = vmatpush1.msra.mxu0 %v4821
    %5091 = vmatprep.subr.mxu0 0.0
    %5092 = vmatpush1.msra.mxu0 0.0
    %5093 = vmatprep.subr.mxu0 0.0
    %5094 = vmatpush1.msra.mxu0 0.0
    %5095 = vmatprep.subr.mxu0 0.0
    %5096 = vmatpush1.msra.mxu0 0.0
    %5097 = vmatprep.subr.mxu0 0.0
    %5098 = vmatpush1.msra.mxu0 0.0
    %5099 = vmatprep.subr.mxu0 0.0
    %5100 = vmatpush1.msra.mxu0 0.0
    %5101 = vmatprep.subr.mxu0 0.0
    %5102 = vmatpush1.msra.mxu0 0.0
    %5103 = vmatprep.subr.mxu0 0.0
    %5104 = vmatpush1.msra.mxu0 0.0
    %5105 = vmatprep.subr.mxu0 0.0
    %5106 = vmatpush1.msra.mxu0 0.0
    %5107 = vmatprep.subr.mxu0 0.0
    %5108 = vmatpush1.msra.mxu0 0.0
    %5109 = vmatprep.subr.mxu0 0.0
    %5110 = vmatpush1.msra.mxu0 0.0
    %5111 = vmatprep.subr.mxu0 0.0
    %5112 = vmatpush1.msra.mxu0 0.0
    %5113 = vmatprep.subr.mxu0 0.0
    %5114 = vmatpush1.msra.mxu0 0.0
    %5115 = vmatprep.mubr.f32.mxu0 %v4979
    %5116 = vmatmul.mubr.f32.gmra.mrb[0].mxu0 %v4899
    %v5117 = vpop.f32.mrb[0].mxu0
    %v5118 = vadd.f32 0.0, %v5117
    %v5119 = vpop.f32.mrb[0].mxu0
    %5120 = vdwg.mxu0
    %v5121 = vmax.f32 %v5048, %v5118
    %v5123 = vsel %vm2118, %v4976, 0
    %5125 = vmatprep.subr.mxu0 0.0
    %5126 = vmatpush1.msra.mxu0 %v4782
    %5127 = vmatprep.subr.mxu0 0.0
    %5128 = vmatpush1.msra.mxu0 %v4783
    %5129 = vmatprep.subr.mxu0 0.0
    %5130 = vmatpush1.msra.mxu0 %v4784
    %5131 = vmatprep.subr.mxu0 0.0
    %5132 = vmatpush1.msra.mxu0 %v4785
    %5133 = vmatprep.subr.mxu0 0.0
    %5134 = vmatpush1.msra.mxu0 %v4786
    %5135 = vmatprep.subr.mxu0 0.0
    %5136 = vmatpush1.msra.mxu0 %v4787
    %5137 = vmatprep.subr.mxu0 0.0
    %5138 = vmatpush1.msra.mxu0 %v4788
    %5139 = vmatprep.subr.mxu0 0.0
    %5140 = vmatpush1.msra.mxu0 %v4789
    %5141 = vmatprep.subr.mxu0 0.0
    %5142 = vmatpush1.msra.mxu0 %v4790
    %5143 = vmatprep.subr.mxu0 0.0
    %5144 = vmatpush1.msra.mxu0 %v4791
    %5145 = vmatprep.subr.mxu0 0.0
    %5146 = vmatpush1.msra.mxu0 %v4792
    %5147 = vmatprep.subr.mxu0 0.0
    %5148 = vmatpush1.msra.mxu0 %v4793
    %5149 = vmatprep.subr.mxu0 0.0
    %5150 = vmatpush1.msra.mxu0 %v4794
    %5151 = vmatprep.subr.mxu0 0.0
    %5152 = vmatpush1.msra.mxu0 %v4795
    %5153 = vmatprep.subr.mxu0 0.0
    %5154 = vmatpush1.msra.mxu0 %v4796
    %5155 = vmatprep.subr.mxu0 0.0
    %5156 = vmatpush1.msra.mxu0 %v4797
    %5157 = vmatprep.subr.mxu0 0.0
    %5158 = vmatpush1.msra.mxu0 %v4798
    %5159 = vmatprep.subr.mxu0 0.0
    %5160 = vmatpush1.msra.mxu0 %v4799
    %5161 = vmatprep.subr.mxu0 0.0
    %5162 = vmatpush1.msra.mxu0 %v4800
    %5163 = vmatprep.subr.mxu0 0.0
    %5164 = vmatpush1.msra.mxu0 %v4801
    %5165 = vmatprep.subr.mxu0 0.0
    %5166 = vmatpush1.msra.mxu0 0.0
    %5167 = vmatprep.subr.mxu0 0.0
    %5168 = vmatpush1.msra.mxu0 0.0
    %5169 = vmatprep.subr.mxu0 0.0
    %5170 = vmatpush1.msra.mxu0 0.0
    %5171 = vmatprep.subr.mxu0 0.0
    %5172 = vmatpush1.msra.mxu0 0.0
    %5173 = vmatprep.subr.mxu0 0.0
    %5174 = vmatpush1.msra.mxu0 0.0
    %5175 = vmatprep.subr.mxu0 0.0
    %5176 = vmatpush1.msra.mxu0 0.0
    %5177 = vmatprep.subr.mxu0 0.0
    %5178 = vmatpush1.msra.mxu0 0.0
    %5179 = vmatprep.subr.mxu0 0.0
    %5180 = vmatpush1.msra.mxu0 0.0
    %5181 = vmatprep.subr.mxu0 0.0
    %5182 = vmatpush1.msra.mxu0 0.0
    %5183 = vmatprep.subr.mxu0 0.0
    %5184 = vmatpush1.msra.mxu0 0.0
    %5185 = vmatprep.subr.mxu0 0.0
    %5186 = vmatpush1.msra.mxu0 0.0
    %5187 = vmatprep.subr.mxu0 0.0
    %5188 = vmatpush1.msra.mxu0 0.0
    %5189 = vmatprep.mubr.f32.mxu0 %v5123
    %5190 = vmatmul.mubr.f32.gmra.mrb[0].mxu0 %v4974
    %v5191 = vpop.f32.mrb[0].mxu0
    %v5192 = vadd.f32 0.0, %v5191
    %v5193 = vpop.f32.mrb[0].mxu0
    %5194 = vdwg.mxu0
    %5195 = vmatprep.subr.mxu0 0.0
    %5196 = vmatpush1.msra.mxu0 %v4802
    %5197 = vmatprep.subr.mxu0 0.0
    %5198 = vmatpush1.msra.mxu0 %v4803
    %5199 = vmatprep.subr.mxu0 0.0
    %5200 = vmatpush1.msra.mxu0 %v4804
    %5201 = vmatprep.subr.mxu0 0.0
    %5202 = vmatpush1.msra.mxu0 %v4805
    %5203 = vmatprep.subr.mxu0 0.0
    %5204 = vmatpush1.msra.mxu0 %v4806
    %5205 = vmatprep.subr.mxu0 0.0
    %5206 = vmatpush1.msra.mxu0 %v4807
    %5207 = vmatprep.subr.mxu0 0.0
    %5208 = vmatpush1.msra.mxu0 %v4808
    %5209 = vmatprep.subr.mxu0 0.0
    %5210 = vmatpush1.msra.mxu0 %v4809
    %5211 = vmatprep.subr.mxu0 0.0
    %5212 = vmatpush1.msra.mxu0 %v4810
    %5213 = vmatprep.subr.mxu0 0.0
    %5214 = vmatpush1.msra.mxu0 %v4811
    %5215 = vmatprep.subr.mxu0 0.0
    %5216 = vmatpush1.msra.mxu0 %v4812
    %5217 = vmatprep.subr.mxu0 0.0
    %5218 = vmatpush1.msra.mxu0 %v4813
    %5219 = vmatprep.subr.mxu0 0.0
    %5220 = vmatpush1.msra.mxu0 %v4814
    %5221 = vmatprep.subr.mxu0 0.0
    %5222 = vmatpush1.msra.mxu0 %v4815
    %5223 = vmatprep.subr.mxu0 0.0
    %5224 = vmatpush1.msra.mxu0 %v4816
    %5225 = vmatprep.subr.mxu0 0.0
    %5226 = vmatpush1.msra.mxu0 %v4817
    %5227 = vmatprep.subr.mxu0 0.0
    %5228 = vmatpush1.msra.mxu0 %v4818
    %5229 = vmatprep.subr.mxu0 0.0
    %5230 = vmatpush1.msra.mxu0 %v4819
    %5231 = vmatprep.subr.mxu0 0.0
    %5232 = vmatpush1.msra.mxu0 %v4820
    %5233 = vmatprep.subr.mxu0 0.0
    %5234 = vmatpush1.msra.mxu0 %v4821
    %5235 = vmatprep.subr.mxu0 0.0
    %5236 = vmatpush1.msra.mxu0 0.0
    %5237 = vmatprep.subr.mxu0 0.0
    %5238 = vmatpush1.msra.mxu0 0.0
    %5239 = vmatprep.subr.mxu0 0.0
    %5240 = vmatpush1.msra.mxu0 0.0
    %5241 = vmatprep.subr.mxu0 0.0
    %5242 = vmatpush1.msra.mxu0 0.0
    %5243 = vmatprep.subr.mxu0 0.0
    %5244 = vmatpush1.msra.mxu0 0.0
    %5245 = vmatprep.subr.mxu0 0.0
    %5246 = vmatpush1.msra.mxu0 0.0
    %5247 = vmatprep.subr.mxu0 0.0
    %5248 = vmatpush1.msra.mxu0 0.0
    %5249 = vmatprep.subr.mxu0 0.0
    %5250 = vmatpush1.msra.mxu0 0.0
    %5251 = vmatprep.subr.mxu0 0.0
    %5252 = vmatpush1.msra.mxu0 0.0
    %5253 = vmatprep.subr.mxu0 0.0
    %5254 = vmatpush1.msra.mxu0 0.0
    %5255 = vmatprep.subr.mxu0 0.0
    %5256 = vmatpush1.msra.mxu0 0.0
    %5257 = vmatprep.subr.mxu0 0.0
    %5258 = vmatpush1.msra.mxu0 0.0
    %5259 = vmatprep.mubr.f32.mxu0 %v5123
    %5260 = vmatmul.mubr.f32.gmra.mrb[0].mxu0 %v4974
    %v5261 = vpop.f32.mrb[0].mxu0
    %v5262 = vadd.f32 0.0, %v5261
    %v5263 = vpop.f32.mrb[0].mxu0
    %5264 = vdwg.mxu0
    %v5265 = vmax.f32 %v5192, %v5262
    %v5266 = vmax.f32 %v5121, %v5265
    %v5267 = vld [vmem:[%s9] sm:$0xff]
    %v5268 = vld [vmem:[%s9 + $0x8] sm:$0xff]
    %v5269 = vld [vmem:[%s9 + $0x10] sm:$0xff]
    %v5270 = vld [vmem:[%s9 + $0x18] sm:$0xff]
    %v5271 = vld [vmem:[%s9 + $0x20] sm:$0xff]
    %v5272 = vld [vmem:[%s9 + $0x28] sm:$0xff]
    %v5273 = vld [vmem:[%s9 + $0x30] sm:$0xff]
    %v5274 = vld [vmem:[%s9 + $0x38] sm:$0xff]
    %v5275 = vld [vmem:[%s9 + $0x40] sm:$0xff]
    %v5276 = vld [vmem:[%s9 + $0x48] sm:$0xff]
    %v5277 = vld [vmem:[%s2418] sm:$0xff]
    %v5278 = vld [vmem:[%s2418 + $0x8] sm:$0xff]
    %v5279 = vld [vmem:[%s2418 + $0x10] sm:$0xff]
    %v5280 = vld [vmem:[%s2418 + $0x18] sm:$0xff]
    %v5281 = vld [vmem:[%s2418 + $0x20] sm:$0xff]
    %v5282 = vld [vmem:[%s2418 + $0x28] sm:$0xff]
    %v5283 = vld [vmem:[%s2418 + $0x30] sm:$0xff]
    %v5284 = vld [vmem:[%s2418 + $0x38] sm:$0xff]
    %v5285 = vld [vmem:[%s2418 + $0x40] sm:$0xff]
    %v5286 = vld [vmem:[%s2418 + $0x48] sm:$0xff]
    %v5288 = vrot.slane %v5266, 1
    %v5289 = vsel %vm2431, %v5288, 0
    %5291 = vmatprep.subr.mxu0 0.0
    %5292 = vmatpush1.msra.mxu0 %v5277
    %5293 = vmatprep.subr.mxu0 0.0
    %5294 = vmatpush1.msra.mxu0 %v5278
    %5295 = vmatprep.subr.mxu0 0.0
    %5296 = vmatpush1.msra.mxu0 %v5279
    %5297 = vmatprep.subr.mxu0 0.0
    %5298 = vmatpush1.msra.mxu0 %v5280
    %5299 = vmatprep.subr.mxu0 0.0
    %5300 = vmatpush1.msra.mxu0 %v5281
    %5301 = vmatprep.subr.mxu0 0.0
    %5302 = vmatpush1.msra.mxu0 %v5282
    %5303 = vmatprep.subr.mxu0 0.0
    %5304 = vmatpush1.msra.mxu0 %v5283
    %5305 = vmatprep.subr.mxu0 0.0
    %5306 = vmatpush1.msra.mxu0 %v5284
    %5307 = vmatprep.subr.mxu0 0.0
    %5308 = vmatpush1.msra.mxu0 %v5285
    %5309 = vmatprep.subr.mxu0 0.0
    %5310 = vmatpush1.msra.mxu0 %v5286
    %5311 = vmatprep.subr.mxu0 0.0
    %5312 = vmatpush1.msra.mxu0 0.0
    %5313 = vmatprep.subr.mxu0 0.0
    %5314 = vmatpush1.msra.mxu0 0.0
    %5315 = vmatprep.subr.mxu0 0.0
    %5316 = vmatpush1.msra.mxu0 0.0
    %5317 = vmatprep.subr.mxu0 0.0
    %5318 = vmatpush1.msra.mxu0 0.0
    %5319 = vmatprep.subr.mxu0 0.0
    %5320 = vmatpush1.msra.mxu0 0.0
    %5321 = vmatprep.subr.mxu0 0.0
    %5322 = vmatpush1.msra.mxu0 0.0
    %5323 = vmatprep.subr.mxu0 0.0
    %5324 = vmatpush1.msra.mxu0 0.0
    %5325 = vmatprep.subr.mxu0 0.0
    %5326 = vmatpush1.msra.mxu0 0.0
    %5327 = vmatprep.subr.mxu0 0.0
    %5328 = vmatpush1.msra.mxu0 0.0
    %5329 = vmatprep.subr.mxu0 0.0
    %5330 = vmatpush1.msra.mxu0 0.0
    %5331 = vmatprep.subr.mxu0 0.0
    %5332 = vmatpush1.msra.mxu0 0.0
    %5333 = vmatprep.subr.mxu0 0.0
    %5334 = vmatpush1.msra.mxu0 0.0
    %5335 = vmatprep.subr.mxu0 0.0
    %5336 = vmatpush1.msra.mxu0 0.0
    %5337 = vmatprep.subr.mxu0 0.0
    %5338 = vmatpush1.msra.mxu0 0.0
    %5339 = vmatprep.subr.mxu0 0.0
    %5340 = vmatpush1.msra.mxu0 0.0
    %5341 = vmatprep.subr.mxu0 0.0
    %5342 = vmatpush1.msra.mxu0 0.0
    %5343 = vmatprep.subr.mxu0 0.0
    %5344 = vmatpush1.msra.mxu0 0.0
    %5345 = vmatprep.subr.mxu0 0.0
    %5346 = vmatpush1.msra.mxu0 0.0
    %5347 = vmatprep.subr.mxu0 0.0
    %5348 = vmatpush1.msra.mxu0 0.0
    %5349 = vmatprep.subr.mxu0 0.0
    %5350 = vmatpush1.msra.mxu0 0.0
    %5351 = vmatprep.subr.mxu0 0.0
    %5352 = vmatpush1.msra.mxu0 0.0
    %5353 = vmatprep.subr.mxu0 0.0
    %5354 = vmatpush1.msra.mxu0 0.0
    %5355 = vmatprep.mubr.f32.mxu0 0.0
    %5356 = vmatmul.mubr.f32.gmra.mrb[0].mxu0 %v5289
    %v5357 = vpop.f32.mrb[0].mxu0
    %v5358 = vadd.f32 0.0, %v5357
    %v5359 = vpop.f32.mrb[0].mxu0
    %5360 = vdwg.mxu0
    %v5361 = vsel %vm2431, %v5266, 0
    %5363 = vmatprep.subr.mxu0 0.0
    %5364 = vmatpush1.msra.mxu0 %v5267
    %5365 = vmatprep.subr.mxu0 0.0
    %5366 = vmatpush1.msra.mxu0 %v5268
    %5367 = vmatprep.subr.mxu0 0.0
    %5368 = vmatpush1.msra.mxu0 %v5269
    %5369 = vmatprep.subr.mxu0 0.0
    %5370 = vmatpush1.msra.mxu0 %v5270
    %5371 = vmatprep.subr.mxu0 0.0
    %5372 = vmatpush1.msra.mxu0 %v5271
    %5373 = vmatprep.subr.mxu0 0.0
    %5374 = vmatpush1.msra.mxu0 %v5272
    %5375 = vmatprep.subr.mxu0 0.0
    %5376 = vmatpush1.msra.mxu0 %v5273
    %5377 = vmatprep.subr.mxu0 0.0
    %5378 = vmatpush1.msra.mxu0 %v5274
    %5379 = vmatprep.subr.mxu0 0.0
    %5380 = vmatpush1.msra.mxu0 %v5275
    %5381 = vmatprep.subr.mxu0 0.0
    %5382 = vmatpush1.msra.mxu0 %v5276
    %5383 = vmatprep.subr.mxu0 0.0
    %5384 = vmatpush1.msra.mxu0 0.0
    %5385 = vmatprep.subr.mxu0 0.0
    %5386 = vmatpush1.msra.mxu0 0.0
    %5387 = vmatprep.subr.mxu0 0.0
    %5388 = vmatpush1.msra.mxu0 0.0
    %5389 = vmatprep.subr.mxu0 0.0
    %5390 = vmatpush1.msra.mxu0 0.0
    %5391 = vmatprep.subr.mxu0 0.0
    %5392 = vmatpush1.msra.mxu0 0.0
    %5393 = vmatprep.subr.mxu0 0.0
    %5394 = vmatpush1.msra.mxu0 0.0
    %5395 = vmatprep.subr.mxu0 0.0
    %5396 = vmatpush1.msra.mxu0 0.0
    %5397 = vmatprep.subr.mxu0 0.0
    %5398 = vmatpush1.msra.mxu0 0.0
    %5399 = vmatprep.subr.mxu0 0.0
    %5400 = vmatpush1.msra.mxu0 0.0
    %5401 = vmatprep.subr.mxu0 0.0
    %5402 = vmatpush1.msra.mxu0 0.0
    %5403 = vmatprep.subr.mxu0 0.0
    %5404 = vmatpush1.msra.mxu0 0.0
    %5405 = vmatprep.subr.mxu0 0.0
    %5406 = vmatpush1.msra.mxu0 0.0
    %5407 = vmatprep.subr.mxu0 0.0
    %5408 = vmatpush1.msra.mxu0 0.0
    %5409 = vmatprep.subr.mxu0 0.0
    %5410 = vmatpush1.msra.mxu0 0.0
    %5411 = vmatprep.subr.mxu0 0.0
    %5412 = vmatpush1.msra.mxu0 0.0
    %5413 = vmatprep.subr.mxu0 0.0
    %5414 = vmatpush1.msra.mxu0 0.0
    %5415 = vmatprep.subr.mxu0 0.0
    %5416 = vmatpush1.msra.mxu0 0.0
    %5417 = vmatprep.subr.mxu0 0.0
    %5418 = vmatpush1.msra.mxu0 0.0
    %5419 = vmatprep.subr.mxu0 0.0
    %5420 = vmatpush1.msra.mxu0 0.0
    %5421 = vmatprep.subr.mxu0 0.0
    %5422 = vmatpush1.msra.mxu0 0.0
    %5423 = vmatprep.subr.mxu0 0.0
    %5424 = vmatpush1.msra.mxu0 0.0
    %5425 = vmatprep.subr.mxu0 0.0
    %5426 = vmatpush1.msra.mxu0 0.0
    %5427 = vmatprep.mubr.f32.mxu0 0.0
    %5428 = vmatmul.mubr.f32.gmra.mrb[0].mxu0 %v5361
    %v5429 = vpop.f32.mrb[0].mxu0
    %v5430 = vadd.f32 %v5358, %v5429
    %v5431 = vpop.f32.mrb[0].mxu0
    %5432 = vdwg.mxu0
    %v5433 = vld [vmem:[%s2576] sm:$0xff]
    %v5434 = vld [vmem:[%s2576 + $0x8] sm:$0xff]
    %v5435 = vld [vmem:[%s2576 + $0x10] sm:$0xff]
    %v5436 = vld [vmem:[%s2576 + $0x18] sm:$0xff]
    %v5437 = vld [vmem:[%s2576 + $0x20] sm:$0xff]
    %v5438 = vld [vmem:[%s2576 + $0x28] sm:$0xff]
    %v5439 = vld [vmem:[%s2576 + $0x30] sm:$0xff]
    %v5440 = vld [vmem:[%s2576 + $0x38] sm:$0xff]
    %v5441 = vld [vmem:[%s2576 + $0x40] sm:$0xff]
    %v5442 = vld [vmem:[%s2576 + $0x48] sm:$0xff]
    %v5443 = vrot.slane %v5266, 2
    %v5444 = vsel %vm2431, %v5443, 0
    %5446 = vmatprep.subr.mxu0 0.0
    %5447 = vmatpush1.msra.mxu0 %v5433
    %5448 = vmatprep.subr.mxu0 0.0
    %5449 = vmatpush1.msra.mxu0 %v5434
    %5450 = vmatprep.subr.mxu0 0.0
    %5451 = vmatpush1.msra.mxu0 %v5435
    %5452 = vmatprep.subr.mxu0 0.0
    %5453 = vmatpush1.msra.mxu0 %v5436
    %5454 = vmatprep.subr.mxu0 0.0
    %5455 = vmatpush1.msra.mxu0 %v5437
    %5456 = vmatprep.subr.mxu0 0.0
    %5457 = vmatpush1.msra.mxu0 %v5438
    %5458 = vmatprep.subr.mxu0 0.0
    %5459 = vmatpush1.msra.mxu0 %v5439
    %5460 = vmatprep.subr.mxu0 0.0
    %5461 = vmatpush1.msra.mxu0 %v5440
    %5462 = vmatprep.subr.mxu0 0.0
    %5463 = vmatpush1.msra.mxu0 %v5441
    %5464 = vmatprep.subr.mxu0 0.0
    %5465 = vmatpush1.msra.mxu0 %v5442
    %5466 = vmatprep.subr.mxu0 0.0
    %5467 = vmatpush1.msra.mxu0 0.0
    %5468 = vmatprep.subr.mxu0 0.0
    %5469 = vmatpush1.msra.mxu0 0.0
    %5470 = vmatprep.subr.mxu0 0.0
    %5471 = vmatpush1.msra.mxu0 0.0
    %5472 = vmatprep.subr.mxu0 0.0
    %5473 = vmatpush1.msra.mxu0 0.0
    %5474 = vmatprep.subr.mxu0 0.0
    %5475 = vmatpush1.msra.mxu0 0.0
    %5476 = vmatprep.subr.mxu0 0.0
    %5477 = vmatpush1.msra.mxu0 0.0
    %5478 = vmatprep.subr.mxu0 0.0
    %5479 = vmatpush1.msra.mxu0 0.0
    %5480 = vmatprep.subr.mxu0 0.0
    %5481 = vmatpush1.msra.mxu0 0.0
    %5482 = vmatprep.subr.mxu0 0.0
    %5483 = vmatpush1.msra.mxu0 0.0
    %5484 = vmatprep.subr.mxu0 0.0
    %5485 = vmatpush1.msra.mxu0 0.0
    %5486 = vmatprep.subr.mxu0 0.0
    %5487 = vmatpush1.msra.mxu0 0.0
    %5488 = vmatprep.subr.mxu0 0.0
    %5489 = vmatpush1.msra.mxu0 0.0
    %5490 = vmatprep.subr.mxu0 0.0
    %5491 = vmatpush1.msra.mxu0 0.0
    %5492 = vmatprep.subr.mxu0 0.0
    %5493 = vmatpush1.msra.mxu0 0.0
    %5494 = vmatprep.subr.mxu0 0.0
    %5495 = vmatpush1.msra.mxu0 0.0
    %5496 = vmatprep.subr.mxu0 0.0
    %5497 = vmatpush1.msra.mxu0 0.0
    %5498 = vmatprep.subr.mxu0 0.0
    %5499 = vmatpush1.msra.mxu0 0.0
    %5500 = vmatprep.subr.mxu0 0.0
    %5501 = vmatpush1.msra.mxu0 0.0
    %5502 = vmatprep.subr.mxu0 0.0
    %5503 = vmatpush1.msra.mxu0 0.0
    %5504 = vmatprep.subr.mxu0 0.0
    %5505 = vmatpush1.msra.mxu0 0.0
    %5506 = vmatprep.subr.mxu0 0.0
    %5507 = vmatpush1.msra.mxu0 0.0
    %5508 = vmatprep.subr.mxu0 0.0
    %5509 = vmatpush1.msra.mxu0 0.0
    %5510 = vmatprep.mubr.f32.mxu0 0.0
    %5511 = vmatmul.mubr.f32.gmra.mrb[0].mxu0 %v5444
    %v5512 = vpop.f32.mrb[0].mxu0
    %v5513 = vadd.f32 0.0, %v5512
    %v5514 = vpop.f32.mrb[0].mxu0
    %5515 = vdwg.mxu0
    %v5516 = vadd.f32 %v5430, %v5513
    %v5517 = vld [vmem:[%s2661] sm:$0xff]
    %v5518 = vld [vmem:[%s2661 + $0x8] sm:$0xff]
    %v5519 = vld [vmem:[%s2661 + $0x10] sm:$0xff]
    %v5520 = vld [vmem:[%s2661 + $0x18] sm:$0xff]
    %v5521 = vld [vmem:[%s2661 + $0x20] sm:$0xff]
    %v5522 = vld [vmem:[%s2661 + $0x28] sm:$0xff]
    %v5523 = vld [vmem:[%s2661 + $0x30] sm:$0xff]
    %v5524 = vld [vmem:[%s2661 + $0x38] sm:$0xff]
    %v5525 = vld [vmem:[%s2661 + $0x40] sm:$0xff]
    %v5526 = vld [vmem:[%s2661 + $0x48] sm:$0xff]
    %v5527 = vrot.slane %v5266, 3
    %v5528 = vsel %vm2431, %v5527, 0
    %5530 = vmatprep.subr.mxu0 0.0
    %5531 = vmatpush1.msra.mxu0 %v5517
    %5532 = vmatprep.subr.mxu0 0.0
    %5533 = vmatpush1.msra.mxu0 %v5518
    %5534 = vmatprep.subr.mxu0 0.0
    %5535 = vmatpush1.msra.mxu0 %v5519
    %5536 = vmatprep.subr.mxu0 0.0
    %5537 = vmatpush1.msra.mxu0 %v5520
    %5538 = vmatprep.subr.mxu0 0.0
    %5539 = vmatpush1.msra.mxu0 %v5521
    %5540 = vmatprep.subr.mxu0 0.0
    %5541 = vmatpush1.msra.mxu0 %v5522
    %5542 = vmatprep.subr.mxu0 0.0
    %5543 = vmatpush1.msra.mxu0 %v5523
    %5544 = vmatprep.subr.mxu0 0.0
    %5545 = vmatpush1.msra.mxu0 %v5524
    %5546 = vmatprep.subr.mxu0 0.0
    %5547 = vmatpush1.msra.mxu0 %v5525
    %5548 = vmatprep.subr.mxu0 0.0
    %5549 = vmatpush1.msra.mxu0 %v5526
    %5550 = vmatprep.subr.mxu0 0.0
    %5551 = vmatpush1.msra.mxu0 0.0
    %5552 = vmatprep.subr.mxu0 0.0
    %5553 = vmatpush1.msra.mxu0 0.0
    %5554 = vmatprep.subr.mxu0 0.0
    %5555 = vmatpush1.msra.mxu0 0.0
    %5556 = vmatprep.subr.mxu0 0.0
    %5557 = vmatpush1.msra.mxu0 0.0
    %5558 = vmatprep.subr.mxu0 0.0
    %5559 = vmatpush1.msra.mxu0 0.0
    %5560 = vmatprep.subr.mxu0 0.0
    %5561 = vmatpush1.msra.mxu0 0.0
    %5562 = vmatprep.subr.mxu0 0.0
    %5563 = vmatpush1.msra.mxu0 0.0
    %5564 = vmatprep.subr.mxu0 0.0
    %5565 = vmatpush1.msra.mxu0 0.0
    %5566 = vmatprep.subr.mxu0 0.0
    %5567 = vmatpush1.msra.mxu0 0.0
    %5568 = vmatprep.subr.mxu0 0.0
    %5569 = vmatpush1.msra.mxu0 0.0
    %5570 = vmatprep.subr.mxu0 0.0
    %5571 = vmatpush1.msra.mxu0 0.0
    %5572 = vmatprep.subr.mxu0 0.0
    %5573 = vmatpush1.msra.mxu0 0.0
    %5574 = vmatprep.subr.mxu0 0.0
    %5575 = vmatpush1.msra.mxu0 0.0
    %5576 = vmatprep.subr.mxu0 0.0
    %5577 = vmatpush1.msra.mxu0 0.0
    %5578 = vmatprep.subr.mxu0 0.0
    %5579 = vmatpush1.msra.mxu0 0.0
    %5580 = vmatprep.subr.mxu0 0.0
    %5581 = vmatpush1.msra.mxu0 0.0
    %5582 = vmatprep.subr.mxu0 0.0
    %5583 = vmatpush1.msra.mxu0 0.0
    %5584 = vmatprep.subr.mxu0 0.0
    %5585 = vmatpush1.msra.mxu0 0.0
    %5586 = vmatprep.subr.mxu0 0.0
    %5587 = vmatpush1.msra.mxu0 0.0
    %5588 = vmatprep.subr.mxu0 0.0
    %5589 = vmatpush1.msra.mxu0 0.0
    %5590 = vmatprep.subr.mxu0 0.0
    %5591 = vmatpush1.msra.mxu0 0.0
    %5592 = vmatprep.subr.mxu0 0.0
    %5593 = vmatpush1.msra.mxu0 0.0
    %5594 = vmatprep.mubr.f32.mxu0 0.0
    %5595 = vmatmul.mubr.f32.gmra.mrb[0].mxu0 %v5528
    %v5596 = vpop.f32.mrb[0].mxu0
    %v5597 = vadd.f32 0.0, %v5596
    %v5598 = vpop.f32.mrb[0].mxu0
    %5599 = vdwg.mxu0
    %v5600 = vadd.f32 %v5516, %v5597
    %v5601 = vld [vmem:[%s2746] sm:$0xff]
    %v5602 = vld [vmem:[%s2746 + $0x8] sm:$0xff]
    %v5603 = vld [vmem:[%s2746 + $0x10] sm:$0xff]
    %v5604 = vld [vmem:[%s2746 + $0x18] sm:$0xff]
    %v5605 = vld [vmem:[%s2746 + $0x20] sm:$0xff]
    %v5606 = vld [vmem:[%s2746 + $0x28] sm:$0xff]
    %v5607 = vld [vmem:[%s2746 + $0x30] sm:$0xff]
    %v5608 = vld [vmem:[%s2746 + $0x38] sm:$0xff]
    %v5609 = vld [vmem:[%s2746 + $0x40] sm:$0xff]
    %v5610 = vld [vmem:[%s2746 + $0x48] sm:$0xff]
    %v5611 = vrot.slane %v5266, 4
    %v5612 = vsel %vm2431, %v5611, 0
    %5614 = vmatprep.subr.mxu0 0.0
    %5615 = vmatpush1.msra.mxu0 %v5601
    %5616 = vmatprep.subr.mxu0 0.0
    %5617 = vmatpush1.msra.mxu0 %v5602
    %5618 = vmatprep.subr.mxu0 0.0
    %5619 = vmatpush1.msra.mxu0 %v5603
    %5620 = vmatprep.subr.mxu0 0.0
    %5621 = vmatpush1.msra.mxu0 %v5604
    %5622 = vmatprep.subr.mxu0 0.0
    %5623 = vmatpush1.msra.mxu0 %v5605
    %5624 = vmatprep.subr.mxu0 0.0
    %5625 = vmatpush1.msra.mxu0 %v5606
    %5626 = vmatprep.subr.mxu0 0.0
    %5627 = vmatpush1.msra.mxu0 %v5607
    %5628 = vmatprep.subr.mxu0 0.0
    %5629 = vmatpush1.msra.mxu0 %v5608
    %5630 = vmatprep.subr.mxu0 0.0
    %5631 = vmatpush1.msra.mxu0 %v5609
    %5632 = vmatprep.subr.mxu0 0.0
    %5633 = vmatpush1.msra.mxu0 %v5610
    %5634 = vmatprep.subr.mxu0 0.0
    %5635 = vmatpush1.msra.mxu0 0.0
    %5636 = vmatprep.subr.mxu0 0.0
    %5637 = vmatpush1.msra.mxu0 0.0
    %5638 = vmatprep.subr.mxu0 0.0
    %5639 = vmatpush1.msra.mxu0 0.0
    %5640 = vmatprep.subr.mxu0 0.0
    %5641 = vmatpush1.msra.mxu0 0.0
    %5642 = vmatprep.subr.mxu0 0.0
    %5643 = vmatpush1.msra.mxu0 0.0
    %5644 = vmatprep.subr.mxu0 0.0
    %5645 = vmatpush1.msra.mxu0 0.0
    %5646 = vmatprep.subr.mxu0 0.0
    %5647 = vmatpush1.msra.mxu0 0.0
    %5648 = vmatprep.subr.mxu0 0.0
    %5649 = vmatpush1.msra.mxu0 0.0
    %5650 = vmatprep.subr.mxu0 0.0
    %5651 = vmatpush1.msra.mxu0 0.0
    %5652 = vmatprep.subr.mxu0 0.0
    %5653 = vmatpush1.msra.mxu0 0.0
    %5654 = vmatprep.subr.mxu0 0.0
    %5655 = vmatpush1.msra.mxu0 0.0
    %5656 = vmatprep.subr.mxu0 0.0
    %5657 = vmatpush1.msra.mxu0 0.0
    %5658 = vmatprep.subr.mxu0 0.0
    %5659 = vmatpush1.msra.mxu0 0.0
    %5660 = vmatprep.subr.mxu0 0.0
    %5661 = vmatpush1.msra.mxu0 0.0
    %5662 = vmatprep.subr.mxu0 0.0
    %5663 = vmatpush1.msra.mxu0 0.0
    %5664 = vmatprep.subr.mxu0 0.0
    %5665 = vmatpush1.msra.mxu0 0.0
    %5666 = vmatprep.subr.mxu0 0.0
    %5667 = vmatpush1.msra.mxu0 0.0
    %5668 = vmatprep.subr.mxu0 0.0
    %5669 = vmatpush1.msra.mxu0 0.0
    %5670 = vmatprep.subr.mxu0 0.0
    %5671 = vmatpush1.msra.mxu0 0.0
    %5672 = vmatprep.subr.mxu0 0.0
    %5673 = vmatpush1.msra.mxu0 0.0
    %5674 = vmatprep.subr.mxu0 0.0
    %5675 = vmatpush1.msra.mxu0 0.0
    %5676 = vmatprep.subr.mxu0 0.0
    %5677 = vmatpush1.msra.mxu0 0.0
    %5678 = vmatprep.mubr.f32.mxu0 0.0
    %5679 = vmatmul.mubr.f32.gmra.mrb[0].mxu0 %v5612
    %v5680 = vpop.f32.mrb[0].mxu0
    %v5681 = vadd.f32 0.0, %v5680
    %v5682 = vpop.f32.mrb[0].mxu0
    %5683 = vdwg.mxu0
    %v5684 = vadd.f32 %v5600, %v5681
    %v5685 = vadd.f32 %v5684, %v53
    %v5686 = vmax.f32 %v5685, 0.0
    %v5688 = vsel %vm2833, %v5686, 0
    %5690 = vmatprep.subr.mxu0 0.0
    %5691 = vmatpush1.msra.mxu0 %v56
    %5692 = vmatprep.subr.mxu0 0.0
    %5693 = vmatpush1.msra.mxu0 %v57
    %5694 = vmatprep.subr.mxu0 0.0
    %5695 = vmatpush1.msra.mxu0 %v58
    %5696 = vmatprep.subr.mxu0 0.0
    %5697 = vmatpush1.msra.mxu0 %v59
    %5698 = vmatprep.subr.mxu0 0.0
    %5699 = vmatpush1.msra.mxu0 %v60
    %5700 = vmatprep.subr.mxu0 0.0
    %5701 = vmatpush1.msra.mxu0 %v61
    %5702 = vmatprep.subr.mxu0 0.0
    %5703 = vmatpush1.msra.mxu0 %v62
    %5704 = vmatprep.subr.mxu0 0.0
    %5705 = vmatpush1.msra.mxu0 %v63
    %5706 = vmatprep.subr.mxu0 0.0
    %5707 = vmatpush1.msra.mxu0 %v64
    %5708 = vmatprep.subr.mxu0 0.0
    %5709 = vmatpush1.msra.mxu0 %v65
    %5710 = vmatprep.subr.mxu0 0.0
    %5711 = vmatpush1.msra.mxu0 %v66
    %5712 = vmatprep.subr.mxu0 0.0
    %5713 = vmatpush1.msra.mxu0 %v67
    %5714 = vmatprep.subr.mxu0 0.0
    %5715 = vmatpush1.msra.mxu0 %v68
    %5716 = vmatprep.subr.mxu0 0.0
    %5717 = vmatpush1.msra.mxu0 %v69
    %5718 = vmatprep.subr.mxu0 0.0
    %5719 = vmatpush1.msra.mxu0 %v70
    %5720 = vmatprep.subr.mxu0 0.0
    %5721 = vmatpush1.msra.mxu0 0.0
    %5722 = vmatprep.subr.mxu0 0.0
    %5723 = vmatpush1.msra.mxu0 0.0
    %5724 = vmatprep.subr.mxu0 0.0
    %5725 = vmatpush1.msra.mxu0 0.0
    %5726 = vmatprep.subr.mxu0 0.0
    %5727 = vmatpush1.msra.mxu0 0.0
    %5728 = vmatprep.subr.mxu0 0.0
    %5729 = vmatpush1.msra.mxu0 0.0
    %5730 = vmatprep.subr.mxu0 0.0
    %5731 = vmatpush1.msra.mxu0 0.0
    %5732 = vmatprep.subr.mxu0 0.0
    %5733 = vmatpush1.msra.mxu0 0.0
    %5734 = vmatprep.subr.mxu0 0.0
    %5735 = vmatpush1.msra.mxu0 0.0
    %5736 = vmatprep.subr.mxu0 0.0
    %5737 = vmatpush1.msra.mxu0 0.0
    %5738 = vmatprep.subr.mxu0 0.0
    %5739 = vmatpush1.msra.mxu0 0.0
    %5740 = vmatprep.subr.mxu0 0.0
    %5741 = vmatpush1.msra.mxu0 0.0
    %5742 = vmatprep.subr.mxu0 0.0
    %5743 = vmatpush1.msra.mxu0 0.0
    %5744 = vmatprep.subr.mxu0 0.0
    %5745 = vmatpush1.msra.mxu0 0.0
    %5746 = vmatprep.subr.mxu0 0.0
    %5747 = vmatpush1.msra.mxu0 0.0
    %5748 = vmatprep.subr.mxu0 0.0
    %5749 = vmatpush1.msra.mxu0 0.0
    %5750 = vmatprep.subr.mxu0 0.0
    %5751 = vmatpush1.msra.mxu0 0.0
    %5752 = vmatprep.subr.mxu0 0.0
    %5753 = vmatpush1.msra.mxu0 0.0
    %5754 = vmatprep.mubr.f32.mxu0 0.0
    %5755 = vmatmul.mubr.f32.gmra.mrb[0].mxu0 %v5688
    %v5756 = vpop.f32.mrb[0].mxu0
    %v5757 = vadd.f32 %v54, %v5756
    %v5758 = vpop.f32.mrb[0].mxu0
    %5759 = vdwg.mxu0
    %v5760 = vmax.f32 %v5757, 0.0
    %v5762 = vsel %vm1373, %v5760, 0
    %5764 = vmatprep.subr.mxu0 0.0
    %5765 = vmatpush1.msra.mxu0 %v71
    %5766 = vmatprep.subr.mxu0 0.0
    %5767 = vmatpush1.msra.mxu0 %v72
    %5768 = vmatprep.subr.mxu0 0.0
    %5769 = vmatpush1.msra.mxu0 %v73
    %5770 = vmatprep.subr.mxu0 0.0
    %5771 = vmatpush1.msra.mxu0 %v74
    %5772 = vmatprep.subr.mxu0 0.0
    %5773 = vmatpush1.msra.mxu0 %v75
    %5774 = vmatprep.subr.mxu0 0.0
    %5775 = vmatpush1.msra.mxu0 %v76
    %5776 = vmatprep.subr.mxu0 0.0
    %5777 = vmatpush1.msra.mxu0 %v77
    %5778 = vmatprep.subr.mxu0 0.0
    %5779 = vmatpush1.msra.mxu0 %v78
    %5780 = vmatprep.subr.mxu0 0.0
    %5781 = vmatpush1.msra.mxu0 %v79
    %5782 = vmatprep.subr.mxu0 0.0
    %5783 = vmatpush1.msra.mxu0 %v80
    %5784 = vmatprep.subr.mxu0 0.0
    %5785 = vmatpush1.msra.mxu0 %v2912
    %5786 = vmatprep.subr.mxu0 0.0
    %5787 = vmatpush1.msra.mxu0 0.0
    %5788 = vmatprep.subr.mxu0 0.0
    %5789 = vmatpush1.msra.mxu0 0.0
    %5790 = vmatprep.subr.mxu0 0.0
    %5791 = vmatpush1.msra.mxu0 0.0
    %5792 = vmatprep.subr.mxu0 0.0
    %5793 = vmatpush1.msra.mxu0 0.0
    %5794 = vmatprep.subr.mxu0 0.0
    %5795 = vmatpush1.msra.mxu0 0.0
    %5796 = vmatprep.subr.mxu0 0.0
    %5797 = vmatpush1.msra.mxu0 0.0
    %5798 = vmatprep.subr.mxu0 0.0
    %5799 = vmatpush1.msra.mxu0 0.0
    %5800 = vmatprep.subr.mxu0 0.0
    %5801 = vmatpush1.msra.mxu0 0.0
    %5802 = vmatprep.subr.mxu0 0.0
    %5803 = vmatpush1.msra.mxu0 0.0
    %5804 = vmatprep.subr.mxu0 0.0
    %5805 = vmatpush1.msra.mxu0 0.0
    %5806 = vmatprep.subr.mxu0 0.0
    %5807 = vmatpush1.msra.mxu0 0.0
    %5808 = vmatprep.subr.mxu0 0.0
    %5809 = vmatpush1.msra.mxu0 0.0
    %5810 = vmatprep.subr.mxu0 0.0
    %5811 = vmatpush1.msra.mxu0 0.0
    %5812 = vmatprep.subr.mxu0 0.0
    %5813 = vmatpush1.msra.mxu0 0.0
    %5814 = vmatprep.subr.mxu0 0.0
    %5815 = vmatpush1.msra.mxu0 0.0
    %5816 = vmatprep.subr.mxu0 0.0
    %5817 = vmatpush1.msra.mxu0 0.0
    %5818 = vmatprep.subr.mxu0 0.0
    %5819 = vmatpush1.msra.mxu0 0.0
    %5820 = vmatprep.subr.mxu0 0.0
    %5821 = vmatpush1.msra.mxu0 0.0
    %5822 = vmatprep.subr.mxu0 0.0
    %5823 = vmatpush1.msra.mxu0 0.0
    %5824 = vmatprep.subr.mxu0 0.0
    %5825 = vmatpush1.msra.mxu0 0.0
    %5826 = vmatprep.subr.mxu0 0.0
    %5827 = vmatpush1.msra.mxu0 0.0
    %5828 = vmatprep.mubr.f32.mxu0 0.0
    %5829 = vmatmul.mubr.f32.gmra.mrb[0].mxu0 %v5762
    %v5830 = vpop.f32.mrb[0].mxu0
    %v5831 = vadd.f32 %v55, %v5830
    %v5832 = vpop.f32.mrb[0].mxu0
    %5833 = vdwg.mxu0
    %5834 = vst [vmem:[#allocation2 + $0x1] sm:$0x1] %v5831
    // Predicated region
    $region62: #{net_forward.1} parent=1 // pred_check
      _
    $region63: #{net_forward.1} parent=1 // pred_check_branch
      %5836 = sbr.rel (0) target = $region65
    $region64: #{net_forward.1} parent=1 // pred_region
      %s5838 = ssub.s32 32, 32
      %5839 = vsyncadd [#allocation3], %s5838
      %s5841 = sshll.u32 [#allocation2], 4
      %s5842 = int_to_ptr.vmem [resolvable:$true] %s5841
      %5844 = dma.vmem_to_hbm [thread:$0]  %s5842, 32, %s15, [#allocation3]
    $region65: #{net_forward.1} parent=1 // pred_fallthru
      _
    // Predicated region
    $region66: #{net_forward.1} parent=1 // pred_check
      _
    $region67: #{net_forward.1} parent=1 // pred_check_branch
      %5846 = sbr.rel (0) target = $region69
    $region68: #{net_forward.1} parent=1 // pred_region
      %5847 = dma.done [#allocation3], 32
    $region69: #{net_forward.1} parent=1 // pred_fallthru
      _
    %5848 = vsyncpa [#allocation3], 1

</llo_original>
